<compile_context>
chip_gen: v5e
topology: v5e:2x2
jax: 0.10.0
libtpu: 0.0.40
codegen_flags: <defaults>
</compile_context>

<pallas_src>
import jax
import jax.numpy as jnp
from jax.experimental import pallas as pl
from jax.experimental.pallas import tpu as pltpu


POOL_PAD_W = 768          # 26*26 = 676 padded pooled lanes, rounded up to 6*128
CONV2_OUT_W = 640         # covers all valid output lanes q = 26*h + w <= 621, 5*128


# ---------------------------------------------------------------------------
# Kernel A: conv1 + relu + maxpool2 + conv2 + relu + global-avg-pool + fc + relu
# One grid step per batch element.
# ---------------------------------------------------------------------------
def psf_feat_kernel(xcol_ref, w1_ref, b1m_ref, w2_ref, b2_ref, mout_ref,
                    wfc_ref, bfc_ref, o_ref, p_ref):
    f32 = jnp.float32

    # conv1 for all four 2x2 pool-window offsets at once: one lane-dense matmul.
    pre = jnp.dot(w1_ref[...], xcol_ref[0], preferred_element_type=f32)  # (16, 3072)

    # 2x2 max-pool = elementwise max of the four aligned 768-lane chunks; the
    # lane-masked bias + relu yields the zero-padded (26x26, stride-26) pooled map.
    c0 = pre[:, 0 * POOL_PAD_W:1 * POOL_PAD_W]
    c1 = pre[:, 1 * POOL_PAD_W:2 * POOL_PAD_W]
    c2 = pre[:, 2 * POOL_PAD_W:3 * POOL_PAD_W]
    c3 = pre[:, 3 * POOL_PAD_W:4 * POOL_PAD_W]
    m = jnp.maximum(jnp.maximum(c0, c1), jnp.maximum(c2, c3))
    p_ref[...] = jnp.maximum(m + b1m_ref[...], 0.0)                      # (16, 768)

    # conv2: 9 lane-dense matmuls on lane-shifted windows of the padded pooled map.
    acc = jnp.zeros((32, CONV2_OUT_W), f32)
    for dy in range(3):
        for dx in range(3):
            t = 3 * dy + dx                   # tap index (matches w2 layout)
            d = 26 * dy + dx                  # lane shift in the stride-26 layout
            acc = acc + jnp.dot(w2_ref[t], p_ref[:, pl.ds(d, CONV2_OUT_W)],
                                preferred_element_type=f32)
    h2 = jnp.maximum(acc + b2_ref[...], 0.0)                             # (32, 640)

    # Global average pool over the 576 valid output lanes, then fc(32->32)+relu.
    tot = jnp.sum(h2 * mout_ref[...], axis=1, keepdims=True)             # (32, 1)
    feat = tot * (1.0 / 576.0)
    hfc = jnp.maximum(jnp.dot(wfc_ref[...], feat, preferred_element_type=f32)
                      + bfc_ref[...], 0.0)                               # (32, 1)
    o_ref[0] = hfc


def psf_small_features(xcol, w1c, b1m, w2c, b2c, mask_out, wfcT, bfcc):
    B = xcol.shape[0]
    out = pl.pallas_call(
        psf_feat_kernel,
        out_shape=jax.ShapeDtypeStruct((B, 32, 1), jnp.float32),
        grid=(B,),
        in_specs=[
            pl.BlockSpec((1, 9, 4 * POOL_PAD_W), lambda b: (b, 0, 0)),
            pl.BlockSpec((16, 9), lambda b: (0, 0)),
            pl.BlockSpec((16, POOL_PAD_W), lambda b: (0, 0)),
            pl.BlockSpec((9, 32, 16), lambda b: (0, 0, 0)),
            pl.BlockSpec((32, 1), lambda b: (0, 0)),
            pl.BlockSpec((1, CONV2_OUT_W), lambda b: (0, 0)),
            pl.BlockSpec((32, 32), lambda b: (0, 0)),
            pl.BlockSpec((32, 1), lambda b: (0, 0)),
        ],
        out_specs=pl.BlockSpec((1, 32, 1), lambda b: (b, 0, 0)),
        scratch_shapes=[pltpu.VMEM((16, POOL_PAD_W), jnp.float32)],
        compiler_params=pltpu.CompilerParams(dimension_semantics=("parallel",)),
    )(xcol, w1c, b1m, w2c, b2c, mask_out, wfcT, bfcc)
    return out[:, :, 0]                                                  # (B, 32)


# ---------------------------------------------------------------------------
# Kernel B: fused heads  y = x @ [W96 | W48 | W24] + [b96 | b48 | b24]
# Tiled over the (large) output dim; pure weight streaming.
# ---------------------------------------------------------------------------
def fc_heads_kernel(x_ref, w_ref, b_ref, o_ref):
    o_ref[...] = (jnp.dot(x_ref[...], w_ref[...],
                          preferred_element_type=jnp.float32) + b_ref[...])


def fused_heads(x, w, b, tn=16128):
    B, K = x.shape
    N = w.shape[1]
    assert N % tn == 0
    return pl.pallas_call(
        fc_heads_kernel,
        out_shape=jax.ShapeDtypeStruct((B, N), jnp.float32),
        grid=(N // tn,),
        in_specs=[pl.BlockSpec((B, K), lambda j: (0, 0)),
                  pl.BlockSpec((K, tn), lambda j: (0, j)),
                  pl.BlockSpec((1, tn), lambda j: (0, j))],
        out_specs=pl.BlockSpec((B, tn), lambda j: (0, j)),
        compiler_params=pltpu.CompilerParams(dimension_semantics=("parallel",)),
    )(x, w, b)


# ---------------------------------------------------------------------------
# Host-side layout prep (pure data movement / one-time weight re-layout)
# ---------------------------------------------------------------------------
def build_xcol(x):
    """im2col for conv1 fused with the 2x2 pool-window offsets.

    Returns (B, 9, 3072): axis-1 is the conv1 tap t = 3*dy+dx; the lane axis is
    [pool offset j = 2*i + j2] x [26x26 zero-padded pooled grid, flattened with
    stride 26 and zero-padded to 768 lanes].
    """
    B = x.shape[0]
    xp = jnp.pad(x[:, 0], ((0, 0), (1, 1), (1, 1)))                 # (B, 50, 50)
    taps = []
    for dy in range(3):
        for dx in range(3):
            offs = []
            for i in range(2):
                for j2 in range(2):
                    patch = xp[:, i + dy: i + dy + 48: 2,
                               j2 + dx: j2 + dx + 48: 2]            # (B, 24, 24)
                    padded = jnp.pad(patch, ((0, 0), (1, 1), (1, 1)))  # (B, 26, 26)
                    flat = jnp.pad(padded.reshape(B, 676),
                                   ((0, 0), (0, POOL_PAD_W - 676)))    # (B, 768)
                    offs.append(flat)
            taps.append(jnp.concatenate(offs, axis=1))              # (B, 3072)
    return jnp.stack(taps, axis=1)                                  # (B, 9, 3072)


def prepare_params(p):
    """One-time re-layout of the PyTorch-style parameters into kernel-ready arrays."""
    f32 = jnp.float32
    # conv1 weight (3,3,1,16) HWIO -> (16, 9), tap t = 3*dy + dx
    w1c = jnp.transpose(p["w1"][:, :, 0, :], (2, 0, 1)).reshape(16, 9)
    # conv2 weight (3,3,16,32) HWIO -> (9, 32, 16), tap t = 3*dy + dx
    w2c = jnp.transpose(p["w2"], (0, 1, 3, 2)).reshape(9, 32, 16)
    # conv1 bias, masked to the valid (non-padding) lanes of the padded pooled map
    lane = jnp.arange(POOL_PAD_W)
    r, c = lane // 26, lane % 26
    valid_in = ((r >= 1) & (r <= 24) & (c >= 1) & (c <= 24)).astype(f32)
    b1m = p["b1"].reshape(16, 1) * valid_in.reshape(1, POOL_PAD_W)      # (16, 768)
    b2c = p["b2"].reshape(32, 1)
    # mask selecting the 576 valid conv2-output lanes (q = 26*h + w, h,w < 24)
    lane_o = jnp.arange(CONV2_OUT_W)
    ro, co = lane_o // 26, lane_o % 26
    mask_out = ((ro < 24) & (co < 24)).astype(f32).reshape(1, CONV2_OUT_W)
    wfcT = p["wfc"].T                                                   # (32, 32)
    bfcc = p["bfc"].reshape(32, 1)
    # fused big heads
    w_heads = jnp.concatenate([p["w96"], p["w48"], p["w24"]], axis=1)   # (32, 48384)
    b_heads = jnp.concatenate([p["b96"], p["b48"], p["b24"]]).reshape(1, -1)
    return dict(w1c=w1c, b1m=b1m, w2c=w2c, b2c=b2c, mask_out=mask_out,
                wfcT=wfcT, bfcc=bfcc, w_heads=w_heads, b_heads=b_heads)


def psf_forward(x, kp):
    B = x.shape[0]
    xcol = build_xcol(x)
    f = psf_small_features(xcol, kp["w1c"], kp["b1m"], kp["w2c"], kp["b2c"],
                           kp["mask_out"], kp["wfcT"], kp["bfcc"])      # (B, 32)
    y = fused_heads(f, kp["w_heads"], kp["b_heads"])                    # (B, 48384)
    n96 = 96 * 96 * 4
    n48 = 48 * 48 * 4
    y96 = y[:, :n96].reshape(B, 4, 96, 96)
    y48 = y[:, n96:n96 + n48].reshape(B, 4, 48, 48)
    y24 = y[:, n96 + n48:].reshape(B, 4, 24, 24)
    return y96, y48, y24


# ---------------------------------------------------------------------------
# Pure-JAX reference (same parameters, PyTorch forward semantics)
# ---------------------------------------------------------------------------
def reference_forward(x, p):
    hi = jax.lax.Precision.HIGHEST
    dn = ("NHWC", "HWIO", "NHWC")
    xN = jnp.transpose(x, (0, 2, 3, 1))                   # NCHW -> NHWC
    h = jax.lax.conv_general_dilated(xN, p["w1"], (1, 1), "SAME",
                                     dimension_numbers=dn, precision=hi) + p["b1"]
    h = jax.nn.relu(h)
    h = jax.lax.reduce_window(h, -jnp.inf, jax.lax.max,
                              (1, 2, 2, 1), (1, 2, 2, 1), "VALID")
    h = jax.lax.conv_general_dilated(h, p["w2"], (1, 1), "SAME",
                                     dimension_numbers=dn, precision=hi) + p["b2"]
    h = jax.nn.relu(h)
    g = jnp.mean(h, axis=(1, 2))                          # (B, 32)
    f = jax.nn.relu(jnp.dot(g, p["wfc"], precision=hi) + p["bfc"])
    y96 = jnp.dot(f, p["w96"], precision=hi) + p["b96"]
    y48 = jnp.dot(f, p["w48"], precision=hi) + p["b48"]
    y24 = jnp.dot(f, p["w24"], precision=hi) + p["b24"]
    return (y96.reshape(-1, 4, 96, 96),
            y48.reshape(-1, 4, 48, 48),
            y24.reshape(-1, 4, 24, 24))


if __name__ == "__main__":
    key = jax.random.PRNGKey(0)
    ks = jax.random.split(key, 13)
    f32 = jnp.float32
    # Deterministic synthetic parameters. Conv weights are stored HWIO; fc weights
    # are stored (in, out), i.e. the transpose of PyTorch's nn.Linear.weight.
    params = {
        "w1": 0.2 * jax.random.normal(ks[0], (3, 3, 1, 16), f32),
        "b1": 0.1 * jax.random.normal(ks[1], (16,), f32),
        "w2": 0.1 * jax.random.normal(ks[2], (3, 3, 16, 32), f32),
        "b2": 0.1 * jax.random.normal(ks[3], (32,), f32),
        "wfc": 0.2 * jax.random.normal(ks[4], (32, 32), f32),
        "bfc": 0.1 * jax.random.normal(ks[5], (32,), f32),
        "w96": 0.05 * jax.random.normal(ks[6], (32, 96 * 96 * 4), f32),
        "b96": 0.05 * jax.random.normal(ks[7], (96 * 96 * 4,), f32),
        "w48": 0.05 * jax.random.normal(ks[8], (32, 48 * 48 * 4), f32),
        "b48": 0.05 * jax.random.normal(ks[9], (48 * 48 * 4,), f32),
        "w24": 0.05 * jax.random.normal(ks[10], (32, 24 * 24 * 4), f32),
        "b24": 0.05 * jax.random.normal(ks[11], (24 * 24 * 4,), f32),
    }
    x = jax.random.normal(ks[12], (2, 1, 48, 48), f32)    # PSF kernels, NCHW

    kp = prepare_params(params)                           # one-time weight re-layout
    fwd = jax.jit(psf_forward)
    feat_96, feat_48, feat_24 = jax.block_until_ready(fwd(x, kp))

    assert feat_96.shape == (2, 4, 96, 96)
    assert feat_48.shape == (2, 4, 48, 48)
    assert feat_24.shape == (2, 4, 24, 24)

    r96, r48, r24 = reference_forward(x, params)
    for got, ref in ((feat_96, r96), (feat_48, r48), (feat_24, r24)):
        err = float(jnp.max(jnp.abs(got - ref)))
        assert jnp.allclose(got, ref, atol=1e-2, rtol=1e-2), f"max abs err {err}"

    print("KERNEL_OK")
</pallas_src>

<mosaic_0001>
module attributes {stable_mosaic.version = 11 : i64} {
  func.func @psf_feat_kernel(%arg0: i32, %arg1: memref<1x9x3072xf32, #tpu.memory_space<vmem>>, %arg2: memref<16x9xf32, #tpu.memory_space<vmem>>, %arg3: memref<16x768xf32, #tpu.memory_space<vmem>>, %arg4: memref<9x32x16xf32, #tpu.memory_space<vmem>>, %arg5: memref<32x1xf32, #tpu.memory_space<vmem>>, %arg6: memref<1x640xf32, #tpu.memory_space<vmem>>, %arg7: memref<32x32xf32, #tpu.memory_space<vmem>>, %arg8: memref<32x1xf32, #tpu.memory_space<vmem>>, %arg9: memref<1x32x1xf32, #tpu.memory_space<vmem>>, %arg10: memref<16x768xf32, #tpu.memory_space<vmem>>) attributes {dimension_semantics = [#tpu.dimension_semantics<parallel>], iteration_bounds = array<i64: 2>, scalar_prefetch = 0 : i64, scratch_operands = 1 : i64, tpu.core_type = #tpu.core_type<tc>, window_params = [{transform_indices = @transform_0, window_bounds = array<i64: 1, 9, 3072>}, {pipeline_mode = #tpu.pipeline_mode<synchronous>, transform_indices = @transform_1, window_bounds = array<i64: 16, 9>}, {pipeline_mode = #tpu.pipeline_mode<synchronous>, transform_indices = @transform_2, window_bounds = array<i64: 16, 768>}, {pipeline_mode = #tpu.pipeline_mode<synchronous>, transform_indices = @transform_3, window_bounds = array<i64: 9, 32, 16>}, {pipeline_mode = #tpu.pipeline_mode<synchronous>, transform_indices = @transform_4, window_bounds = array<i64: 32, 1>}, {pipeline_mode = #tpu.pipeline_mode<synchronous>, transform_indices = @transform_5, window_bounds = array<i64: 1, 640>}, {pipeline_mode = #tpu.pipeline_mode<synchronous>, transform_indices = @transform_6, window_bounds = array<i64: 32, 32>}, {pipeline_mode = #tpu.pipeline_mode<synchronous>, transform_indices = @transform_7, window_bounds = array<i64: 32, 1>}, {transform_indices = @transform_8, window_bounds = array<i64: 1, 32, 1>}]} {
    %c0 = arith.constant 0 : index
    %c0_0 = arith.constant 0 : index
    %0 = vector.load %arg2[%c0, %c0_0] : memref<16x9xf32, #tpu.memory_space<vmem>>, vector<16x9xf32>
    %c0_1 = arith.constant 0 : index
    %c0_2 = arith.constant 0 : index
    %c0_3 = arith.constant 0 : index
    %1 = vector.load %arg1[%c0_1, %c0_2, %c0_3] : memref<1x9x3072xf32, #tpu.memory_space<vmem>>, vector<1x9x3072xf32>
    %2 = vector.shape_cast %1 : vector<1x9x3072xf32> to vector<9x3072xf32>
    %cst = arith.constant dense<0.000000e+00> : vector<16x3072xf32>
    %3 = tpu.matmul %0, %2, %cst {dimension_numbers = #tpu.dot_dimension_numbers<[1], [0], [0], [1], [0, 0, 1, 1], [], []>} : vector<16x9xf32>, vector<9x3072xf32>, vector<16x3072xf32> -> vector<16x3072xf32>
    %4 = vector.extract_strided_slice %3 {offsets = [0, 0], sizes = [16, 768], strides = [1, 1]} : vector<16x3072xf32> to vector<16x768xf32>
    %5 = vector.extract_strided_slice %3 {offsets = [0, 768], sizes = [16, 768], strides = [1, 1]} : vector<16x3072xf32> to vector<16x768xf32>
    %6 = vector.extract_strided_slice %3 {offsets = [0, 1536], sizes = [16, 768], strides = [1, 1]} : vector<16x3072xf32> to vector<16x768xf32>
    %7 = vector.extract_strided_slice %3 {offsets = [0, 2304], sizes = [16, 768], strides = [1, 1]} : vector<16x3072xf32> to vector<16x768xf32>
    %8 = arith.maximumf %4, %5 : vector<16x768xf32>
    %9 = arith.maximumf %6, %7 : vector<16x768xf32>
    %10 = arith.maximumf %8, %9 : vector<16x768xf32>
    %c0_4 = arith.constant 0 : index
    %c0_5 = arith.constant 0 : index
    %11 = vector.load %arg3[%c0_4, %c0_5] : memref<16x768xf32, #tpu.memory_space<vmem>>, vector<16x768xf32>
    %12 = arith.addf %10, %11 : vector<16x768xf32>
    %cst_6 = arith.constant 0.000000e+00 : f32
    %13 = vector.broadcast %cst_6 : f32 to vector<16x768xf32>
    %14 = arith.maximumf %12, %13 : vector<16x768xf32>
    %c0_7 = arith.constant 0 : index
    %c0_8 = arith.constant 0 : index
    %15 = vector.load %arg10[%c0_7, %c0_8] : memref<16x768xf32, #tpu.memory_space<vmem>>, vector<16x768xf32>
    tpu.vector_store %arg10[%c0_7, %c0_8], %14 {strides = array<i32>} : memref<16x768xf32, #tpu.memory_space<vmem>>, vector<16x768xf32>,
    %cst_9 = arith.constant 0.000000e+00 : f32
    %16 = vector.broadcast %cst_9 : f32 to vector<32x640xf32>
    %c0_10 = arith.constant 0 : index
    %c0_11 = arith.constant 0 : index
    %c0_12 = arith.constant 0 : index
    %17 = vector.load %arg4[%c0_10, %c0_11, %c0_12] : memref<9x32x16xf32, #tpu.memory_space<vmem>>, vector<1x32x16xf32>
    %18 = vector.shape_cast %17 : vector<1x32x16xf32> to vector<32x16xf32>
    %c0_13 = arith.constant 0 : index
    %c0_14 = arith.constant 0 : index
    %19 = vector.load %arg10[%c0_13, %c0_14] : memref<16x768xf32, #tpu.memory_space<vmem>>, vector<16x640xf32>
    %cst_15 = arith.constant dense<0.000000e+00> : vector<32x640xf32>
    %20 = tpu.matmul %18, %19, %cst_15 {dimension_numbers = #tpu.dot_dimension_numbers<[1], [0], [0], [1], [0, 0, 1, 1], [], []>} : vector<32x16xf32>, vector<16x640xf32>, vector<32x640xf32> -> vector<32x640xf32>
    %21 = arith.addf %16, %20 : vector<32x640xf32>
    %c1 = arith.constant 1 : index
    %c0_16 = arith.constant 0 : index
    %c0_17 = arith.constant 0 : index
    %22 = vector.load %arg4[%c1, %c0_16, %c0_17] : memref<9x32x16xf32, #tpu.memory_space<vmem>>, vector<1x32x16xf32>
    %23 = vector.shape_cast %22 : vector<1x32x16xf32> to vector<32x16xf32>
    %c0_18 = arith.constant 0 : index
    %c1_19 = arith.constant 1 : index
    %24 = vector.load %arg10[%c0_18, %c1_19] : memref<16x768xf32, #tpu.memory_space<vmem>>, vector<16x640xf32>
    %cst_20 = arith.constant dense<0.000000e+00> : vector<32x640xf32>
    %25 = tpu.matmul %23, %24, %cst_20 {dimension_numbers = #tpu.dot_dimension_numbers<[1], [0], [0], [1], [0, 0, 1, 1], [], []>} : vector<32x16xf32>, vector<16x640xf32>, vector<32x640xf32> -> vector<32x640xf32>
    %26 = arith.addf %21, %25 : vector<32x640xf32>
    %c2 = arith.constant 2 : index
    %c0_21 = arith.constant 0 : index
    %c0_22 = arith.constant 0 : index
    %27 = vector.load %arg4[%c2, %c0_21, %c0_22] : memref<9x32x16xf32, #tpu.memory_space<vmem>>, vector<1x32x16xf32>
    %28 = vector.shape_cast %27 : vector<1x32x16xf32> to vector<32x16xf32>
    %c0_23 = arith.constant 0 : index
    %c2_24 = arith.constant 2 : index
    %29 = vector.load %arg10[%c0_23, %c2_24] : memref<16x768xf32, #tpu.memory_space<vmem>>, vector<16x640xf32>
    %cst_25 = arith.constant dense<0.000000e+00> : vector<32x640xf32>
    %30 = tpu.matmul %28, %29, %cst_25 {dimension_numbers = #tpu.dot_dimension_numbers<[1], [0], [0], [1], [0, 0, 1, 1], [], []>} : vector<32x16xf32>, vector<16x640xf32>, vector<32x640xf32> -> vector<32x640xf32>
    %31 = arith.addf %26, %30 : vector<32x640xf32>
    %c3 = arith.constant 3 : index
    %c0_26 = arith.constant 0 : index
    %c0_27 = arith.constant 0 : index
    %32 = vector.load %arg4[%c3, %c0_26, %c0_27] : memref<9x32x16xf32, #tpu.memory_space<vmem>>, vector<1x32x16xf32>
    %33 = vector.shape_cast %32 : vector<1x32x16xf32> to vector<32x16xf32>
    %c0_28 = arith.constant 0 : index
    %c26 = arith.constant 26 : index
    %34 = vector.load %arg10[%c0_28, %c26] : memref<16x768xf32, #tpu.memory_space<vmem>>, vector<16x640xf32>
    %cst_29 = arith.constant dense<0.000000e+00> : vector<32x640xf32>
    %35 = tpu.matmul %33, %34, %cst_29 {dimension_numbers = #tpu.dot_dimension_numbers<[1], [0], [0], [1], [0, 0, 1, 1], [], []>} : vector<32x16xf32>, vector<16x640xf32>, vector<32x640xf32> -> vector<32x640xf32>
    %36 = arith.addf %31, %35 : vector<32x640xf32>
    %c4 = arith.constant 4 : index
    %c0_30 = arith.constant 0 : index
    %c0_31 = arith.constant 0 : index
    %37 = vector.load %arg4[%c4, %c0_30, %c0_31] : memref<9x32x16xf32, #tpu.memory_space<vmem>>, vector<1x32x16xf32>
    %38 = vector.shape_cast %37 : vector<1x32x16xf32> to vector<32x16xf32>
    %c0_32 = arith.constant 0 : index
    %c27 = arith.constant 27 : index
    %39 = vector.load %arg10[%c0_32, %c27] : memref<16x768xf32, #tpu.memory_space<vmem>>, vector<16x640xf32>
    %cst_33 = arith.constant dense<0.000000e+00> : vector<32x640xf32>
    %40 = tpu.matmul %38, %39, %cst_33 {dimension_numbers = #tpu.dot_dimension_numbers<[1], [0], [0], [1], [0, 0, 1, 1], [], []>} : vector<32x16xf32>, vector<16x640xf32>, vector<32x640xf32> -> vector<32x640xf32>
    %41 = arith.addf %36, %40 : vector<32x640xf32>
    %c5 = arith.constant 5 : index
    %c0_34 = arith.constant 0 : index
    %c0_35 = arith.constant 0 : index
    %42 = vector.load %arg4[%c5, %c0_34, %c0_35] : memref<9x32x16xf32, #tpu.memory_space<vmem>>, vector<1x32x16xf32>
    %43 = vector.shape_cast %42 : vector<1x32x16xf32> to vector<32x16xf32>
    %c0_36 = arith.constant 0 : index
    %c28 = arith.constant 28 : index
    %44 = vector.load %arg10[%c0_36, %c28] : memref<16x768xf32, #tpu.memory_space<vmem>>, vector<16x640xf32>
    %cst_37 = arith.constant dense<0.000000e+00> : vector<32x640xf32>
    %45 = tpu.matmul %43, %44, %cst_37 {dimension_numbers = #tpu.dot_dimension_numbers<[1], [0], [0], [1], [0, 0, 1, 1], [], []>} : vector<32x16xf32>, vector<16x640xf32>, vector<32x640xf32> -> vector<32x640xf32>
    %46 = arith.addf %41, %45 : vector<32x640xf32>
    %c6 = arith.constant 6 : index
    %c0_38 = arith.constant 0 : index
    %c0_39 = arith.constant 0 : index
    %47 = vector.load %arg4[%c6, %c0_38, %c0_39] : memref<9x32x16xf32, #tpu.memory_space<vmem>>, vector<1x32x16xf32>
    %48 = vector.shape_cast %47 : vector<1x32x16xf32> to vector<32x16xf32>
    %c0_40 = arith.constant 0 : index
    %c52 = arith.constant 52 : index
    %49 = vector.load %arg10[%c0_40, %c52] : memref<16x768xf32, #tpu.memory_space<vmem>>, vector<16x640xf32>
    %cst_41 = arith.constant dense<0.000000e+00> : vector<32x640xf32>
    %50 = tpu.matmul %48, %49, %cst_41 {dimension_numbers = #tpu.dot_dimension_numbers<[1], [0], [0], [1], [0, 0, 1, 1], [], []>} : vector<32x16xf32>, vector<16x640xf32>, vector<32x640xf32> -> vector<32x640xf32>
    %51 = arith.addf %46, %50 : vector<32x640xf32>
    %c7 = arith.constant 7 : index
    %c0_42 = arith.constant 0 : index
    %c0_43 = arith.constant 0 : index
    %52 = vector.load %arg4[%c7, %c0_42, %c0_43] : memref<9x32x16xf32, #tpu.memory_space<vmem>>, vector<1x32x16xf32>
    %53 = vector.shape_cast %52 : vector<1x32x16xf32> to vector<32x16xf32>
    %c0_44 = arith.constant 0 : index
    %c53 = arith.constant 53 : index
    %54 = vector.load %arg10[%c0_44, %c53] : memref<16x768xf32, #tpu.memory_space<vmem>>, vector<16x640xf32>
    %cst_45 = arith.constant dense<0.000000e+00> : vector<32x640xf32>
    %55 = tpu.matmul %53, %54, %cst_45 {dimension_numbers = #tpu.dot_dimension_numbers<[1], [0], [0], [1], [0, 0, 1, 1], [], []>} : vector<32x16xf32>, vector<16x640xf32>, vector<32x640xf32> -> vector<32x640xf32>
    %56 = arith.addf %51, %55 : vector<32x640xf32>
    %c8 = arith.constant 8 : index
    %c0_46 = arith.constant 0 : index
    %c0_47 = arith.constant 0 : index
    %57 = vector.load %arg4[%c8, %c0_46, %c0_47] : memref<9x32x16xf32, #tpu.memory_space<vmem>>, vector<1x32x16xf32>
    %58 = vector.shape_cast %57 : vector<1x32x16xf32> to vector<32x16xf32>
    %c0_48 = arith.constant 0 : index
    %c54 = arith.constant 54 : index
    %59 = vector.load %arg10[%c0_48, %c54] : memref<16x768xf32, #tpu.memory_space<vmem>>, vector<16x640xf32>
    %cst_49 = arith.constant dense<0.000000e+00> : vector<32x640xf32>
    %60 = tpu.matmul %58, %59, %cst_49 {dimension_numbers = #tpu.dot_dimension_numbers<[1], [0], [0], [1], [0, 0, 1, 1], [], []>} : vector<32x16xf32>, vector<16x640xf32>, vector<32x640xf32> -> vector<32x640xf32>
    %61 = arith.addf %56, %60 : vector<32x640xf32>
    %c0_50 = arith.constant 0 : index
    %c0_51 = arith.constant 0 : index
    %62 = vector.load %arg5[%c0_50, %c0_51] : memref<32x1xf32, #tpu.memory_space<vmem>>, vector<32x1xf32>
    %63 = vector.broadcast %62 : vector<32x1xf32> to vector<32x640xf32>
    %64 = arith.addf %61, %63 : vector<32x640xf32>
    %cst_52 = arith.constant 0.000000e+00 : f32
    %65 = vector.broadcast %cst_52 : f32 to vector<32x640xf32>
    %66 = arith.maximumf %64, %65 : vector<32x640xf32>
    %c0_53 = arith.constant 0 : index
    %c0_54 = arith.constant 0 : index
    %67 = vector.load %arg6[%c0_53, %c0_54] : memref<1x640xf32, #tpu.memory_space<vmem>>, vector<1x640xf32>
    %68 = vector.broadcast %67 : vector<1x640xf32> to vector<32x640xf32>
    %69 = arith.mulf %66, %68 : vector<32x640xf32>
    %cst_55 = arith.constant dense<0.000000e+00> : vector<32xf32>
    %70 = vector.multi_reduction <add>, %69, %cst_55 [1] : vector<32x640xf32> to vector<32xf32>
    %71 = vector.shape_cast %70 : vector<32xf32> to vector<32x1xf32>
    %cst_56 = arith.constant 0.00173611112 : f32
    %72 = vector.broadcast %cst_56 : f32 to vector<32x1xf32>
    %73 = arith.mulf %71, %72 : vector<32x1xf32>
    %c0_57 = arith.constant 0 : index
    %c0_58 = arith.constant 0 : index
    %74 = vector.load %arg7[%c0_57, %c0_58] : memref<32x32xf32, #tpu.memory_space<vmem>>, vector<32x32xf32>
    %cst_59 = arith.constant dense<0.000000e+00> : vector<32x1xf32>
    %75 = tpu.matmul %74, %73, %cst_59 {dimension_numbers = #tpu.dot_dimension_numbers<[1], [0], [0], [1], [0, 0, 1, 1], [], []>} : vector<32x32xf32>, vector<32x1xf32>, vector<32x1xf32> -> vector<32x1xf32>
    %c0_60 = arith.constant 0 : index
    %c0_61 = arith.constant 0 : index
    %76 = vector.load %arg8[%c0_60, %c0_61] : memref<32x1xf32, #tpu.memory_space<vmem>>, vector<32x1xf32>
    %77 = arith.addf %75, %76 : vector<32x1xf32>
    %cst_62 = arith.constant 0.000000e+00 : f32
    %78 = vector.broadcast %cst_62 : f32 to vector<32x1xf32>
    %79 = arith.maximumf %77, %78 : vector<32x1xf32>
    %c0_63 = arith.constant 0 : index
    %c0_64 = arith.constant 0 : index
    %c0_65 = arith.constant 0 : index
    %80 = vector.load %arg9[%c0_63, %c0_64, %c0_65] : memref<1x32x1xf32, #tpu.memory_space<vmem>>, vector<1x32x1xf32>
    %81 = vector.shape_cast %80 : vector<1x32x1xf32> to vector<32x1xf32>
    %82 = vector.shape_cast %79 : vector<32x1xf32> to vector<1x32x1xf32>
    tpu.vector_store %arg9[%c0_63, %c0_64, %c0_65], %82 {strides = array<i32>} : memref<1x32x1xf32, #tpu.memory_space<vmem>>, vector<1x32x1xf32>,
    return
  }
  func.func @transform_0(%arg0: i32) -> (i32, i32, i32) {
    %c0_i32 = arith.constant 0 : i32
    %c0_i32_0 = arith.constant 0 : i32
    %c0_i32_1 = arith.constant 0 : i32
    return %arg0, %c0_i32, %c0_i32_0 : i32, i32, i32
  }
  func.func @transform_1(%arg0: i32) -> (i32, i32) {
    %c0_i32 = arith.constant 0 : i32
    %c0_i32_0 = arith.constant 0 : i32
    %c0_i32_1 = arith.constant 0 : i32
    return %c0_i32, %c0_i32_0 : i32, i32
  }
  func.func @transform_2(%arg0: i32) -> (i32, i32) {
    %c0_i32 = arith.constant 0 : i32
    %c0_i32_0 = arith.constant 0 : i32
    %c0_i32_1 = arith.constant 0 : i32
    return %c0_i32, %c0_i32_0 : i32, i32
  }
  func.func @transform_3(%arg0: i32) -> (i32, i32, i32) {
    %c0_i32 = arith.constant 0 : i32
    %c0_i32_0 = arith.constant 0 : i32
    %c0_i32_1 = arith.constant 0 : i32
    %c0_i32_2 = arith.constant 0 : i32
    return %c0_i32, %c0_i32_0, %c0_i32_1 : i32, i32, i32
  }
  func.func @transform_4(%arg0: i32) -> (i32, i32) {
    %c0_i32 = arith.constant 0 : i32
    %c0_i32_0 = arith.constant 0 : i32
    %c0_i32_1 = arith.constant 0 : i32
    return %c0_i32, %c0_i32_0 : i32, i32
  }
  func.func @transform_5(%arg0: i32) -> (i32, i32) {
    %c0_i32 = arith.constant 0 : i32
    %c0_i32_0 = arith.constant 0 : i32
    %c0_i32_1 = arith.constant 0 : i32
    return %c0_i32, %c0_i32_0 : i32, i32
  }
  func.func @transform_6(%arg0: i32) -> (i32, i32) {
    %c0_i32 = arith.constant 0 : i32
    %c0_i32_0 = arith.constant 0 : i32
    %c0_i32_1 = arith.constant 0 : i32
    return %c0_i32, %c0_i32_0 : i32, i32
  }
  func.func @transform_7(%arg0: i32) -> (i32, i32) {
    %c0_i32 = arith.constant 0 : i32
    %c0_i32_0 = arith.constant 0 : i32
    %c0_i32_1 = arith.constant 0 : i32
    return %c0_i32, %c0_i32_0 : i32, i32
  }
  func.func @transform_8(%arg0: i32) -> (i32, i32, i32) {
    %c0_i32 = arith.constant 0 : i32
    %c0_i32_0 = arith.constant 0 : i32
    %c0_i32_1 = arith.constant 0 : i32
    return %arg0, %c0_i32, %c0_i32_0 : i32, i32, i32
  }
}

module attributes {stable_mosaic.version = 11 : i64} {
  func.func @fc_heads_kernel(%arg0: i32, %arg1: memref<2x32xf32, #tpu.memory_space<vmem>>, %arg2: memref<32x16128xf32, #tpu.memory_space<vmem>>, %arg3: memref<1x16128xf32, #tpu.memory_space<vmem>>, %arg4: memref<2x16128xf32, #tpu.memory_space<vmem>>) attributes {dimension_semantics = [#tpu.dimension_semantics<parallel>], iteration_bounds = array<i64: 3>, scalar_prefetch = 0 : i64, scratch_operands = 0 : i64, tpu.core_type = #tpu.core_type<tc>, window_params = [{pipeline_mode = #tpu.pipeline_mode<synchronous>, transform_indices = @transform_0, window_bounds = array<i64: 2, 32>}, {transform_indices = @transform_1, window_bounds = array<i64: 32, 16128>}, {transform_indices = @transform_2, window_bounds = array<i64: 1, 16128>}, {transform_indices = @transform_3, window_bounds = array<i64: 2, 16128>}]} {
    %c0 = arith.constant 0 : index
    %c0_0 = arith.constant 0 : index
    %0 = vector.load %arg1[%c0, %c0_0] : memref<2x32xf32, #tpu.memory_space<vmem>>, vector<2x32xf32>
    %c0_1 = arith.constant 0 : index
    %c0_2 = arith.constant 0 : index
    %1 = vector.load %arg2[%c0_1, %c0_2] : memref<32x16128xf32, #tpu.memory_space<vmem>>, vector<32x16128xf32>
    %cst = arith.constant dense<0.000000e+00> : vector<2x16128xf32>
    %2 = tpu.matmul %0, %1, %cst {dimension_numbers = #tpu.dot_dimension_numbers<[1], [0], [0], [1], [0, 0, 1, 1], [], []>} : vector<2x32xf32>, vector<32x16128xf32>, vector<2x16128xf32> -> vector<2x16128xf32>
    %c0_3 = arith.constant 0 : index
    %c0_4 = arith.constant 0 : index
    %3 = vector.load %arg3[%c0_3, %c0_4] : memref<1x16128xf32, #tpu.memory_space<vmem>>, vector<1x16128xf32>
    %4 = vector.broadcast %3 : vector<1x16128xf32> to vector<2x16128xf32>
    %5 = arith.addf %2, %4 : vector<2x16128xf32>
    %c0_5 = arith.constant 0 : index
    %c0_6 = arith.constant 0 : index
    %6 = vector.load %arg4[%c0_5, %c0_6] : memref<2x16128xf32, #tpu.memory_space<vmem>>, vector<2x16128xf32>
    tpu.vector_store %arg4[%c0_5, %c0_6], %5 {strides = array<i32>} : memref<2x16128xf32, #tpu.memory_space<vmem>>, vector<2x16128xf32>,
    return
  }
  func.func @transform_0(%arg0: i32) -> (i32, i32) {
    %c0_i32 = arith.constant 0 : i32
    %c0_i32_0 = arith.constant 0 : i32
    %c0_i32_1 = arith.constant 0 : i32
    return %c0_i32, %c0_i32_0 : i32, i32
  }
  func.func @transform_1(%arg0: i32) -> (i32, i32) {
    %c0_i32 = arith.constant 0 : i32
    %c0_i32_0 = arith.constant 0 : i32
    return %c0_i32, %arg0 : i32, i32
  }
  func.func @transform_2(%arg0: i32) -> (i32, i32) {
    %c0_i32 = arith.constant 0 : i32
    %c0_i32_0 = arith.constant 0 : i32
    return %c0_i32, %arg0 : i32, i32
  }
  func.func @transform_3(%arg0: i32) -> (i32, i32) {
    %c0_i32 = arith.constant 0 : i32
    %c0_i32_0 = arith.constant 0 : i32
    return %c0_i32, %arg0 : i32, i32
  }
}

</mosaic_0001>

<llo_original>
// kernel: psf_forward.2
$region0: #{psf_forward.2}
  #allocation0 [shape = 'u32[]', space=smem, size = 0x4, offset = 0x4, fixed_abs, tag = 'smem constant byte address 0x4 - core index']
  #allocation1 [shape = 'u32[72,128]{1,0:T(1,128)}', space=vmem, size = 0x9000, scoped, tag = 'internal scratch']
  #allocation2 [shape = 'f32[16,768]{1,0:T(8,128)}', space=vmem, size = 0xc000, scoped, tag = 'scratch operand']
  %s0 = inlined_call_operand.vmem [shape: f32[2,9,3072], index: 0, kind: input, shape index: {}]
  %s1 = inlined_call_operand.hbm [shape: f32[16,9], index: 1, kind: input, shape index: {}]
  %s2 = inlined_call_operand.hbm [shape: f32[16,768], index: 2, kind: input, shape index: {}]
  %s3 = inlined_call_operand.vmem [shape: f32[9,32,16], index: 3, kind: input, shape index: {}]
  %s4 = inlined_call_operand.vmem [shape: f32[32,1], index: 4, kind: input, shape index: {}]
  %s5 = inlined_call_operand.hbm [shape: f32[1,640], index: 5, kind: input, shape index: {}]
  %s6 = inlined_call_operand.hbm [shape: f32[32,32], index: 6, kind: input, shape index: {}]
  %s7 = inlined_call_operand.vmem [shape: f32[32,1], index: 7, kind: input, shape index: {}]
  %s8 = inlined_call_operand.vmem [shape: f32[2,32,1], index: 8, kind: output, shape index: {}]
  %s9 = sld [smem:[#allocation0]]
  $region81: #{psf_forward.2} parent=0
    _
  %s11 = ssub.s32 1, %s9
  %s12 = scalar_select 0, %s11, %s9
  $region1: #{psf_forward.2} parent=0
    #allocation3 [shape = 'u8[8192]{0}', space=vmem, size = 0x2000, scoped, tag = 'input window, operand 1, single buffered']
    #allocation4 [shape = 's32[2]{0}', space=sflag, size = 0x8, scoped, tag = 'scoped memory for psf_forward.2']
    #allocation5 [shape = 'u8[49152]{0}', space=vmem, size = 0xc000, scoped, tag = 'input window, operand 2, single buffered']
    #allocation6 [shape = 's32[1]{0}', space=sflag, size = 0x4, scoped, tag = 'scoped memory for psf_forward.2']
    #allocation7 [shape = 'u8[2560]{0}', space=vmem, size = 0xc00, scoped, tag = 'input window, operand 5, single buffered']
    #allocation8 [shape = 'u8[16384]{0}', space=vmem, size = 0x4000, scoped, tag = 'input window, operand 6, single buffered']
    #allocation9 [shape = 's32[1]{0}', space=sflag, size = 0x4, scoped, tag = 'scoped memory for psf_forward.2']
    %13 = vsyncpa [#allocation4], 0
    %14 = vsyncpa [#allocation6], 0
    %15 = vsyncpa [#allocation9], 0
    loop: start=0, step=1, limit=4
    $region2: #{psf_forward.2} parent=1 // loop_pre_header
      _
    $region3: #{psf_forward.2} parent=1 // loop_header
      %s17 = sphi 0, %s21
      %p18 = scmp.ge.s32.totalorder %s17, 4
      %s27 = sphi 0, %s29
      %s30 = sphi 0, %s27
      %s31 = sphi 0, %s30
      %s47 = sphi 0, %s31
      %s51 = sphi 0, %s51
      %s53 = sphi 0, %s51
      %s54 = sphi 0, %s53
      %s68 = sphi 0, %s54
      %s72 = sphi 0, %s72
      %s74 = sphi 0, %s72
      %s75 = sphi 0, %s74
      %s89 = sphi 0, %s75
      %s93 = sphi 0, %s93
      %s95 = sphi 0, %s93
      %s96 = sphi 0, %s95
      %s110 = sphi 0, %s96
      %s114 = sphi 0, %s114
      %s116 = sphi 0, %s114
      %s117 = sphi 0, %s116
      %s131 = sphi 0, %s117
      %s135 = sphi 0, %s135
      %s137 = sphi 0, %s135
      %s138 = sphi 0, %s137
      %s152 = sphi 0, %s138
      %s156 = sphi 0, %s156
      %s158 = sphi 0, %s156
      %s159 = sphi 0, %s158
      %s173 = sphi 0, %s159
      %s177 = sphi 0, %s177
      %s179 = sphi 0, %s177
      %s180 = sphi 0, %s179
      %s194 = sphi 0, %s180
      %s200 = sphi 0, %s202
      %s203 = sphi 0, %s200
      %s204 = sphi 0, %s203
      %s220 = sphi 0, %s204
    $region4: #{psf_forward.2} parent=1 // loop_header_branch
      %20 = sbr.rel (%p18) target = $region8
    $region5: #{psf_forward.2} parent=1 // loop_body
      %s22 = ssub.s32 %s17, 1
      %s23 = ssub.s32 %s17, 2
      %s24 = sadd.s32 %s17, 1
      %s25 = ssub.s32 %s17, %s24
      %p26 = scmp.eq.s32.totalorder %s25, 0
      %s28 = sadd.s32 %s27, 1
      %s29 = scalar_select %p26, %s27, %s28
      %p32 = pneg %p26
      %p33 = scmp.eq.s32.totalorder %s17, 1
      %p34 = por %p32, %p33
      %p35 = scmp.ne.s32.totalorder %s27, %s30
      %p36 = scmp.eq.s32.totalorder %s17, 0
      %p37 = por %p35, %p36
      %p38 = scmp.ne.s32.totalorder %s27, %s30
      %p39 = scmp.eq.s32.totalorder %s22, 1
      %p40 = por %p38, %p39
      %p41 = scmp.ne.s32.totalorder %s30, %s31
      %p42 = scmp.eq.s32.totalorder %s22, 0
      %p43 = por %p41, %p42
      %p44 = scmp.ne.s32.totalorder %s30, %s31
      %p45 = scmp.eq.s32.totalorder %s23, 1
      %p46 = por %p44, %p45
      %p48 = scmp.ne.s32.totalorder %s31, %s47
      %p49 = scmp.eq.s32.totalorder %s23, 0
      %p50 = por %p48, %p49
      %s52 = sadd.s32 %s51, 1
      %p55 = scmp.eq.s32.totalorder %s17, 1
      %p56 = scmp.ne.s32.totalorder %s51, %s53
      %p57 = scmp.eq.s32.totalorder %s17, 0
      %p58 = por %p56, %p57
      %p59 = scmp.ne.s32.totalorder %s51, %s53
      %p60 = scmp.eq.s32.totalorder %s22, 1
      %p61 = por %p59, %p60
      %p62 = scmp.ne.s32.totalorder %s53, %s54
      %p63 = scmp.eq.s32.totalorder %s22, 0
      %p64 = por %p62, %p63
      %p65 = scmp.ne.s32.totalorder %s53, %s54
      %p66 = scmp.eq.s32.totalorder %s23, 1
      %p67 = por %p65, %p66
      %p69 = scmp.ne.s32.totalorder %s54, %s68
      %p70 = scmp.eq.s32.totalorder %s23, 0
      %p71 = por %p69, %p70
      %s73 = sadd.s32 %s72, 1
      %p76 = scmp.eq.s32.totalorder %s17, 1
      %p77 = scmp.ne.s32.totalorder %s72, %s74
      %p78 = scmp.eq.s32.totalorder %s17, 0
      %p79 = por %p77, %p78
      %p80 = scmp.ne.s32.totalorder %s72, %s74
      %p81 = scmp.eq.s32.totalorder %s22, 1
      %p82 = por %p80, %p81
      %p83 = scmp.ne.s32.totalorder %s74, %s75
      %p84 = scmp.eq.s32.totalorder %s22, 0
      %p85 = por %p83, %p84
      %p86 = scmp.ne.s32.totalorder %s74, %s75
      %p87 = scmp.eq.s32.totalorder %s23, 1
      %p88 = por %p86, %p87
      %p90 = scmp.ne.s32.totalorder %s75, %s89
      %p91 = scmp.eq.s32.totalorder %s23, 0
      %p92 = por %p90, %p91
      %s94 = sadd.s32 %s93, 1
      %p97 = scmp.eq.s32.totalorder %s17, 1
      %p98 = scmp.ne.s32.totalorder %s93, %s95
      %p99 = scmp.eq.s32.totalorder %s17, 0
      %p100 = por %p98, %p99
      %p101 = scmp.ne.s32.totalorder %s93, %s95
      %p102 = scmp.eq.s32.totalorder %s22, 1
      %p103 = por %p101, %p102
      %p104 = scmp.ne.s32.totalorder %s95, %s96
      %p105 = scmp.eq.s32.totalorder %s22, 0
      %p106 = por %p104, %p105
      %p107 = scmp.ne.s32.totalorder %s95, %s96
      %p108 = scmp.eq.s32.totalorder %s23, 1
      %p109 = por %p107, %p108
      %p111 = scmp.ne.s32.totalorder %s96, %s110
      %p112 = scmp.eq.s32.totalorder %s23, 0
      %p113 = por %p111, %p112
      %s115 = sadd.s32 %s114, 1
      %p118 = scmp.eq.s32.totalorder %s17, 1
      %p119 = scmp.ne.s32.totalorder %s114, %s116
      %p120 = scmp.eq.s32.totalorder %s17, 0
      %p121 = por %p119, %p120
      %p122 = scmp.ne.s32.totalorder %s114, %s116
      %p123 = scmp.eq.s32.totalorder %s22, 1
      %p124 = por %p122, %p123
      %p125 = scmp.ne.s32.totalorder %s116, %s117
      %p126 = scmp.eq.s32.totalorder %s22, 0
      %p127 = por %p125, %p126
      %p128 = scmp.ne.s32.totalorder %s116, %s117
      %p129 = scmp.eq.s32.totalorder %s23, 1
      %p130 = por %p128, %p129
      %p132 = scmp.ne.s32.totalorder %s117, %s131
      %p133 = scmp.eq.s32.totalorder %s23, 0
      %p134 = por %p132, %p133
      %s136 = sadd.s32 %s135, 1
      %p139 = scmp.eq.s32.totalorder %s17, 1
      %p140 = scmp.ne.s32.totalorder %s135, %s137
      %p141 = scmp.eq.s32.totalorder %s17, 0
      %p142 = por %p140, %p141
      %p143 = scmp.ne.s32.totalorder %s135, %s137
      %p144 = scmp.eq.s32.totalorder %s22, 1
      %p145 = por %p143, %p144
      %p146 = scmp.ne.s32.totalorder %s137, %s138
      %p147 = scmp.eq.s32.totalorder %s22, 0
      %p148 = por %p146, %p147
      %p149 = scmp.ne.s32.totalorder %s137, %s138
      %p150 = scmp.eq.s32.totalorder %s23, 1
      %p151 = por %p149, %p150
      %p153 = scmp.ne.s32.totalorder %s138, %s152
      %p154 = scmp.eq.s32.totalorder %s23, 0
      %p155 = por %p153, %p154
      %s157 = sadd.s32 %s156, 1
      %p160 = scmp.eq.s32.totalorder %s17, 1
      %p161 = scmp.ne.s32.totalorder %s156, %s158
      %p162 = scmp.eq.s32.totalorder %s17, 0
      %p163 = por %p161, %p162
      %p164 = scmp.ne.s32.totalorder %s156, %s158
      %p165 = scmp.eq.s32.totalorder %s22, 1
      %p166 = por %p164, %p165
      %p167 = scmp.ne.s32.totalorder %s158, %s159
      %p168 = scmp.eq.s32.totalorder %s22, 0
      %p169 = por %p167, %p168
      %p170 = scmp.ne.s32.totalorder %s158, %s159
      %p171 = scmp.eq.s32.totalorder %s23, 1
      %p172 = por %p170, %p171
      %p174 = scmp.ne.s32.totalorder %s159, %s173
      %p175 = scmp.eq.s32.totalorder %s23, 0
      %p176 = por %p174, %p175
      %s178 = sadd.s32 %s177, 1
      %p181 = scmp.eq.s32.totalorder %s17, 1
      %p182 = scmp.ne.s32.totalorder %s177, %s179
      %p183 = scmp.eq.s32.totalorder %s17, 0
      %p184 = por %p182, %p183
      %p185 = scmp.ne.s32.totalorder %s177, %s179
      %p186 = scmp.eq.s32.totalorder %s22, 1
      %p187 = por %p185, %p186
      %p188 = scmp.ne.s32.totalorder %s179, %s180
      %p189 = scmp.eq.s32.totalorder %s22, 0
      %p190 = por %p188, %p189
      %p191 = scmp.ne.s32.totalorder %s179, %s180
      %p192 = scmp.eq.s32.totalorder %s23, 1
      %p193 = por %p191, %p192
      %p195 = scmp.ne.s32.totalorder %s180, %s194
      %p196 = scmp.eq.s32.totalorder %s23, 0
      %p197 = por %p195, %p196
      %s198 = ssub.s32 %s17, %s24
      %p199 = scmp.eq.s32.totalorder %s198, 0
      %s201 = sadd.s32 %s200, 1
      %s202 = scalar_select %p199, %s200, %s201
      %p205 = pneg %p199
      %p206 = scmp.eq.s32.totalorder %s17, 1
      %p207 = por %p205, %p206
      %p208 = scmp.ne.s32.totalorder %s200, %s203
      %p209 = scmp.eq.s32.totalorder %s17, 0
      %p210 = por %p208, %p209
      %p211 = scmp.ne.s32.totalorder %s200, %s203
      %p212 = scmp.eq.s32.totalorder %s22, 1
      %p213 = por %p211, %p212
      %p214 = scmp.ne.s32.totalorder %s203, %s204
      %p215 = scmp.eq.s32.totalorder %s22, 0
      %p216 = por %p214, %p215
      %p217 = scmp.ne.s32.totalorder %s203, %s204
      %p218 = scmp.eq.s32.totalorder %s23, 1
      %p219 = por %p217, %p218
      %p221 = scmp.ne.s32.totalorder %s204, %s220
      %p222 = scmp.eq.s32.totalorder %s23, 0
      %p223 = por %p221, %p222
      %p224 = scmp.le.s32.totalorder 1, %s17
      %p225 = scmp.lt.s32.totalorder %s17, 3
      %p226 = pnand %p224, %p225
      %p227 = pneg %p226
      // Predicated region
      $region9: #{psf_forward.2} parent=5 // pred_check
        _
      $region10: #{psf_forward.2} parent=5 // pred_check_branch
        %229 = sbr.rel (%p226) target = $region12
      $region11: #{psf_forward.2} parent=5 // pred_region
        %s230 = ssub.s32 %s17, 1
        // Predicated region
        $region13: #{psf_forward.2} parent=11 // pred_check
          %p231 = pneg %p64
        $region14: #{psf_forward.2} parent=11 // pred_check_branch
          %233 = sbr.rel (%p231) target = $region16
        $region15: #{psf_forward.2} parent=11 // pred_region
          %235 = vsyncadd [#allocation4], 0
          %s236 = sshll.u32 %s1, 4
          %s237 = int_to_ptr.hbm [resolvable:$true] %s236
          %s238 = sshll.u32 [#allocation3], 4
          %s239 = int_to_ptr.vmem [resolvable:$true] %s238
          %244 = dma.hbm_to_vmem [thread:$0]  %s237, 256, %s239, [#allocation4], 128, 128, 8
        $region16: #{psf_forward.2} parent=11 // pred_fallthru
          _
        // Predicated region
        $region17: #{psf_forward.2} parent=11 // pred_check
          %p245 = pneg %p85
        $region18: #{psf_forward.2} parent=11 // pred_check_branch
          %247 = sbr.rel (%p245) target = $region20
        $region19: #{psf_forward.2} parent=11 // pred_region
          %249 = vsyncadd [#allocation6], 0
          %s250 = sshll.u32 %s2, 4
          %s251 = int_to_ptr.hbm [resolvable:$true] %s250
          %s252 = sshll.u32 [#allocation5], 4
          %s253 = int_to_ptr.vmem [resolvable:$true] %s252
          %258 = dma.hbm_to_vmem [thread:$0]  %s251, 1536, %s253, [#allocation6], 768, 768, 48
        $region20: #{psf_forward.2} parent=11 // pred_fallthru
          _
        // Predicated region
        $region21: #{psf_forward.2} parent=11 // pred_check
          %p259 = pneg %p106
        $region22: #{psf_forward.2} parent=11 // pred_check_branch
          %261 = sbr.rel (%p259) target = $region24
        $region23: #{psf_forward.2} parent=11 // pred_region
          _
        $region24: #{psf_forward.2} parent=11 // pred_fallthru
          _
        // Predicated region
        $region25: #{psf_forward.2} parent=11 // pred_check
          %p262 = pneg %p127
        $region26: #{psf_forward.2} parent=11 // pred_check_branch
          %264 = sbr.rel (%p262) target = $region28
        $region27: #{psf_forward.2} parent=11 // pred_region
          _
        $region28: #{psf_forward.2} parent=11 // pred_fallthru
          _
        // Predicated region
        $region29: #{psf_forward.2} parent=11 // pred_check
          %p265 = pneg %p148
        $region30: #{psf_forward.2} parent=11 // pred_check_branch
          %267 = sbr.rel (%p265) target = $region32
        $region31: #{psf_forward.2} parent=11 // pred_region
          %269 = vsyncadd [#allocation6], 0
          %s271 = sshll.u32 %s5, 4
          %s272 = int_to_ptr.hbm [resolvable:$true] %s271
          %s273 = sshll.u32 [#allocation7], 4
          %s274 = int_to_ptr.vmem [resolvable:$true] %s273
          %276 = dma.hbm_to_vmem [thread:$0]  %s272, 80, %s274, [#allocation6]
        $region32: #{psf_forward.2} parent=11 // pred_fallthru
          _
        // Predicated region
        $region33: #{psf_forward.2} parent=11 // pred_check
          %p277 = pneg %p169
        $region34: #{psf_forward.2} parent=11 // pred_check_branch
          %279 = sbr.rel (%p277) target = $region36
        $region35: #{psf_forward.2} parent=11 // pred_region
          %281 = vsyncadd [#allocation9], 0
          %s282 = sshll.u32 %s6, 4
          %s283 = int_to_ptr.hbm [resolvable:$true] %s282
          %s284 = sshll.u32 [#allocation8], 4
          %s285 = int_to_ptr.vmem [resolvable:$true] %s284
          %290 = dma.hbm_to_vmem [thread:$0]  %s283, 512, %s285, [#allocation9], 128, 128, 8
        $region36: #{psf_forward.2} parent=11 // pred_fallthru
          _
        // Predicated region
        $region37: #{psf_forward.2} parent=11 // pred_check
          %p291 = pneg %p190
        $region38: #{psf_forward.2} parent=11 // pred_check_branch
          %293 = sbr.rel (%p291) target = $region40
        $region39: #{psf_forward.2} parent=11 // pred_region
          _
        $region40: #{psf_forward.2} parent=11 // pred_fallthru
          _
      $region12: #{psf_forward.2} parent=5 // pred_fallthru
        _
      %p294 = scmp.lt.s32.totalorder %s17, 2
      // Predicated region
      $region41: #{psf_forward.2} parent=5 // pred_check
        %p295 = pneg %p294
      $region42: #{psf_forward.2} parent=5 // pred_check_branch
        %297 = sbr.rel (%p295) target = $region44
      $region43: #{psf_forward.2} parent=5 // pred_region
        // Predicated region
        $region45: #{psf_forward.2} parent=43 // pred_check
          %p298 = pneg %p37
        $region46: #{psf_forward.2} parent=43 // pred_check_branch
          %300 = sbr.rel (%p298) target = $region48
        $region47: #{psf_forward.2} parent=43 // pred_region
          %p301 = scmp.lt.s32.totalorder %s17, 1
          %s302 = scalar_select %p301, %s17, 1
          %s303 = smul.addr %s302, 48
          %s304 = smul.addr %s303, 8
          %s305 = scalar_lea.vmem %s0, %s304
        $region48: #{psf_forward.2} parent=43 // pred_fallthru
          _
      $region44: #{psf_forward.2} parent=5 // pred_fallthru
        _
      %p306 = scmp.le.s32.totalorder 1, %s17
      %p307 = scmp.lt.s32.totalorder %s17, 3
      %p308 = pnand %p306, %p307
      %p309 = pneg %p308
      // Predicated region
      $region49: #{psf_forward.2} parent=5 // pred_check
        _
      $region50: #{psf_forward.2} parent=5 // pred_check_branch
        %311 = sbr.rel (%p308) target = $region52
      $region51: #{psf_forward.2} parent=5 // pred_region
        %s312 = ssub.s32 %s17, 1
        // Predicated region
        $region53: #{psf_forward.2} parent=51 // pred_check
          %p313 = pneg %p64
        $region54: #{psf_forward.2} parent=51 // pred_check_branch
          %315 = sbr.rel (%p313) target = $region56
        $region55: #{psf_forward.2} parent=51 // pred_region
          %317 = dma.done [#allocation4], 256
        $region56: #{psf_forward.2} parent=51 // pred_fallthru
          _
        // Predicated region
        $region57: #{psf_forward.2} parent=51 // pred_check
          %p318 = pneg %p85
        $region58: #{psf_forward.2} parent=51 // pred_check_branch
          %320 = sbr.rel (%p318) target = $region60
        $region59: #{psf_forward.2} parent=51 // pred_region
          %322 = dma.done [#allocation6], 1536
        $region60: #{psf_forward.2} parent=51 // pred_fallthru
          _
        // Predicated region
        $region61: #{psf_forward.2} parent=51 // pred_check
          %p323 = pneg %p148
        $region62: #{psf_forward.2} parent=51 // pred_check_branch
          %325 = sbr.rel (%p323) target = $region64
        $region63: #{psf_forward.2} parent=51 // pred_region
          %327 = dma.done [#allocation6], 80
        $region64: #{psf_forward.2} parent=51 // pred_fallthru
          _
        // Predicated region
        $region65: #{psf_forward.2} parent=51 // pred_check
          %p328 = pneg %p169
        $region66: #{psf_forward.2} parent=51 // pred_check_branch
          %330 = sbr.rel (%p328) target = $region68
        $region67: #{psf_forward.2} parent=51 // pred_region
          %332 = dma.done [#allocation9], 512
        $region68: #{psf_forward.2} parent=51 // pred_fallthru
          _
        %p333 = scmp.lt.s32.totalorder %s22, 1
        %s334 = scalar_select %p333, %s22, 1
        %s335 = smul.addr %s334, 48
        %s336 = smul.addr %s335, 8
        %s337 = scalar_lea.vmem %s0, %s336
        %p338 = pneg %p43
        %p339 = pneg %p40
        %p340 = pneg %p64
        %p341 = pneg %p61
        %p342 = pneg %p85
        %p343 = pneg %p82
        %p344 = pneg %p106
        %p345 = pneg %p103
        %p346 = pneg %p127
        %p347 = pneg %p124
        %p348 = pneg %p148
        %p349 = pneg %p145
        %p350 = pneg %p169
        %p351 = pneg %p166
        %p352 = pneg %p190
        %p353 = pneg %p187
        %p354 = pneg %p216
        %p355 = pneg %p213
        %p356 = scmp.lt.s32.totalorder %s22, 1
        %s357 = scalar_select %p356, %s22, 1
        %s358 = smul.addr %s357, 4
        %s359 = smul.addr %s358, 8
        %s360 = scalar_lea.vmem %s8, %s359
        %p361 = scmp.lt.s32.totalorder %s22, 1
        %s362 = scalar_select %p361, %s22, 1
        %s363 = smul.addr %s362, 48
        %s364 = smul.addr %s363, 8
        %s365 = scalar_lea.vmem %s0, %s364
        %p366 = scmp.lt.s32.totalorder %s22, 1
        %s367 = scalar_select %p366, %s22, 1
        %s368 = smul.addr %s367, 4
        %s369 = smul.addr %s368, 8
        %s370 = scalar_lea.vmem %s8, %s369
        %v371 = vld [vmem:[#allocation3] sm:$0xff]
        %v372 = vld [vmem:[#allocation3 + $0x8] sm:$0xff]
        %v373 = vld [vmem:[%s365] sm:$0xff]
        %v374 = vld [vmem:[%s365 + $0x8] sm:$0xff]
        %v375 = vld [vmem:[%s365 + $0x10] sm:$0xff]
        %v376 = vld [vmem:[%s365 + $0x18] sm:$0xff]
        %v377 = vld [vmem:[%s365 + $0x20] sm:$0xff]
        %v378 = vld [vmem:[%s365 + $0x28] sm:$0xff]
        %v379 = vld [vmem:[%s365 + $0x30] sm:$0xff]
        %v380 = vld [vmem:[%s365 + $0x38] sm:$0xff]
        %v381 = vld [vmem:[%s365 + $0x40] sm:$0xff]
        %v382 = vld [vmem:[%s365 + $0x48] sm:$0xff]
        %v383 = vld [vmem:[%s365 + $0x50] sm:$0xff]
        %v384 = vld [vmem:[%s365 + $0x58] sm:$0xff]
        %v385 = vld [vmem:[%s365 + $0x60] sm:$0xff]
        %v386 = vld [vmem:[%s365 + $0x68] sm:$0xff]
        %v387 = vld [vmem:[%s365 + $0x70] sm:$0xff]
        %v388 = vld [vmem:[%s365 + $0x78] sm:$0xff]
        %v389 = vld [vmem:[%s365 + $0x80] sm:$0xff]
        %v390 = vld [vmem:[%s365 + $0x88] sm:$0xff]
        %v391 = vld [vmem:[%s365 + $0x90] sm:$0xff]
        %v392 = vld [vmem:[%s365 + $0x98] sm:$0xff]
        %v393 = vld [vmem:[%s365 + $0xa0] sm:$0xff]
        %v394 = vld [vmem:[%s365 + $0xa8] sm:$0xff]
        %v395 = vld [vmem:[%s365 + $0xb0] sm:$0xff]
        %v396 = vld [vmem:[%s365 + $0xb8] sm:$0xff]
        %v397 = vld [vmem:[%s365 + $0xc0] sm:$0x1]
        %v398 = vld [vmem:[%s365 + $0xc8] sm:$0x1]
        %v399 = vld [vmem:[%s365 + $0xd0] sm:$0x1]
        %v400 = vld [vmem:[%s365 + $0xd8] sm:$0x1]
        %v401 = vld [vmem:[%s365 + $0xe0] sm:$0x1]
        %v402 = vld [vmem:[%s365 + $0xe8] sm:$0x1]
        %v403 = vld [vmem:[%s365 + $0xf0] sm:$0x1]
        %v404 = vld [vmem:[%s365 + $0xf8] sm:$0x1]
        %v405 = vld [vmem:[%s365 + $0x100] sm:$0x1]
        %v406 = vld [vmem:[%s365 + $0x108] sm:$0x1]
        %v407 = vld [vmem:[%s365 + $0x110] sm:$0x1]
        %v408 = vld [vmem:[%s365 + $0x118] sm:$0x1]
        %v409 = vld [vmem:[%s365 + $0x120] sm:$0x1]
        %v410 = vld [vmem:[%s365 + $0x128] sm:$0x1]
        %v411 = vld [vmem:[%s365 + $0x130] sm:$0x1]
        %v412 = vld [vmem:[%s365 + $0x138] sm:$0x1]
        %v413 = vld [vmem:[%s365 + $0x140] sm:$0x1]
        %v414 = vld [vmem:[%s365 + $0x148] sm:$0x1]
        %v415 = vld [vmem:[%s365 + $0x150] sm:$0x1]
        %v416 = vld [vmem:[%s365 + $0x158] sm:$0x1]
        %v417 = vld [vmem:[%s365 + $0x160] sm:$0x1]
        %v418 = vld [vmem:[%s365 + $0x168] sm:$0x1]
        %v419 = vld [vmem:[%s365 + $0x170] sm:$0x1]
        %v420 = vld [vmem:[%s365 + $0x178] sm:$0x1]
        %vm421 = vcmask 72704
        %v423 = vsel %vm421, %v371, 0
        %v426 = vsel %vm421, %v372, 0
        %vm428 = vcmask 1040384
        %v430 = vsel %vm428, %v397, 0
        %v433 = vsel %vm428, %v398, 0
        %v436 = vsel %vm428, %v399, 0
        %v439 = vsel %vm428, %v400, 0
        %v442 = vsel %vm428, %v401, 0
        %v445 = vsel %vm428, %v402, 0
        %v448 = vsel %vm428, %v403, 0
        %v451 = vsel %vm428, %v404, 0
        %v454 = vsel %vm428, %v405, 0
        %v457 = vsel %vm428, %v406, 0
        %v460 = vsel %vm428, %v407, 0
        %v463 = vsel %vm428, %v408, 0
        %v466 = vsel %vm428, %v409, 0
        %v469 = vsel %vm428, %v410, 0
        %v472 = vsel %vm428, %v411, 0
        %v475 = vsel %vm428, %v412, 0
        %v478 = vsel %vm428, %v413, 0
        %v481 = vsel %vm428, %v414, 0
        %v484 = vsel %vm428, %v415, 0
        %v487 = vsel %vm428, %v416, 0
        %v490 = vsel %vm428, %v417, 0
        %v493 = vsel %vm428, %v418, 0
        %v496 = vsel %vm428, %v419, 0
        %v499 = vsel %vm428, %v420, 0
        %501 = vmatpush.msra.mxu0 0.0
        %502 = vmatpush.msra.mxu0 0.0
        %503 = vmatpush.msra.mxu0 0.0
        %504 = vmatpush.msra.mxu0 0.0
        %505 = vmatpush.msra.mxu0 0.0
        %506 = vmatpush.msra.mxu0 0.0
        %507 = vmatpush.msra.mxu0 0.0
        %508 = vmatpush.msra.mxu0 0.0
        %509 = vmatpush.msra.mxu0 0.0
        %510 = vmatpush.msra.mxu0 0.0
        %511 = vmatpush.msra.mxu0 0.0
        %512 = vmatpush.msra.mxu0 0.0
        %513 = vmatpush.msra.mxu0 0.0
        %514 = vmatpush.msra.mxu0 0.0
        %515 = vmatpush.msra.mxu0 %v430
        %516 = vmatpush.msra.mxu0 %v373
        %517 = vmatmul.f32.gmra.mxu0 %v423
        %v518 = vpop.f32.mrf.mxu0
        %v519 = vadd.f32 0.0, %v518
        %520 = vmatmul.f32.gmra.mxu0 %v426
        %v521 = vpop.f32.mrf.mxu0
        %v522 = vadd.f32 0.0, %v521
        %523 = vdwg.mxu0
        %524 = vmatpush.msra.mxu0 0.0
        %525 = vmatpush.msra.mxu0 0.0
        %526 = vmatpush.msra.mxu0 0.0
        %527 = vmatpush.msra.mxu0 0.0
        %528 = vmatpush.msra.mxu0 0.0
        %529 = vmatpush.msra.mxu0 0.0
        %530 = vmatpush.msra.mxu0 0.0
        %531 = vmatpush.msra.mxu0 0.0
        %532 = vmatpush.msra.mxu0 0.0
        %533 = vmatpush.msra.mxu0 0.0
        %534 = vmatpush.msra.mxu0 0.0
        %535 = vmatpush.msra.mxu0 0.0
        %536 = vmatpush.msra.mxu0 0.0
        %537 = vmatpush.msra.mxu0 0.0
        %538 = vmatpush.msra.mxu0 %v433
        %539 = vmatpush.msra.mxu0 %v374
        %540 = vmatmul.f32.gmra.mxu0 %v423
        %v541 = vpop.f32.mrf.mxu0
        %v542 = vadd.f32 0.0, %v541
        %543 = vmatmul.f32.gmra.mxu0 %v426
        %v544 = vpop.f32.mrf.mxu0
        %v545 = vadd.f32 0.0, %v544
        %546 = vdwg.mxu0
        %547 = vmatpush.msra.mxu0 0.0
        %548 = vmatpush.msra.mxu0 0.0
        %549 = vmatpush.msra.mxu0 0.0
        %550 = vmatpush.msra.mxu0 0.0
        %551 = vmatpush.msra.mxu0 0.0
        %552 = vmatpush.msra.mxu0 0.0
        %553 = vmatpush.msra.mxu0 0.0
        %554 = vmatpush.msra.mxu0 0.0
        %555 = vmatpush.msra.mxu0 0.0
        %556 = vmatpush.msra.mxu0 0.0
        %557 = vmatpush.msra.mxu0 0.0
        %558 = vmatpush.msra.mxu0 0.0
        %559 = vmatpush.msra.mxu0 0.0
        %560 = vmatpush.msra.mxu0 0.0
        %561 = vmatpush.msra.mxu0 %v436
        %562 = vmatpush.msra.mxu0 %v375
        %563 = vmatmul.f32.gmra.mxu0 %v423
        %v564 = vpop.f32.mrf.mxu0
        %v565 = vadd.f32 0.0, %v564
        %566 = vmatmul.f32.gmra.mxu0 %v426
        %v567 = vpop.f32.mrf.mxu0
        %v568 = vadd.f32 0.0, %v567
        %569 = vdwg.mxu0
        %570 = vmatpush.msra.mxu0 0.0
        %571 = vmatpush.msra.mxu0 0.0
        %572 = vmatpush.msra.mxu0 0.0
        %573 = vmatpush.msra.mxu0 0.0
        %574 = vmatpush.msra.mxu0 0.0
        %575 = vmatpush.msra.mxu0 0.0
        %576 = vmatpush.msra.mxu0 0.0
        %577 = vmatpush.msra.mxu0 0.0
        %578 = vmatpush.msra.mxu0 0.0
        %579 = vmatpush.msra.mxu0 0.0
        %580 = vmatpush.msra.mxu0 0.0
        %581 = vmatpush.msra.mxu0 0.0
        %582 = vmatpush.msra.mxu0 0.0
        %583 = vmatpush.msra.mxu0 0.0
        %584 = vmatpush.msra.mxu0 %v439
        %585 = vmatpush.msra.mxu0 %v376
        %586 = vmatmul.f32.gmra.mxu0 %v423
        %v587 = vpop.f32.mrf.mxu0
        %v588 = vadd.f32 0.0, %v587
        %589 = vmatmul.f32.gmra.mxu0 %v426
        %v590 = vpop.f32.mrf.mxu0
        %v591 = vadd.f32 0.0, %v590
        %592 = vdwg.mxu0
        %593 = vmatpush.msra.mxu0 0.0
        %594 = vmatpush.msra.mxu0 0.0
        %595 = vmatpush.msra.mxu0 0.0
        %596 = vmatpush.msra.mxu0 0.0
        %597 = vmatpush.msra.mxu0 0.0
        %598 = vmatpush.msra.mxu0 0.0
        %599 = vmatpush.msra.mxu0 0.0
        %600 = vmatpush.msra.mxu0 0.0
        %601 = vmatpush.msra.mxu0 0.0
        %602 = vmatpush.msra.mxu0 0.0
        %603 = vmatpush.msra.mxu0 0.0
        %604 = vmatpush.msra.mxu0 0.0
        %605 = vmatpush.msra.mxu0 0.0
        %606 = vmatpush.msra.mxu0 0.0
        %607 = vmatpush.msra.mxu0 %v442
        %608 = vmatpush.msra.mxu0 %v377
        %609 = vmatmul.f32.gmra.mxu0 %v423
        %v610 = vpop.f32.mrf.mxu0
        %v611 = vadd.f32 0.0, %v610
        %612 = vmatmul.f32.gmra.mxu0 %v426
        %v613 = vpop.f32.mrf.mxu0
        %v614 = vadd.f32 0.0, %v613
        %615 = vdwg.mxu0
        %616 = vmatpush.msra.mxu0 0.0
        %617 = vmatpush.msra.mxu0 0.0
        %618 = vmatpush.msra.mxu0 0.0
        %619 = vmatpush.msra.mxu0 0.0
        %620 = vmatpush.msra.mxu0 0.0
        %621 = vmatpush.msra.mxu0 0.0
        %622 = vmatpush.msra.mxu0 0.0
        %623 = vmatpush.msra.mxu0 0.0
        %624 = vmatpush.msra.mxu0 0.0
        %625 = vmatpush.msra.mxu0 0.0
        %626 = vmatpush.msra.mxu0 0.0
        %627 = vmatpush.msra.mxu0 0.0
        %628 = vmatpush.msra.mxu0 0.0
        %629 = vmatpush.msra.mxu0 0.0
        %630 = vmatpush.msra.mxu0 %v445
        %631 = vmatpush.msra.mxu0 %v378
        %632 = vmatmul.f32.gmra.mxu0 %v423
        %v633 = vpop.f32.mrf.mxu0
        %v634 = vadd.f32 0.0, %v633
        %635 = vmatmul.f32.gmra.mxu0 %v426
        %v636 = vpop.f32.mrf.mxu0
        %v637 = vadd.f32 0.0, %v636
        %638 = vdwg.mxu0
        %639 = vmatpush.msra.mxu0 0.0
        %640 = vmatpush.msra.mxu0 0.0
        %641 = vmatpush.msra.mxu0 0.0
        %642 = vmatpush.msra.mxu0 0.0
        %643 = vmatpush.msra.mxu0 0.0
        %644 = vmatpush.msra.mxu0 0.0
        %645 = vmatpush.msra.mxu0 0.0
        %646 = vmatpush.msra.mxu0 0.0
        %647 = vmatpush.msra.mxu0 0.0
        %648 = vmatpush.msra.mxu0 0.0
        %649 = vmatpush.msra.mxu0 0.0
        %650 = vmatpush.msra.mxu0 0.0
        %651 = vmatpush.msra.mxu0 0.0
        %652 = vmatpush.msra.mxu0 0.0
        %653 = vmatpush.msra.mxu0 %v448
        %654 = vmatpush.msra.mxu0 %v379
        %655 = vmatmul.f32.gmra.mxu0 %v423
        %v656 = vpop.f32.mrf.mxu0
        %v657 = vadd.f32 0.0, %v656
        %658 = vmatmul.f32.gmra.mxu0 %v426
        %v659 = vpop.f32.mrf.mxu0
        %v660 = vadd.f32 0.0, %v659
        %661 = vdwg.mxu0
        %662 = vmatpush.msra.mxu0 0.0
        %663 = vmatpush.msra.mxu0 0.0
        %664 = vmatpush.msra.mxu0 0.0
        %665 = vmatpush.msra.mxu0 0.0
        %666 = vmatpush.msra.mxu0 0.0
        %667 = vmatpush.msra.mxu0 0.0
        %668 = vmatpush.msra.mxu0 0.0
        %669 = vmatpush.msra.mxu0 0.0
        %670 = vmatpush.msra.mxu0 0.0
        %671 = vmatpush.msra.mxu0 0.0
        %672 = vmatpush.msra.mxu0 0.0
        %673 = vmatpush.msra.mxu0 0.0
        %674 = vmatpush.msra.mxu0 0.0
        %675 = vmatpush.msra.mxu0 0.0
        %676 = vmatpush.msra.mxu0 %v451
        %677 = vmatpush.msra.mxu0 %v380
        %678 = vmatmul.f32.gmra.mxu0 %v423
        %v679 = vpop.f32.mrf.mxu0
        %v680 = vadd.f32 0.0, %v679
        %681 = vmatmul.f32.gmra.mxu0 %v426
        %v682 = vpop.f32.mrf.mxu0
        %v683 = vadd.f32 0.0, %v682
        %684 = vdwg.mxu0
        %685 = vmatpush.msra.mxu0 0.0
        %686 = vmatpush.msra.mxu0 0.0
        %687 = vmatpush.msra.mxu0 0.0
        %688 = vmatpush.msra.mxu0 0.0
        %689 = vmatpush.msra.mxu0 0.0
        %690 = vmatpush.msra.mxu0 0.0
        %691 = vmatpush.msra.mxu0 0.0
        %692 = vmatpush.msra.mxu0 0.0
        %693 = vmatpush.msra.mxu0 0.0
        %694 = vmatpush.msra.mxu0 0.0
        %695 = vmatpush.msra.mxu0 0.0
        %696 = vmatpush.msra.mxu0 0.0
        %697 = vmatpush.msra.mxu0 0.0
        %698 = vmatpush.msra.mxu0 0.0
        %699 = vmatpush.msra.mxu0 %v454
        %700 = vmatpush.msra.mxu0 %v381
        %701 = vmatmul.f32.gmra.mxu0 %v423
        %v702 = vpop.f32.mrf.mxu0
        %v703 = vadd.f32 0.0, %v702
        %704 = vmatmul.f32.gmra.mxu0 %v426
        %v705 = vpop.f32.mrf.mxu0
        %v706 = vadd.f32 0.0, %v705
        %707 = vdwg.mxu0
        %708 = vmatpush.msra.mxu0 0.0
        %709 = vmatpush.msra.mxu0 0.0
        %710 = vmatpush.msra.mxu0 0.0
        %711 = vmatpush.msra.mxu0 0.0
        %712 = vmatpush.msra.mxu0 0.0
        %713 = vmatpush.msra.mxu0 0.0
        %714 = vmatpush.msra.mxu0 0.0
        %715 = vmatpush.msra.mxu0 0.0
        %716 = vmatpush.msra.mxu0 0.0
        %717 = vmatpush.msra.mxu0 0.0
        %718 = vmatpush.msra.mxu0 0.0
        %719 = vmatpush.msra.mxu0 0.0
        %720 = vmatpush.msra.mxu0 0.0
        %721 = vmatpush.msra.mxu0 0.0
        %722 = vmatpush.msra.mxu0 %v457
        %723 = vmatpush.msra.mxu0 %v382
        %724 = vmatmul.f32.gmra.mxu0 %v423
        %v725 = vpop.f32.mrf.mxu0
        %v726 = vadd.f32 0.0, %v725
        %727 = vmatmul.f32.gmra.mxu0 %v426
        %v728 = vpop.f32.mrf.mxu0
        %v729 = vadd.f32 0.0, %v728
        %730 = vdwg.mxu0
        %731 = vmatpush.msra.mxu0 0.0
        %732 = vmatpush.msra.mxu0 0.0
        %733 = vmatpush.msra.mxu0 0.0
        %734 = vmatpush.msra.mxu0 0.0
        %735 = vmatpush.msra.mxu0 0.0
        %736 = vmatpush.msra.mxu0 0.0
        %737 = vmatpush.msra.mxu0 0.0
        %738 = vmatpush.msra.mxu0 0.0
        %739 = vmatpush.msra.mxu0 0.0
        %740 = vmatpush.msra.mxu0 0.0
        %741 = vmatpush.msra.mxu0 0.0
        %742 = vmatpush.msra.mxu0 0.0
        %743 = vmatpush.msra.mxu0 0.0
        %744 = vmatpush.msra.mxu0 0.0
        %745 = vmatpush.msra.mxu0 %v460
        %746 = vmatpush.msra.mxu0 %v383
        %747 = vmatmul.f32.gmra.mxu0 %v423
        %v748 = vpop.f32.mrf.mxu0
        %v749 = vadd.f32 0.0, %v748
        %750 = vmatmul.f32.gmra.mxu0 %v426
        %v751 = vpop.f32.mrf.mxu0
        %v752 = vadd.f32 0.0, %v751
        %753 = vdwg.mxu0
        %754 = vmatpush.msra.mxu0 0.0
        %755 = vmatpush.msra.mxu0 0.0
        %756 = vmatpush.msra.mxu0 0.0
        %757 = vmatpush.msra.mxu0 0.0
        %758 = vmatpush.msra.mxu0 0.0
        %759 = vmatpush.msra.mxu0 0.0
        %760 = vmatpush.msra.mxu0 0.0
        %761 = vmatpush.msra.mxu0 0.0
        %762 = vmatpush.msra.mxu0 0.0
        %763 = vmatpush.msra.mxu0 0.0
        %764 = vmatpush.msra.mxu0 0.0
        %765 = vmatpush.msra.mxu0 0.0
        %766 = vmatpush.msra.mxu0 0.0
        %767 = vmatpush.msra.mxu0 0.0
        %768 = vmatpush.msra.mxu0 %v463
        %769 = vmatpush.msra.mxu0 %v384
        %770 = vmatmul.f32.gmra.mxu0 %v423
        %v771 = vpop.f32.mrf.mxu0
        %v772 = vadd.f32 0.0, %v771
        %773 = vmatmul.f32.gmra.mxu0 %v426
        %v774 = vpop.f32.mrf.mxu0
        %v775 = vadd.f32 0.0, %v774
        %776 = vdwg.mxu0
        %777 = vmatpush.msra.mxu0 0.0
        %778 = vmatpush.msra.mxu0 0.0
        %779 = vmatpush.msra.mxu0 0.0
        %780 = vmatpush.msra.mxu0 0.0
        %781 = vmatpush.msra.mxu0 0.0
        %782 = vmatpush.msra.mxu0 0.0
        %783 = vmatpush.msra.mxu0 0.0
        %784 = vmatpush.msra.mxu0 0.0
        %785 = vmatpush.msra.mxu0 0.0
        %786 = vmatpush.msra.mxu0 0.0
        %787 = vmatpush.msra.mxu0 0.0
        %788 = vmatpush.msra.mxu0 0.0
        %789 = vmatpush.msra.mxu0 0.0
        %790 = vmatpush.msra.mxu0 0.0
        %791 = vmatpush.msra.mxu0 %v466
        %792 = vmatpush.msra.mxu0 %v385
        %793 = vmatmul.f32.gmra.mxu0 %v423
        %v794 = vpop.f32.mrf.mxu0
        %v795 = vadd.f32 0.0, %v794
        %796 = vmatmul.f32.gmra.mxu0 %v426
        %v797 = vpop.f32.mrf.mxu0
        %v798 = vadd.f32 0.0, %v797
        %799 = vdwg.mxu0
        %800 = vmatpush.msra.mxu0 0.0
        %801 = vmatpush.msra.mxu0 0.0
        %802 = vmatpush.msra.mxu0 0.0
        %803 = vmatpush.msra.mxu0 0.0
        %804 = vmatpush.msra.mxu0 0.0
        %805 = vmatpush.msra.mxu0 0.0
        %806 = vmatpush.msra.mxu0 0.0
        %807 = vmatpush.msra.mxu0 0.0
        %808 = vmatpush.msra.mxu0 0.0
        %809 = vmatpush.msra.mxu0 0.0
        %810 = vmatpush.msra.mxu0 0.0
        %811 = vmatpush.msra.mxu0 0.0
        %812 = vmatpush.msra.mxu0 0.0
        %813 = vmatpush.msra.mxu0 0.0
        %814 = vmatpush.msra.mxu0 %v469
        %815 = vmatpush.msra.mxu0 %v386
        %816 = vmatmul.f32.gmra.mxu0 %v423
        %v817 = vpop.f32.mrf.mxu0
        %v818 = vadd.f32 0.0, %v817
        %819 = vmatmul.f32.gmra.mxu0 %v426
        %v820 = vpop.f32.mrf.mxu0
        %v821 = vadd.f32 0.0, %v820
        %822 = vdwg.mxu0
        %823 = vmatpush.msra.mxu0 0.0
        %824 = vmatpush.msra.mxu0 0.0
        %825 = vmatpush.msra.mxu0 0.0
        %826 = vmatpush.msra.mxu0 0.0
        %827 = vmatpush.msra.mxu0 0.0
        %828 = vmatpush.msra.mxu0 0.0
        %829 = vmatpush.msra.mxu0 0.0
        %830 = vmatpush.msra.mxu0 0.0
        %831 = vmatpush.msra.mxu0 0.0
        %832 = vmatpush.msra.mxu0 0.0
        %833 = vmatpush.msra.mxu0 0.0
        %834 = vmatpush.msra.mxu0 0.0
        %835 = vmatpush.msra.mxu0 0.0
        %836 = vmatpush.msra.mxu0 0.0
        %837 = vmatpush.msra.mxu0 %v472
        %838 = vmatpush.msra.mxu0 %v387
        %839 = vmatmul.f32.gmra.mxu0 %v423
        %v840 = vpop.f32.mrf.mxu0
        %v841 = vadd.f32 0.0, %v840
        %842 = vmatmul.f32.gmra.mxu0 %v426
        %v843 = vpop.f32.mrf.mxu0
        %v844 = vadd.f32 0.0, %v843
        %845 = vdwg.mxu0
        %846 = vmatpush.msra.mxu0 0.0
        %847 = vmatpush.msra.mxu0 0.0
        %848 = vmatpush.msra.mxu0 0.0
        %849 = vmatpush.msra.mxu0 0.0
        %850 = vmatpush.msra.mxu0 0.0
        %851 = vmatpush.msra.mxu0 0.0
        %852 = vmatpush.msra.mxu0 0.0
        %853 = vmatpush.msra.mxu0 0.0
        %854 = vmatpush.msra.mxu0 0.0
        %855 = vmatpush.msra.mxu0 0.0
        %856 = vmatpush.msra.mxu0 0.0
        %857 = vmatpush.msra.mxu0 0.0
        %858 = vmatpush.msra.mxu0 0.0
        %859 = vmatpush.msra.mxu0 0.0
        %860 = vmatpush.msra.mxu0 %v475
        %861 = vmatpush.msra.mxu0 %v388
        %862 = vmatmul.f32.gmra.mxu0 %v423
        %v863 = vpop.f32.mrf.mxu0
        %v864 = vadd.f32 0.0, %v863
        %865 = vmatmul.f32.gmra.mxu0 %v426
        %v866 = vpop.f32.mrf.mxu0
        %v867 = vadd.f32 0.0, %v866
        %868 = vdwg.mxu0
        %869 = vmatpush.msra.mxu0 0.0
        %870 = vmatpush.msra.mxu0 0.0
        %871 = vmatpush.msra.mxu0 0.0
        %872 = vmatpush.msra.mxu0 0.0
        %873 = vmatpush.msra.mxu0 0.0
        %874 = vmatpush.msra.mxu0 0.0
        %875 = vmatpush.msra.mxu0 0.0
        %876 = vmatpush.msra.mxu0 0.0
        %877 = vmatpush.msra.mxu0 0.0
        %878 = vmatpush.msra.mxu0 0.0
        %879 = vmatpush.msra.mxu0 0.0
        %880 = vmatpush.msra.mxu0 0.0
        %881 = vmatpush.msra.mxu0 0.0
        %882 = vmatpush.msra.mxu0 0.0
        %883 = vmatpush.msra.mxu0 %v478
        %884 = vmatpush.msra.mxu0 %v389
        %885 = vmatmul.f32.gmra.mxu0 %v423
        %v886 = vpop.f32.mrf.mxu0
        %v887 = vadd.f32 0.0, %v886
        %888 = vmatmul.f32.gmra.mxu0 %v426
        %v889 = vpop.f32.mrf.mxu0
        %v890 = vadd.f32 0.0, %v889
        %891 = vdwg.mxu0
        %892 = vmatpush.msra.mxu0 0.0
        %893 = vmatpush.msra.mxu0 0.0
        %894 = vmatpush.msra.mxu0 0.0
        %895 = vmatpush.msra.mxu0 0.0
        %896 = vmatpush.msra.mxu0 0.0
        %897 = vmatpush.msra.mxu0 0.0
        %898 = vmatpush.msra.mxu0 0.0
        %899 = vmatpush.msra.mxu0 0.0
        %900 = vmatpush.msra.mxu0 0.0
        %901 = vmatpush.msra.mxu0 0.0
        %902 = vmatpush.msra.mxu0 0.0
        %903 = vmatpush.msra.mxu0 0.0
        %904 = vmatpush.msra.mxu0 0.0
        %905 = vmatpush.msra.mxu0 0.0
        %906 = vmatpush.msra.mxu0 %v481
        %907 = vmatpush.msra.mxu0 %v390
        %908 = vmatmul.f32.gmra.mxu0 %v423
        %v909 = vpop.f32.mrf.mxu0
        %v910 = vadd.f32 0.0, %v909
        %911 = vmatmul.f32.gmra.mxu0 %v426
        %v912 = vpop.f32.mrf.mxu0
        %v913 = vadd.f32 0.0, %v912
        %914 = vdwg.mxu0
        %915 = vmatpush.msra.mxu0 0.0
        %916 = vmatpush.msra.mxu0 0.0
        %917 = vmatpush.msra.mxu0 0.0
        %918 = vmatpush.msra.mxu0 0.0
        %919 = vmatpush.msra.mxu0 0.0
        %920 = vmatpush.msra.mxu0 0.0
        %921 = vmatpush.msra.mxu0 0.0
        %922 = vmatpush.msra.mxu0 0.0
        %923 = vmatpush.msra.mxu0 0.0
        %924 = vmatpush.msra.mxu0 0.0
        %925 = vmatpush.msra.mxu0 0.0
        %926 = vmatpush.msra.mxu0 0.0
        %927 = vmatpush.msra.mxu0 0.0
        %928 = vmatpush.msra.mxu0 0.0
        %929 = vmatpush.msra.mxu0 %v484
        %930 = vmatpush.msra.mxu0 %v391
        %931 = vmatmul.f32.gmra.mxu0 %v423
        %v932 = vpop.f32.mrf.mxu0
        %v933 = vadd.f32 0.0, %v932
        %934 = vmatmul.f32.gmra.mxu0 %v426
        %v935 = vpop.f32.mrf.mxu0
        %v936 = vadd.f32 0.0, %v935
        %937 = vdwg.mxu0
        %938 = vmatpush.msra.mxu0 0.0
        %939 = vmatpush.msra.mxu0 0.0
        %940 = vmatpush.msra.mxu0 0.0
        %941 = vmatpush.msra.mxu0 0.0
        %942 = vmatpush.msra.mxu0 0.0
        %943 = vmatpush.msra.mxu0 0.0
        %944 = vmatpush.msra.mxu0 0.0
        %945 = vmatpush.msra.mxu0 0.0
        %946 = vmatpush.msra.mxu0 0.0
        %947 = vmatpush.msra.mxu0 0.0
        %948 = vmatpush.msra.mxu0 0.0
        %949 = vmatpush.msra.mxu0 0.0
        %950 = vmatpush.msra.mxu0 0.0
        %951 = vmatpush.msra.mxu0 0.0
        %952 = vmatpush.msra.mxu0 %v487
        %953 = vmatpush.msra.mxu0 %v392
        %954 = vmatmul.f32.gmra.mxu0 %v423
        %v955 = vpop.f32.mrf.mxu0
        %v956 = vadd.f32 0.0, %v955
        %957 = vmatmul.f32.gmra.mxu0 %v426
        %v958 = vpop.f32.mrf.mxu0
        %v959 = vadd.f32 0.0, %v958
        %960 = vdwg.mxu0
        %961 = vmatpush.msra.mxu0 0.0
        %962 = vmatpush.msra.mxu0 0.0
        %963 = vmatpush.msra.mxu0 0.0
        %964 = vmatpush.msra.mxu0 0.0
        %965 = vmatpush.msra.mxu0 0.0
        %966 = vmatpush.msra.mxu0 0.0
        %967 = vmatpush.msra.mxu0 0.0
        %968 = vmatpush.msra.mxu0 0.0
        %969 = vmatpush.msra.mxu0 0.0
        %970 = vmatpush.msra.mxu0 0.0
        %971 = vmatpush.msra.mxu0 0.0
        %972 = vmatpush.msra.mxu0 0.0
        %973 = vmatpush.msra.mxu0 0.0
        %974 = vmatpush.msra.mxu0 0.0
        %975 = vmatpush.msra.mxu0 %v490
        %976 = vmatpush.msra.mxu0 %v393
        %977 = vmatmul.f32.gmra.mxu0 %v423
        %v978 = vpop.f32.mrf.mxu0
        %v979 = vadd.f32 0.0, %v978
        %980 = vmatmul.f32.gmra.mxu0 %v426
        %v981 = vpop.f32.mrf.mxu0
        %v982 = vadd.f32 0.0, %v981
        %983 = vdwg.mxu0
        %984 = vmatpush.msra.mxu0 0.0
        %985 = vmatpush.msra.mxu0 0.0
        %986 = vmatpush.msra.mxu0 0.0
        %987 = vmatpush.msra.mxu0 0.0
        %988 = vmatpush.msra.mxu0 0.0
        %989 = vmatpush.msra.mxu0 0.0
        %990 = vmatpush.msra.mxu0 0.0
        %991 = vmatpush.msra.mxu0 0.0
        %992 = vmatpush.msra.mxu0 0.0
        %993 = vmatpush.msra.mxu0 0.0
        %994 = vmatpush.msra.mxu0 0.0
        %995 = vmatpush.msra.mxu0 0.0
        %996 = vmatpush.msra.mxu0 0.0
        %997 = vmatpush.msra.mxu0 0.0
        %998 = vmatpush.msra.mxu0 %v493
        %999 = vmatpush.msra.mxu0 %v394
        %1000 = vmatmul.f32.gmra.mxu0 %v423
        %v1001 = vpop.f32.mrf.mxu0
        %v1002 = vadd.f32 0.0, %v1001
        %1003 = vmatmul.f32.gmra.mxu0 %v426
        %v1004 = vpop.f32.mrf.mxu0
        %v1005 = vadd.f32 0.0, %v1004
        %1006 = vdwg.mxu0
        %1007 = vmatpush.msra.mxu0 0.0
        %1008 = vmatpush.msra.mxu0 0.0
        %1009 = vmatpush.msra.mxu0 0.0
        %1010 = vmatpush.msra.mxu0 0.0
        %1011 = vmatpush.msra.mxu0 0.0
        %1012 = vmatpush.msra.mxu0 0.0
        %1013 = vmatpush.msra.mxu0 0.0
        %1014 = vmatpush.msra.mxu0 0.0
        %1015 = vmatpush.msra.mxu0 0.0
        %1016 = vmatpush.msra.mxu0 0.0
        %1017 = vmatpush.msra.mxu0 0.0
        %1018 = vmatpush.msra.mxu0 0.0
        %1019 = vmatpush.msra.mxu0 0.0
        %1020 = vmatpush.msra.mxu0 0.0
        %1021 = vmatpush.msra.mxu0 %v496
        %1022 = vmatpush.msra.mxu0 %v395
        %1023 = vmatmul.f32.gmra.mxu0 %v423
        %v1024 = vpop.f32.mrf.mxu0
        %v1025 = vadd.f32 0.0, %v1024
        %1026 = vmatmul.f32.gmra.mxu0 %v426
        %v1027 = vpop.f32.mrf.mxu0
        %v1028 = vadd.f32 0.0, %v1027
        %1029 = vdwg.mxu0
        %1030 = vmatpush.msra.mxu0 0.0
        %1031 = vmatpush.msra.mxu0 0.0
        %1032 = vmatpush.msra.mxu0 0.0
        %1033 = vmatpush.msra.mxu0 0.0
        %1034 = vmatpush.msra.mxu0 0.0
        %1035 = vmatpush.msra.mxu0 0.0
        %1036 = vmatpush.msra.mxu0 0.0
        %1037 = vmatpush.msra.mxu0 0.0
        %1038 = vmatpush.msra.mxu0 0.0
        %1039 = vmatpush.msra.mxu0 0.0
        %1040 = vmatpush.msra.mxu0 0.0
        %1041 = vmatpush.msra.mxu0 0.0
        %1042 = vmatpush.msra.mxu0 0.0
        %1043 = vmatpush.msra.mxu0 0.0
        %1044 = vmatpush.msra.mxu0 %v499
        %1045 = vmatpush.msra.mxu0 %v396
        %1046 = vmatmul.f32.gmra.mxu0 %v423
        %v1047 = vpop.f32.mrf.mxu0
        %v1048 = vadd.f32 0.0, %v1047
        %1049 = vmatmul.f32.gmra.mxu0 %v426
        %v1050 = vpop.f32.mrf.mxu0
        %v1051 = vadd.f32 0.0, %v1050
        %1052 = vdwg.mxu0
        %v1053 = vmax.f32 %v519, %v657
        %v1054 = vmax.f32 %v542, %v680
        %v1055 = vmax.f32 %v565, %v703
        %v1056 = vmax.f32 %v588, %v726
        %v1057 = vmax.f32 %v611, %v749
        %v1058 = vmax.f32 %v634, %v772
        %v1059 = vmax.f32 %v522, %v660
        %v1060 = vmax.f32 %v545, %v683
        %v1061 = vmax.f32 %v568, %v706
        %v1062 = vmax.f32 %v591, %v729
        %v1063 = vmax.f32 %v614, %v752
        %v1064 = vmax.f32 %v637, %v775
        %v1065 = vmax.f32 %v795, %v933
        %v1066 = vmax.f32 %v818, %v956
        %v1067 = vmax.f32 %v841, %v979
        %v1068 = vmax.f32 %v864, %v1002
        %v1069 = vmax.f32 %v887, %v1025
        %v1070 = vmax.f32 %v910, %v1048
        %v1071 = vmax.f32 %v798, %v936
        %v1072 = vmax.f32 %v821, %v959
        %v1073 = vmax.f32 %v844, %v982
        %v1074 = vmax.f32 %v867, %v1005
        %v1075 = vmax.f32 %v890, %v1028
        %v1076 = vmax.f32 %v913, %v1051
        %v1077 = vmax.f32 %v1053, %v1065
        %v1078 = vmax.f32 %v1054, %v1066
        %v1079 = vmax.f32 %v1055, %v1067
        %v1080 = vmax.f32 %v1056, %v1068
        %v1081 = vmax.f32 %v1057, %v1069
        %v1082 = vmax.f32 %v1058, %v1070
        %v1083 = vmax.f32 %v1059, %v1071
        %v1084 = vmax.f32 %v1060, %v1072
        %v1085 = vmax.f32 %v1061, %v1073
        %v1086 = vmax.f32 %v1062, %v1074
        %v1087 = vmax.f32 %v1063, %v1075
        %v1088 = vmax.f32 %v1064, %v1076
        %v1089 = vld [vmem:[#allocation5] sm:$0xff]
        %v1090 = vld [vmem:[#allocation5 + $0x8] sm:$0xff]
        %v1091 = vld [vmem:[#allocation5 + $0x10] sm:$0xff]
        %v1092 = vld [vmem:[#allocation5 + $0x18] sm:$0xff]
        %v1093 = vld [vmem:[#allocation5 + $0x20] sm:$0xff]
        %v1094 = vld [vmem:[#allocation5 + $0x28] sm:$0xff]
        %v1095 = vld [vmem:[#allocation5 + $0x30] sm:$0xff]
        %v1096 = vld [vmem:[#allocation5 + $0x38] sm:$0xff]
        %v1097 = vld [vmem:[#allocation5 + $0x40] sm:$0xff]
        %v1098 = vld [vmem:[#allocation5 + $0x48] sm:$0xff]
        %v1099 = vld [vmem:[#allocation5 + $0x50] sm:$0xff]
        %v1100 = vld [vmem:[#allocation5 + $0x58] sm:$0xff]
        %v1101 = vadd.f32 %v1077, %v1089
        %v1102 = vadd.f32 %v1078, %v1090
        %v1103 = vadd.f32 %v1079, %v1091
        %v1104 = vadd.f32 %v1080, %v1092
        %v1105 = vadd.f32 %v1081, %v1093
        %v1106 = vadd.f32 %v1082, %v1094
        %v1107 = vadd.f32 %v1083, %v1095
        %v1108 = vadd.f32 %v1084, %v1096
        %v1109 = vadd.f32 %v1085, %v1097
        %v1110 = vadd.f32 %v1086, %v1098
        %v1111 = vadd.f32 %v1087, %v1099
        %v1112 = vadd.f32 %v1088, %v1100
        %v1113 = vmax.f32 %v1101, 0.0
        %v1114 = vmax.f32 %v1102, 0.0
        %v1115 = vmax.f32 %v1103, 0.0
        %v1116 = vmax.f32 %v1104, 0.0
        %v1117 = vmax.f32 %v1105, 0.0
        %v1118 = vmax.f32 %v1106, 0.0
        %v1119 = vmax.f32 %v1107, 0.0
        %v1120 = vmax.f32 %v1108, 0.0
        %v1121 = vmax.f32 %v1109, 0.0
        %v1122 = vmax.f32 %v1110, 0.0
        %v1123 = vmax.f32 %v1111, 0.0
        %v1124 = vmax.f32 %v1112, 0.0
        %1125 = vst [vmem:[#allocation2] sm:$0xff] %v1113
        %1126 = vst [vmem:[#allocation2 + $0x8] sm:$0xff] %v1114
        %1127 = vst [vmem:[#allocation2 + $0x10] sm:$0xff] %v1115
        %1128 = vst [vmem:[#allocation2 + $0x18] sm:$0xff] %v1116
        %1129 = vst [vmem:[#allocation2 + $0x20] sm:$0xff] %v1117
        %1130 = vst [vmem:[#allocation2 + $0x28] sm:$0xff] %v1118
        %1131 = vst [vmem:[#allocation2 + $0x30] sm:$0xff] %v1119
        %1132 = vst [vmem:[#allocation2 + $0x38] sm:$0xff] %v1120
        %1133 = vst [vmem:[#allocation2 + $0x40] sm:$0xff] %v1121
        %1134 = vst [vmem:[#allocation2 + $0x48] sm:$0xff] %v1122
        %1135 = vst [vmem:[#allocation2 + $0x50] sm:$0xff] %v1123
        %1136 = vst [vmem:[#allocation2 + $0x58] sm:$0xff] %v1124
        %v1137 = vld [vmem:[%s3] sm:$0xff]
        %v1138 = vld [vmem:[%s3 + $0x8] sm:$0xff]
        %v1139 = vld [vmem:[%s3 + $0x10] sm:$0xff]
        %v1140 = vld [vmem:[%s3 + $0x18] sm:$0xff]
        %v1141 = vld [vmem:[#allocation2] sm:$0xff]
        %v1142 = vld [vmem:[#allocation2 + $0x8] sm:$0xff]
        %v1143 = vld [vmem:[#allocation2 + $0x10] sm:$0xff]
        %v1144 = vld [vmem:[#allocation2 + $0x18] sm:$0xff]
        %v1145 = vld [vmem:[#allocation2 + $0x20] sm:$0xff]
        %v1146 = vld [vmem:[#allocation2 + $0x30] sm:$0xff]
        %v1147 = vld [vmem:[#allocation2 + $0x38] sm:$0xff]
        %v1148 = vld [vmem:[#allocation2 + $0x40] sm:$0xff]
        %v1149 = vld [vmem:[#allocation2 + $0x48] sm:$0xff]
        %v1150 = vld [vmem:[#allocation2 + $0x50] sm:$0xff]
        %s1151 = scalar_lea.vmem %s3, 32
        %v1152 = vld [vmem:[%s1151] sm:$0xff]
        %v1153 = vld [vmem:[%s1151 + $0x8] sm:$0xff]
        %v1154 = vld [vmem:[%s1151 + $0x10] sm:$0xff]
        %v1155 = vld [vmem:[%s1151 + $0x18] sm:$0xff]
        %v1156 = vld [vmem:[#allocation2] sm:$0xff]
        %v1157 = vld [vmem:[#allocation2 + $0x8] sm:$0xff]
        %v1158 = vld [vmem:[#allocation2 + $0x10] sm:$0xff]
        %v1159 = vld [vmem:[#allocation2 + $0x18] sm:$0xff]
        %v1160 = vld [vmem:[#allocation2 + $0x20] sm:$0xff]
        %v1161 = vld [vmem:[#allocation2 + $0x28] sm:$0xff]
        %v1162 = vld [vmem:[#allocation2 + $0x30] sm:$0xff]
        %v1163 = vld [vmem:[#allocation2 + $0x38] sm:$0xff]
        %v1164 = vld [vmem:[#allocation2 + $0x40] sm:$0xff]
        %v1165 = vld [vmem:[#allocation2 + $0x48] sm:$0xff]
        %v1166 = vld [vmem:[#allocation2 + $0x50] sm:$0xff]
        %v1167 = vld [vmem:[#allocation2 + $0x58] sm:$0xff]
        %1180 = vrot.lane.b32.xlu0 %v1156, 127
        %v1181 = vpop.permute.xlu0 %1180
        %1182 = vrot.lane.b32.xlu0 %v1157, 127
        %v1183 = vpop.permute.xlu0 %1182
        %1184 = vrot.lane.b32.xlu0 %v1158, 127
        %v1185 = vpop.permute.xlu0 %1184
        %1186 = vrot.lane.b32.xlu0 %v1159, 127
        %v1187 = vpop.permute.xlu0 %1186
        %1188 = vrot.lane.b32.xlu0 %v1160, 127
        %v1189 = vpop.permute.xlu0 %1188
        %1190 = vrot.lane.b32.xlu0 %v1161, 127
        %v1191 = vpop.permute.xlu0 %1190
        %1192 = vrot.lane.b32.xlu0 %v1162, 127
        %v1193 = vpop.permute.xlu0 %1192
        %1194 = vrot.lane.b32.xlu0 %v1163, 127
        %v1195 = vpop.permute.xlu0 %1194
        %1196 = vrot.lane.b32.xlu0 %v1164, 127
        %v1197 = vpop.permute.xlu0 %1196
        %1198 = vrot.lane.b32.xlu0 %v1165, 127
        %v1199 = vpop.permute.xlu0 %1198
        %1200 = vrot.lane.b32.xlu0 %v1166, 127
        %v1201 = vpop.permute.xlu0 %1200
        %1202 = vrot.lane.b32.xlu0 %v1167, 127
        %v1203 = vpop.permute.xlu0 %1202
        %vm1204 = vcmask 1039360
        %v1205 = vsel %vm1204, %v1181, %v1183
        %v1206 = vsel %vm1204, %v1183, %v1185
        %v1207 = vsel %vm1204, %v1185, %v1187
        %v1208 = vsel %vm1204, %v1187, %v1189
        %v1209 = vsel %vm1204, %v1189, %v1191
        %v1210 = vsel %vm1204, %v1193, %v1195
        %v1211 = vsel %vm1204, %v1195, %v1197
        %v1212 = vsel %vm1204, %v1197, %v1199
        %v1213 = vsel %vm1204, %v1199, %v1201
        %v1214 = vsel %vm1204, %v1201, %v1203
        %vm1225 = vcmask 130048
        %v1227 = vsel %vm1225, %v1152, 0
        %v1230 = vsel %vm1225, %v1153, 0
        %v1233 = vsel %vm1225, %v1154, 0
        %v1236 = vsel %vm1225, %v1155, 0
        %1238 = vmatpush.msra.mxu0 0.0
        %1239 = vmatpush.msra.mxu0 0.0
        %1240 = vmatpush.msra.mxu0 0.0
        %1241 = vmatpush.msra.mxu0 0.0
        %1242 = vmatpush.msra.mxu0 0.0
        %1243 = vmatpush.msra.mxu0 0.0
        %1244 = vmatpush.msra.mxu0 0.0
        %1245 = vmatpush.msra.mxu0 0.0
        %1246 = vmatpush.msra.mxu0 0.0
        %1247 = vmatpush.msra.mxu0 0.0
        %1248 = vmatpush.msra.mxu0 0.0
        %1249 = vmatpush.msra.mxu0 0.0
        %1250 = vmatpush.msra.mxu0 0.0
        %1251 = vmatpush.msra.mxu0 0.0
        %1252 = vmatpush.msra.mxu0 %v1210
        %1253 = vmatpush.msra.mxu0 %v1205
        %1254 = vmatmul.f32.gmra.mxu0 %v1227
        %v1255 = vpop.f32.mrf.mxu0
        %v1256 = vadd.f32 0.0, %v1255
        %1257 = vmatmul.f32.gmra.mxu0 %v1230
        %v1258 = vpop.f32.mrf.mxu0
        %v1259 = vadd.f32 0.0, %v1258
        %1260 = vmatmul.f32.gmra.mxu0 %v1233
        %v1261 = vpop.f32.mrf.mxu0
        %v1262 = vadd.f32 0.0, %v1261
        %1263 = vmatmul.f32.gmra.mxu0 %v1236
        %v1264 = vpop.f32.mrf.mxu0
        %v1265 = vadd.f32 0.0, %v1264
        %1266 = vdwg.mxu0
        %1267 = vmatpush.msra.mxu0 0.0
        %1268 = vmatpush.msra.mxu0 0.0
        %1269 = vmatpush.msra.mxu0 0.0
        %1270 = vmatpush.msra.mxu0 0.0
        %1271 = vmatpush.msra.mxu0 0.0
        %1272 = vmatpush.msra.mxu0 0.0
        %1273 = vmatpush.msra.mxu0 0.0
        %1274 = vmatpush.msra.mxu0 0.0
        %1275 = vmatpush.msra.mxu0 0.0
        %1276 = vmatpush.msra.mxu0 0.0
        %1277 = vmatpush.msra.mxu0 0.0
        %1278 = vmatpush.msra.mxu0 0.0
        %1279 = vmatpush.msra.mxu0 0.0
        %1280 = vmatpush.msra.mxu0 0.0
        %1281 = vmatpush.msra.mxu0 %v1211
        %1282 = vmatpush.msra.mxu0 %v1206
        %1283 = vmatmul.f32.gmra.mxu0 %v1227
        %v1284 = vpop.f32.mrf.mxu0
        %v1285 = vadd.f32 0.0, %v1284
        %1286 = vmatmul.f32.gmra.mxu0 %v1230
        %v1287 = vpop.f32.mrf.mxu0
        %v1288 = vadd.f32 0.0, %v1287
        %1289 = vmatmul.f32.gmra.mxu0 %v1233
        %v1290 = vpop.f32.mrf.mxu0
        %v1291 = vadd.f32 0.0, %v1290
        %1292 = vmatmul.f32.gmra.mxu0 %v1236
        %v1293 = vpop.f32.mrf.mxu0
        %v1294 = vadd.f32 0.0, %v1293
        %1295 = vdwg.mxu0
        %1296 = vmatpush.msra.mxu0 0.0
        %1297 = vmatpush.msra.mxu0 0.0
        %1298 = vmatpush.msra.mxu0 0.0
        %1299 = vmatpush.msra.mxu0 0.0
        %1300 = vmatpush.msra.mxu0 0.0
        %1301 = vmatpush.msra.mxu0 0.0
        %1302 = vmatpush.msra.mxu0 0.0
        %1303 = vmatpush.msra.mxu0 0.0
        %1304 = vmatpush.msra.mxu0 0.0
        %1305 = vmatpush.msra.mxu0 0.0
        %1306 = vmatpush.msra.mxu0 0.0
        %1307 = vmatpush.msra.mxu0 0.0
        %1308 = vmatpush.msra.mxu0 0.0
        %1309 = vmatpush.msra.mxu0 0.0
        %1310 = vmatpush.msra.mxu0 %v1212
        %1311 = vmatpush.msra.mxu0 %v1207
        %1312 = vmatmul.f32.gmra.mxu0 %v1227
        %v1313 = vpop.f32.mrf.mxu0
        %v1314 = vadd.f32 0.0, %v1313
        %1315 = vmatmul.f32.gmra.mxu0 %v1230
        %v1316 = vpop.f32.mrf.mxu0
        %v1317 = vadd.f32 0.0, %v1316
        %1318 = vmatmul.f32.gmra.mxu0 %v1233
        %v1319 = vpop.f32.mrf.mxu0
        %v1320 = vadd.f32 0.0, %v1319
        %1321 = vmatmul.f32.gmra.mxu0 %v1236
        %v1322 = vpop.f32.mrf.mxu0
        %v1323 = vadd.f32 0.0, %v1322
        %1324 = vdwg.mxu0
        %1325 = vmatpush.msra.mxu0 0.0
        %1326 = vmatpush.msra.mxu0 0.0
        %1327 = vmatpush.msra.mxu0 0.0
        %1328 = vmatpush.msra.mxu0 0.0
        %1329 = vmatpush.msra.mxu0 0.0
        %1330 = vmatpush.msra.mxu0 0.0
        %1331 = vmatpush.msra.mxu0 0.0
        %1332 = vmatpush.msra.mxu0 0.0
        %1333 = vmatpush.msra.mxu0 0.0
        %1334 = vmatpush.msra.mxu0 0.0
        %1335 = vmatpush.msra.mxu0 0.0
        %1336 = vmatpush.msra.mxu0 0.0
        %1337 = vmatpush.msra.mxu0 0.0
        %1338 = vmatpush.msra.mxu0 0.0
        %1339 = vmatpush.msra.mxu0 %v1213
        %1340 = vmatpush.msra.mxu0 %v1208
        %1341 = vmatmul.f32.gmra.mxu0 %v1227
        %v1342 = vpop.f32.mrf.mxu0
        %v1343 = vadd.f32 0.0, %v1342
        %1344 = vmatmul.f32.gmra.mxu0 %v1230
        %v1345 = vpop.f32.mrf.mxu0
        %v1346 = vadd.f32 0.0, %v1345
        %1347 = vmatmul.f32.gmra.mxu0 %v1233
        %v1348 = vpop.f32.mrf.mxu0
        %v1349 = vadd.f32 0.0, %v1348
        %1350 = vmatmul.f32.gmra.mxu0 %v1236
        %v1351 = vpop.f32.mrf.mxu0
        %v1352 = vadd.f32 0.0, %v1351
        %1353 = vdwg.mxu0
        %1354 = vmatpush.msra.mxu0 0.0
        %1355 = vmatpush.msra.mxu0 0.0
        %1356 = vmatpush.msra.mxu0 0.0
        %1357 = vmatpush.msra.mxu0 0.0
        %1358 = vmatpush.msra.mxu0 0.0
        %1359 = vmatpush.msra.mxu0 0.0
        %1360 = vmatpush.msra.mxu0 0.0
        %1361 = vmatpush.msra.mxu0 0.0
        %1362 = vmatpush.msra.mxu0 0.0
        %1363 = vmatpush.msra.mxu0 0.0
        %1364 = vmatpush.msra.mxu0 0.0
        %1365 = vmatpush.msra.mxu0 0.0
        %1366 = vmatpush.msra.mxu0 0.0
        %1367 = vmatpush.msra.mxu0 0.0
        %1368 = vmatpush.msra.mxu0 %v1214
        %1369 = vmatpush.msra.mxu0 %v1209
        %1370 = vmatmul.f32.gmra.mxu0 %v1227
        %v1371 = vpop.f32.mrf.mxu0
        %v1372 = vadd.f32 0.0, %v1371
        %1373 = vmatmul.f32.gmra.mxu0 %v1230
        %v1374 = vpop.f32.mrf.mxu0
        %v1375 = vadd.f32 0.0, %v1374
        %1376 = vmatmul.f32.gmra.mxu0 %v1233
        %v1377 = vpop.f32.mrf.mxu0
        %v1378 = vadd.f32 0.0, %v1377
        %1379 = vmatmul.f32.gmra.mxu0 %v1236
        %v1380 = vpop.f32.mrf.mxu0
        %v1381 = vadd.f32 0.0, %v1380
        %1382 = vdwg.mxu0
        %v1384 = vsel %vm1225, %v1137, 0
        %v1387 = vsel %vm1225, %v1138, 0
        %v1390 = vsel %vm1225, %v1139, 0
        %v1393 = vsel %vm1225, %v1140, 0
        %1395 = vmatpush.msra.mxu0 0.0
        %1396 = vmatpush.msra.mxu0 0.0
        %1397 = vmatpush.msra.mxu0 0.0
        %1398 = vmatpush.msra.mxu0 0.0
        %1399 = vmatpush.msra.mxu0 0.0
        %1400 = vmatpush.msra.mxu0 0.0
        %1401 = vmatpush.msra.mxu0 0.0
        %1402 = vmatpush.msra.mxu0 0.0
        %1403 = vmatpush.msra.mxu0 0.0
        %1404 = vmatpush.msra.mxu0 0.0
        %1405 = vmatpush.msra.mxu0 0.0
        %1406 = vmatpush.msra.mxu0 0.0
        %1407 = vmatpush.msra.mxu0 0.0
        %1408 = vmatpush.msra.mxu0 0.0
        %1409 = vmatpush.msra.mxu0 %v1146
        %1410 = vmatpush.msra.mxu0 %v1141
        %1411 = vmatmul.f32.gmra.mxu0 %v1384
        %v1412 = vpop.f32.mrf.mxu0
        %v1413 = vadd.f32 %v1256, %v1412
        %1414 = vmatmul.f32.gmra.mxu0 %v1387
        %v1415 = vpop.f32.mrf.mxu0
        %v1416 = vadd.f32 %v1259, %v1415
        %1417 = vmatmul.f32.gmra.mxu0 %v1390
        %v1418 = vpop.f32.mrf.mxu0
        %v1419 = vadd.f32 %v1262, %v1418
        %1420 = vmatmul.f32.gmra.mxu0 %v1393
        %v1421 = vpop.f32.mrf.mxu0
        %v1422 = vadd.f32 %v1265, %v1421
        %1423 = vdwg.mxu0
        %1424 = vmatpush.msra.mxu0 0.0
        %1425 = vmatpush.msra.mxu0 0.0
        %1426 = vmatpush.msra.mxu0 0.0
        %1427 = vmatpush.msra.mxu0 0.0
        %1428 = vmatpush.msra.mxu0 0.0
        %1429 = vmatpush.msra.mxu0 0.0
        %1430 = vmatpush.msra.mxu0 0.0
        %1431 = vmatpush.msra.mxu0 0.0
        %1432 = vmatpush.msra.mxu0 0.0
        %1433 = vmatpush.msra.mxu0 0.0
        %1434 = vmatpush.msra.mxu0 0.0
        %1435 = vmatpush.msra.mxu0 0.0
        %1436 = vmatpush.msra.mxu0 0.0
        %1437 = vmatpush.msra.mxu0 0.0
        %1438 = vmatpush.msra.mxu0 %v1147
        %1439 = vmatpush.msra.mxu0 %v1142
        %1440 = vmatmul.f32.gmra.mxu0 %v1384
        %v1441 = vpop.f32.mrf.mxu0
        %v1442 = vadd.f32 %v1285, %v1441
        %1443 = vmatmul.f32.gmra.mxu0 %v1387
        %v1444 = vpop.f32.mrf.mxu0
        %v1445 = vadd.f32 %v1288, %v1444
        %1446 = vmatmul.f32.gmra.mxu0 %v1390
        %v1447 = vpop.f32.mrf.mxu0
        %v1448 = vadd.f32 %v1291, %v1447
        %1449 = vmatmul.f32.gmra.mxu0 %v1393
        %v1450 = vpop.f32.mrf.mxu0
        %v1451 = vadd.f32 %v1294, %v1450
        %1452 = vdwg.mxu0
        %1453 = vmatpush.msra.mxu0 0.0
        %1454 = vmatpush.msra.mxu0 0.0
        %1455 = vmatpush.msra.mxu0 0.0
        %1456 = vmatpush.msra.mxu0 0.0
        %1457 = vmatpush.msra.mxu0 0.0
        %1458 = vmatpush.msra.mxu0 0.0
        %1459 = vmatpush.msra.mxu0 0.0
        %1460 = vmatpush.msra.mxu0 0.0
        %1461 = vmatpush.msra.mxu0 0.0
        %1462 = vmatpush.msra.mxu0 0.0
        %1463 = vmatpush.msra.mxu0 0.0
        %1464 = vmatpush.msra.mxu0 0.0
        %1465 = vmatpush.msra.mxu0 0.0
        %1466 = vmatpush.msra.mxu0 0.0
        %1467 = vmatpush.msra.mxu0 %v1148
        %1468 = vmatpush.msra.mxu0 %v1143
        %1469 = vmatmul.f32.gmra.mxu0 %v1384
        %v1470 = vpop.f32.mrf.mxu0
        %v1471 = vadd.f32 %v1314, %v1470
        %1472 = vmatmul.f32.gmra.mxu0 %v1387
        %v1473 = vpop.f32.mrf.mxu0
        %v1474 = vadd.f32 %v1317, %v1473
        %1475 = vmatmul.f32.gmra.mxu0 %v1390
        %v1476 = vpop.f32.mrf.mxu0
        %v1477 = vadd.f32 %v1320, %v1476
        %1478 = vmatmul.f32.gmra.mxu0 %v1393
        %v1479 = vpop.f32.mrf.mxu0
        %v1480 = vadd.f32 %v1323, %v1479
        %1481 = vdwg.mxu0
        %1482 = vmatpush.msra.mxu0 0.0
        %1483 = vmatpush.msra.mxu0 0.0
        %1484 = vmatpush.msra.mxu0 0.0
        %1485 = vmatpush.msra.mxu0 0.0
        %1486 = vmatpush.msra.mxu0 0.0
        %1487 = vmatpush.msra.mxu0 0.0
        %1488 = vmatpush.msra.mxu0 0.0
        %1489 = vmatpush.msra.mxu0 0.0
        %1490 = vmatpush.msra.mxu0 0.0
        %1491 = vmatpush.msra.mxu0 0.0
        %1492 = vmatpush.msra.mxu0 0.0
        %1493 = vmatpush.msra.mxu0 0.0
        %1494 = vmatpush.msra.mxu0 0.0
        %1495 = vmatpush.msra.mxu0 0.0
        %1496 = vmatpush.msra.mxu0 %v1149
        %1497 = vmatpush.msra.mxu0 %v1144
        %1498 = vmatmul.f32.gmra.mxu0 %v1384
        %v1499 = vpop.f32.mrf.mxu0
        %v1500 = vadd.f32 %v1343, %v1499
        %1501 = vmatmul.f32.gmra.mxu0 %v1387
        %v1502 = vpop.f32.mrf.mxu0
        %v1503 = vadd.f32 %v1346, %v1502
        %1504 = vmatmul.f32.gmra.mxu0 %v1390
        %v1505 = vpop.f32.mrf.mxu0
        %v1506 = vadd.f32 %v1349, %v1505
        %1507 = vmatmul.f32.gmra.mxu0 %v1393
        %v1508 = vpop.f32.mrf.mxu0
        %v1509 = vadd.f32 %v1352, %v1508
        %1510 = vdwg.mxu0
        %1511 = vmatpush.msra.mxu0 0.0
        %1512 = vmatpush.msra.mxu0 0.0
        %1513 = vmatpush.msra.mxu0 0.0
        %1514 = vmatpush.msra.mxu0 0.0
        %1515 = vmatpush.msra.mxu0 0.0
        %1516 = vmatpush.msra.mxu0 0.0
        %1517 = vmatpush.msra.mxu0 0.0
        %1518 = vmatpush.msra.mxu0 0.0
        %1519 = vmatpush.msra.mxu0 0.0
        %1520 = vmatpush.msra.mxu0 0.0
        %1521 = vmatpush.msra.mxu0 0.0
        %1522 = vmatpush.msra.mxu0 0.0
        %1523 = vmatpush.msra.mxu0 0.0
        %1524 = vmatpush.msra.mxu0 0.0
        %1525 = vmatpush.msra.mxu0 %v1150
        %1526 = vmatpush.msra.mxu0 %v1145
        %1527 = vmatmul.f32.gmra.mxu0 %v1384
        %v1528 = vpop.f32.mrf.mxu0
        %v1529 = vadd.f32 %v1372, %v1528
        %1530 = vmatmul.f32.gmra.mxu0 %v1387
        %v1531 = vpop.f32.mrf.mxu0
        %v1532 = vadd.f32 %v1375, %v1531
        %1533 = vmatmul.f32.gmra.mxu0 %v1390
        %v1534 = vpop.f32.mrf.mxu0
        %v1535 = vadd.f32 %v1378, %v1534
        %1536 = vmatmul.f32.gmra.mxu0 %v1393
        %v1537 = vpop.f32.mrf.mxu0
        %v1538 = vadd.f32 %v1381, %v1537
        %1539 = vdwg.mxu0
        %s1540 = scalar_lea.vmem %s3, 64
        %v1541 = vld [vmem:[%s1540] sm:$0xff]
        %v1542 = vld [vmem:[%s1540 + $0x8] sm:$0xff]
        %v1543 = vld [vmem:[%s1540 + $0x10] sm:$0xff]
        %v1544 = vld [vmem:[%s1540 + $0x18] sm:$0xff]
        %1545 = vrot.lane.b32.xlu0 %v1156, 126
        %v1546 = vpop.permute.xlu0 %1545
        %1547 = vrot.lane.b32.xlu0 %v1157, 126
        %v1548 = vpop.permute.xlu0 %1547
        %1549 = vrot.lane.b32.xlu0 %v1158, 126
        %v1550 = vpop.permute.xlu0 %1549
        %1551 = vrot.lane.b32.xlu0 %v1159, 126
        %v1552 = vpop.permute.xlu0 %1551
        %1553 = vrot.lane.b32.xlu0 %v1160, 126
        %v1554 = vpop.permute.xlu0 %1553
        %1555 = vrot.lane.b32.xlu0 %v1161, 126
        %v1556 = vpop.permute.xlu0 %1555
        %1557 = vrot.lane.b32.xlu0 %v1162, 126
        %v1558 = vpop.permute.xlu0 %1557
        %1559 = vrot.lane.b32.xlu0 %v1163, 126
        %v1560 = vpop.permute.xlu0 %1559
        %1561 = vrot.lane.b32.xlu0 %v1164, 126
        %v1562 = vpop.permute.xlu0 %1561
        %1563 = vrot.lane.b32.xlu0 %v1165, 126
        %v1564 = vpop.permute.xlu0 %1563
        %1565 = vrot.lane.b32.xlu0 %v1166, 126
        %v1566 = vpop.permute.xlu0 %1565
        %1567 = vrot.lane.b32.xlu0 %v1167, 126
        %v1568 = vpop.permute.xlu0 %1567
        %vm1569 = vcmask 1031168
        %v1570 = vsel %vm1569, %v1546, %v1548
        %v1571 = vsel %vm1569, %v1548, %v1550
        %v1572 = vsel %vm1569, %v1550, %v1552
        %v1573 = vsel %vm1569, %v1552, %v1554
        %v1574 = vsel %vm1569, %v1554, %v1556
        %v1575 = vsel %vm1569, %v1558, %v1560
        %v1576 = vsel %vm1569, %v1560, %v1562
        %v1577 = vsel %vm1569, %v1562, %v1564
        %v1578 = vsel %vm1569, %v1564, %v1566
        %v1579 = vsel %vm1569, %v1566, %v1568
        %v1591 = vsel %vm1225, %v1541, 0
        %v1594 = vsel %vm1225, %v1542, 0
        %v1597 = vsel %vm1225, %v1543, 0
        %v1600 = vsel %vm1225, %v1544, 0
        %1602 = vmatpush.msra.mxu0 0.0
        %1603 = vmatpush.msra.mxu0 0.0
        %1604 = vmatpush.msra.mxu0 0.0
        %1605 = vmatpush.msra.mxu0 0.0
        %1606 = vmatpush.msra.mxu0 0.0
        %1607 = vmatpush.msra.mxu0 0.0
        %1608 = vmatpush.msra.mxu0 0.0
        %1609 = vmatpush.msra.mxu0 0.0
        %1610 = vmatpush.msra.mxu0 0.0
        %1611 = vmatpush.msra.mxu0 0.0
        %1612 = vmatpush.msra.mxu0 0.0
        %1613 = vmatpush.msra.mxu0 0.0
        %1614 = vmatpush.msra.mxu0 0.0
        %1615 = vmatpush.msra.mxu0 0.0
        %1616 = vmatpush.msra.mxu0 %v1575
        %1617 = vmatpush.msra.mxu0 %v1570
        %1618 = vmatmul.f32.gmra.mxu0 %v1591
        %v1619 = vpop.f32.mrf.mxu0
        %v1620 = vadd.f32 0.0, %v1619
        %1621 = vmatmul.f32.gmra.mxu0 %v1594
        %v1622 = vpop.f32.mrf.mxu0
        %v1623 = vadd.f32 0.0, %v1622
        %1624 = vmatmul.f32.gmra.mxu0 %v1597
        %v1625 = vpop.f32.mrf.mxu0
        %v1626 = vadd.f32 0.0, %v1625
        %1627 = vmatmul.f32.gmra.mxu0 %v1600
        %v1628 = vpop.f32.mrf.mxu0
        %v1629 = vadd.f32 0.0, %v1628
        %1630 = vdwg.mxu0
        %1631 = vmatpush.msra.mxu0 0.0
        %1632 = vmatpush.msra.mxu0 0.0
        %1633 = vmatpush.msra.mxu0 0.0
        %1634 = vmatpush.msra.mxu0 0.0
        %1635 = vmatpush.msra.mxu0 0.0
        %1636 = vmatpush.msra.mxu0 0.0
        %1637 = vmatpush.msra.mxu0 0.0
        %1638 = vmatpush.msra.mxu0 0.0
        %1639 = vmatpush.msra.mxu0 0.0
        %1640 = vmatpush.msra.mxu0 0.0
        %1641 = vmatpush.msra.mxu0 0.0
        %1642 = vmatpush.msra.mxu0 0.0
        %1643 = vmatpush.msra.mxu0 0.0
        %1644 = vmatpush.msra.mxu0 0.0
        %1645 = vmatpush.msra.mxu0 %v1576
        %1646 = vmatpush.msra.mxu0 %v1571
        %1647 = vmatmul.f32.gmra.mxu0 %v1591
        %v1648 = vpop.f32.mrf.mxu0
        %v1649 = vadd.f32 0.0, %v1648
        %1650 = vmatmul.f32.gmra.mxu0 %v1594
        %v1651 = vpop.f32.mrf.mxu0
        %v1652 = vadd.f32 0.0, %v1651
        %1653 = vmatmul.f32.gmra.mxu0 %v1597
        %v1654 = vpop.f32.mrf.mxu0
        %v1655 = vadd.f32 0.0, %v1654
        %1656 = vmatmul.f32.gmra.mxu0 %v1600
        %v1657 = vpop.f32.mrf.mxu0
        %v1658 = vadd.f32 0.0, %v1657
        %1659 = vdwg.mxu0
        %1660 = vmatpush.msra.mxu0 0.0
        %1661 = vmatpush.msra.mxu0 0.0
        %1662 = vmatpush.msra.mxu0 0.0
        %1663 = vmatpush.msra.mxu0 0.0
        %1664 = vmatpush.msra.mxu0 0.0
        %1665 = vmatpush.msra.mxu0 0.0
        %1666 = vmatpush.msra.mxu0 0.0
        %1667 = vmatpush.msra.mxu0 0.0
        %1668 = vmatpush.msra.mxu0 0.0
        %1669 = vmatpush.msra.mxu0 0.0
        %1670 = vmatpush.msra.mxu0 0.0
        %1671 = vmatpush.msra.mxu0 0.0
        %1672 = vmatpush.msra.mxu0 0.0
        %1673 = vmatpush.msra.mxu0 0.0
        %1674 = vmatpush.msra.mxu0 %v1577
        %1675 = vmatpush.msra.mxu0 %v1572
        %1676 = vmatmul.f32.gmra.mxu0 %v1591
        %v1677 = vpop.f32.mrf.mxu0
        %v1678 = vadd.f32 0.0, %v1677
        %1679 = vmatmul.f32.gmra.mxu0 %v1594
        %v1680 = vpop.f32.mrf.mxu0
        %v1681 = vadd.f32 0.0, %v1680
        %1682 = vmatmul.f32.gmra.mxu0 %v1597
        %v1683 = vpop.f32.mrf.mxu0
        %v1684 = vadd.f32 0.0, %v1683
        %1685 = vmatmul.f32.gmra.mxu0 %v1600
        %v1686 = vpop.f32.mrf.mxu0
        %v1687 = vadd.f32 0.0, %v1686
        %1688 = vdwg.mxu0
        %1689 = vmatpush.msra.mxu0 0.0
        %1690 = vmatpush.msra.mxu0 0.0
        %1691 = vmatpush.msra.mxu0 0.0
        %1692 = vmatpush.msra.mxu0 0.0
        %1693 = vmatpush.msra.mxu0 0.0
        %1694 = vmatpush.msra.mxu0 0.0
        %1695 = vmatpush.msra.mxu0 0.0
        %1696 = vmatpush.msra.mxu0 0.0
        %1697 = vmatpush.msra.mxu0 0.0
        %1698 = vmatpush.msra.mxu0 0.0
        %1699 = vmatpush.msra.mxu0 0.0
        %1700 = vmatpush.msra.mxu0 0.0
        %1701 = vmatpush.msra.mxu0 0.0
        %1702 = vmatpush.msra.mxu0 0.0
        %1703 = vmatpush.msra.mxu0 %v1578
        %1704 = vmatpush.msra.mxu0 %v1573
        %1705 = vmatmul.f32.gmra.mxu0 %v1591
        %v1706 = vpop.f32.mrf.mxu0
        %v1707 = vadd.f32 0.0, %v1706
        %1708 = vmatmul.f32.gmra.mxu0 %v1594
        %v1709 = vpop.f32.mrf.mxu0
        %v1710 = vadd.f32 0.0, %v1709
        %1711 = vmatmul.f32.gmra.mxu0 %v1597
        %v1712 = vpop.f32.mrf.mxu0
        %v1713 = vadd.f32 0.0, %v1712
        %1714 = vmatmul.f32.gmra.mxu0 %v1600
        %v1715 = vpop.f32.mrf.mxu0
        %v1716 = vadd.f32 0.0, %v1715
        %1717 = vdwg.mxu0
        %1718 = vmatpush.msra.mxu0 0.0
        %1719 = vmatpush.msra.mxu0 0.0
        %1720 = vmatpush.msra.mxu0 0.0
        %1721 = vmatpush.msra.mxu0 0.0
        %1722 = vmatpush.msra.mxu0 0.0
        %1723 = vmatpush.msra.mxu0 0.0
        %1724 = vmatpush.msra.mxu0 0.0
        %1725 = vmatpush.msra.mxu0 0.0
        %1726 = vmatpush.msra.mxu0 0.0
        %1727 = vmatpush.msra.mxu0 0.0
        %1728 = vmatpush.msra.mxu0 0.0
        %1729 = vmatpush.msra.mxu0 0.0
        %1730 = vmatpush.msra.mxu0 0.0
        %1731 = vmatpush.msra.mxu0 0.0
        %1732 = vmatpush.msra.mxu0 %v1579
        %1733 = vmatpush.msra.mxu0 %v1574
        %1734 = vmatmul.f32.gmra.mxu0 %v1591
        %v1735 = vpop.f32.mrf.mxu0
        %v1736 = vadd.f32 0.0, %v1735
        %1737 = vmatmul.f32.gmra.mxu0 %v1594
        %v1738 = vpop.f32.mrf.mxu0
        %v1739 = vadd.f32 0.0, %v1738
        %1740 = vmatmul.f32.gmra.mxu0 %v1597
        %v1741 = vpop.f32.mrf.mxu0
        %v1742 = vadd.f32 0.0, %v1741
        %1743 = vmatmul.f32.gmra.mxu0 %v1600
        %v1744 = vpop.f32.mrf.mxu0
        %v1745 = vadd.f32 0.0, %v1744
        %1746 = vdwg.mxu0
        %v1747 = vadd.f32 %v1413, %v1620
        %v1748 = vadd.f32 %v1442, %v1649
        %v1749 = vadd.f32 %v1471, %v1678
        %v1750 = vadd.f32 %v1500, %v1707
        %v1751 = vadd.f32 %v1529, %v1736
        %v1752 = vadd.f32 %v1416, %v1623
        %v1753 = vadd.f32 %v1445, %v1652
        %v1754 = vadd.f32 %v1474, %v1681
        %v1755 = vadd.f32 %v1503, %v1710
        %v1756 = vadd.f32 %v1532, %v1739
        %v1757 = vadd.f32 %v1419, %v1626
        %v1758 = vadd.f32 %v1448, %v1655
        %v1759 = vadd.f32 %v1477, %v1684
        %v1760 = vadd.f32 %v1506, %v1713
        %v1761 = vadd.f32 %v1535, %v1742
        %v1762 = vadd.f32 %v1422, %v1629
        %v1763 = vadd.f32 %v1451, %v1658
        %v1764 = vadd.f32 %v1480, %v1687
        %v1765 = vadd.f32 %v1509, %v1716
        %v1766 = vadd.f32 %v1538, %v1745
        %s1767 = scalar_lea.vmem %s3, 96
        %v1768 = vld [vmem:[%s1767] sm:$0xff]
        %v1769 = vld [vmem:[%s1767 + $0x8] sm:$0xff]
        %v1770 = vld [vmem:[%s1767 + $0x10] sm:$0xff]
        %v1771 = vld [vmem:[%s1767 + $0x18] sm:$0xff]
        %1772 = vrot.lane.b32.xlu0 %v1156, 102
        %v1773 = vpop.permute.xlu0 %1772
        %1774 = vrot.lane.b32.xlu0 %v1157, 102
        %v1775 = vpop.permute.xlu0 %1774
        %1776 = vrot.lane.b32.xlu0 %v1158, 102
        %v1777 = vpop.permute.xlu0 %1776
        %1778 = vrot.lane.b32.xlu0 %v1159, 102
        %v1779 = vpop.permute.xlu0 %1778
        %1780 = vrot.lane.b32.xlu0 %v1160, 102
        %v1781 = vpop.permute.xlu0 %1780
        %1782 = vrot.lane.b32.xlu0 %v1161, 102
        %v1783 = vpop.permute.xlu0 %1782
        %1784 = vrot.lane.b32.xlu0 %v1162, 102
        %v1785 = vpop.permute.xlu0 %1784
        %1786 = vrot.lane.b32.xlu0 %v1163, 102
        %v1787 = vpop.permute.xlu0 %1786
        %1788 = vrot.lane.b32.xlu0 %v1164, 102
        %v1789 = vpop.permute.xlu0 %1788
        %1790 = vrot.lane.b32.xlu0 %v1165, 102
        %v1791 = vpop.permute.xlu0 %1790
        %1792 = vrot.lane.b32.xlu0 %v1166, 102
        %v1793 = vpop.permute.xlu0 %1792
        %1794 = vrot.lane.b32.xlu0 %v1167, 102
        %v1795 = vpop.permute.xlu0 %1794
        %vm1796 = vcmask 834560
        %v1797 = vsel %vm1796, %v1773, %v1775
        %v1798 = vsel %vm1796, %v1775, %v1777
        %v1799 = vsel %vm1796, %v1777, %v1779
        %v1800 = vsel %vm1796, %v1779, %v1781
        %v1801 = vsel %vm1796, %v1781, %v1783
        %v1802 = vsel %vm1796, %v1785, %v1787
        %v1803 = vsel %vm1796, %v1787, %v1789
        %v1804 = vsel %vm1796, %v1789, %v1791
        %v1805 = vsel %vm1796, %v1791, %v1793
        %v1806 = vsel %vm1796, %v1793, %v1795
        %v1818 = vsel %vm1225, %v1768, 0
        %v1821 = vsel %vm1225, %v1769, 0
        %v1824 = vsel %vm1225, %v1770, 0
        %v1827 = vsel %vm1225, %v1771, 0
        %1829 = vmatpush.msra.mxu0 0.0
        %1830 = vmatpush.msra.mxu0 0.0
        %1831 = vmatpush.msra.mxu0 0.0
        %1832 = vmatpush.msra.mxu0 0.0
        %1833 = vmatpush.msra.mxu0 0.0
        %1834 = vmatpush.msra.mxu0 0.0
        %1835 = vmatpush.msra.mxu0 0.0
        %1836 = vmatpush.msra.mxu0 0.0
        %1837 = vmatpush.msra.mxu0 0.0
        %1838 = vmatpush.msra.mxu0 0.0
        %1839 = vmatpush.msra.mxu0 0.0
        %1840 = vmatpush.msra.mxu0 0.0
        %1841 = vmatpush.msra.mxu0 0.0
        %1842 = vmatpush.msra.mxu0 0.0
        %1843 = vmatpush.msra.mxu0 %v1802
        %1844 = vmatpush.msra.mxu0 %v1797
        %1845 = vmatmul.f32.gmra.mxu0 %v1818
        %v1846 = vpop.f32.mrf.mxu0
        %v1847 = vadd.f32 0.0, %v1846
        %1848 = vmatmul.f32.gmra.mxu0 %v1821
        %v1849 = vpop.f32.mrf.mxu0
        %v1850 = vadd.f32 0.0, %v1849
        %1851 = vmatmul.f32.gmra.mxu0 %v1824
        %v1852 = vpop.f32.mrf.mxu0
        %v1853 = vadd.f32 0.0, %v1852
        %1854 = vmatmul.f32.gmra.mxu0 %v1827
        %v1855 = vpop.f32.mrf.mxu0
        %v1856 = vadd.f32 0.0, %v1855
        %1857 = vdwg.mxu0
        %1858 = vmatpush.msra.mxu0 0.0
        %1859 = vmatpush.msra.mxu0 0.0
        %1860 = vmatpush.msra.mxu0 0.0
        %1861 = vmatpush.msra.mxu0 0.0
        %1862 = vmatpush.msra.mxu0 0.0
        %1863 = vmatpush.msra.mxu0 0.0
        %1864 = vmatpush.msra.mxu0 0.0
        %1865 = vmatpush.msra.mxu0 0.0
        %1866 = vmatpush.msra.mxu0 0.0
        %1867 = vmatpush.msra.mxu0 0.0
        %1868 = vmatpush.msra.mxu0 0.0
        %1869 = vmatpush.msra.mxu0 0.0
        %1870 = vmatpush.msra.mxu0 0.0
        %1871 = vmatpush.msra.mxu0 0.0
        %1872 = vmatpush.msra.mxu0 %v1803
        %1873 = vmatpush.msra.mxu0 %v1798
        %1874 = vmatmul.f32.gmra.mxu0 %v1818
        %v1875 = vpop.f32.mrf.mxu0
        %v1876 = vadd.f32 0.0, %v1875
        %1877 = vmatmul.f32.gmra.mxu0 %v1821
        %v1878 = vpop.f32.mrf.mxu0
        %v1879 = vadd.f32 0.0, %v1878
        %1880 = vmatmul.f32.gmra.mxu0 %v1824
        %v1881 = vpop.f32.mrf.mxu0
        %v1882 = vadd.f32 0.0, %v1881
        %1883 = vmatmul.f32.gmra.mxu0 %v1827
        %v1884 = vpop.f32.mrf.mxu0
        %v1885 = vadd.f32 0.0, %v1884
        %1886 = vdwg.mxu0
        %1887 = vmatpush.msra.mxu0 0.0
        %1888 = vmatpush.msra.mxu0 0.0
        %1889 = vmatpush.msra.mxu0 0.0
        %1890 = vmatpush.msra.mxu0 0.0
        %1891 = vmatpush.msra.mxu0 0.0
        %1892 = vmatpush.msra.mxu0 0.0
        %1893 = vmatpush.msra.mxu0 0.0
        %1894 = vmatpush.msra.mxu0 0.0
        %1895 = vmatpush.msra.mxu0 0.0
        %1896 = vmatpush.msra.mxu0 0.0
        %1897 = vmatpush.msra.mxu0 0.0
        %1898 = vmatpush.msra.mxu0 0.0
        %1899 = vmatpush.msra.mxu0 0.0
        %1900 = vmatpush.msra.mxu0 0.0
        %1901 = vmatpush.msra.mxu0 %v1804
        %1902 = vmatpush.msra.mxu0 %v1799
        %1903 = vmatmul.f32.gmra.mxu0 %v1818
        %v1904 = vpop.f32.mrf.mxu0
        %v1905 = vadd.f32 0.0, %v1904
        %1906 = vmatmul.f32.gmra.mxu0 %v1821
        %v1907 = vpop.f32.mrf.mxu0
        %v1908 = vadd.f32 0.0, %v1907
        %1909 = vmatmul.f32.gmra.mxu0 %v1824
        %v1910 = vpop.f32.mrf.mxu0
        %v1911 = vadd.f32 0.0, %v1910
        %1912 = vmatmul.f32.gmra.mxu0 %v1827
        %v1913 = vpop.f32.mrf.mxu0
        %v1914 = vadd.f32 0.0, %v1913
        %1915 = vdwg.mxu0
        %1916 = vmatpush.msra.mxu0 0.0
        %1917 = vmatpush.msra.mxu0 0.0
        %1918 = vmatpush.msra.mxu0 0.0
        %1919 = vmatpush.msra.mxu0 0.0
        %1920 = vmatpush.msra.mxu0 0.0
        %1921 = vmatpush.msra.mxu0 0.0
        %1922 = vmatpush.msra.mxu0 0.0
        %1923 = vmatpush.msra.mxu0 0.0
        %1924 = vmatpush.msra.mxu0 0.0
        %1925 = vmatpush.msra.mxu0 0.0
        %1926 = vmatpush.msra.mxu0 0.0
        %1927 = vmatpush.msra.mxu0 0.0
        %1928 = vmatpush.msra.mxu0 0.0
        %1929 = vmatpush.msra.mxu0 0.0
        %1930 = vmatpush.msra.mxu0 %v1805
        %1931 = vmatpush.msra.mxu0 %v1800
        %1932 = vmatmul.f32.gmra.mxu0 %v1818
        %v1933 = vpop.f32.mrf.mxu0
        %v1934 = vadd.f32 0.0, %v1933
        %1935 = vmatmul.f32.gmra.mxu0 %v1821
        %v1936 = vpop.f32.mrf.mxu0
        %v1937 = vadd.f32 0.0, %v1936
        %1938 = vmatmul.f32.gmra.mxu0 %v1824
        %v1939 = vpop.f32.mrf.mxu0
        %v1940 = vadd.f32 0.0, %v1939
        %1941 = vmatmul.f32.gmra.mxu0 %v1827
        %v1942 = vpop.f32.mrf.mxu0
        %v1943 = vadd.f32 0.0, %v1942
        %1944 = vdwg.mxu0
        %1945 = vmatpush.msra.mxu0 0.0
        %1946 = vmatpush.msra.mxu0 0.0
        %1947 = vmatpush.msra.mxu0 0.0
        %1948 = vmatpush.msra.mxu0 0.0
        %1949 = vmatpush.msra.mxu0 0.0
        %1950 = vmatpush.msra.mxu0 0.0
        %1951 = vmatpush.msra.mxu0 0.0
        %1952 = vmatpush.msra.mxu0 0.0
        %1953 = vmatpush.msra.mxu0 0.0
        %1954 = vmatpush.msra.mxu0 0.0
        %1955 = vmatpush.msra.mxu0 0.0
        %1956 = vmatpush.msra.mxu0 0.0
        %1957 = vmatpush.msra.mxu0 0.0
        %1958 = vmatpush.msra.mxu0 0.0
        %1959 = vmatpush.msra.mxu0 %v1806
        %1960 = vmatpush.msra.mxu0 %v1801
        %1961 = vmatmul.f32.gmra.mxu0 %v1818
        %v1962 = vpop.f32.mrf.mxu0
        %v1963 = vadd.f32 0.0, %v1962
        %1964 = vmatmul.f32.gmra.mxu0 %v1821
        %v1965 = vpop.f32.mrf.mxu0
        %v1966 = vadd.f32 0.0, %v1965
        %1967 = vmatmul.f32.gmra.mxu0 %v1824
        %v1968 = vpop.f32.mrf.mxu0
        %v1969 = vadd.f32 0.0, %v1968
        %1970 = vmatmul.f32.gmra.mxu0 %v1827
        %v1971 = vpop.f32.mrf.mxu0
        %v1972 = vadd.f32 0.0, %v1971
        %1973 = vdwg.mxu0
        %v1974 = vadd.f32 %v1747, %v1847
        %v1975 = vadd.f32 %v1748, %v1876
        %v1976 = vadd.f32 %v1749, %v1905
        %v1977 = vadd.f32 %v1750, %v1934
        %v1978 = vadd.f32 %v1751, %v1963
        %v1979 = vadd.f32 %v1752, %v1850
        %v1980 = vadd.f32 %v1753, %v1879
        %v1981 = vadd.f32 %v1754, %v1908
        %v1982 = vadd.f32 %v1755, %v1937
        %v1983 = vadd.f32 %v1756, %v1966
        %v1984 = vadd.f32 %v1757, %v1853
        %v1985 = vadd.f32 %v1758, %v1882
        %v1986 = vadd.f32 %v1759, %v1911
        %v1987 = vadd.f32 %v1760, %v1940
        %v1988 = vadd.f32 %v1761, %v1969
        %v1989 = vadd.f32 %v1762, %v1856
        %v1990 = vadd.f32 %v1763, %v1885
        %v1991 = vadd.f32 %v1764, %v1914
        %v1992 = vadd.f32 %v1765, %v1943
        %v1993 = vadd.f32 %v1766, %v1972
        %s1994 = scalar_lea.vmem %s3, 128
        %v1995 = vld [vmem:[%s1994] sm:$0xff]
        %v1996 = vld [vmem:[%s1994 + $0x8] sm:$0xff]
        %v1997 = vld [vmem:[%s1994 + $0x10] sm:$0xff]
        %v1998 = vld [vmem:[%s1994 + $0x18] sm:$0xff]
        %1999 = vrot.lane.b32.xlu0 %v1156, 101
        %v2000 = vpop.permute.xlu0 %1999
        %2001 = vrot.lane.b32.xlu0 %v1157, 101
        %v2002 = vpop.permute.xlu0 %2001
        %2003 = vrot.lane.b32.xlu0 %v1158, 101
        %v2004 = vpop.permute.xlu0 %2003
        %2005 = vrot.lane.b32.xlu0 %v1159, 101
        %v2006 = vpop.permute.xlu0 %2005
        %2007 = vrot.lane.b32.xlu0 %v1160, 101
        %v2008 = vpop.permute.xlu0 %2007
        %2009 = vrot.lane.b32.xlu0 %v1161, 101
        %v2010 = vpop.permute.xlu0 %2009
        %2011 = vrot.lane.b32.xlu0 %v1162, 101
        %v2012 = vpop.permute.xlu0 %2011
        %2013 = vrot.lane.b32.xlu0 %v1163, 101
        %v2014 = vpop.permute.xlu0 %2013
        %2015 = vrot.lane.b32.xlu0 %v1164, 101
        %v2016 = vpop.permute.xlu0 %2015
        %2017 = vrot.lane.b32.xlu0 %v1165, 101
        %v2018 = vpop.permute.xlu0 %2017
        %2019 = vrot.lane.b32.xlu0 %v1166, 101
        %v2020 = vpop.permute.xlu0 %2019
        %2021 = vrot.lane.b32.xlu0 %v1167, 101
        %v2022 = vpop.permute.xlu0 %2021
        %vm2023 = vcmask 826368
        %v2024 = vsel %vm2023, %v2000, %v2002
        %v2025 = vsel %vm2023, %v2002, %v2004
        %v2026 = vsel %vm2023, %v2004, %v2006
        %v2027 = vsel %vm2023, %v2006, %v2008
        %v2028 = vsel %vm2023, %v2008, %v2010
        %v2029 = vsel %vm2023, %v2012, %v2014
        %v2030 = vsel %vm2023, %v2014, %v2016
        %v2031 = vsel %vm2023, %v2016, %v2018
        %v2032 = vsel %vm2023, %v2018, %v2020
        %v2033 = vsel %vm2023, %v2020, %v2022
        %v2045 = vsel %vm1225, %v1995, 0
        %v2048 = vsel %vm1225, %v1996, 0
        %v2051 = vsel %vm1225, %v1997, 0
        %v2054 = vsel %vm1225, %v1998, 0
        %2056 = vmatpush.msra.mxu0 0.0
        %2057 = vmatpush.msra.mxu0 0.0
        %2058 = vmatpush.msra.mxu0 0.0
        %2059 = vmatpush.msra.mxu0 0.0
        %2060 = vmatpush.msra.mxu0 0.0
        %2061 = vmatpush.msra.mxu0 0.0
        %2062 = vmatpush.msra.mxu0 0.0
        %2063 = vmatpush.msra.mxu0 0.0
        %2064 = vmatpush.msra.mxu0 0.0
        %2065 = vmatpush.msra.mxu0 0.0
        %2066 = vmatpush.msra.mxu0 0.0
        %2067 = vmatpush.msra.mxu0 0.0
        %2068 = vmatpush.msra.mxu0 0.0
        %2069 = vmatpush.msra.mxu0 0.0
        %2070 = vmatpush.msra.mxu0 %v2029
        %2071 = vmatpush.msra.mxu0 %v2024
        %2072 = vmatmul.f32.gmra.mxu0 %v2045
        %v2073 = vpop.f32.mrf.mxu0
        %v2074 = vadd.f32 0.0, %v2073
        %2075 = vmatmul.f32.gmra.mxu0 %v2048
        %v2076 = vpop.f32.mrf.mxu0
        %v2077 = vadd.f32 0.0, %v2076
        %2078 = vmatmul.f32.gmra.mxu0 %v2051
        %v2079 = vpop.f32.mrf.mxu0
        %v2080 = vadd.f32 0.0, %v2079
        %2081 = vmatmul.f32.gmra.mxu0 %v2054
        %v2082 = vpop.f32.mrf.mxu0
        %v2083 = vadd.f32 0.0, %v2082
        %2084 = vdwg.mxu0
        %2085 = vmatpush.msra.mxu0 0.0
        %2086 = vmatpush.msra.mxu0 0.0
        %2087 = vmatpush.msra.mxu0 0.0
        %2088 = vmatpush.msra.mxu0 0.0
        %2089 = vmatpush.msra.mxu0 0.0
        %2090 = vmatpush.msra.mxu0 0.0
        %2091 = vmatpush.msra.mxu0 0.0
        %2092 = vmatpush.msra.mxu0 0.0
        %2093 = vmatpush.msra.mxu0 0.0
        %2094 = vmatpush.msra.mxu0 0.0
        %2095 = vmatpush.msra.mxu0 0.0
        %2096 = vmatpush.msra.mxu0 0.0
        %2097 = vmatpush.msra.mxu0 0.0
        %2098 = vmatpush.msra.mxu0 0.0
        %2099 = vmatpush.msra.mxu0 %v2030
        %2100 = vmatpush.msra.mxu0 %v2025
        %2101 = vmatmul.f32.gmra.mxu0 %v2045
        %v2102 = vpop.f32.mrf.mxu0
        %v2103 = vadd.f32 0.0, %v2102
        %2104 = vmatmul.f32.gmra.mxu0 %v2048
        %v2105 = vpop.f32.mrf.mxu0
        %v2106 = vadd.f32 0.0, %v2105
        %2107 = vmatmul.f32.gmra.mxu0 %v2051
        %v2108 = vpop.f32.mrf.mxu0
        %v2109 = vadd.f32 0.0, %v2108
        %2110 = vmatmul.f32.gmra.mxu0 %v2054
        %v2111 = vpop.f32.mrf.mxu0
        %v2112 = vadd.f32 0.0, %v2111
        %2113 = vdwg.mxu0
        %2114 = vmatpush.msra.mxu0 0.0
        %2115 = vmatpush.msra.mxu0 0.0
        %2116 = vmatpush.msra.mxu0 0.0
        %2117 = vmatpush.msra.mxu0 0.0
        %2118 = vmatpush.msra.mxu0 0.0
        %2119 = vmatpush.msra.mxu0 0.0
        %2120 = vmatpush.msra.mxu0 0.0
        %2121 = vmatpush.msra.mxu0 0.0
        %2122 = vmatpush.msra.mxu0 0.0
        %2123 = vmatpush.msra.mxu0 0.0
        %2124 = vmatpush.msra.mxu0 0.0
        %2125 = vmatpush.msra.mxu0 0.0
        %2126 = vmatpush.msra.mxu0 0.0
        %2127 = vmatpush.msra.mxu0 0.0
        %2128 = vmatpush.msra.mxu0 %v2031
        %2129 = vmatpush.msra.mxu0 %v2026
        %2130 = vmatmul.f32.gmra.mxu0 %v2045
        %v2131 = vpop.f32.mrf.mxu0
        %v2132 = vadd.f32 0.0, %v2131
        %2133 = vmatmul.f32.gmra.mxu0 %v2048
        %v2134 = vpop.f32.mrf.mxu0
        %v2135 = vadd.f32 0.0, %v2134
        %2136 = vmatmul.f32.gmra.mxu0 %v2051
        %v2137 = vpop.f32.mrf.mxu0
        %v2138 = vadd.f32 0.0, %v2137
        %2139 = vmatmul.f32.gmra.mxu0 %v2054
        %v2140 = vpop.f32.mrf.mxu0
        %v2141 = vadd.f32 0.0, %v2140
        %2142 = vdwg.mxu0
        %2143 = vmatpush.msra.mxu0 0.0
        %2144 = vmatpush.msra.mxu0 0.0
        %2145 = vmatpush.msra.mxu0 0.0
        %2146 = vmatpush.msra.mxu0 0.0
        %2147 = vmatpush.msra.mxu0 0.0
        %2148 = vmatpush.msra.mxu0 0.0
        %2149 = vmatpush.msra.mxu0 0.0
        %2150 = vmatpush.msra.mxu0 0.0
        %2151 = vmatpush.msra.mxu0 0.0
        %2152 = vmatpush.msra.mxu0 0.0
        %2153 = vmatpush.msra.mxu0 0.0
        %2154 = vmatpush.msra.mxu0 0.0
        %2155 = vmatpush.msra.mxu0 0.0
        %2156 = vmatpush.msra.mxu0 0.0
        %2157 = vmatpush.msra.mxu0 %v2032
        %2158 = vmatpush.msra.mxu0 %v2027
        %2159 = vmatmul.f32.gmra.mxu0 %v2045
        %v2160 = vpop.f32.mrf.mxu0
        %v2161 = vadd.f32 0.0, %v2160
        %2162 = vmatmul.f32.gmra.mxu0 %v2048
        %v2163 = vpop.f32.mrf.mxu0
        %v2164 = vadd.f32 0.0, %v2163
        %2165 = vmatmul.f32.gmra.mxu0 %v2051
        %v2166 = vpop.f32.mrf.mxu0
        %v2167 = vadd.f32 0.0, %v2166
        %2168 = vmatmul.f32.gmra.mxu0 %v2054
        %v2169 = vpop.f32.mrf.mxu0
        %v2170 = vadd.f32 0.0, %v2169
        %2171 = vdwg.mxu0
        %2172 = vmatpush.msra.mxu0 0.0
        %2173 = vmatpush.msra.mxu0 0.0
        %2174 = vmatpush.msra.mxu0 0.0
        %2175 = vmatpush.msra.mxu0 0.0
        %2176 = vmatpush.msra.mxu0 0.0
        %2177 = vmatpush.msra.mxu0 0.0
        %2178 = vmatpush.msra.mxu0 0.0
        %2179 = vmatpush.msra.mxu0 0.0
        %2180 = vmatpush.msra.mxu0 0.0
        %2181 = vmatpush.msra.mxu0 0.0
        %2182 = vmatpush.msra.mxu0 0.0
        %2183 = vmatpush.msra.mxu0 0.0
        %2184 = vmatpush.msra.mxu0 0.0
        %2185 = vmatpush.msra.mxu0 0.0
        %2186 = vmatpush.msra.mxu0 %v2033
        %2187 = vmatpush.msra.mxu0 %v2028
        %2188 = vmatmul.f32.gmra.mxu0 %v2045
        %v2189 = vpop.f32.mrf.mxu0
        %v2190 = vadd.f32 0.0, %v2189
        %2191 = vmatmul.f32.gmra.mxu0 %v2048
        %v2192 = vpop.f32.mrf.mxu0
        %v2193 = vadd.f32 0.0, %v2192
        %2194 = vmatmul.f32.gmra.mxu0 %v2051
        %v2195 = vpop.f32.mrf.mxu0
        %v2196 = vadd.f32 0.0, %v2195
        %2197 = vmatmul.f32.gmra.mxu0 %v2054
        %v2198 = vpop.f32.mrf.mxu0
        %v2199 = vadd.f32 0.0, %v2198
        %2200 = vdwg.mxu0
        %v2201 = vadd.f32 %v1974, %v2074
        %v2202 = vadd.f32 %v1975, %v2103
        %v2203 = vadd.f32 %v1976, %v2132
        %v2204 = vadd.f32 %v1977, %v2161
        %v2205 = vadd.f32 %v1978, %v2190
        %v2206 = vadd.f32 %v1979, %v2077
        %v2207 = vadd.f32 %v1980, %v2106
        %v2208 = vadd.f32 %v1981, %v2135
        %v2209 = vadd.f32 %v1982, %v2164
        %v2210 = vadd.f32 %v1983, %v2193
        %v2211 = vadd.f32 %v1984, %v2080
        %v2212 = vadd.f32 %v1985, %v2109
        %v2213 = vadd.f32 %v1986, %v2138
        %v2214 = vadd.f32 %v1987, %v2167
        %v2215 = vadd.f32 %v1988, %v2196
        %v2216 = vadd.f32 %v1989, %v2083
        %v2217 = vadd.f32 %v1990, %v2112
        %v2218 = vadd.f32 %v1991, %v2141
        %v2219 = vadd.f32 %v1992, %v2170
        %v2220 = vadd.f32 %v1993, %v2199
        %s2221 = scalar_lea.vmem %s3, 160
        %v2222 = vld [vmem:[%s2221] sm:$0xff]
        %v2223 = vld [vmem:[%s2221 + $0x8] sm:$0xff]
        %v2224 = vld [vmem:[%s2221 + $0x10] sm:$0xff]
        %v2225 = vld [vmem:[%s2221 + $0x18] sm:$0xff]
        %2226 = vrot.lane.b32.xlu0 %v1156, 100
        %v2227 = vpop.permute.xlu0 %2226
        %2228 = vrot.lane.b32.xlu0 %v1157, 100
        %v2229 = vpop.permute.xlu0 %2228
        %2230 = vrot.lane.b32.xlu0 %v1158, 100
        %v2231 = vpop.permute.xlu0 %2230
        %2232 = vrot.lane.b32.xlu0 %v1159, 100
        %v2233 = vpop.permute.xlu0 %2232
        %2234 = vrot.lane.b32.xlu0 %v1160, 100
        %v2235 = vpop.permute.xlu0 %2234
        %2236 = vrot.lane.b32.xlu0 %v1161, 100
        %v2237 = vpop.permute.xlu0 %2236
        %2238 = vrot.lane.b32.xlu0 %v1162, 100
        %v2239 = vpop.permute.xlu0 %2238
        %2240 = vrot.lane.b32.xlu0 %v1163, 100
        %v2241 = vpop.permute.xlu0 %2240
        %2242 = vrot.lane.b32.xlu0 %v1164, 100
        %v2243 = vpop.permute.xlu0 %2242
        %2244 = vrot.lane.b32.xlu0 %v1165, 100
        %v2245 = vpop.permute.xlu0 %2244
        %2246 = vrot.lane.b32.xlu0 %v1166, 100
        %v2247 = vpop.permute.xlu0 %2246
        %2248 = vrot.lane.b32.xlu0 %v1167, 100
        %v2249 = vpop.permute.xlu0 %2248
        %vm2250 = vcmask 818176
        %v2251 = vsel %vm2250, %v2227, %v2229
        %v2252 = vsel %vm2250, %v2229, %v2231
        %v2253 = vsel %vm2250, %v2231, %v2233
        %v2254 = vsel %vm2250, %v2233, %v2235
        %v2255 = vsel %vm2250, %v2235, %v2237
        %v2256 = vsel %vm2250, %v2239, %v2241
        %v2257 = vsel %vm2250, %v2241, %v2243
        %v2258 = vsel %vm2250, %v2243, %v2245
        %v2259 = vsel %vm2250, %v2245, %v2247
        %v2260 = vsel %vm2250, %v2247, %v2249
        %v2272 = vsel %vm1225, %v2222, 0
        %v2275 = vsel %vm1225, %v2223, 0
        %v2278 = vsel %vm1225, %v2224, 0
        %v2281 = vsel %vm1225, %v2225, 0
        %2283 = vmatpush.msra.mxu0 0.0
        %2284 = vmatpush.msra.mxu0 0.0
        %2285 = vmatpush.msra.mxu0 0.0
        %2286 = vmatpush.msra.mxu0 0.0
        %2287 = vmatpush.msra.mxu0 0.0
        %2288 = vmatpush.msra.mxu0 0.0
        %2289 = vmatpush.msra.mxu0 0.0
        %2290 = vmatpush.msra.mxu0 0.0
        %2291 = vmatpush.msra.mxu0 0.0
        %2292 = vmatpush.msra.mxu0 0.0
        %2293 = vmatpush.msra.mxu0 0.0
        %2294 = vmatpush.msra.mxu0 0.0
        %2295 = vmatpush.msra.mxu0 0.0
        %2296 = vmatpush.msra.mxu0 0.0
        %2297 = vmatpush.msra.mxu0 %v2256
        %2298 = vmatpush.msra.mxu0 %v2251
        %2299 = vmatmul.f32.gmra.mxu0 %v2272
        %v2300 = vpop.f32.mrf.mxu0
        %v2301 = vadd.f32 0.0, %v2300
        %2302 = vmatmul.f32.gmra.mxu0 %v2275
        %v2303 = vpop.f32.mrf.mxu0
        %v2304 = vadd.f32 0.0, %v2303
        %2305 = vmatmul.f32.gmra.mxu0 %v2278
        %v2306 = vpop.f32.mrf.mxu0
        %v2307 = vadd.f32 0.0, %v2306
        %2308 = vmatmul.f32.gmra.mxu0 %v2281
        %v2309 = vpop.f32.mrf.mxu0
        %v2310 = vadd.f32 0.0, %v2309
        %2311 = vdwg.mxu0
        %2312 = vmatpush.msra.mxu0 0.0
        %2313 = vmatpush.msra.mxu0 0.0
        %2314 = vmatpush.msra.mxu0 0.0
        %2315 = vmatpush.msra.mxu0 0.0
        %2316 = vmatpush.msra.mxu0 0.0
        %2317 = vmatpush.msra.mxu0 0.0
        %2318 = vmatpush.msra.mxu0 0.0
        %2319 = vmatpush.msra.mxu0 0.0
        %2320 = vmatpush.msra.mxu0 0.0
        %2321 = vmatpush.msra.mxu0 0.0
        %2322 = vmatpush.msra.mxu0 0.0
        %2323 = vmatpush.msra.mxu0 0.0
        %2324 = vmatpush.msra.mxu0 0.0
        %2325 = vmatpush.msra.mxu0 0.0
        %2326 = vmatpush.msra.mxu0 %v2257
        %2327 = vmatpush.msra.mxu0 %v2252
        %2328 = vmatmul.f32.gmra.mxu0 %v2272
        %v2329 = vpop.f32.mrf.mxu0
        %v2330 = vadd.f32 0.0, %v2329
        %2331 = vmatmul.f32.gmra.mxu0 %v2275
        %v2332 = vpop.f32.mrf.mxu0
        %v2333 = vadd.f32 0.0, %v2332
        %2334 = vmatmul.f32.gmra.mxu0 %v2278
        %v2335 = vpop.f32.mrf.mxu0
        %v2336 = vadd.f32 0.0, %v2335
        %2337 = vmatmul.f32.gmra.mxu0 %v2281
        %v2338 = vpop.f32.mrf.mxu0
        %v2339 = vadd.f32 0.0, %v2338
        %2340 = vdwg.mxu0
        %2341 = vmatpush.msra.mxu0 0.0
        %2342 = vmatpush.msra.mxu0 0.0
        %2343 = vmatpush.msra.mxu0 0.0
        %2344 = vmatpush.msra.mxu0 0.0
        %2345 = vmatpush.msra.mxu0 0.0
        %2346 = vmatpush.msra.mxu0 0.0
        %2347 = vmatpush.msra.mxu0 0.0
        %2348 = vmatpush.msra.mxu0 0.0
        %2349 = vmatpush.msra.mxu0 0.0
        %2350 = vmatpush.msra.mxu0 0.0
        %2351 = vmatpush.msra.mxu0 0.0
        %2352 = vmatpush.msra.mxu0 0.0
        %2353 = vmatpush.msra.mxu0 0.0
        %2354 = vmatpush.msra.mxu0 0.0
        %2355 = vmatpush.msra.mxu0 %v2258
        %2356 = vmatpush.msra.mxu0 %v2253
        %2357 = vmatmul.f32.gmra.mxu0 %v2272
        %v2358 = vpop.f32.mrf.mxu0
        %v2359 = vadd.f32 0.0, %v2358
        %2360 = vmatmul.f32.gmra.mxu0 %v2275
        %v2361 = vpop.f32.mrf.mxu0
        %v2362 = vadd.f32 0.0, %v2361
        %2363 = vmatmul.f32.gmra.mxu0 %v2278
        %v2364 = vpop.f32.mrf.mxu0
        %v2365 = vadd.f32 0.0, %v2364
        %2366 = vmatmul.f32.gmra.mxu0 %v2281
        %v2367 = vpop.f32.mrf.mxu0
        %v2368 = vadd.f32 0.0, %v2367
        %2369 = vdwg.mxu0
        %2370 = vmatpush.msra.mxu0 0.0
        %2371 = vmatpush.msra.mxu0 0.0
        %2372 = vmatpush.msra.mxu0 0.0
        %2373 = vmatpush.msra.mxu0 0.0
        %2374 = vmatpush.msra.mxu0 0.0
        %2375 = vmatpush.msra.mxu0 0.0
        %2376 = vmatpush.msra.mxu0 0.0
        %2377 = vmatpush.msra.mxu0 0.0
        %2378 = vmatpush.msra.mxu0 0.0
        %2379 = vmatpush.msra.mxu0 0.0
        %2380 = vmatpush.msra.mxu0 0.0
        %2381 = vmatpush.msra.mxu0 0.0
        %2382 = vmatpush.msra.mxu0 0.0
        %2383 = vmatpush.msra.mxu0 0.0
        %2384 = vmatpush.msra.mxu0 %v2259
        %2385 = vmatpush.msra.mxu0 %v2254
        %2386 = vmatmul.f32.gmra.mxu0 %v2272
        %v2387 = vpop.f32.mrf.mxu0
        %v2388 = vadd.f32 0.0, %v2387
        %2389 = vmatmul.f32.gmra.mxu0 %v2275
        %v2390 = vpop.f32.mrf.mxu0
        %v2391 = vadd.f32 0.0, %v2390
        %2392 = vmatmul.f32.gmra.mxu0 %v2278
        %v2393 = vpop.f32.mrf.mxu0
        %v2394 = vadd.f32 0.0, %v2393
        %2395 = vmatmul.f32.gmra.mxu0 %v2281
        %v2396 = vpop.f32.mrf.mxu0
        %v2397 = vadd.f32 0.0, %v2396
        %2398 = vdwg.mxu0
        %2399 = vmatpush.msra.mxu0 0.0
        %2400 = vmatpush.msra.mxu0 0.0
        %2401 = vmatpush.msra.mxu0 0.0
        %2402 = vmatpush.msra.mxu0 0.0
        %2403 = vmatpush.msra.mxu0 0.0
        %2404 = vmatpush.msra.mxu0 0.0
        %2405 = vmatpush.msra.mxu0 0.0
        %2406 = vmatpush.msra.mxu0 0.0
        %2407 = vmatpush.msra.mxu0 0.0
        %2408 = vmatpush.msra.mxu0 0.0
        %2409 = vmatpush.msra.mxu0 0.0
        %2410 = vmatpush.msra.mxu0 0.0
        %2411 = vmatpush.msra.mxu0 0.0
        %2412 = vmatpush.msra.mxu0 0.0
        %2413 = vmatpush.msra.mxu0 %v2260
        %2414 = vmatpush.msra.mxu0 %v2255
        %2415 = vmatmul.f32.gmra.mxu0 %v2272
        %v2416 = vpop.f32.mrf.mxu0
        %v2417 = vadd.f32 0.0, %v2416
        %2418 = vmatmul.f32.gmra.mxu0 %v2275
        %v2419 = vpop.f32.mrf.mxu0
        %v2420 = vadd.f32 0.0, %v2419
        %2421 = vmatmul.f32.gmra.mxu0 %v2278
        %v2422 = vpop.f32.mrf.mxu0
        %v2423 = vadd.f32 0.0, %v2422
        %2424 = vmatmul.f32.gmra.mxu0 %v2281
        %v2425 = vpop.f32.mrf.mxu0
        %v2426 = vadd.f32 0.0, %v2425
        %2427 = vdwg.mxu0
        %v2428 = vadd.f32 %v2201, %v2301
        %v2429 = vadd.f32 %v2202, %v2330
        %v2430 = vadd.f32 %v2203, %v2359
        %v2431 = vadd.f32 %v2204, %v2388
        %v2432 = vadd.f32 %v2205, %v2417
        %v2433 = vadd.f32 %v2206, %v2304
        %v2434 = vadd.f32 %v2207, %v2333
        %v2435 = vadd.f32 %v2208, %v2362
        %v2436 = vadd.f32 %v2209, %v2391
        %v2437 = vadd.f32 %v2210, %v2420
        %v2438 = vadd.f32 %v2211, %v2307
        %v2439 = vadd.f32 %v2212, %v2336
        %v2440 = vadd.f32 %v2213, %v2365
        %v2441 = vadd.f32 %v2214, %v2394
        %v2442 = vadd.f32 %v2215, %v2423
        %v2443 = vadd.f32 %v2216, %v2310
        %v2444 = vadd.f32 %v2217, %v2339
        %v2445 = vadd.f32 %v2218, %v2368
        %v2446 = vadd.f32 %v2219, %v2397
        %v2447 = vadd.f32 %v2220, %v2426
        %s2448 = scalar_lea.vmem %s3, 192
        %v2449 = vld [vmem:[%s2448] sm:$0xff]
        %v2450 = vld [vmem:[%s2448 + $0x8] sm:$0xff]
        %v2451 = vld [vmem:[%s2448 + $0x10] sm:$0xff]
        %v2452 = vld [vmem:[%s2448 + $0x18] sm:$0xff]
        %2453 = vrot.lane.b32.xlu0 %v1156, 76
        %v2454 = vpop.permute.xlu0 %2453
        %2455 = vrot.lane.b32.xlu0 %v1157, 76
        %v2456 = vpop.permute.xlu0 %2455
        %2457 = vrot.lane.b32.xlu0 %v1158, 76
        %v2458 = vpop.permute.xlu0 %2457
        %2459 = vrot.lane.b32.xlu0 %v1159, 76
        %v2460 = vpop.permute.xlu0 %2459
        %2461 = vrot.lane.b32.xlu0 %v1160, 76
        %v2462 = vpop.permute.xlu0 %2461
        %2463 = vrot.lane.b32.xlu0 %v1161, 76
        %v2464 = vpop.permute.xlu0 %2463
        %2465 = vrot.lane.b32.xlu0 %v1162, 76
        %v2466 = vpop.permute.xlu0 %2465
        %2467 = vrot.lane.b32.xlu0 %v1163, 76
        %v2468 = vpop.permute.xlu0 %2467
        %2469 = vrot.lane.b32.xlu0 %v1164, 76
        %v2470 = vpop.permute.xlu0 %2469
        %2471 = vrot.lane.b32.xlu0 %v1165, 76
        %v2472 = vpop.permute.xlu0 %2471
        %2473 = vrot.lane.b32.xlu0 %v1166, 76
        %v2474 = vpop.permute.xlu0 %2473
        %2475 = vrot.lane.b32.xlu0 %v1167, 76
        %v2476 = vpop.permute.xlu0 %2475
        %vm2477 = vcmask 621568
        %v2478 = vsel %vm2477, %v2454, %v2456
        %v2479 = vsel %vm2477, %v2456, %v2458
        %v2480 = vsel %vm2477, %v2458, %v2460
        %v2481 = vsel %vm2477, %v2460, %v2462
        %v2482 = vsel %vm2477, %v2462, %v2464
        %v2483 = vsel %vm2477, %v2466, %v2468
        %v2484 = vsel %vm2477, %v2468, %v2470
        %v2485 = vsel %vm2477, %v2470, %v2472
        %v2486 = vsel %vm2477, %v2472, %v2474
        %v2487 = vsel %vm2477, %v2474, %v2476
        %v2499 = vsel %vm1225, %v2449, 0
        %v2502 = vsel %vm1225, %v2450, 0
        %v2505 = vsel %vm1225, %v2451, 0
        %v2508 = vsel %vm1225, %v2452, 0
        %2510 = vmatpush.msra.mxu0 0.0
        %2511 = vmatpush.msra.mxu0 0.0
        %2512 = vmatpush.msra.mxu0 0.0
        %2513 = vmatpush.msra.mxu0 0.0
        %2514 = vmatpush.msra.mxu0 0.0
        %2515 = vmatpush.msra.mxu0 0.0
        %2516 = vmatpush.msra.mxu0 0.0
        %2517 = vmatpush.msra.mxu0 0.0
        %2518 = vmatpush.msra.mxu0 0.0
        %2519 = vmatpush.msra.mxu0 0.0
        %2520 = vmatpush.msra.mxu0 0.0
        %2521 = vmatpush.msra.mxu0 0.0
        %2522 = vmatpush.msra.mxu0 0.0
        %2523 = vmatpush.msra.mxu0 0.0
        %2524 = vmatpush.msra.mxu0 %v2483
        %2525 = vmatpush.msra.mxu0 %v2478
        %2526 = vmatmul.f32.gmra.mxu0 %v2499
        %v2527 = vpop.f32.mrf.mxu0
        %v2528 = vadd.f32 0.0, %v2527
        %2529 = vmatmul.f32.gmra.mxu0 %v2502
        %v2530 = vpop.f32.mrf.mxu0
        %v2531 = vadd.f32 0.0, %v2530
        %2532 = vmatmul.f32.gmra.mxu0 %v2505
        %v2533 = vpop.f32.mrf.mxu0
        %v2534 = vadd.f32 0.0, %v2533
        %2535 = vmatmul.f32.gmra.mxu0 %v2508
        %v2536 = vpop.f32.mrf.mxu0
        %v2537 = vadd.f32 0.0, %v2536
        %2538 = vdwg.mxu0
        %2539 = vmatpush.msra.mxu0 0.0
        %2540 = vmatpush.msra.mxu0 0.0
        %2541 = vmatpush.msra.mxu0 0.0
        %2542 = vmatpush.msra.mxu0 0.0
        %2543 = vmatpush.msra.mxu0 0.0
        %2544 = vmatpush.msra.mxu0 0.0
        %2545 = vmatpush.msra.mxu0 0.0
        %2546 = vmatpush.msra.mxu0 0.0
        %2547 = vmatpush.msra.mxu0 0.0
        %2548 = vmatpush.msra.mxu0 0.0
        %2549 = vmatpush.msra.mxu0 0.0
        %2550 = vmatpush.msra.mxu0 0.0
        %2551 = vmatpush.msra.mxu0 0.0
        %2552 = vmatpush.msra.mxu0 0.0
        %2553 = vmatpush.msra.mxu0 %v2484
        %2554 = vmatpush.msra.mxu0 %v2479
        %2555 = vmatmul.f32.gmra.mxu0 %v2499
        %v2556 = vpop.f32.mrf.mxu0
        %v2557 = vadd.f32 0.0, %v2556
        %2558 = vmatmul.f32.gmra.mxu0 %v2502
        %v2559 = vpop.f32.mrf.mxu0
        %v2560 = vadd.f32 0.0, %v2559
        %2561 = vmatmul.f32.gmra.mxu0 %v2505
        %v2562 = vpop.f32.mrf.mxu0
        %v2563 = vadd.f32 0.0, %v2562
        %2564 = vmatmul.f32.gmra.mxu0 %v2508
        %v2565 = vpop.f32.mrf.mxu0
        %v2566 = vadd.f32 0.0, %v2565
        %2567 = vdwg.mxu0
        %2568 = vmatpush.msra.mxu0 0.0
        %2569 = vmatpush.msra.mxu0 0.0
        %2570 = vmatpush.msra.mxu0 0.0
        %2571 = vmatpush.msra.mxu0 0.0
        %2572 = vmatpush.msra.mxu0 0.0
        %2573 = vmatpush.msra.mxu0 0.0
        %2574 = vmatpush.msra.mxu0 0.0
        %2575 = vmatpush.msra.mxu0 0.0
        %2576 = vmatpush.msra.mxu0 0.0
        %2577 = vmatpush.msra.mxu0 0.0
        %2578 = vmatpush.msra.mxu0 0.0
        %2579 = vmatpush.msra.mxu0 0.0
        %2580 = vmatpush.msra.mxu0 0.0
        %2581 = vmatpush.msra.mxu0 0.0
        %2582 = vmatpush.msra.mxu0 %v2485
        %2583 = vmatpush.msra.mxu0 %v2480
        %2584 = vmatmul.f32.gmra.mxu0 %v2499
        %v2585 = vpop.f32.mrf.mxu0
        %v2586 = vadd.f32 0.0, %v2585
        %2587 = vmatmul.f32.gmra.mxu0 %v2502
        %v2588 = vpop.f32.mrf.mxu0
        %v2589 = vadd.f32 0.0, %v2588
        %2590 = vmatmul.f32.gmra.mxu0 %v2505
        %v2591 = vpop.f32.mrf.mxu0
        %v2592 = vadd.f32 0.0, %v2591
        %2593 = vmatmul.f32.gmra.mxu0 %v2508
        %v2594 = vpop.f32.mrf.mxu0
        %v2595 = vadd.f32 0.0, %v2594
        %2596 = vdwg.mxu0
        %2597 = vmatpush.msra.mxu0 0.0
        %2598 = vmatpush.msra.mxu0 0.0
        %2599 = vmatpush.msra.mxu0 0.0
        %2600 = vmatpush.msra.mxu0 0.0
        %2601 = vmatpush.msra.mxu0 0.0
        %2602 = vmatpush.msra.mxu0 0.0
        %2603 = vmatpush.msra.mxu0 0.0
        %2604 = vmatpush.msra.mxu0 0.0
        %2605 = vmatpush.msra.mxu0 0.0
        %2606 = vmatpush.msra.mxu0 0.0
        %2607 = vmatpush.msra.mxu0 0.0
        %2608 = vmatpush.msra.mxu0 0.0
        %2609 = vmatpush.msra.mxu0 0.0
        %2610 = vmatpush.msra.mxu0 0.0
        %2611 = vmatpush.msra.mxu0 %v2486
        %2612 = vmatpush.msra.mxu0 %v2481
        %2613 = vmatmul.f32.gmra.mxu0 %v2499
        %v2614 = vpop.f32.mrf.mxu0
        %v2615 = vadd.f32 0.0, %v2614
        %2616 = vmatmul.f32.gmra.mxu0 %v2502
        %v2617 = vpop.f32.mrf.mxu0
        %v2618 = vadd.f32 0.0, %v2617
        %2619 = vmatmul.f32.gmra.mxu0 %v2505
        %v2620 = vpop.f32.mrf.mxu0
        %v2621 = vadd.f32 0.0, %v2620
        %2622 = vmatmul.f32.gmra.mxu0 %v2508
        %v2623 = vpop.f32.mrf.mxu0
        %v2624 = vadd.f32 0.0, %v2623
        %2625 = vdwg.mxu0
        %2626 = vmatpush.msra.mxu0 0.0
        %2627 = vmatpush.msra.mxu0 0.0
        %2628 = vmatpush.msra.mxu0 0.0
        %2629 = vmatpush.msra.mxu0 0.0
        %2630 = vmatpush.msra.mxu0 0.0
        %2631 = vmatpush.msra.mxu0 0.0
        %2632 = vmatpush.msra.mxu0 0.0
        %2633 = vmatpush.msra.mxu0 0.0
        %2634 = vmatpush.msra.mxu0 0.0
        %2635 = vmatpush.msra.mxu0 0.0
        %2636 = vmatpush.msra.mxu0 0.0
        %2637 = vmatpush.msra.mxu0 0.0
        %2638 = vmatpush.msra.mxu0 0.0
        %2639 = vmatpush.msra.mxu0 0.0
        %2640 = vmatpush.msra.mxu0 %v2487
        %2641 = vmatpush.msra.mxu0 %v2482
        %2642 = vmatmul.f32.gmra.mxu0 %v2499
        %v2643 = vpop.f32.mrf.mxu0
        %v2644 = vadd.f32 0.0, %v2643
        %2645 = vmatmul.f32.gmra.mxu0 %v2502
        %v2646 = vpop.f32.mrf.mxu0
        %v2647 = vadd.f32 0.0, %v2646
        %2648 = vmatmul.f32.gmra.mxu0 %v2505
        %v2649 = vpop.f32.mrf.mxu0
        %v2650 = vadd.f32 0.0, %v2649
        %2651 = vmatmul.f32.gmra.mxu0 %v2508
        %v2652 = vpop.f32.mrf.mxu0
        %v2653 = vadd.f32 0.0, %v2652
        %2654 = vdwg.mxu0
        %v2655 = vadd.f32 %v2428, %v2528
        %v2656 = vadd.f32 %v2429, %v2557
        %v2657 = vadd.f32 %v2430, %v2586
        %v2658 = vadd.f32 %v2431, %v2615
        %v2659 = vadd.f32 %v2432, %v2644
        %v2660 = vadd.f32 %v2433, %v2531
        %v2661 = vadd.f32 %v2434, %v2560
        %v2662 = vadd.f32 %v2435, %v2589
        %v2663 = vadd.f32 %v2436, %v2618
        %v2664 = vadd.f32 %v2437, %v2647
        %v2665 = vadd.f32 %v2438, %v2534
        %v2666 = vadd.f32 %v2439, %v2563
        %v2667 = vadd.f32 %v2440, %v2592
        %v2668 = vadd.f32 %v2441, %v2621
        %v2669 = vadd.f32 %v2442, %v2650
        %v2670 = vadd.f32 %v2443, %v2537
        %v2671 = vadd.f32 %v2444, %v2566
        %v2672 = vadd.f32 %v2445, %v2595
        %v2673 = vadd.f32 %v2446, %v2624
        %v2674 = vadd.f32 %v2447, %v2653
        %s2675 = scalar_lea.vmem %s3, 224
        %v2676 = vld [vmem:[%s2675] sm:$0xff]
        %v2677 = vld [vmem:[%s2675 + $0x8] sm:$0xff]
        %v2678 = vld [vmem:[%s2675 + $0x10] sm:$0xff]
        %v2679 = vld [vmem:[%s2675 + $0x18] sm:$0xff]
        %2680 = vrot.lane.b32.xlu0 %v1156, 75
        %v2681 = vpop.permute.xlu0 %2680
        %2682 = vrot.lane.b32.xlu0 %v1157, 75
        %v2683 = vpop.permute.xlu0 %2682
        %2684 = vrot.lane.b32.xlu0 %v1158, 75
        %v2685 = vpop.permute.xlu0 %2684
        %2686 = vrot.lane.b32.xlu0 %v1159, 75
        %v2687 = vpop.permute.xlu0 %2686
        %2688 = vrot.lane.b32.xlu0 %v1160, 75
        %v2689 = vpop.permute.xlu0 %2688
        %2690 = vrot.lane.b32.xlu0 %v1161, 75
        %v2691 = vpop.permute.xlu0 %2690
        %2692 = vrot.lane.b32.xlu0 %v1162, 75
        %v2693 = vpop.permute.xlu0 %2692
        %2694 = vrot.lane.b32.xlu0 %v1163, 75
        %v2695 = vpop.permute.xlu0 %2694
        %2696 = vrot.lane.b32.xlu0 %v1164, 75
        %v2697 = vpop.permute.xlu0 %2696
        %2698 = vrot.lane.b32.xlu0 %v1165, 75
        %v2699 = vpop.permute.xlu0 %2698
        %2700 = vrot.lane.b32.xlu0 %v1166, 75
        %v2701 = vpop.permute.xlu0 %2700
        %2702 = vrot.lane.b32.xlu0 %v1167, 75
        %v2703 = vpop.permute.xlu0 %2702
        %vm2704 = vcmask 613376
        %v2705 = vsel %vm2704, %v2681, %v2683
        %v2706 = vsel %vm2704, %v2683, %v2685
        %v2707 = vsel %vm2704, %v2685, %v2687
        %v2708 = vsel %vm2704, %v2687, %v2689
        %v2709 = vsel %vm2704, %v2689, %v2691
        %v2710 = vsel %vm2704, %v2693, %v2695
        %v2711 = vsel %vm2704, %v2695, %v2697
        %v2712 = vsel %vm2704, %v2697, %v2699
        %v2713 = vsel %vm2704, %v2699, %v2701
        %v2714 = vsel %vm2704, %v2701, %v2703
        %v2726 = vsel %vm1225, %v2676, 0
        %v2729 = vsel %vm1225, %v2677, 0
        %v2732 = vsel %vm1225, %v2678, 0
        %v2735 = vsel %vm1225, %v2679, 0
        %2737 = vmatpush.msra.mxu0 0.0
        %2738 = vmatpush.msra.mxu0 0.0
        %2739 = vmatpush.msra.mxu0 0.0
        %2740 = vmatpush.msra.mxu0 0.0
        %2741 = vmatpush.msra.mxu0 0.0
        %2742 = vmatpush.msra.mxu0 0.0
        %2743 = vmatpush.msra.mxu0 0.0
        %2744 = vmatpush.msra.mxu0 0.0
        %2745 = vmatpush.msra.mxu0 0.0
        %2746 = vmatpush.msra.mxu0 0.0
        %2747 = vmatpush.msra.mxu0 0.0
        %2748 = vmatpush.msra.mxu0 0.0
        %2749 = vmatpush.msra.mxu0 0.0
        %2750 = vmatpush.msra.mxu0 0.0
        %2751 = vmatpush.msra.mxu0 %v2710
        %2752 = vmatpush.msra.mxu0 %v2705
        %2753 = vmatmul.f32.gmra.mxu0 %v2726
        %v2754 = vpop.f32.mrf.mxu0
        %v2755 = vadd.f32 0.0, %v2754
        %2756 = vmatmul.f32.gmra.mxu0 %v2729
        %v2757 = vpop.f32.mrf.mxu0
        %v2758 = vadd.f32 0.0, %v2757
        %2759 = vmatmul.f32.gmra.mxu0 %v2732
        %v2760 = vpop.f32.mrf.mxu0
        %v2761 = vadd.f32 0.0, %v2760
        %2762 = vmatmul.f32.gmra.mxu0 %v2735
        %v2763 = vpop.f32.mrf.mxu0
        %v2764 = vadd.f32 0.0, %v2763
        %2765 = vdwg.mxu0
        %2766 = vmatpush.msra.mxu0 0.0
        %2767 = vmatpush.msra.mxu0 0.0
        %2768 = vmatpush.msra.mxu0 0.0
        %2769 = vmatpush.msra.mxu0 0.0
        %2770 = vmatpush.msra.mxu0 0.0
        %2771 = vmatpush.msra.mxu0 0.0
        %2772 = vmatpush.msra.mxu0 0.0
        %2773 = vmatpush.msra.mxu0 0.0
        %2774 = vmatpush.msra.mxu0 0.0
        %2775 = vmatpush.msra.mxu0 0.0
        %2776 = vmatpush.msra.mxu0 0.0
        %2777 = vmatpush.msra.mxu0 0.0
        %2778 = vmatpush.msra.mxu0 0.0
        %2779 = vmatpush.msra.mxu0 0.0
        %2780 = vmatpush.msra.mxu0 %v2711
        %2781 = vmatpush.msra.mxu0 %v2706
        %2782 = vmatmul.f32.gmra.mxu0 %v2726
        %v2783 = vpop.f32.mrf.mxu0
        %v2784 = vadd.f32 0.0, %v2783
        %2785 = vmatmul.f32.gmra.mxu0 %v2729
        %v2786 = vpop.f32.mrf.mxu0
        %v2787 = vadd.f32 0.0, %v2786
        %2788 = vmatmul.f32.gmra.mxu0 %v2732
        %v2789 = vpop.f32.mrf.mxu0
        %v2790 = vadd.f32 0.0, %v2789
        %2791 = vmatmul.f32.gmra.mxu0 %v2735
        %v2792 = vpop.f32.mrf.mxu0
        %v2793 = vadd.f32 0.0, %v2792
        %2794 = vdwg.mxu0
        %2795 = vmatpush.msra.mxu0 0.0
        %2796 = vmatpush.msra.mxu0 0.0
        %2797 = vmatpush.msra.mxu0 0.0
        %2798 = vmatpush.msra.mxu0 0.0
        %2799 = vmatpush.msra.mxu0 0.0
        %2800 = vmatpush.msra.mxu0 0.0
        %2801 = vmatpush.msra.mxu0 0.0
        %2802 = vmatpush.msra.mxu0 0.0
        %2803 = vmatpush.msra.mxu0 0.0
        %2804 = vmatpush.msra.mxu0 0.0
        %2805 = vmatpush.msra.mxu0 0.0
        %2806 = vmatpush.msra.mxu0 0.0
        %2807 = vmatpush.msra.mxu0 0.0
        %2808 = vmatpush.msra.mxu0 0.0
        %2809 = vmatpush.msra.mxu0 %v2712
        %2810 = vmatpush.msra.mxu0 %v2707
        %2811 = vmatmul.f32.gmra.mxu0 %v2726
        %v2812 = vpop.f32.mrf.mxu0
        %v2813 = vadd.f32 0.0, %v2812
        %2814 = vmatmul.f32.gmra.mxu0 %v2729
        %v2815 = vpop.f32.mrf.mxu0
        %v2816 = vadd.f32 0.0, %v2815
        %2817 = vmatmul.f32.gmra.mxu0 %v2732
        %v2818 = vpop.f32.mrf.mxu0
        %v2819 = vadd.f32 0.0, %v2818
        %2820 = vmatmul.f32.gmra.mxu0 %v2735
        %v2821 = vpop.f32.mrf.mxu0
        %v2822 = vadd.f32 0.0, %v2821
        %2823 = vdwg.mxu0
        %2824 = vmatpush.msra.mxu0 0.0
        %2825 = vmatpush.msra.mxu0 0.0
        %2826 = vmatpush.msra.mxu0 0.0
        %2827 = vmatpush.msra.mxu0 0.0
        %2828 = vmatpush.msra.mxu0 0.0
        %2829 = vmatpush.msra.mxu0 0.0
        %2830 = vmatpush.msra.mxu0 0.0
        %2831 = vmatpush.msra.mxu0 0.0
        %2832 = vmatpush.msra.mxu0 0.0
        %2833 = vmatpush.msra.mxu0 0.0
        %2834 = vmatpush.msra.mxu0 0.0
        %2835 = vmatpush.msra.mxu0 0.0
        %2836 = vmatpush.msra.mxu0 0.0
        %2837 = vmatpush.msra.mxu0 0.0
        %2838 = vmatpush.msra.mxu0 %v2713
        %2839 = vmatpush.msra.mxu0 %v2708
        %2840 = vmatmul.f32.gmra.mxu0 %v2726
        %v2841 = vpop.f32.mrf.mxu0
        %v2842 = vadd.f32 0.0, %v2841
        %2843 = vmatmul.f32.gmra.mxu0 %v2729
        %v2844 = vpop.f32.mrf.mxu0
        %v2845 = vadd.f32 0.0, %v2844
        %2846 = vmatmul.f32.gmra.mxu0 %v2732
        %v2847 = vpop.f32.mrf.mxu0
        %v2848 = vadd.f32 0.0, %v2847
        %2849 = vmatmul.f32.gmra.mxu0 %v2735
        %v2850 = vpop.f32.mrf.mxu0
        %v2851 = vadd.f32 0.0, %v2850
        %2852 = vdwg.mxu0
        %2853 = vmatpush.msra.mxu0 0.0
        %2854 = vmatpush.msra.mxu0 0.0
        %2855 = vmatpush.msra.mxu0 0.0
        %2856 = vmatpush.msra.mxu0 0.0
        %2857 = vmatpush.msra.mxu0 0.0
        %2858 = vmatpush.msra.mxu0 0.0
        %2859 = vmatpush.msra.mxu0 0.0
        %2860 = vmatpush.msra.mxu0 0.0
        %2861 = vmatpush.msra.mxu0 0.0
        %2862 = vmatpush.msra.mxu0 0.0
        %2863 = vmatpush.msra.mxu0 0.0
        %2864 = vmatpush.msra.mxu0 0.0
        %2865 = vmatpush.msra.mxu0 0.0
        %2866 = vmatpush.msra.mxu0 0.0
        %2867 = vmatpush.msra.mxu0 %v2714
        %2868 = vmatpush.msra.mxu0 %v2709
        %2869 = vmatmul.f32.gmra.mxu0 %v2726
        %v2870 = vpop.f32.mrf.mxu0
        %v2871 = vadd.f32 0.0, %v2870
        %2872 = vmatmul.f32.gmra.mxu0 %v2729
        %v2873 = vpop.f32.mrf.mxu0
        %v2874 = vadd.f32 0.0, %v2873
        %2875 = vmatmul.f32.gmra.mxu0 %v2732
        %v2876 = vpop.f32.mrf.mxu0
        %v2877 = vadd.f32 0.0, %v2876
        %2878 = vmatmul.f32.gmra.mxu0 %v2735
        %v2879 = vpop.f32.mrf.mxu0
        %v2880 = vadd.f32 0.0, %v2879
        %2881 = vdwg.mxu0
        %v2882 = vadd.f32 %v2655, %v2755
        %v2883 = vadd.f32 %v2656, %v2784
        %v2884 = vadd.f32 %v2657, %v2813
        %v2885 = vadd.f32 %v2658, %v2842
        %v2886 = vadd.f32 %v2659, %v2871
        %v2887 = vadd.f32 %v2660, %v2758
        %v2888 = vadd.f32 %v2661, %v2787
        %v2889 = vadd.f32 %v2662, %v2816
        %v2890 = vadd.f32 %v2663, %v2845
        %v2891 = vadd.f32 %v2664, %v2874
        %v2892 = vadd.f32 %v2665, %v2761
        %v2893 = vadd.f32 %v2666, %v2790
        %v2894 = vadd.f32 %v2667, %v2819
        %v2895 = vadd.f32 %v2668, %v2848
        %v2896 = vadd.f32 %v2669, %v2877
        %v2897 = vadd.f32 %v2670, %v2764
        %v2898 = vadd.f32 %v2671, %v2793
        %v2899 = vadd.f32 %v2672, %v2822
        %v2900 = vadd.f32 %v2673, %v2851
        %v2901 = vadd.f32 %v2674, %v2880
        %s2902 = scalar_lea.vmem %s3, 256
        %v2903 = vld [vmem:[%s2902] sm:$0xff]
        %v2904 = vld [vmem:[%s2902 + $0x8] sm:$0xff]
        %v2905 = vld [vmem:[%s2902 + $0x10] sm:$0xff]
        %v2906 = vld [vmem:[%s2902 + $0x18] sm:$0xff]
        %2907 = vrot.lane.b32.xlu0 %v1156, 74
        %v2908 = vpop.permute.xlu0 %2907
        %2909 = vrot.lane.b32.xlu0 %v1157, 74
        %v2910 = vpop.permute.xlu0 %2909
        %2911 = vrot.lane.b32.xlu0 %v1158, 74
        %v2912 = vpop.permute.xlu0 %2911
        %2913 = vrot.lane.b32.xlu0 %v1159, 74
        %v2914 = vpop.permute.xlu0 %2913
        %2915 = vrot.lane.b32.xlu0 %v1160, 74
        %v2916 = vpop.permute.xlu0 %2915
        %2917 = vrot.lane.b32.xlu0 %v1161, 74
        %v2918 = vpop.permute.xlu0 %2917
        %2919 = vrot.lane.b32.xlu0 %v1162, 74
        %v2920 = vpop.permute.xlu0 %2919
        %2921 = vrot.lane.b32.xlu0 %v1163, 74
        %v2922 = vpop.permute.xlu0 %2921
        %2923 = vrot.lane.b32.xlu0 %v1164, 74
        %v2924 = vpop.permute.xlu0 %2923
        %2925 = vrot.lane.b32.xlu0 %v1165, 74
        %v2926 = vpop.permute.xlu0 %2925
        %2927 = vrot.lane.b32.xlu0 %v1166, 74
        %v2928 = vpop.permute.xlu0 %2927
        %2929 = vrot.lane.b32.xlu0 %v1167, 74
        %v2930 = vpop.permute.xlu0 %2929
        %vm2931 = vcmask 605184
        %v2932 = vsel %vm2931, %v2908, %v2910
        %v2933 = vsel %vm2931, %v2910, %v2912
        %v2934 = vsel %vm2931, %v2912, %v2914
        %v2935 = vsel %vm2931, %v2914, %v2916
        %v2936 = vsel %vm2931, %v2916, %v2918
        %v2937 = vsel %vm2931, %v2920, %v2922
        %v2938 = vsel %vm2931, %v2922, %v2924
        %v2939 = vsel %vm2931, %v2924, %v2926
        %v2940 = vsel %vm2931, %v2926, %v2928
        %v2941 = vsel %vm2931, %v2928, %v2930
        %v2953 = vsel %vm1225, %v2903, 0
        %v2956 = vsel %vm1225, %v2904, 0
        %v2959 = vsel %vm1225, %v2905, 0
        %v2962 = vsel %vm1225, %v2906, 0
        %2964 = vmatpush.msra.mxu0 0.0
        %2965 = vmatpush.msra.mxu0 0.0
        %2966 = vmatpush.msra.mxu0 0.0
        %2967 = vmatpush.msra.mxu0 0.0
        %2968 = vmatpush.msra.mxu0 0.0
        %2969 = vmatpush.msra.mxu0 0.0
        %2970 = vmatpush.msra.mxu0 0.0
        %2971 = vmatpush.msra.mxu0 0.0
        %2972 = vmatpush.msra.mxu0 0.0
        %2973 = vmatpush.msra.mxu0 0.0
        %2974 = vmatpush.msra.mxu0 0.0
        %2975 = vmatpush.msra.mxu0 0.0
        %2976 = vmatpush.msra.mxu0 0.0
        %2977 = vmatpush.msra.mxu0 0.0
        %2978 = vmatpush.msra.mxu0 %v2937
        %2979 = vmatpush.msra.mxu0 %v2932
        %2980 = vmatmul.f32.gmra.mxu0 %v2953
        %v2981 = vpop.f32.mrf.mxu0
        %v2982 = vadd.f32 0.0, %v2981
        %2983 = vmatmul.f32.gmra.mxu0 %v2956
        %v2984 = vpop.f32.mrf.mxu0
        %v2985 = vadd.f32 0.0, %v2984
        %2986 = vmatmul.f32.gmra.mxu0 %v2959
        %v2987 = vpop.f32.mrf.mxu0
        %v2988 = vadd.f32 0.0, %v2987
        %2989 = vmatmul.f32.gmra.mxu0 %v2962
        %v2990 = vpop.f32.mrf.mxu0
        %v2991 = vadd.f32 0.0, %v2990
        %2992 = vdwg.mxu0
        %2993 = vmatpush.msra.mxu0 0.0
        %2994 = vmatpush.msra.mxu0 0.0
        %2995 = vmatpush.msra.mxu0 0.0
        %2996 = vmatpush.msra.mxu0 0.0
        %2997 = vmatpush.msra.mxu0 0.0
        %2998 = vmatpush.msra.mxu0 0.0
        %2999 = vmatpush.msra.mxu0 0.0
        %3000 = vmatpush.msra.mxu0 0.0
        %3001 = vmatpush.msra.mxu0 0.0
        %3002 = vmatpush.msra.mxu0 0.0
        %3003 = vmatpush.msra.mxu0 0.0
        %3004 = vmatpush.msra.mxu0 0.0
        %3005 = vmatpush.msra.mxu0 0.0
        %3006 = vmatpush.msra.mxu0 0.0
        %3007 = vmatpush.msra.mxu0 %v2938
        %3008 = vmatpush.msra.mxu0 %v2933
        %3009 = vmatmul.f32.gmra.mxu0 %v2953
        %v3010 = vpop.f32.mrf.mxu0
        %v3011 = vadd.f32 0.0, %v3010
        %3012 = vmatmul.f32.gmra.mxu0 %v2956
        %v3013 = vpop.f32.mrf.mxu0
        %v3014 = vadd.f32 0.0, %v3013
        %3015 = vmatmul.f32.gmra.mxu0 %v2959
        %v3016 = vpop.f32.mrf.mxu0
        %v3017 = vadd.f32 0.0, %v3016
        %3018 = vmatmul.f32.gmra.mxu0 %v2962
        %v3019 = vpop.f32.mrf.mxu0
        %v3020 = vadd.f32 0.0, %v3019
        %3021 = vdwg.mxu0
        %3022 = vmatpush.msra.mxu0 0.0
        %3023 = vmatpush.msra.mxu0 0.0
        %3024 = vmatpush.msra.mxu0 0.0
        %3025 = vmatpush.msra.mxu0 0.0
        %3026 = vmatpush.msra.mxu0 0.0
        %3027 = vmatpush.msra.mxu0 0.0
        %3028 = vmatpush.msra.mxu0 0.0
        %3029 = vmatpush.msra.mxu0 0.0
        %3030 = vmatpush.msra.mxu0 0.0
        %3031 = vmatpush.msra.mxu0 0.0
        %3032 = vmatpush.msra.mxu0 0.0
        %3033 = vmatpush.msra.mxu0 0.0
        %3034 = vmatpush.msra.mxu0 0.0
        %3035 = vmatpush.msra.mxu0 0.0
        %3036 = vmatpush.msra.mxu0 %v2939
        %3037 = vmatpush.msra.mxu0 %v2934
        %3038 = vmatmul.f32.gmra.mxu0 %v2953
        %v3039 = vpop.f32.mrf.mxu0
        %v3040 = vadd.f32 0.0, %v3039
        %3041 = vmatmul.f32.gmra.mxu0 %v2956
        %v3042 = vpop.f32.mrf.mxu0
        %v3043 = vadd.f32 0.0, %v3042
        %3044 = vmatmul.f32.gmra.mxu0 %v2959
        %v3045 = vpop.f32.mrf.mxu0
        %v3046 = vadd.f32 0.0, %v3045
        %3047 = vmatmul.f32.gmra.mxu0 %v2962
        %v3048 = vpop.f32.mrf.mxu0
        %v3049 = vadd.f32 0.0, %v3048
        %3050 = vdwg.mxu0
        %3051 = vmatpush.msra.mxu0 0.0
        %3052 = vmatpush.msra.mxu0 0.0
        %3053 = vmatpush.msra.mxu0 0.0
        %3054 = vmatpush.msra.mxu0 0.0
        %3055 = vmatpush.msra.mxu0 0.0
        %3056 = vmatpush.msra.mxu0 0.0
        %3057 = vmatpush.msra.mxu0 0.0
        %3058 = vmatpush.msra.mxu0 0.0
        %3059 = vmatpush.msra.mxu0 0.0
        %3060 = vmatpush.msra.mxu0 0.0
        %3061 = vmatpush.msra.mxu0 0.0
        %3062 = vmatpush.msra.mxu0 0.0
        %3063 = vmatpush.msra.mxu0 0.0
        %3064 = vmatpush.msra.mxu0 0.0
        %3065 = vmatpush.msra.mxu0 %v2940
        %3066 = vmatpush.msra.mxu0 %v2935
        %3067 = vmatmul.f32.gmra.mxu0 %v2953
        %v3068 = vpop.f32.mrf.mxu0
        %v3069 = vadd.f32 0.0, %v3068
        %3070 = vmatmul.f32.gmra.mxu0 %v2956
        %v3071 = vpop.f32.mrf.mxu0
        %v3072 = vadd.f32 0.0, %v3071
        %3073 = vmatmul.f32.gmra.mxu0 %v2959
        %v3074 = vpop.f32.mrf.mxu0
        %v3075 = vadd.f32 0.0, %v3074
        %3076 = vmatmul.f32.gmra.mxu0 %v2962
        %v3077 = vpop.f32.mrf.mxu0
        %v3078 = vadd.f32 0.0, %v3077
        %3079 = vdwg.mxu0
        %3080 = vmatpush.msra.mxu0 0.0
        %3081 = vmatpush.msra.mxu0 0.0
        %3082 = vmatpush.msra.mxu0 0.0
        %3083 = vmatpush.msra.mxu0 0.0
        %3084 = vmatpush.msra.mxu0 0.0
        %3085 = vmatpush.msra.mxu0 0.0
        %3086 = vmatpush.msra.mxu0 0.0
        %3087 = vmatpush.msra.mxu0 0.0
        %3088 = vmatpush.msra.mxu0 0.0
        %3089 = vmatpush.msra.mxu0 0.0
        %3090 = vmatpush.msra.mxu0 0.0
        %3091 = vmatpush.msra.mxu0 0.0
        %3092 = vmatpush.msra.mxu0 0.0
        %3093 = vmatpush.msra.mxu0 0.0
        %3094 = vmatpush.msra.mxu0 %v2941
        %3095 = vmatpush.msra.mxu0 %v2936
        %3096 = vmatmul.f32.gmra.mxu0 %v2953
        %v3097 = vpop.f32.mrf.mxu0
        %v3098 = vadd.f32 0.0, %v3097
        %3099 = vmatmul.f32.gmra.mxu0 %v2956
        %v3100 = vpop.f32.mrf.mxu0
        %v3101 = vadd.f32 0.0, %v3100
        %3102 = vmatmul.f32.gmra.mxu0 %v2959
        %v3103 = vpop.f32.mrf.mxu0
        %v3104 = vadd.f32 0.0, %v3103
        %3105 = vmatmul.f32.gmra.mxu0 %v2962
        %v3106 = vpop.f32.mrf.mxu0
        %v3107 = vadd.f32 0.0, %v3106
        %3108 = vdwg.mxu0
        %v3109 = vadd.f32 %v2882, %v2982
        %v3110 = vadd.f32 %v2883, %v3011
        %v3111 = vadd.f32 %v2884, %v3040
        %v3112 = vadd.f32 %v2885, %v3069
        %v3113 = vadd.f32 %v2886, %v3098
        %v3114 = vadd.f32 %v2887, %v2985
        %v3115 = vadd.f32 %v2888, %v3014
        %v3116 = vadd.f32 %v2889, %v3043
        %v3117 = vadd.f32 %v2890, %v3072
        %v3118 = vadd.f32 %v2891, %v3101
        %v3119 = vadd.f32 %v2892, %v2988
        %v3120 = vadd.f32 %v2893, %v3017
        %v3121 = vadd.f32 %v2894, %v3046
        %v3122 = vadd.f32 %v2895, %v3075
        %v3123 = vadd.f32 %v2896, %v3104
        %v3124 = vadd.f32 %v2897, %v2991
        %v3125 = vadd.f32 %v2898, %v3020
        %v3126 = vadd.f32 %v2899, %v3049
        %v3127 = vadd.f32 %v2900, %v3078
        %v3128 = vadd.f32 %v2901, %v3107
        %v3129 = vld [vmem:[%s4] sm:$0xff]
        %v3130 = vld [vmem:[%s4 + $0x8] sm:$0xff]
        %v3131 = vld [vmem:[%s4 + $0x10] sm:$0xff]
        %v3132 = vld [vmem:[%s4 + $0x18] sm:$0xff]
        %3134 = vset.pattern.permute.xlu0 0
        %3135 = vperm.xlu0 %3134, %v3129
        %v3136 = vpop.permute.xlu0 %3135
        %3139 = vset.pattern.permute.xlu0 0
        %3140 = vperm.xlu0 %3139, %v3130
        %v3141 = vpop.permute.xlu0 %3140
        %3144 = vset.pattern.permute.xlu0 0
        %3145 = vperm.xlu0 %3144, %v3131
        %v3146 = vpop.permute.xlu0 %3145
        %3149 = vset.pattern.permute.xlu0 0
        %3150 = vperm.xlu0 %3149, %v3132
        %v3151 = vpop.permute.xlu0 %3150
        %v3153 = vadd.f32 %v3109, %v3136
        %v3154 = vadd.f32 %v3110, %v3136
        %v3155 = vadd.f32 %v3111, %v3136
        %v3156 = vadd.f32 %v3112, %v3136
        %v3157 = vadd.f32 %v3113, %v3136
        %v3158 = vadd.f32 %v3114, %v3141
        %v3159 = vadd.f32 %v3115, %v3141
        %v3160 = vadd.f32 %v3116, %v3141
        %v3161 = vadd.f32 %v3117, %v3141
        %v3162 = vadd.f32 %v3118, %v3141
        %v3163 = vadd.f32 %v3119, %v3146
        %v3164 = vadd.f32 %v3120, %v3146
        %v3165 = vadd.f32 %v3121, %v3146
        %v3166 = vadd.f32 %v3122, %v3146
        %v3167 = vadd.f32 %v3123, %v3146
        %v3168 = vadd.f32 %v3124, %v3151
        %v3169 = vadd.f32 %v3125, %v3151
        %v3170 = vadd.f32 %v3126, %v3151
        %v3171 = vadd.f32 %v3127, %v3151
        %v3172 = vadd.f32 %v3128, %v3151
        %v3173 = vmax.f32 %v3153, 0.0
        %v3174 = vmax.f32 %v3154, 0.0
        %v3175 = vmax.f32 %v3155, 0.0
        %v3176 = vmax.f32 %v3156, 0.0
        %v3177 = vmax.f32 %v3157, 0.0
        %v3178 = vmax.f32 %v3158, 0.0
        %v3179 = vmax.f32 %v3159, 0.0
        %v3180 = vmax.f32 %v3160, 0.0
        %v3181 = vmax.f32 %v3161, 0.0
        %v3182 = vmax.f32 %v3162, 0.0
        %v3183 = vmax.f32 %v3163, 0.0
        %v3184 = vmax.f32 %v3164, 0.0
        %v3185 = vmax.f32 %v3165, 0.0
        %v3186 = vmax.f32 %v3166, 0.0
        %v3187 = vmax.f32 %v3167, 0.0
        %v3188 = vmax.f32 %v3168, 0.0
        %v3189 = vmax.f32 %v3169, 0.0
        %v3190 = vmax.f32 %v3170, 0.0
        %v3191 = vmax.f32 %v3171, 0.0
        %v3192 = vmax.f32 %v3172, 0.0
        %v3193 = vld [vmem:[#allocation7] sm:$0x1f]
        %v3195 = vperm.slane %v3193, 0
        %v3196 = vperm.slane %v3193, 1
        %v3197 = vperm.slane %v3193, 2
        %v3198 = vperm.slane %v3193, 3
        %v3199 = vperm.slane %v3193, 4
        %v3205 = vmul.f32 %v3173, %v3195
        %v3206 = vmul.f32 %v3174, %v3196
        %v3207 = vmul.f32 %v3175, %v3197
        %v3208 = vmul.f32 %v3176, %v3198
        %v3209 = vmul.f32 %v3177, %v3199
        %v3210 = vmul.f32 %v3178, %v3195
        %v3211 = vmul.f32 %v3179, %v3196
        %v3212 = vmul.f32 %v3180, %v3197
        %v3213 = vmul.f32 %v3181, %v3198
        %v3214 = vmul.f32 %v3182, %v3199
        %v3215 = vmul.f32 %v3183, %v3195
        %v3216 = vmul.f32 %v3184, %v3196
        %v3217 = vmul.f32 %v3185, %v3197
        %v3218 = vmul.f32 %v3186, %v3198
        %v3219 = vmul.f32 %v3187, %v3199
        %v3220 = vmul.f32 %v3188, %v3195
        %v3221 = vmul.f32 %v3189, %v3196
        %v3222 = vmul.f32 %v3190, %v3197
        %v3223 = vmul.f32 %v3191, %v3198
        %v3224 = vmul.f32 %v3192, %v3199
        %v3225 = vadd.f32 %v3205, %v3206
        %v3226 = vadd.f32 %v3225, %v3207
        %v3227 = vadd.f32 %v3226, %v3208
        %v3228 = vadd.f32 %v3227, %v3209
        %3229 = vadd.xlane.f32.xlu0 %v3228
        %v3230 = vpop.xlane.xlu0 %3229
        %v3231 = vadd.f32 %v3210, %v3211
        %v3232 = vadd.f32 %v3231, %v3212
        %v3233 = vadd.f32 %v3232, %v3213
        %v3234 = vadd.f32 %v3233, %v3214
        %3235 = vadd.xlane.f32.xlu0 %v3234
        %v3236 = vpop.xlane.xlu0 %3235
        %v3237 = vadd.f32 %v3215, %v3216
        %v3238 = vadd.f32 %v3237, %v3217
        %v3239 = vadd.f32 %v3238, %v3218
        %v3240 = vadd.f32 %v3239, %v3219
        %3241 = vadd.xlane.f32.xlu0 %v3240
        %v3242 = vpop.xlane.xlu0 %3241
        %v3243 = vadd.f32 %v3220, %v3221
        %v3244 = vadd.f32 %v3243, %v3222
        %v3245 = vadd.f32 %v3244, %v3223
        %v3246 = vadd.f32 %v3245, %v3224
        %3247 = vadd.xlane.f32.xlu0 %v3246
        %v3248 = vpop.xlane.xlu0 %3247
        %v3249 = vmul.f32 %v3230, 0.0017361111
        %v3250 = vmul.f32 %v3236, 0.0017361111
        %v3251 = vmul.f32 %v3242, 0.0017361111
        %v3252 = vmul.f32 %v3248, 0.0017361111
        %v3253 = vld [vmem:[#allocation8] sm:$0xff]
        %v3254 = vld [vmem:[#allocation8 + $0x8] sm:$0xff]
        %v3255 = vld [vmem:[#allocation8 + $0x10] sm:$0xff]
        %v3256 = vld [vmem:[#allocation8 + $0x18] sm:$0xff]
        %v3257 = vld [vmem:[%s7] sm:$0xff]
        %v3258 = vld [vmem:[%s7 + $0x8] sm:$0xff]
        %v3259 = vld [vmem:[%s7 + $0x10] sm:$0xff]
        %v3260 = vld [vmem:[%s7 + $0x18] sm:$0xff]
        %vm3261 = vcmask 261120
        %v3263 = vsel %vm3261, %v3253, 0
        %v3266 = vsel %vm3261, %v3254, 0
        %v3269 = vsel %vm3261, %v3255, 0
        %v3272 = vsel %vm3261, %v3256, 0
        %3274 = vmatpush.msra.mxu0 0.0
        %3275 = vmatpush.msra.mxu0 0.0
        %3276 = vmatpush.msra.mxu0 0.0
        %3277 = vmatpush.msra.mxu0 0.0
        %3278 = vmatpush.msra.mxu0 0.0
        %3279 = vmatpush.msra.mxu0 0.0
        %3280 = vmatpush.msra.mxu0 0.0
        %3281 = vmatpush.msra.mxu0 0.0
        %3282 = vmatpush.msra.mxu0 0.0
        %3283 = vmatpush.msra.mxu0 0.0
        %3284 = vmatpush.msra.mxu0 0.0
        %3285 = vmatpush.msra.mxu0 0.0
        %3286 = vmatpush.msra.mxu0 %v3252
        %3287 = vmatpush.msra.mxu0 %v3251
        %3288 = vmatpush.msra.mxu0 %v3250
        %3289 = vmatpush.msra.mxu0 %v3249
        %3290 = vmatmul.f32.gmra.mxu0 %v3263
        %v3291 = vpop.f32.mrf.mxu0
        %v3292 = vadd.f32 %v3257, %v3291
        %3293 = vmatmul.f32.gmra.mxu0 %v3266
        %v3294 = vpop.f32.mrf.mxu0
        %v3295 = vadd.f32 %v3258, %v3294
        %3296 = vmatmul.f32.gmra.mxu0 %v3269
        %v3297 = vpop.f32.mrf.mxu0
        %v3298 = vadd.f32 %v3259, %v3297
        %3299 = vmatmul.f32.gmra.mxu0 %v3272
        %v3300 = vpop.f32.mrf.mxu0
        %v3301 = vadd.f32 %v3260, %v3300
        %3302 = vdwg.mxu0
        %v3303 = vmax.f32 %v3292, 0.0
        %v3304 = vmax.f32 %v3295, 0.0
        %v3305 = vmax.f32 %v3298, 0.0
        %v3306 = vmax.f32 %v3301, 0.0
        %vm3307 = vcmask 7168
        %3308 = vst.msk [vmem:[%s370] sm:$0xff] %vm3307, %v3303
        %3309 = vst.msk [vmem:[%s370 + $0x8] sm:$0xff] %vm3307, %v3304
        %3310 = vst.msk [vmem:[%s370 + $0x10] sm:$0xff] %vm3307, %v3305
        %3311 = vst.msk [vmem:[%s370 + $0x18] sm:$0xff] %vm3307, %v3306
        %p3312 = scmp.lt.s32.totalorder %s22, 1
        %s3313 = scalar_select %p3312, %s22, 1
        %s3314 = smul.addr %s3313, 4
        %s3315 = smul.addr %s3314, 8
        %s3316 = scalar_lea.vmem %s8, %s3315
        // Predicated region
        $region69: #{psf_forward.2} parent=51 // pred_check
          %p3317 = pneg %p213
        $region70: #{psf_forward.2} parent=51 // pred_check_branch
          %3319 = sbr.rel (%p3317) target = $region72
        $region71: #{psf_forward.2} parent=51 // pred_region
          _
        $region72: #{psf_forward.2} parent=51 // pred_fallthru
          _
      $region52: #{psf_forward.2} parent=5 // pred_fallthru
        _
      %p3320 = scmp.le.s32.totalorder 2, %s17
      // Predicated region
      $region73: #{psf_forward.2} parent=5 // pred_check
        %p3321 = pneg %p3320
      $region74: #{psf_forward.2} parent=5 // pred_check_branch
        %3323 = sbr.rel (%p3321) target = $region76
      $region75: #{psf_forward.2} parent=5 // pred_region
        %s3324 = ssub.s32 %s17, 2
        // Predicated region
        $region77: #{psf_forward.2} parent=75 // pred_check
          %p3325 = pneg %p219
        $region78: #{psf_forward.2} parent=75 // pred_check_branch
          %3327 = sbr.rel (%p3325) target = $region80
        $region79: #{psf_forward.2} parent=75 // pred_region
          %p3328 = scmp.lt.s32.totalorder %s23, 1
          %s3329 = scalar_select %p3328, %s23, 1
          %s3330 = smul.addr %s3329, 4
          %s3331 = smul.addr %s3330, 8
          %s3332 = scalar_lea.vmem %s8, %s3331
        $region80: #{psf_forward.2} parent=75 // pred_fallthru
          _
      $region76: #{psf_forward.2} parent=5 // pred_fallthru
        _
    $region6: #{psf_forward.2} parent=1 // loop_footer
      %s21 = sadd.s32 1, %s17
    $region7: #{psf_forward.2} parent=1 // loop_footer_branch
      %16 = sbr.rel target = $region3
    $region8: #{psf_forward.2} parent=1 // loop_exit
      _
    %3333 = vsyncpa [#allocation4], 1
    %s3334 = scalar_lea.sflag [#allocation4], 1
    %3335 = vsyncpa %s3334, 1
    %3336 = vsyncpa [#allocation6], 1
    %3337 = vsyncpa [#allocation9], 1

// kernel: psf_forward.3
$region0: #{psf_forward.3}
  #allocation0 [shape = 'u32[]', space=smem, size = 0x4, offset = 0x4, fixed_abs, tag = 'smem constant byte address 0x4 - core index']
  #allocation1 [shape = 'u32[72,128]{1,0:T(1,128)}', space=vmem, size = 0x9000, scoped, tag = 'internal scratch']
  %s0 = inlined_call_operand.vmem [shape: f32[2,32], index: 0, kind: input, shape index: {}]
  %s1 = inlined_call_operand.hbm [shape: f32[32,48384], index: 1, kind: input, shape index: {}]
  %s2 = inlined_call_operand.hbm [shape: f32[1,48384], index: 2, kind: input, shape index: {}]
  %s3 = inlined_call_operand.vmem [shape: f32[2,48384], index: 3, kind: output, shape index: {}]
  %s4 = sld [smem:[#allocation0]]
  $region53: #{psf_forward.3} parent=0
    _
  %s6 = ssub.s32 1, %s4
  %s7 = scalar_select 0, %s6, %s4
  $region1: #{psf_forward.3} parent=0
    #allocation2 [shape = 'u8[4128768]{0}', space=vmem, size = 0x3f0000, scoped, tag = 'input window, operand 1']
    #allocation3 [shape = 's32[2]{0}', space=sflag, size = 0x8, scoped, tag = 'scoped memory for psf_forward.3']
    #allocation4 [shape = 'u8[129024]{0}', space=vmem, size = 0x1f800, scoped, tag = 'input window, operand 2']
    #allocation5 [shape = 's32[2]{0}', space=sflag, size = 0x8, scoped, tag = 'scoped memory for psf_forward.3']
    %8 = vsyncpa [#allocation3], 0
    %s9 = scalar_lea.sflag [#allocation3], 1
    %10 = vsyncpa %s9, 0
    %11 = vsyncpa [#allocation5], 0
    %s12 = scalar_lea.sflag [#allocation5], 1
    %13 = vsyncpa %s12, 0
    loop: start=0, step=1, limit=5
    $region2: #{psf_forward.3} parent=1 // loop_pre_header
      _
    $region3: #{psf_forward.3} parent=1 // loop_header
      %s15 = sphi 0, %s19
      %p16 = scmp.ge.s32.totalorder %s15, 5
      %s23 = sphi 0, %s23
      %s25 = sphi 0, %s23
      %s26 = sphi 0, %s25
      %s40 = sphi 0, %s26
      %s46 = sphi 0, %s48
      %s49 = sphi 0, %s46
      %s50 = sphi 0, %s49
      %s66 = sphi 0, %s50
      %s72 = sphi 0, %s74
      %s75 = sphi 0, %s72
      %s76 = sphi 0, %s75
      %s92 = sphi 0, %s76
      %s98 = sphi 0, %s100
      %s101 = sphi 0, %s98
      %s102 = sphi 0, %s101
      %s118 = sphi 0, %s102
    $region4: #{psf_forward.3} parent=1 // loop_header_branch
      %18 = sbr.rel (%p16) target = $region8
    $region5: #{psf_forward.3} parent=1 // loop_body
      %s20 = ssub.s32 %s15, 1
      %s21 = ssub.s32 %s15, 2
      %s22 = sadd.s32 %s15, 1
      %s24 = sadd.s32 %s23, 1
      %p27 = scmp.eq.s32.totalorder %s15, 2
      %p28 = scmp.ne.s32.totalorder %s23, %s25
      %p29 = scmp.eq.s32.totalorder %s15, 0
      %p30 = por %p28, %p29
      %p31 = scmp.ne.s32.totalorder %s23, %s25
      %p32 = scmp.eq.s32.totalorder %s20, 2
      %p33 = por %p31, %p32
      %p34 = scmp.ne.s32.totalorder %s25, %s26
      %p35 = scmp.eq.s32.totalorder %s20, 0
      %p36 = por %p34, %p35
      %p37 = scmp.ne.s32.totalorder %s25, %s26
      %p38 = scmp.eq.s32.totalorder %s21, 2
      %p39 = por %p37, %p38
      %p41 = scmp.ne.s32.totalorder %s26, %s40
      %p42 = scmp.eq.s32.totalorder %s21, 0
      %p43 = por %p41, %p42
      %s44 = ssub.s32 %s15, %s22
      %p45 = scmp.eq.s32.totalorder %s44, 0
      %s47 = sadd.s32 %s46, 1
      %s48 = scalar_select %p45, %s46, %s47
      %p51 = pneg %p45
      %p52 = scmp.eq.s32.totalorder %s15, 2
      %p53 = por %p51, %p52
      %p54 = scmp.ne.s32.totalorder %s46, %s49
      %p55 = scmp.eq.s32.totalorder %s15, 0
      %p56 = por %p54, %p55
      %p57 = scmp.ne.s32.totalorder %s46, %s49
      %p58 = scmp.eq.s32.totalorder %s20, 2
      %p59 = por %p57, %p58
      %p60 = scmp.ne.s32.totalorder %s49, %s50
      %p61 = scmp.eq.s32.totalorder %s20, 0
      %p62 = por %p60, %p61
      %p63 = scmp.ne.s32.totalorder %s49, %s50
      %p64 = scmp.eq.s32.totalorder %s21, 2
      %p65 = por %p63, %p64
      %p67 = scmp.ne.s32.totalorder %s50, %s66
      %p68 = scmp.eq.s32.totalorder %s21, 0
      %p69 = por %p67, %p68
      %s70 = ssub.s32 %s15, %s22
      %p71 = scmp.eq.s32.totalorder %s70, 0
      %s73 = sadd.s32 %s72, 1
      %s74 = scalar_select %p71, %s72, %s73
      %p77 = pneg %p71
      %p78 = scmp.eq.s32.totalorder %s15, 2
      %p79 = por %p77, %p78
      %p80 = scmp.ne.s32.totalorder %s72, %s75
      %p81 = scmp.eq.s32.totalorder %s15, 0
      %p82 = por %p80, %p81
      %p83 = scmp.ne.s32.totalorder %s72, %s75
      %p84 = scmp.eq.s32.totalorder %s20, 2
      %p85 = por %p83, %p84
      %p86 = scmp.ne.s32.totalorder %s75, %s76
      %p87 = scmp.eq.s32.totalorder %s20, 0
      %p88 = por %p86, %p87
      %p89 = scmp.ne.s32.totalorder %s75, %s76
      %p90 = scmp.eq.s32.totalorder %s21, 2
      %p91 = por %p89, %p90
      %p93 = scmp.ne.s32.totalorder %s76, %s92
      %p94 = scmp.eq.s32.totalorder %s21, 0
      %p95 = por %p93, %p94
      %s96 = ssub.s32 %s15, %s22
      %p97 = scmp.eq.s32.totalorder %s96, 0
      %s99 = sadd.s32 %s98, 1
      %s100 = scalar_select %p97, %s98, %s99
      %p103 = pneg %p97
      %p104 = scmp.eq.s32.totalorder %s15, 2
      %p105 = por %p103, %p104
      %p106 = scmp.ne.s32.totalorder %s98, %s101
      %p107 = scmp.eq.s32.totalorder %s15, 0
      %p108 = por %p106, %p107
      %p109 = scmp.ne.s32.totalorder %s98, %s101
      %p110 = scmp.eq.s32.totalorder %s20, 2
      %p111 = por %p109, %p110
      %p112 = scmp.ne.s32.totalorder %s101, %s102
      %p113 = scmp.eq.s32.totalorder %s20, 0
      %p114 = por %p112, %p113
      %p115 = scmp.ne.s32.totalorder %s101, %s102
      %p116 = scmp.eq.s32.totalorder %s21, 2
      %p117 = por %p115, %p116
      %p119 = scmp.ne.s32.totalorder %s102, %s118
      %p120 = scmp.eq.s32.totalorder %s21, 0
      %p121 = por %p119, %p120
      %p122 = scmp.le.s32.totalorder 1, %s15
      %p123 = scmp.lt.s32.totalorder %s15, 4
      %p124 = pnand %p122, %p123
      %p125 = pneg %p124
      // Predicated region
      $region9: #{psf_forward.3} parent=5 // pred_check
        _
      $region10: #{psf_forward.3} parent=5 // pred_check_branch
        %127 = sbr.rel (%p124) target = $region12
      $region11: #{psf_forward.3} parent=5 // pred_region
        %s128 = ssub.s32 %s15, 1
        // Predicated region
        $region13: #{psf_forward.3} parent=11 // pred_check
          %p129 = pneg %p36
        $region14: #{psf_forward.3} parent=11 // pred_check_branch
          %131 = sbr.rel (%p129) target = $region16
        $region15: #{psf_forward.3} parent=11 // pred_region
          _
        $region16: #{psf_forward.3} parent=11 // pred_fallthru
          _
      $region12: #{psf_forward.3} parent=5 // pred_fallthru
        _
      %p132 = scmp.lt.s32.totalorder %s15, 3
      // Predicated region
      $region17: #{psf_forward.3} parent=5 // pred_check
        %p133 = pneg %p132
      $region18: #{psf_forward.3} parent=5 // pred_check_branch
        %135 = sbr.rel (%p133) target = $region20
      $region19: #{psf_forward.3} parent=5 // pred_region
        // Predicated region
        $region21: #{psf_forward.3} parent=19 // pred_check
          %p136 = pneg %p56
        $region22: #{psf_forward.3} parent=19 // pred_check_branch
          %138 = sbr.rel (%p136) target = $region24
        $region23: #{psf_forward.3} parent=19 // pred_region
          %s139 = sand.u32 %s46, 1
          %s140 = scalar_lea.sflag [#allocation3], %s139
          %s141 = sand.u32 %s46, 1
          %s142 = smul.addr %s141, 4032
          %s143 = scalar_lea.vmem [#allocation2], %s142
          %s144 = smul.u32 126, %s15
          %146 = vsyncadd %s140, 0
          %s147 = smul.addr %s144, 8
          %s148 = scalar_lea.hbm %s1, %s147
          %s149 = sshll.u32 %s148, 4
          %s150 = int_to_ptr.hbm [resolvable:$true] %s149
          %s151 = sshll.u32 %s143, 4
          %s152 = int_to_ptr.vmem [resolvable:$true] %s151
          %157 = dma.hbm_to_vmem [thread:$0]  %s150, 64512, %s152, %s140, 48384, 16128, 1008
        $region24: #{psf_forward.3} parent=19 // pred_fallthru
          _
        // Predicated region
        $region25: #{psf_forward.3} parent=19 // pred_check
          %p158 = pneg %p82
        $region26: #{psf_forward.3} parent=19 // pred_check_branch
          %160 = sbr.rel (%p158) target = $region28
        $region27: #{psf_forward.3} parent=19 // pred_region
          %s161 = sand.u32 %s72, 1
          %s162 = scalar_lea.sflag [#allocation5], %s161
          %s163 = sand.u32 %s72, 1
          %s164 = smul.addr %s163, 126
          %s165 = scalar_lea.vmem [#allocation4], %s164
          %s166 = smul.u32 126, %s15
          %168 = vsyncadd %s162, 0
          %s169 = scalar_lea.hbm %s2, %s166
          %s171 = sshll.u32 %s169, 4
          %s172 = int_to_ptr.hbm [resolvable:$true] %s171
          %s173 = sshll.u32 %s165, 4
          %s174 = int_to_ptr.vmem [resolvable:$true] %s173
          %176 = dma.hbm_to_vmem [thread:$0]  %s172, 2016, %s174, %s162
        $region28: #{psf_forward.3} parent=19 // pred_fallthru
          _
      $region20: #{psf_forward.3} parent=5 // pred_fallthru
        _
      %p177 = scmp.le.s32.totalorder 1, %s15
      %p178 = scmp.lt.s32.totalorder %s15, 4
      %p179 = pnand %p177, %p178
      %p180 = pneg %p179
      // Predicated region
      $region29: #{psf_forward.3} parent=5 // pred_check
        _
      $region30: #{psf_forward.3} parent=5 // pred_check_branch
        %182 = sbr.rel (%p179) target = $region32
      $region31: #{psf_forward.3} parent=5 // pred_region
        %s183 = ssub.s32 %s15, 1
        %s184 = sand.u32 %s49, 1
        %s185 = scalar_lea.sflag [#allocation3], %s184
        %s186 = sand.u32 %s49, 1
        %s187 = smul.addr %s186, 4032
        %s188 = scalar_lea.vmem [#allocation2], %s187
        // Predicated region
        $region33: #{psf_forward.3} parent=31 // pred_check
          %p189 = pneg %p62
        $region34: #{psf_forward.3} parent=31 // pred_check_branch
          %191 = sbr.rel (%p189) target = $region36
        $region35: #{psf_forward.3} parent=31 // pred_region
          %193 = dma.done %s185, 64512
        $region36: #{psf_forward.3} parent=31 // pred_fallthru
          _
        %s194 = sand.u32 %s75, 1
        %s195 = scalar_lea.sflag [#allocation5], %s194
        %s196 = sand.u32 %s75, 1
        %s197 = smul.addr %s196, 126
        %s198 = scalar_lea.vmem [#allocation4], %s197
        // Predicated region
        $region37: #{psf_forward.3} parent=31 // pred_check
          %p199 = pneg %p88
        $region38: #{psf_forward.3} parent=31 // pred_check_branch
          %201 = sbr.rel (%p199) target = $region40
        $region39: #{psf_forward.3} parent=31 // pred_region
          %203 = dma.done %s195, 2016
        $region40: #{psf_forward.3} parent=31 // pred_fallthru
          _
        %p204 = pneg %p36
        %p205 = pneg %p33
        %s206 = sand.u32 %s49, 1
        %s207 = scalar_lea.sflag [#allocation3], %s206
        %s208 = sand.u32 %s49, 1
        %s209 = smul.addr %s208, 4032
        %s210 = scalar_lea.vmem [#allocation2], %s209
        %p211 = pneg %p62
        %p212 = pneg %p59
        %s213 = sand.u32 %s75, 1
        %s214 = scalar_lea.sflag [#allocation5], %s213
        %s215 = sand.u32 %s75, 1
        %s216 = smul.addr %s215, 126
        %s217 = scalar_lea.vmem [#allocation4], %s216
        %p218 = pneg %p88
        %p219 = pneg %p85
        %p220 = pneg %p114
        %p221 = pneg %p111
        %s222 = smul.u32 126, %s20
        %p223 = scmp.lt.s32.totalorder %s222, 377
        %s224 = scalar_select %p223, %s222, 377
        %s225 = smul.addr %s224, 2
        %s226 = scalar_lea.vmem %s3, %s225
        %s227 = smul.u32 126, %s20
        %s228 = smul.u32 126, %s20
        %s229 = smul.u32 126, %s20
        %p230 = scmp.lt.s32.totalorder %s229, 377
        %s231 = scalar_select %p230, %s229, 377
        %s232 = smul.addr %s231, 2
        %s233 = scalar_lea.vmem %s3, %s232
        %s234 = smul.u32 126, %s20
        %v235 = vld [vmem:[%s0] sm:$0x3]
        %v236 = vld [vmem:[%s188] sm:$0xff]
        %v237 = vld [vmem:[%s188 + $0x8] sm:$0xff]
        %v238 = vld [vmem:[%s188 + $0x10] sm:$0xff]
        %v239 = vld [vmem:[%s188 + $0x18] sm:$0xff]
        %v240 = vld [vmem:[%s188 + $0x20] sm:$0xff]
        %v241 = vld [vmem:[%s188 + $0x28] sm:$0xff]
        %v242 = vld [vmem:[%s188 + $0x30] sm:$0xff]
        %v243 = vld [vmem:[%s188 + $0x38] sm:$0xff]
        %v244 = vld [vmem:[%s188 + $0x40] sm:$0xff]
        %v245 = vld [vmem:[%s188 + $0x48] sm:$0xff]
        %v246 = vld [vmem:[%s188 + $0x50] sm:$0xff]
        %v247 = vld [vmem:[%s188 + $0x58] sm:$0xff]
        %v248 = vld [vmem:[%s188 + $0x60] sm:$0xff]
        %v249 = vld [vmem:[%s188 + $0x68] sm:$0xff]
        %v250 = vld [vmem:[%s188 + $0x70] sm:$0xff]
        %v251 = vld [vmem:[%s188 + $0x78] sm:$0xff]
        %v252 = vld [vmem:[%s188 + $0x80] sm:$0xff]
        %v253 = vld [vmem:[%s188 + $0x88] sm:$0xff]
        %v254 = vld [vmem:[%s188 + $0x90] sm:$0xff]
        %v255 = vld [vmem:[%s188 + $0x98] sm:$0xff]
        %v256 = vld [vmem:[%s188 + $0xa0] sm:$0xff]
        %v257 = vld [vmem:[%s188 + $0xa8] sm:$0xff]
        %v258 = vld [vmem:[%s188 + $0xb0] sm:$0xff]
        %v259 = vld [vmem:[%s188 + $0xb8] sm:$0xff]
        %v260 = vld [vmem:[%s188 + $0xc0] sm:$0xff]
        %v261 = vld [vmem:[%s188 + $0xc8] sm:$0xff]
        %v262 = vld [vmem:[%s188 + $0xd0] sm:$0xff]
        %v263 = vld [vmem:[%s188 + $0xd8] sm:$0xff]
        %v264 = vld [vmem:[%s188 + $0xe0] sm:$0xff]
        %v265 = vld [vmem:[%s188 + $0xe8] sm:$0xff]
        %v266 = vld [vmem:[%s188 + $0xf0] sm:$0xff]
        %v267 = vld [vmem:[%s188 + $0xf8] sm:$0xff]
        %v268 = vld [vmem:[%s188 + $0x100] sm:$0xff]
        %v269 = vld [vmem:[%s188 + $0x108] sm:$0xff]
        %v270 = vld [vmem:[%s188 + $0x110] sm:$0xff]
        %v271 = vld [vmem:[%s188 + $0x118] sm:$0xff]
        %v272 = vld [vmem:[%s188 + $0x120] sm:$0xff]
        %v273 = vld [vmem:[%s188 + $0x128] sm:$0xff]
        %v274 = vld [vmem:[%s188 + $0x130] sm:$0xff]
        %v275 = vld [vmem:[%s188 + $0x138] sm:$0xff]
        %v276 = vld [vmem:[%s188 + $0x140] sm:$0xff]
        %v277 = vld [vmem:[%s188 + $0x148] sm:$0xff]
        %v278 = vld [vmem:[%s188 + $0x150] sm:$0xff]
        %v279 = vld [vmem:[%s188 + $0x158] sm:$0xff]
        %v280 = vld [vmem:[%s188 + $0x160] sm:$0xff]
        %v281 = vld [vmem:[%s188 + $0x168] sm:$0xff]
        %v282 = vld [vmem:[%s188 + $0x170] sm:$0xff]
        %v283 = vld [vmem:[%s188 + $0x178] sm:$0xff]
        %v284 = vld [vmem:[%s188 + $0x180] sm:$0xff]
        %v285 = vld [vmem:[%s188 + $0x188] sm:$0xff]
        %v286 = vld [vmem:[%s188 + $0x190] sm:$0xff]
        %v287 = vld [vmem:[%s188 + $0x198] sm:$0xff]
        %v288 = vld [vmem:[%s188 + $0x1a0] sm:$0xff]
        %v289 = vld [vmem:[%s188 + $0x1a8] sm:$0xff]
        %v290 = vld [vmem:[%s188 + $0x1b0] sm:$0xff]
        %v291 = vld [vmem:[%s188 + $0x1b8] sm:$0xff]
        %v292 = vld [vmem:[%s188 + $0x1c0] sm:$0xff]
        %v293 = vld [vmem:[%s188 + $0x1c8] sm:$0xff]
        %v294 = vld [vmem:[%s188 + $0x1d0] sm:$0xff]
        %v295 = vld [vmem:[%s188 + $0x1d8] sm:$0xff]
        %v296 = vld [vmem:[%s188 + $0x1e0] sm:$0xff]
        %v297 = vld [vmem:[%s188 + $0x1e8] sm:$0xff]
        %v298 = vld [vmem:[%s188 + $0x1f0] sm:$0xff]
        %v299 = vld [vmem:[%s188 + $0x1f8] sm:$0xff]
        %v300 = vld [vmem:[%s188 + $0x200] sm:$0xff]
        %v301 = vld [vmem:[%s188 + $0x208] sm:$0xff]
        %v302 = vld [vmem:[%s188 + $0x210] sm:$0xff]
        %v303 = vld [vmem:[%s188 + $0x218] sm:$0xff]
        %v304 = vld [vmem:[%s188 + $0x220] sm:$0xff]
        %v305 = vld [vmem:[%s188 + $0x228] sm:$0xff]
        %v306 = vld [vmem:[%s188 + $0x230] sm:$0xff]
        %v307 = vld [vmem:[%s188 + $0x238] sm:$0xff]
        %v308 = vld [vmem:[%s188 + $0x240] sm:$0xff]
        %v309 = vld [vmem:[%s188 + $0x248] sm:$0xff]
        %v310 = vld [vmem:[%s188 + $0x250] sm:$0xff]
        %v311 = vld [vmem:[%s188 + $0x258] sm:$0xff]
        %v312 = vld [vmem:[%s188 + $0x260] sm:$0xff]
        %v313 = vld [vmem:[%s188 + $0x268] sm:$0xff]
        %v314 = vld [vmem:[%s188 + $0x270] sm:$0xff]
        %v315 = vld [vmem:[%s188 + $0x278] sm:$0xff]
        %v316 = vld [vmem:[%s188 + $0x280] sm:$0xff]
        %v317 = vld [vmem:[%s188 + $0x288] sm:$0xff]
        %v318 = vld [vmem:[%s188 + $0x290] sm:$0xff]
        %v319 = vld [vmem:[%s188 + $0x298] sm:$0xff]
        %v320 = vld [vmem:[%s188 + $0x2a0] sm:$0xff]
        %v321 = vld [vmem:[%s188 + $0x2a8] sm:$0xff]
        %v322 = vld [vmem:[%s188 + $0x2b0] sm:$0xff]
        %v323 = vld [vmem:[%s188 + $0x2b8] sm:$0xff]
        %v324 = vld [vmem:[%s188 + $0x2c0] sm:$0xff]
        %v325 = vld [vmem:[%s188 + $0x2c8] sm:$0xff]
        %v326 = vld [vmem:[%s188 + $0x2d0] sm:$0xff]
        %v327 = vld [vmem:[%s188 + $0x2d8] sm:$0xff]
        %v328 = vld [vmem:[%s188 + $0x2e0] sm:$0xff]
        %v329 = vld [vmem:[%s188 + $0x2e8] sm:$0xff]
        %v330 = vld [vmem:[%s188 + $0x2f0] sm:$0xff]
        %v331 = vld [vmem:[%s188 + $0x2f8] sm:$0xff]
        %v332 = vld [vmem:[%s188 + $0x300] sm:$0xff]
        %v333 = vld [vmem:[%s188 + $0x308] sm:$0xff]
        %v334 = vld [vmem:[%s188 + $0x310] sm:$0xff]
        %v335 = vld [vmem:[%s188 + $0x318] sm:$0xff]
        %v336 = vld [vmem:[%s188 + $0x320] sm:$0xff]
        %v337 = vld [vmem:[%s188 + $0x328] sm:$0xff]
        %v338 = vld [vmem:[%s188 + $0x330] sm:$0xff]
        %v339 = vld [vmem:[%s188 + $0x338] sm:$0xff]
        %v340 = vld [vmem:[%s188 + $0x340] sm:$0xff]
        %v341 = vld [vmem:[%s188 + $0x348] sm:$0xff]
        %v342 = vld [vmem:[%s188 + $0x350] sm:$0xff]
        %v343 = vld [vmem:[%s188 + $0x358] sm:$0xff]
        %v344 = vld [vmem:[%s188 + $0x360] sm:$0xff]
        %v345 = vld [vmem:[%s188 + $0x368] sm:$0xff]
        %v346 = vld [vmem:[%s188 + $0x370] sm:$0xff]
        %v347 = vld [vmem:[%s188 + $0x378] sm:$0xff]
        %v348 = vld [vmem:[%s188 + $0x380] sm:$0xff]
        %v349 = vld [vmem:[%s188 + $0x388] sm:$0xff]
        %v350 = vld [vmem:[%s188 + $0x390] sm:$0xff]
        %v351 = vld [vmem:[%s188 + $0x398] sm:$0xff]
        %v352 = vld [vmem:[%s188 + $0x3a0] sm:$0xff]
        %v353 = vld [vmem:[%s188 + $0x3a8] sm:$0xff]
        %v354 = vld [vmem:[%s188 + $0x3b0] sm:$0xff]
        %v355 = vld [vmem:[%s188 + $0x3b8] sm:$0xff]
        %v356 = vld [vmem:[%s188 + $0x3c0] sm:$0xff]
        %v357 = vld [vmem:[%s188 + $0x3c8] sm:$0xff]
        %v358 = vld [vmem:[%s188 + $0x3d0] sm:$0xff]
        %v359 = vld [vmem:[%s188 + $0x3d8] sm:$0xff]
        %v360 = vld [vmem:[%s188 + $0x3e0] sm:$0xff]
        %v361 = vld [vmem:[%s188 + $0x3e8] sm:$0xff]
        %v362 = vld [vmem:[%s188 + $0x3f0] sm:$0xff]
        %v363 = vld [vmem:[%s188 + $0x3f8] sm:$0xff]
        %v364 = vld [vmem:[%s188 + $0x400] sm:$0xff]
        %v365 = vld [vmem:[%s188 + $0x408] sm:$0xff]
        %v366 = vld [vmem:[%s188 + $0x410] sm:$0xff]
        %v367 = vld [vmem:[%s188 + $0x418] sm:$0xff]
        %v368 = vld [vmem:[%s188 + $0x420] sm:$0xff]
        %v369 = vld [vmem:[%s188 + $0x428] sm:$0xff]
        %v370 = vld [vmem:[%s188 + $0x430] sm:$0xff]
        %v371 = vld [vmem:[%s188 + $0x438] sm:$0xff]
        %v372 = vld [vmem:[%s188 + $0x440] sm:$0xff]
        %v373 = vld [vmem:[%s188 + $0x448] sm:$0xff]
        %v374 = vld [vmem:[%s188 + $0x450] sm:$0xff]
        %v375 = vld [vmem:[%s188 + $0x458] sm:$0xff]
        %v376 = vld [vmem:[%s188 + $0x460] sm:$0xff]
        %v377 = vld [vmem:[%s188 + $0x468] sm:$0xff]
        %v378 = vld [vmem:[%s188 + $0x470] sm:$0xff]
        %v379 = vld [vmem:[%s188 + $0x478] sm:$0xff]
        %v380 = vld [vmem:[%s188 + $0x480] sm:$0xff]
        %v381 = vld [vmem:[%s188 + $0x488] sm:$0xff]
        %v382 = vld [vmem:[%s188 + $0x490] sm:$0xff]
        %v383 = vld [vmem:[%s188 + $0x498] sm:$0xff]
        %v384 = vld [vmem:[%s188 + $0x4a0] sm:$0xff]
        %v385 = vld [vmem:[%s188 + $0x4a8] sm:$0xff]
        %v386 = vld [vmem:[%s188 + $0x4b0] sm:$0xff]
        %v387 = vld [vmem:[%s188 + $0x4b8] sm:$0xff]
        %v388 = vld [vmem:[%s188 + $0x4c0] sm:$0xff]
        %v389 = vld [vmem:[%s188 + $0x4c8] sm:$0xff]
        %v390 = vld [vmem:[%s188 + $0x4d0] sm:$0xff]
        %v391 = vld [vmem:[%s188 + $0x4d8] sm:$0xff]
        %v392 = vld [vmem:[%s188 + $0x4e0] sm:$0xff]
        %v393 = vld [vmem:[%s188 + $0x4e8] sm:$0xff]
        %v394 = vld [vmem:[%s188 + $0x4f0] sm:$0xff]
        %v395 = vld [vmem:[%s188 + $0x4f8] sm:$0xff]
        %v396 = vld [vmem:[%s188 + $0x500] sm:$0xff]
        %v397 = vld [vmem:[%s188 + $0x508] sm:$0xff]
        %v398 = vld [vmem:[%s188 + $0x510] sm:$0xff]
        %v399 = vld [vmem:[%s188 + $0x518] sm:$0xff]
        %v400 = vld [vmem:[%s188 + $0x520] sm:$0xff]
        %v401 = vld [vmem:[%s188 + $0x528] sm:$0xff]
        %v402 = vld [vmem:[%s188 + $0x530] sm:$0xff]
        %v403 = vld [vmem:[%s188 + $0x538] sm:$0xff]
        %v404 = vld [vmem:[%s188 + $0x540] sm:$0xff]
        %v405 = vld [vmem:[%s188 + $0x548] sm:$0xff]
        %v406 = vld [vmem:[%s188 + $0x550] sm:$0xff]
        %v407 = vld [vmem:[%s188 + $0x558] sm:$0xff]
        %v408 = vld [vmem:[%s188 + $0x560] sm:$0xff]
        %v409 = vld [vmem:[%s188 + $0x568] sm:$0xff]
        %v410 = vld [vmem:[%s188 + $0x570] sm:$0xff]
        %v411 = vld [vmem:[%s188 + $0x578] sm:$0xff]
        %v412 = vld [vmem:[%s188 + $0x580] sm:$0xff]
        %v413 = vld [vmem:[%s188 + $0x588] sm:$0xff]
        %v414 = vld [vmem:[%s188 + $0x590] sm:$0xff]
        %v415 = vld [vmem:[%s188 + $0x598] sm:$0xff]
        %v416 = vld [vmem:[%s188 + $0x5a0] sm:$0xff]
        %v417 = vld [vmem:[%s188 + $0x5a8] sm:$0xff]
        %v418 = vld [vmem:[%s188 + $0x5b0] sm:$0xff]
        %v419 = vld [vmem:[%s188 + $0x5b8] sm:$0xff]
        %v420 = vld [vmem:[%s188 + $0x5c0] sm:$0xff]
        %v421 = vld [vmem:[%s188 + $0x5c8] sm:$0xff]
        %v422 = vld [vmem:[%s188 + $0x5d0] sm:$0xff]
        %v423 = vld [vmem:[%s188 + $0x5d8] sm:$0xff]
        %v424 = vld [vmem:[%s188 + $0x5e0] sm:$0xff]
        %v425 = vld [vmem:[%s188 + $0x5e8] sm:$0xff]
        %v426 = vld [vmem:[%s188 + $0x5f0] sm:$0xff]
        %v427 = vld [vmem:[%s188 + $0x5f8] sm:$0xff]
        %v428 = vld [vmem:[%s188 + $0x600] sm:$0xff]
        %v429 = vld [vmem:[%s188 + $0x608] sm:$0xff]
        %v430 = vld [vmem:[%s188 + $0x610] sm:$0xff]
        %v431 = vld [vmem:[%s188 + $0x618] sm:$0xff]
        %v432 = vld [vmem:[%s188 + $0x620] sm:$0xff]
        %v433 = vld [vmem:[%s188 + $0x628] sm:$0xff]
        %v434 = vld [vmem:[%s188 + $0x630] sm:$0xff]
        %v435 = vld [vmem:[%s188 + $0x638] sm:$0xff]
        %v436 = vld [vmem:[%s188 + $0x640] sm:$0xff]
        %v437 = vld [vmem:[%s188 + $0x648] sm:$0xff]
        %v438 = vld [vmem:[%s188 + $0x650] sm:$0xff]
        %v439 = vld [vmem:[%s188 + $0x658] sm:$0xff]
        %v440 = vld [vmem:[%s188 + $0x660] sm:$0xff]
        %v441 = vld [vmem:[%s188 + $0x668] sm:$0xff]
        %v442 = vld [vmem:[%s188 + $0x670] sm:$0xff]
        %v443 = vld [vmem:[%s188 + $0x678] sm:$0xff]
        %v444 = vld [vmem:[%s188 + $0x680] sm:$0xff]
        %v445 = vld [vmem:[%s188 + $0x688] sm:$0xff]
        %v446 = vld [vmem:[%s188 + $0x690] sm:$0xff]
        %v447 = vld [vmem:[%s188 + $0x698] sm:$0xff]
        %v448 = vld [vmem:[%s188 + $0x6a0] sm:$0xff]
        %v449 = vld [vmem:[%s188 + $0x6a8] sm:$0xff]
        %v450 = vld [vmem:[%s188 + $0x6b0] sm:$0xff]
        %v451 = vld [vmem:[%s188 + $0x6b8] sm:$0xff]
        %v452 = vld [vmem:[%s188 + $0x6c0] sm:$0xff]
        %v453 = vld [vmem:[%s188 + $0x6c8] sm:$0xff]
        %v454 = vld [vmem:[%s188 + $0x6d0] sm:$0xff]
        %v455 = vld [vmem:[%s188 + $0x6d8] sm:$0xff]
        %v456 = vld [vmem:[%s188 + $0x6e0] sm:$0xff]
        %v457 = vld [vmem:[%s188 + $0x6e8] sm:$0xff]
        %v458 = vld [vmem:[%s188 + $0x6f0] sm:$0xff]
        %v459 = vld [vmem:[%s188 + $0x6f8] sm:$0xff]
        %v460 = vld [vmem:[%s188 + $0x700] sm:$0xff]
        %v461 = vld [vmem:[%s188 + $0x708] sm:$0xff]
        %v462 = vld [vmem:[%s188 + $0x710] sm:$0xff]
        %v463 = vld [vmem:[%s188 + $0x718] sm:$0xff]
        %v464 = vld [vmem:[%s188 + $0x720] sm:$0xff]
        %v465 = vld [vmem:[%s188 + $0x728] sm:$0xff]
        %v466 = vld [vmem:[%s188 + $0x730] sm:$0xff]
        %v467 = vld [vmem:[%s188 + $0x738] sm:$0xff]
        %v468 = vld [vmem:[%s188 + $0x740] sm:$0xff]
        %v469 = vld [vmem:[%s188 + $0x748] sm:$0xff]
        %v470 = vld [vmem:[%s188 + $0x750] sm:$0xff]
        %v471 = vld [vmem:[%s188 + $0x758] sm:$0xff]
        %v472 = vld [vmem:[%s188 + $0x760] sm:$0xff]
        %v473 = vld [vmem:[%s188 + $0x768] sm:$0xff]
        %v474 = vld [vmem:[%s188 + $0x770] sm:$0xff]
        %v475 = vld [vmem:[%s188 + $0x778] sm:$0xff]
        %v476 = vld [vmem:[%s188 + $0x780] sm:$0xff]
        %v477 = vld [vmem:[%s188 + $0x788] sm:$0xff]
        %v478 = vld [vmem:[%s188 + $0x790] sm:$0xff]
        %v479 = vld [vmem:[%s188 + $0x798] sm:$0xff]
        %v480 = vld [vmem:[%s188 + $0x7a0] sm:$0xff]
        %v481 = vld [vmem:[%s188 + $0x7a8] sm:$0xff]
        %v482 = vld [vmem:[%s188 + $0x7b0] sm:$0xff]
        %v483 = vld [vmem:[%s188 + $0x7b8] sm:$0xff]
        %v484 = vld [vmem:[%s188 + $0x7c0] sm:$0xff]
        %v485 = vld [vmem:[%s188 + $0x7c8] sm:$0xff]
        %v486 = vld [vmem:[%s188 + $0x7d0] sm:$0xff]
        %v487 = vld [vmem:[%s188 + $0x7d8] sm:$0xff]
        %v488 = vld [vmem:[%s188 + $0x7e0] sm:$0xff]
        %v489 = vld [vmem:[%s188 + $0x7e8] sm:$0xff]
        %v490 = vld [vmem:[%s188 + $0x7f0] sm:$0xff]
        %v491 = vld [vmem:[%s188 + $0x7f8] sm:$0xff]
        %v492 = vld [vmem:[%s188 + $0x800] sm:$0xff]
        %v493 = vld [vmem:[%s188 + $0x808] sm:$0xff]
        %v494 = vld [vmem:[%s188 + $0x810] sm:$0xff]
        %v495 = vld [vmem:[%s188 + $0x818] sm:$0xff]
        %v496 = vld [vmem:[%s188 + $0x820] sm:$0xff]
        %v497 = vld [vmem:[%s188 + $0x828] sm:$0xff]
        %v498 = vld [vmem:[%s188 + $0x830] sm:$0xff]
        %v499 = vld [vmem:[%s188 + $0x838] sm:$0xff]
        %v500 = vld [vmem:[%s188 + $0x840] sm:$0xff]
        %v501 = vld [vmem:[%s188 + $0x848] sm:$0xff]
        %v502 = vld [vmem:[%s188 + $0x850] sm:$0xff]
        %v503 = vld [vmem:[%s188 + $0x858] sm:$0xff]
        %v504 = vld [vmem:[%s188 + $0x860] sm:$0xff]
        %v505 = vld [vmem:[%s188 + $0x868] sm:$0xff]
        %v506 = vld [vmem:[%s188 + $0x870] sm:$0xff]
        %v507 = vld [vmem:[%s188 + $0x878] sm:$0xff]
        %v508 = vld [vmem:[%s188 + $0x880] sm:$0xff]
        %v509 = vld [vmem:[%s188 + $0x888] sm:$0xff]
        %v510 = vld [vmem:[%s188 + $0x890] sm:$0xff]
        %v511 = vld [vmem:[%s188 + $0x898] sm:$0xff]
        %v512 = vld [vmem:[%s188 + $0x8a0] sm:$0xff]
        %v513 = vld [vmem:[%s188 + $0x8a8] sm:$0xff]
        %v514 = vld [vmem:[%s188 + $0x8b0] sm:$0xff]
        %v515 = vld [vmem:[%s188 + $0x8b8] sm:$0xff]
        %v516 = vld [vmem:[%s188 + $0x8c0] sm:$0xff]
        %v517 = vld [vmem:[%s188 + $0x8c8] sm:$0xff]
        %v518 = vld [vmem:[%s188 + $0x8d0] sm:$0xff]
        %v519 = vld [vmem:[%s188 + $0x8d8] sm:$0xff]
        %v520 = vld [vmem:[%s188 + $0x8e0] sm:$0xff]
        %v521 = vld [vmem:[%s188 + $0x8e8] sm:$0xff]
        %v522 = vld [vmem:[%s188 + $0x8f0] sm:$0xff]
        %v523 = vld [vmem:[%s188 + $0x8f8] sm:$0xff]
        %v524 = vld [vmem:[%s188 + $0x900] sm:$0xff]
        %v525 = vld [vmem:[%s188 + $0x908] sm:$0xff]
        %v526 = vld [vmem:[%s188 + $0x910] sm:$0xff]
        %v527 = vld [vmem:[%s188 + $0x918] sm:$0xff]
        %v528 = vld [vmem:[%s188 + $0x920] sm:$0xff]
        %v529 = vld [vmem:[%s188 + $0x928] sm:$0xff]
        %v530 = vld [vmem:[%s188 + $0x930] sm:$0xff]
        %v531 = vld [vmem:[%s188 + $0x938] sm:$0xff]
        %v532 = vld [vmem:[%s188 + $0x940] sm:$0xff]
        %v533 = vld [vmem:[%s188 + $0x948] sm:$0xff]
        %v534 = vld [vmem:[%s188 + $0x950] sm:$0xff]
        %v535 = vld [vmem:[%s188 + $0x958] sm:$0xff]
        %v536 = vld [vmem:[%s188 + $0x960] sm:$0xff]
        %v537 = vld [vmem:[%s188 + $0x968] sm:$0xff]
        %v538 = vld [vmem:[%s188 + $0x970] sm:$0xff]
        %v539 = vld [vmem:[%s188 + $0x978] sm:$0xff]
        %v540 = vld [vmem:[%s188 + $0x980] sm:$0xff]
        %v541 = vld [vmem:[%s188 + $0x988] sm:$0xff]
        %v542 = vld [vmem:[%s188 + $0x990] sm:$0xff]
        %v543 = vld [vmem:[%s188 + $0x998] sm:$0xff]
        %v544 = vld [vmem:[%s188 + $0x9a0] sm:$0xff]
        %v545 = vld [vmem:[%s188 + $0x9a8] sm:$0xff]
        %v546 = vld [vmem:[%s188 + $0x9b0] sm:$0xff]
        %v547 = vld [vmem:[%s188 + $0x9b8] sm:$0xff]
        %v548 = vld [vmem:[%s188 + $0x9c0] sm:$0xff]
        %v549 = vld [vmem:[%s188 + $0x9c8] sm:$0xff]
        %v550 = vld [vmem:[%s188 + $0x9d0] sm:$0xff]
        %v551 = vld [vmem:[%s188 + $0x9d8] sm:$0xff]
        %v552 = vld [vmem:[%s188 + $0x9e0] sm:$0xff]
        %v553 = vld [vmem:[%s188 + $0x9e8] sm:$0xff]
        %v554 = vld [vmem:[%s188 + $0x9f0] sm:$0xff]
        %v555 = vld [vmem:[%s188 + $0x9f8] sm:$0xff]
        %v556 = vld [vmem:[%s188 + $0xa00] sm:$0xff]
        %v557 = vld [vmem:[%s188 + $0xa08] sm:$0xff]
        %v558 = vld [vmem:[%s188 + $0xa10] sm:$0xff]
        %v559 = vld [vmem:[%s188 + $0xa18] sm:$0xff]
        %v560 = vld [vmem:[%s188 + $0xa20] sm:$0xff]
        %v561 = vld [vmem:[%s188 + $0xa28] sm:$0xff]
        %v562 = vld [vmem:[%s188 + $0xa30] sm:$0xff]
        %v563 = vld [vmem:[%s188 + $0xa38] sm:$0xff]
        %v564 = vld [vmem:[%s188 + $0xa40] sm:$0xff]
        %v565 = vld [vmem:[%s188 + $0xa48] sm:$0xff]
        %v566 = vld [vmem:[%s188 + $0xa50] sm:$0xff]
        %v567 = vld [vmem:[%s188 + $0xa58] sm:$0xff]
        %v568 = vld [vmem:[%s188 + $0xa60] sm:$0xff]
        %v569 = vld [vmem:[%s188 + $0xa68] sm:$0xff]
        %v570 = vld [vmem:[%s188 + $0xa70] sm:$0xff]
        %v571 = vld [vmem:[%s188 + $0xa78] sm:$0xff]
        %v572 = vld [vmem:[%s188 + $0xa80] sm:$0xff]
        %v573 = vld [vmem:[%s188 + $0xa88] sm:$0xff]
        %v574 = vld [vmem:[%s188 + $0xa90] sm:$0xff]
        %v575 = vld [vmem:[%s188 + $0xa98] sm:$0xff]
        %v576 = vld [vmem:[%s188 + $0xaa0] sm:$0xff]
        %v577 = vld [vmem:[%s188 + $0xaa8] sm:$0xff]
        %v578 = vld [vmem:[%s188 + $0xab0] sm:$0xff]
        %v579 = vld [vmem:[%s188 + $0xab8] sm:$0xff]
        %v580 = vld [vmem:[%s188 + $0xac0] sm:$0xff]
        %v581 = vld [vmem:[%s188 + $0xac8] sm:$0xff]
        %v582 = vld [vmem:[%s188 + $0xad0] sm:$0xff]
        %v583 = vld [vmem:[%s188 + $0xad8] sm:$0xff]
        %v584 = vld [vmem:[%s188 + $0xae0] sm:$0xff]
        %v585 = vld [vmem:[%s188 + $0xae8] sm:$0xff]
        %v586 = vld [vmem:[%s188 + $0xaf0] sm:$0xff]
        %v587 = vld [vmem:[%s188 + $0xaf8] sm:$0xff]
        %v588 = vld [vmem:[%s188 + $0xb00] sm:$0xff]
        %v589 = vld [vmem:[%s188 + $0xb08] sm:$0xff]
        %v590 = vld [vmem:[%s188 + $0xb10] sm:$0xff]
        %v591 = vld [vmem:[%s188 + $0xb18] sm:$0xff]
        %v592 = vld [vmem:[%s188 + $0xb20] sm:$0xff]
        %v593 = vld [vmem:[%s188 + $0xb28] sm:$0xff]
        %v594 = vld [vmem:[%s188 + $0xb30] sm:$0xff]
        %v595 = vld [vmem:[%s188 + $0xb38] sm:$0xff]
        %v596 = vld [vmem:[%s188 + $0xb40] sm:$0xff]
        %v597 = vld [vmem:[%s188 + $0xb48] sm:$0xff]
        %v598 = vld [vmem:[%s188 + $0xb50] sm:$0xff]
        %v599 = vld [vmem:[%s188 + $0xb58] sm:$0xff]
        %v600 = vld [vmem:[%s188 + $0xb60] sm:$0xff]
        %v601 = vld [vmem:[%s188 + $0xb68] sm:$0xff]
        %v602 = vld [vmem:[%s188 + $0xb70] sm:$0xff]
        %v603 = vld [vmem:[%s188 + $0xb78] sm:$0xff]
        %v604 = vld [vmem:[%s188 + $0xb80] sm:$0xff]
        %v605 = vld [vmem:[%s188 + $0xb88] sm:$0xff]
        %v606 = vld [vmem:[%s188 + $0xb90] sm:$0xff]
        %v607 = vld [vmem:[%s188 + $0xb98] sm:$0xff]
        %v608 = vld [vmem:[%s188 + $0xba0] sm:$0xff]
        %v609 = vld [vmem:[%s188 + $0xba8] sm:$0xff]
        %v610 = vld [vmem:[%s188 + $0xbb0] sm:$0xff]
        %v611 = vld [vmem:[%s188 + $0xbb8] sm:$0xff]
        %v612 = vld [vmem:[%s188 + $0xbc0] sm:$0xff]
        %v613 = vld [vmem:[%s188 + $0xbc8] sm:$0xff]
        %v614 = vld [vmem:[%s188 + $0xbd0] sm:$0xff]
        %v615 = vld [vmem:[%s188 + $0xbd8] sm:$0xff]
        %v616 = vld [vmem:[%s188 + $0xbe0] sm:$0xff]
        %v617 = vld [vmem:[%s188 + $0xbe8] sm:$0xff]
        %v618 = vld [vmem:[%s188 + $0xbf0] sm:$0xff]
        %v619 = vld [vmem:[%s188 + $0xbf8] sm:$0xff]
        %v620 = vld [vmem:[%s188 + $0xc00] sm:$0xff]
        %v621 = vld [vmem:[%s188 + $0xc08] sm:$0xff]
        %v622 = vld [vmem:[%s188 + $0xc10] sm:$0xff]
        %v623 = vld [vmem:[%s188 + $0xc18] sm:$0xff]
        %v624 = vld [vmem:[%s188 + $0xc20] sm:$0xff]
        %v625 = vld [vmem:[%s188 + $0xc28] sm:$0xff]
        %v626 = vld [vmem:[%s188 + $0xc30] sm:$0xff]
        %v627 = vld [vmem:[%s188 + $0xc38] sm:$0xff]
        %v628 = vld [vmem:[%s188 + $0xc40] sm:$0xff]
        %v629 = vld [vmem:[%s188 + $0xc48] sm:$0xff]
        %v630 = vld [vmem:[%s188 + $0xc50] sm:$0xff]
        %v631 = vld [vmem:[%s188 + $0xc58] sm:$0xff]
        %v632 = vld [vmem:[%s188 + $0xc60] sm:$0xff]
        %v633 = vld [vmem:[%s188 + $0xc68] sm:$0xff]
        %v634 = vld [vmem:[%s188 + $0xc70] sm:$0xff]
        %v635 = vld [vmem:[%s188 + $0xc78] sm:$0xff]
        %v636 = vld [vmem:[%s188 + $0xc80] sm:$0xff]
        %v637 = vld [vmem:[%s188 + $0xc88] sm:$0xff]
        %v638 = vld [vmem:[%s188 + $0xc90] sm:$0xff]
        %v639 = vld [vmem:[%s188 + $0xc98] sm:$0xff]
        %v640 = vld [vmem:[%s188 + $0xca0] sm:$0xff]
        %v641 = vld [vmem:[%s188 + $0xca8] sm:$0xff]
        %v642 = vld [vmem:[%s188 + $0xcb0] sm:$0xff]
        %v643 = vld [vmem:[%s188 + $0xcb8] sm:$0xff]
        %v644 = vld [vmem:[%s188 + $0xcc0] sm:$0xff]
        %v645 = vld [vmem:[%s188 + $0xcc8] sm:$0xff]
        %v646 = vld [vmem:[%s188 + $0xcd0] sm:$0xff]
        %v647 = vld [vmem:[%s188 + $0xcd8] sm:$0xff]
        %v648 = vld [vmem:[%s188 + $0xce0] sm:$0xff]
        %v649 = vld [vmem:[%s188 + $0xce8] sm:$0xff]
        %v650 = vld [vmem:[%s188 + $0xcf0] sm:$0xff]
        %v651 = vld [vmem:[%s188 + $0xcf8] sm:$0xff]
        %v652 = vld [vmem:[%s188 + $0xd00] sm:$0xff]
        %v653 = vld [vmem:[%s188 + $0xd08] sm:$0xff]
        %v654 = vld [vmem:[%s188 + $0xd10] sm:$0xff]
        %v655 = vld [vmem:[%s188 + $0xd18] sm:$0xff]
        %v656 = vld [vmem:[%s188 + $0xd20] sm:$0xff]
        %v657 = vld [vmem:[%s188 + $0xd28] sm:$0xff]
        %v658 = vld [vmem:[%s188 + $0xd30] sm:$0xff]
        %v659 = vld [vmem:[%s188 + $0xd38] sm:$0xff]
        %v660 = vld [vmem:[%s188 + $0xd40] sm:$0xff]
        %v661 = vld [vmem:[%s188 + $0xd48] sm:$0xff]
        %v662 = vld [vmem:[%s188 + $0xd50] sm:$0xff]
        %v663 = vld [vmem:[%s188 + $0xd58] sm:$0xff]
        %v664 = vld [vmem:[%s188 + $0xd60] sm:$0xff]
        %v665 = vld [vmem:[%s188 + $0xd68] sm:$0xff]
        %v666 = vld [vmem:[%s188 + $0xd70] sm:$0xff]
        %v667 = vld [vmem:[%s188 + $0xd78] sm:$0xff]
        %v668 = vld [vmem:[%s188 + $0xd80] sm:$0xff]
        %v669 = vld [vmem:[%s188 + $0xd88] sm:$0xff]
        %v670 = vld [vmem:[%s188 + $0xd90] sm:$0xff]
        %v671 = vld [vmem:[%s188 + $0xd98] sm:$0xff]
        %v672 = vld [vmem:[%s188 + $0xda0] sm:$0xff]
        %v673 = vld [vmem:[%s188 + $0xda8] sm:$0xff]
        %v674 = vld [vmem:[%s188 + $0xdb0] sm:$0xff]
        %v675 = vld [vmem:[%s188 + $0xdb8] sm:$0xff]
        %v676 = vld [vmem:[%s188 + $0xdc0] sm:$0xff]
        %v677 = vld [vmem:[%s188 + $0xdc8] sm:$0xff]
        %v678 = vld [vmem:[%s188 + $0xdd0] sm:$0xff]
        %v679 = vld [vmem:[%s188 + $0xdd8] sm:$0xff]
        %v680 = vld [vmem:[%s188 + $0xde0] sm:$0xff]
        %v681 = vld [vmem:[%s188 + $0xde8] sm:$0xff]
        %v682 = vld [vmem:[%s188 + $0xdf0] sm:$0xff]
        %v683 = vld [vmem:[%s188 + $0xdf8] sm:$0xff]
        %v684 = vld [vmem:[%s188 + $0xe00] sm:$0xff]
        %v685 = vld [vmem:[%s188 + $0xe08] sm:$0xff]
        %v686 = vld [vmem:[%s188 + $0xe10] sm:$0xff]
        %v687 = vld [vmem:[%s188 + $0xe18] sm:$0xff]
        %v688 = vld [vmem:[%s188 + $0xe20] sm:$0xff]
        %v689 = vld [vmem:[%s188 + $0xe28] sm:$0xff]
        %v690 = vld [vmem:[%s188 + $0xe30] sm:$0xff]
        %v691 = vld [vmem:[%s188 + $0xe38] sm:$0xff]
        %v692 = vld [vmem:[%s188 + $0xe40] sm:$0xff]
        %v693 = vld [vmem:[%s188 + $0xe48] sm:$0xff]
        %v694 = vld [vmem:[%s188 + $0xe50] sm:$0xff]
        %v695 = vld [vmem:[%s188 + $0xe58] sm:$0xff]
        %v696 = vld [vmem:[%s188 + $0xe60] sm:$0xff]
        %v697 = vld [vmem:[%s188 + $0xe68] sm:$0xff]
        %v698 = vld [vmem:[%s188 + $0xe70] sm:$0xff]
        %v699 = vld [vmem:[%s188 + $0xe78] sm:$0xff]
        %v700 = vld [vmem:[%s188 + $0xe80] sm:$0xff]
        %v701 = vld [vmem:[%s188 + $0xe88] sm:$0xff]
        %v702 = vld [vmem:[%s188 + $0xe90] sm:$0xff]
        %v703 = vld [vmem:[%s188 + $0xe98] sm:$0xff]
        %v704 = vld [vmem:[%s188 + $0xea0] sm:$0xff]
        %v705 = vld [vmem:[%s188 + $0xea8] sm:$0xff]
        %v706 = vld [vmem:[%s188 + $0xeb0] sm:$0xff]
        %v707 = vld [vmem:[%s188 + $0xeb8] sm:$0xff]
        %v708 = vld [vmem:[%s188 + $0xec0] sm:$0xff]
        %v709 = vld [vmem:[%s188 + $0xec8] sm:$0xff]
        %v710 = vld [vmem:[%s188 + $0xed0] sm:$0xff]
        %v711 = vld [vmem:[%s188 + $0xed8] sm:$0xff]
        %v712 = vld [vmem:[%s188 + $0xee0] sm:$0xff]
        %v713 = vld [vmem:[%s188 + $0xee8] sm:$0xff]
        %v714 = vld [vmem:[%s188 + $0xef0] sm:$0xff]
        %v715 = vld [vmem:[%s188 + $0xef8] sm:$0xff]
        %v716 = vld [vmem:[%s188 + $0xf00] sm:$0xff]
        %v717 = vld [vmem:[%s188 + $0xf08] sm:$0xff]
        %v718 = vld [vmem:[%s188 + $0xf10] sm:$0xff]
        %v719 = vld [vmem:[%s188 + $0xf18] sm:$0xff]
        %v720 = vld [vmem:[%s188 + $0xf20] sm:$0xff]
        %v721 = vld [vmem:[%s188 + $0xf28] sm:$0xff]
        %v722 = vld [vmem:[%s188 + $0xf30] sm:$0xff]
        %v723 = vld [vmem:[%s188 + $0xf38] sm:$0xff]
        %v724 = vld [vmem:[%s188 + $0xf40] sm:$0xff]
        %v725 = vld [vmem:[%s188 + $0xf48] sm:$0xff]
        %v726 = vld [vmem:[%s188 + $0xf50] sm:$0xff]
        %v727 = vld [vmem:[%s188 + $0xf58] sm:$0xff]
        %v728 = vld [vmem:[%s188 + $0xf60] sm:$0xff]
        %v729 = vld [vmem:[%s188 + $0xf68] sm:$0xff]
        %v730 = vld [vmem:[%s188 + $0xf70] sm:$0xff]
        %v731 = vld [vmem:[%s188 + $0xf78] sm:$0xff]
        %v732 = vld [vmem:[%s188 + $0xf80] sm:$0xff]
        %v733 = vld [vmem:[%s188 + $0xf88] sm:$0xff]
        %v734 = vld [vmem:[%s188 + $0xf90] sm:$0xff]
        %v735 = vld [vmem:[%s188 + $0xf98] sm:$0xff]
        %v736 = vld [vmem:[%s188 + $0xfa0] sm:$0xff]
        %v737 = vld [vmem:[%s188 + $0xfa8] sm:$0xff]
        %v738 = vld [vmem:[%s188 + $0xfb0] sm:$0xff]
        %v739 = vld [vmem:[%s188 + $0xfb8] sm:$0xff]
        %v740 = vld [vmem:[%s198] sm:$0xff]
        %v741 = vld [vmem:[%s198 + $0x8] sm:$0xff]
        %v742 = vld [vmem:[%s198 + $0x10] sm:$0xff]
        %v743 = vld [vmem:[%s198 + $0x18] sm:$0xff]
        %v744 = vld [vmem:[%s198 + $0x20] sm:$0xff]
        %v745 = vld [vmem:[%s198 + $0x28] sm:$0xff]
        %v746 = vld [vmem:[%s198 + $0x30] sm:$0xff]
        %v747 = vld [vmem:[%s198 + $0x38] sm:$0xff]
        %v748 = vld [vmem:[%s198 + $0x40] sm:$0xff]
        %v749 = vld [vmem:[%s198 + $0x48] sm:$0xff]
        %v750 = vld [vmem:[%s198 + $0x50] sm:$0xff]
        %v751 = vld [vmem:[%s198 + $0x58] sm:$0xff]
        %v752 = vld [vmem:[%s198 + $0x60] sm:$0xff]
        %v753 = vld [vmem:[%s198 + $0x68] sm:$0xff]
        %v754 = vld [vmem:[%s198 + $0x70] sm:$0xff]
        %v755 = vld [vmem:[%s198 + $0x78] sm:$0x3f]
        %v772 = vperm.slane %v740, 0
        %v773 = vperm.slane %v740, 1
        %v774 = vperm.slane %v740, 2
        %v775 = vperm.slane %v740, 3
        %v776 = vperm.slane %v740, 4
        %v777 = vperm.slane %v740, 5
        %v778 = vperm.slane %v740, 6
        %v779 = vperm.slane %v740, 7
        %v780 = vperm.slane %v741, 0
        %v781 = vperm.slane %v741, 1
        %v782 = vperm.slane %v741, 2
        %v783 = vperm.slane %v741, 3
        %v784 = vperm.slane %v741, 4
        %v785 = vperm.slane %v741, 5
        %v786 = vperm.slane %v741, 6
        %v787 = vperm.slane %v741, 7
        %v788 = vperm.slane %v742, 0
        %v789 = vperm.slane %v742, 1
        %v790 = vperm.slane %v742, 2
        %v791 = vperm.slane %v742, 3
        %v792 = vperm.slane %v742, 4
        %v793 = vperm.slane %v742, 5
        %v794 = vperm.slane %v742, 6
        %v795 = vperm.slane %v742, 7
        %v796 = vperm.slane %v743, 0
        %v797 = vperm.slane %v743, 1
        %v798 = vperm.slane %v743, 2
        %v799 = vperm.slane %v743, 3
        %v800 = vperm.slane %v743, 4
        %v801 = vperm.slane %v743, 5
        %v802 = vperm.slane %v743, 6
        %v803 = vperm.slane %v743, 7
        %v804 = vperm.slane %v744, 0
        %v805 = vperm.slane %v744, 1
        %v806 = vperm.slane %v744, 2
        %v807 = vperm.slane %v744, 3
        %v808 = vperm.slane %v744, 4
        %v809 = vperm.slane %v744, 5
        %v810 = vperm.slane %v744, 6
        %v811 = vperm.slane %v744, 7
        %v812 = vperm.slane %v745, 0
        %v813 = vperm.slane %v745, 1
        %v814 = vperm.slane %v745, 2
        %v815 = vperm.slane %v745, 3
        %v816 = vperm.slane %v745, 4
        %v817 = vperm.slane %v745, 5
        %v818 = vperm.slane %v745, 6
        %v819 = vperm.slane %v745, 7
        %v820 = vperm.slane %v746, 0
        %v821 = vperm.slane %v746, 1
        %v822 = vperm.slane %v746, 2
        %v823 = vperm.slane %v746, 3
        %v824 = vperm.slane %v746, 4
        %v825 = vperm.slane %v746, 5
        %v826 = vperm.slane %v746, 6
        %v827 = vperm.slane %v746, 7
        %v828 = vperm.slane %v747, 0
        %v829 = vperm.slane %v747, 1
        %v830 = vperm.slane %v747, 2
        %v831 = vperm.slane %v747, 3
        %v832 = vperm.slane %v747, 4
        %v833 = vperm.slane %v747, 5
        %v834 = vperm.slane %v747, 6
        %v835 = vperm.slane %v747, 7
        %v836 = vperm.slane %v748, 0
        %v837 = vperm.slane %v748, 1
        %v838 = vperm.slane %v748, 2
        %v839 = vperm.slane %v748, 3
        %v840 = vperm.slane %v748, 4
        %v841 = vperm.slane %v748, 5
        %v842 = vperm.slane %v748, 6
        %v843 = vperm.slane %v748, 7
        %v844 = vperm.slane %v749, 0
        %v845 = vperm.slane %v749, 1
        %v846 = vperm.slane %v749, 2
        %v847 = vperm.slane %v749, 3
        %v848 = vperm.slane %v749, 4
        %v849 = vperm.slane %v749, 5
        %v850 = vperm.slane %v749, 6
        %v851 = vperm.slane %v749, 7
        %v852 = vperm.slane %v750, 0
        %v853 = vperm.slane %v750, 1
        %v854 = vperm.slane %v750, 2
        %v855 = vperm.slane %v750, 3
        %v856 = vperm.slane %v750, 4
        %v857 = vperm.slane %v750, 5
        %v858 = vperm.slane %v750, 6
        %v859 = vperm.slane %v750, 7
        %v860 = vperm.slane %v751, 0
        %v861 = vperm.slane %v751, 1
        %v862 = vperm.slane %v751, 2
        %v863 = vperm.slane %v751, 3
        %v864 = vperm.slane %v751, 4
        %v865 = vperm.slane %v751, 5
        %v866 = vperm.slane %v751, 6
        %v867 = vperm.slane %v751, 7
        %v868 = vperm.slane %v752, 0
        %v869 = vperm.slane %v752, 1
        %v870 = vperm.slane %v752, 2
        %v871 = vperm.slane %v752, 3
        %v872 = vperm.slane %v752, 4
        %v873 = vperm.slane %v752, 5
        %v874 = vperm.slane %v752, 6
        %v875 = vperm.slane %v752, 7
        %v876 = vperm.slane %v753, 0
        %v877 = vperm.slane %v753, 1
        %v878 = vperm.slane %v753, 2
        %v879 = vperm.slane %v753, 3
        %v880 = vperm.slane %v753, 4
        %v881 = vperm.slane %v753, 5
        %v882 = vperm.slane %v753, 6
        %v883 = vperm.slane %v753, 7
        %v884 = vperm.slane %v754, 0
        %v885 = vperm.slane %v754, 1
        %v886 = vperm.slane %v754, 2
        %v887 = vperm.slane %v754, 3
        %v888 = vperm.slane %v754, 4
        %v889 = vperm.slane %v754, 5
        %v890 = vperm.slane %v754, 6
        %v891 = vperm.slane %v754, 7
        %v892 = vperm.slane %v755, 0
        %v893 = vperm.slane %v755, 1
        %v894 = vperm.slane %v755, 2
        %v895 = vperm.slane %v755, 3
        %v896 = vperm.slane %v755, 4
        %v897 = vperm.slane %v755, 5
        %vm1024 = vcmask 261120
        %v1026 = vsel %vm1024, %v235, 0
        %1028 = vmatpush.msra.mxu0 0.0
        %1029 = vmatpush.msra.mxu0 0.0
        %1030 = vmatpush.msra.mxu0 0.0
        %1031 = vmatpush.msra.mxu0 0.0
        %1032 = vmatpush.msra.mxu0 0.0
        %1033 = vmatpush.msra.mxu0 0.0
        %1034 = vmatpush.msra.mxu0 0.0
        %1035 = vmatpush.msra.mxu0 0.0
        %1036 = vmatpush.msra.mxu0 0.0
        %1037 = vmatpush.msra.mxu0 0.0
        %1038 = vmatpush.msra.mxu0 0.0
        %1039 = vmatpush.msra.mxu0 0.0
        %1040 = vmatpush.msra.mxu0 %v614
        %1041 = vmatpush.msra.mxu0 %v488
        %1042 = vmatpush.msra.mxu0 %v362
        %1043 = vmatpush.msra.mxu0 %v236
        %1044 = vmatmul.f32.gmra.mxu0 %v1026
        %v1045 = vpop.f32.mrf.mxu0
        %v1046 = vadd.f32 %v772, %v1045
        %1047 = vdwg.mxu0
        %1048 = vmatpush.msra.mxu0 0.0
        %1049 = vmatpush.msra.mxu0 0.0
        %1050 = vmatpush.msra.mxu0 0.0
        %1051 = vmatpush.msra.mxu0 0.0
        %1052 = vmatpush.msra.mxu0 0.0
        %1053 = vmatpush.msra.mxu0 0.0
        %1054 = vmatpush.msra.mxu0 0.0
        %1055 = vmatpush.msra.mxu0 0.0
        %1056 = vmatpush.msra.mxu0 0.0
        %1057 = vmatpush.msra.mxu0 0.0
        %1058 = vmatpush.msra.mxu0 0.0
        %1059 = vmatpush.msra.mxu0 0.0
        %1060 = vmatpush.msra.mxu0 %v615
        %1061 = vmatpush.msra.mxu0 %v489
        %1062 = vmatpush.msra.mxu0 %v363
        %1063 = vmatpush.msra.mxu0 %v237
        %1064 = vmatmul.f32.gmra.mxu0 %v1026
        %v1065 = vpop.f32.mrf.mxu0
        %v1066 = vadd.f32 %v773, %v1065
        %1067 = vdwg.mxu0
        %1068 = vmatpush.msra.mxu0 0.0
        %1069 = vmatpush.msra.mxu0 0.0
        %1070 = vmatpush.msra.mxu0 0.0
        %1071 = vmatpush.msra.mxu0 0.0
        %1072 = vmatpush.msra.mxu0 0.0
        %1073 = vmatpush.msra.mxu0 0.0
        %1074 = vmatpush.msra.mxu0 0.0
        %1075 = vmatpush.msra.mxu0 0.0
        %1076 = vmatpush.msra.mxu0 0.0
        %1077 = vmatpush.msra.mxu0 0.0
        %1078 = vmatpush.msra.mxu0 0.0
        %1079 = vmatpush.msra.mxu0 0.0
        %1080 = vmatpush.msra.mxu0 %v616
        %1081 = vmatpush.msra.mxu0 %v490
        %1082 = vmatpush.msra.mxu0 %v364
        %1083 = vmatpush.msra.mxu0 %v238
        %1084 = vmatmul.f32.gmra.mxu0 %v1026
        %v1085 = vpop.f32.mrf.mxu0
        %v1086 = vadd.f32 %v774, %v1085
        %1087 = vdwg.mxu0
        %1088 = vmatpush.msra.mxu0 0.0
        %1089 = vmatpush.msra.mxu0 0.0
        %1090 = vmatpush.msra.mxu0 0.0
        %1091 = vmatpush.msra.mxu0 0.0
        %1092 = vmatpush.msra.mxu0 0.0
        %1093 = vmatpush.msra.mxu0 0.0
        %1094 = vmatpush.msra.mxu0 0.0
        %1095 = vmatpush.msra.mxu0 0.0
        %1096 = vmatpush.msra.mxu0 0.0
        %1097 = vmatpush.msra.mxu0 0.0
        %1098 = vmatpush.msra.mxu0 0.0
        %1099 = vmatpush.msra.mxu0 0.0
        %1100 = vmatpush.msra.mxu0 %v617
        %1101 = vmatpush.msra.mxu0 %v491
        %1102 = vmatpush.msra.mxu0 %v365
        %1103 = vmatpush.msra.mxu0 %v239
        %1104 = vmatmul.f32.gmra.mxu0 %v1026
        %v1105 = vpop.f32.mrf.mxu0
        %v1106 = vadd.f32 %v775, %v1105
        %1107 = vdwg.mxu0
        %1108 = vmatpush.msra.mxu0 0.0
        %1109 = vmatpush.msra.mxu0 0.0
        %1110 = vmatpush.msra.mxu0 0.0
        %1111 = vmatpush.msra.mxu0 0.0
        %1112 = vmatpush.msra.mxu0 0.0
        %1113 = vmatpush.msra.mxu0 0.0
        %1114 = vmatpush.msra.mxu0 0.0
        %1115 = vmatpush.msra.mxu0 0.0
        %1116 = vmatpush.msra.mxu0 0.0
        %1117 = vmatpush.msra.mxu0 0.0
        %1118 = vmatpush.msra.mxu0 0.0
        %1119 = vmatpush.msra.mxu0 0.0
        %1120 = vmatpush.msra.mxu0 %v618
        %1121 = vmatpush.msra.mxu0 %v492
        %1122 = vmatpush.msra.mxu0 %v366
        %1123 = vmatpush.msra.mxu0 %v240
        %1124 = vmatmul.f32.gmra.mxu0 %v1026
        %v1125 = vpop.f32.mrf.mxu0
        %v1126 = vadd.f32 %v776, %v1125
        %1127 = vdwg.mxu0
        %1128 = vmatpush.msra.mxu0 0.0
        %1129 = vmatpush.msra.mxu0 0.0
        %1130 = vmatpush.msra.mxu0 0.0
        %1131 = vmatpush.msra.mxu0 0.0
        %1132 = vmatpush.msra.mxu0 0.0
        %1133 = vmatpush.msra.mxu0 0.0
        %1134 = vmatpush.msra.mxu0 0.0
        %1135 = vmatpush.msra.mxu0 0.0
        %1136 = vmatpush.msra.mxu0 0.0
        %1137 = vmatpush.msra.mxu0 0.0
        %1138 = vmatpush.msra.mxu0 0.0
        %1139 = vmatpush.msra.mxu0 0.0
        %1140 = vmatpush.msra.mxu0 %v619
        %1141 = vmatpush.msra.mxu0 %v493
        %1142 = vmatpush.msra.mxu0 %v367
        %1143 = vmatpush.msra.mxu0 %v241
        %1144 = vmatmul.f32.gmra.mxu0 %v1026
        %v1145 = vpop.f32.mrf.mxu0
        %v1146 = vadd.f32 %v777, %v1145
        %1147 = vdwg.mxu0
        %1148 = vmatpush.msra.mxu0 0.0
        %1149 = vmatpush.msra.mxu0 0.0
        %1150 = vmatpush.msra.mxu0 0.0
        %1151 = vmatpush.msra.mxu0 0.0
        %1152 = vmatpush.msra.mxu0 0.0
        %1153 = vmatpush.msra.mxu0 0.0
        %1154 = vmatpush.msra.mxu0 0.0
        %1155 = vmatpush.msra.mxu0 0.0
        %1156 = vmatpush.msra.mxu0 0.0
        %1157 = vmatpush.msra.mxu0 0.0
        %1158 = vmatpush.msra.mxu0 0.0
        %1159 = vmatpush.msra.mxu0 0.0
        %1160 = vmatpush.msra.mxu0 %v620
        %1161 = vmatpush.msra.mxu0 %v494
        %1162 = vmatpush.msra.mxu0 %v368
        %1163 = vmatpush.msra.mxu0 %v242
        %1164 = vmatmul.f32.gmra.mxu0 %v1026
        %v1165 = vpop.f32.mrf.mxu0
        %v1166 = vadd.f32 %v778, %v1165
        %1167 = vdwg.mxu0
        %1168 = vmatpush.msra.mxu0 0.0
        %1169 = vmatpush.msra.mxu0 0.0
        %1170 = vmatpush.msra.mxu0 0.0
        %1171 = vmatpush.msra.mxu0 0.0
        %1172 = vmatpush.msra.mxu0 0.0
        %1173 = vmatpush.msra.mxu0 0.0
        %1174 = vmatpush.msra.mxu0 0.0
        %1175 = vmatpush.msra.mxu0 0.0
        %1176 = vmatpush.msra.mxu0 0.0
        %1177 = vmatpush.msra.mxu0 0.0
        %1178 = vmatpush.msra.mxu0 0.0
        %1179 = vmatpush.msra.mxu0 0.0
        %1180 = vmatpush.msra.mxu0 %v621
        %1181 = vmatpush.msra.mxu0 %v495
        %1182 = vmatpush.msra.mxu0 %v369
        %1183 = vmatpush.msra.mxu0 %v243
        %1184 = vmatmul.f32.gmra.mxu0 %v1026
        %v1185 = vpop.f32.mrf.mxu0
        %v1186 = vadd.f32 %v779, %v1185
        %1187 = vdwg.mxu0
        %1188 = vmatpush.msra.mxu0 0.0
        %1189 = vmatpush.msra.mxu0 0.0
        %1190 = vmatpush.msra.mxu0 0.0
        %1191 = vmatpush.msra.mxu0 0.0
        %1192 = vmatpush.msra.mxu0 0.0
        %1193 = vmatpush.msra.mxu0 0.0
        %1194 = vmatpush.msra.mxu0 0.0
        %1195 = vmatpush.msra.mxu0 0.0
        %1196 = vmatpush.msra.mxu0 0.0
        %1197 = vmatpush.msra.mxu0 0.0
        %1198 = vmatpush.msra.mxu0 0.0
        %1199 = vmatpush.msra.mxu0 0.0
        %1200 = vmatpush.msra.mxu0 %v622
        %1201 = vmatpush.msra.mxu0 %v496
        %1202 = vmatpush.msra.mxu0 %v370
        %1203 = vmatpush.msra.mxu0 %v244
        %1204 = vmatmul.f32.gmra.mxu0 %v1026
        %v1205 = vpop.f32.mrf.mxu0
        %v1206 = vadd.f32 %v780, %v1205
        %1207 = vdwg.mxu0
        %1208 = vmatpush.msra.mxu0 0.0
        %1209 = vmatpush.msra.mxu0 0.0
        %1210 = vmatpush.msra.mxu0 0.0
        %1211 = vmatpush.msra.mxu0 0.0
        %1212 = vmatpush.msra.mxu0 0.0
        %1213 = vmatpush.msra.mxu0 0.0
        %1214 = vmatpush.msra.mxu0 0.0
        %1215 = vmatpush.msra.mxu0 0.0
        %1216 = vmatpush.msra.mxu0 0.0
        %1217 = vmatpush.msra.mxu0 0.0
        %1218 = vmatpush.msra.mxu0 0.0
        %1219 = vmatpush.msra.mxu0 0.0
        %1220 = vmatpush.msra.mxu0 %v623
        %1221 = vmatpush.msra.mxu0 %v497
        %1222 = vmatpush.msra.mxu0 %v371
        %1223 = vmatpush.msra.mxu0 %v245
        %1224 = vmatmul.f32.gmra.mxu0 %v1026
        %v1225 = vpop.f32.mrf.mxu0
        %v1226 = vadd.f32 %v781, %v1225
        %1227 = vdwg.mxu0
        %1228 = vmatpush.msra.mxu0 0.0
        %1229 = vmatpush.msra.mxu0 0.0
        %1230 = vmatpush.msra.mxu0 0.0
        %1231 = vmatpush.msra.mxu0 0.0
        %1232 = vmatpush.msra.mxu0 0.0
        %1233 = vmatpush.msra.mxu0 0.0
        %1234 = vmatpush.msra.mxu0 0.0
        %1235 = vmatpush.msra.mxu0 0.0
        %1236 = vmatpush.msra.mxu0 0.0
        %1237 = vmatpush.msra.mxu0 0.0
        %1238 = vmatpush.msra.mxu0 0.0
        %1239 = vmatpush.msra.mxu0 0.0
        %1240 = vmatpush.msra.mxu0 %v624
        %1241 = vmatpush.msra.mxu0 %v498
        %1242 = vmatpush.msra.mxu0 %v372
        %1243 = vmatpush.msra.mxu0 %v246
        %1244 = vmatmul.f32.gmra.mxu0 %v1026
        %v1245 = vpop.f32.mrf.mxu0
        %v1246 = vadd.f32 %v782, %v1245
        %1247 = vdwg.mxu0
        %1248 = vmatpush.msra.mxu0 0.0
        %1249 = vmatpush.msra.mxu0 0.0
        %1250 = vmatpush.msra.mxu0 0.0
        %1251 = vmatpush.msra.mxu0 0.0
        %1252 = vmatpush.msra.mxu0 0.0
        %1253 = vmatpush.msra.mxu0 0.0
        %1254 = vmatpush.msra.mxu0 0.0
        %1255 = vmatpush.msra.mxu0 0.0
        %1256 = vmatpush.msra.mxu0 0.0
        %1257 = vmatpush.msra.mxu0 0.0
        %1258 = vmatpush.msra.mxu0 0.0
        %1259 = vmatpush.msra.mxu0 0.0
        %1260 = vmatpush.msra.mxu0 %v625
        %1261 = vmatpush.msra.mxu0 %v499
        %1262 = vmatpush.msra.mxu0 %v373
        %1263 = vmatpush.msra.mxu0 %v247
        %1264 = vmatmul.f32.gmra.mxu0 %v1026
        %v1265 = vpop.f32.mrf.mxu0
        %v1266 = vadd.f32 %v783, %v1265
        %1267 = vdwg.mxu0
        %1268 = vmatpush.msra.mxu0 0.0
        %1269 = vmatpush.msra.mxu0 0.0
        %1270 = vmatpush.msra.mxu0 0.0
        %1271 = vmatpush.msra.mxu0 0.0
        %1272 = vmatpush.msra.mxu0 0.0
        %1273 = vmatpush.msra.mxu0 0.0
        %1274 = vmatpush.msra.mxu0 0.0
        %1275 = vmatpush.msra.mxu0 0.0
        %1276 = vmatpush.msra.mxu0 0.0
        %1277 = vmatpush.msra.mxu0 0.0
        %1278 = vmatpush.msra.mxu0 0.0
        %1279 = vmatpush.msra.mxu0 0.0
        %1280 = vmatpush.msra.mxu0 %v626
        %1281 = vmatpush.msra.mxu0 %v500
        %1282 = vmatpush.msra.mxu0 %v374
        %1283 = vmatpush.msra.mxu0 %v248
        %1284 = vmatmul.f32.gmra.mxu0 %v1026
        %v1285 = vpop.f32.mrf.mxu0
        %v1286 = vadd.f32 %v784, %v1285
        %1287 = vdwg.mxu0
        %1288 = vmatpush.msra.mxu0 0.0
        %1289 = vmatpush.msra.mxu0 0.0
        %1290 = vmatpush.msra.mxu0 0.0
        %1291 = vmatpush.msra.mxu0 0.0
        %1292 = vmatpush.msra.mxu0 0.0
        %1293 = vmatpush.msra.mxu0 0.0
        %1294 = vmatpush.msra.mxu0 0.0
        %1295 = vmatpush.msra.mxu0 0.0
        %1296 = vmatpush.msra.mxu0 0.0
        %1297 = vmatpush.msra.mxu0 0.0
        %1298 = vmatpush.msra.mxu0 0.0
        %1299 = vmatpush.msra.mxu0 0.0
        %1300 = vmatpush.msra.mxu0 %v627
        %1301 = vmatpush.msra.mxu0 %v501
        %1302 = vmatpush.msra.mxu0 %v375
        %1303 = vmatpush.msra.mxu0 %v249
        %1304 = vmatmul.f32.gmra.mxu0 %v1026
        %v1305 = vpop.f32.mrf.mxu0
        %v1306 = vadd.f32 %v785, %v1305
        %1307 = vdwg.mxu0
        %1308 = vmatpush.msra.mxu0 0.0
        %1309 = vmatpush.msra.mxu0 0.0
        %1310 = vmatpush.msra.mxu0 0.0
        %1311 = vmatpush.msra.mxu0 0.0
        %1312 = vmatpush.msra.mxu0 0.0
        %1313 = vmatpush.msra.mxu0 0.0
        %1314 = vmatpush.msra.mxu0 0.0
        %1315 = vmatpush.msra.mxu0 0.0
        %1316 = vmatpush.msra.mxu0 0.0
        %1317 = vmatpush.msra.mxu0 0.0
        %1318 = vmatpush.msra.mxu0 0.0
        %1319 = vmatpush.msra.mxu0 0.0
        %1320 = vmatpush.msra.mxu0 %v628
        %1321 = vmatpush.msra.mxu0 %v502
        %1322 = vmatpush.msra.mxu0 %v376
        %1323 = vmatpush.msra.mxu0 %v250
        %1324 = vmatmul.f32.gmra.mxu0 %v1026
        %v1325 = vpop.f32.mrf.mxu0
        %v1326 = vadd.f32 %v786, %v1325
        %1327 = vdwg.mxu0
        %1328 = vmatpush.msra.mxu0 0.0
        %1329 = vmatpush.msra.mxu0 0.0
        %1330 = vmatpush.msra.mxu0 0.0
        %1331 = vmatpush.msra.mxu0 0.0
        %1332 = vmatpush.msra.mxu0 0.0
        %1333 = vmatpush.msra.mxu0 0.0
        %1334 = vmatpush.msra.mxu0 0.0
        %1335 = vmatpush.msra.mxu0 0.0
        %1336 = vmatpush.msra.mxu0 0.0
        %1337 = vmatpush.msra.mxu0 0.0
        %1338 = vmatpush.msra.mxu0 0.0
        %1339 = vmatpush.msra.mxu0 0.0
        %1340 = vmatpush.msra.mxu0 %v629
        %1341 = vmatpush.msra.mxu0 %v503
        %1342 = vmatpush.msra.mxu0 %v377
        %1343 = vmatpush.msra.mxu0 %v251
        %1344 = vmatmul.f32.gmra.mxu0 %v1026
        %v1345 = vpop.f32.mrf.mxu0
        %v1346 = vadd.f32 %v787, %v1345
        %1347 = vdwg.mxu0
        %1348 = vmatpush.msra.mxu0 0.0
        %1349 = vmatpush.msra.mxu0 0.0
        %1350 = vmatpush.msra.mxu0 0.0
        %1351 = vmatpush.msra.mxu0 0.0
        %1352 = vmatpush.msra.mxu0 0.0
        %1353 = vmatpush.msra.mxu0 0.0
        %1354 = vmatpush.msra.mxu0 0.0
        %1355 = vmatpush.msra.mxu0 0.0
        %1356 = vmatpush.msra.mxu0 0.0
        %1357 = vmatpush.msra.mxu0 0.0
        %1358 = vmatpush.msra.mxu0 0.0
        %1359 = vmatpush.msra.mxu0 0.0
        %1360 = vmatpush.msra.mxu0 %v630
        %1361 = vmatpush.msra.mxu0 %v504
        %1362 = vmatpush.msra.mxu0 %v378
        %1363 = vmatpush.msra.mxu0 %v252
        %1364 = vmatmul.f32.gmra.mxu0 %v1026
        %v1365 = vpop.f32.mrf.mxu0
        %v1366 = vadd.f32 %v788, %v1365
        %1367 = vdwg.mxu0
        %1368 = vmatpush.msra.mxu0 0.0
        %1369 = vmatpush.msra.mxu0 0.0
        %1370 = vmatpush.msra.mxu0 0.0
        %1371 = vmatpush.msra.mxu0 0.0
        %1372 = vmatpush.msra.mxu0 0.0
        %1373 = vmatpush.msra.mxu0 0.0
        %1374 = vmatpush.msra.mxu0 0.0
        %1375 = vmatpush.msra.mxu0 0.0
        %1376 = vmatpush.msra.mxu0 0.0
        %1377 = vmatpush.msra.mxu0 0.0
        %1378 = vmatpush.msra.mxu0 0.0
        %1379 = vmatpush.msra.mxu0 0.0
        %1380 = vmatpush.msra.mxu0 %v631
        %1381 = vmatpush.msra.mxu0 %v505
        %1382 = vmatpush.msra.mxu0 %v379
        %1383 = vmatpush.msra.mxu0 %v253
        %1384 = vmatmul.f32.gmra.mxu0 %v1026
        %v1385 = vpop.f32.mrf.mxu0
        %v1386 = vadd.f32 %v789, %v1385
        %1387 = vdwg.mxu0
        %1388 = vmatpush.msra.mxu0 0.0
        %1389 = vmatpush.msra.mxu0 0.0
        %1390 = vmatpush.msra.mxu0 0.0
        %1391 = vmatpush.msra.mxu0 0.0
        %1392 = vmatpush.msra.mxu0 0.0
        %1393 = vmatpush.msra.mxu0 0.0
        %1394 = vmatpush.msra.mxu0 0.0
        %1395 = vmatpush.msra.mxu0 0.0
        %1396 = vmatpush.msra.mxu0 0.0
        %1397 = vmatpush.msra.mxu0 0.0
        %1398 = vmatpush.msra.mxu0 0.0
        %1399 = vmatpush.msra.mxu0 0.0
        %1400 = vmatpush.msra.mxu0 %v632
        %1401 = vmatpush.msra.mxu0 %v506
        %1402 = vmatpush.msra.mxu0 %v380
        %1403 = vmatpush.msra.mxu0 %v254
        %1404 = vmatmul.f32.gmra.mxu0 %v1026
        %v1405 = vpop.f32.mrf.mxu0
        %v1406 = vadd.f32 %v790, %v1405
        %1407 = vdwg.mxu0
        %1408 = vmatpush.msra.mxu0 0.0
        %1409 = vmatpush.msra.mxu0 0.0
        %1410 = vmatpush.msra.mxu0 0.0
        %1411 = vmatpush.msra.mxu0 0.0
        %1412 = vmatpush.msra.mxu0 0.0
        %1413 = vmatpush.msra.mxu0 0.0
        %1414 = vmatpush.msra.mxu0 0.0
        %1415 = vmatpush.msra.mxu0 0.0
        %1416 = vmatpush.msra.mxu0 0.0
        %1417 = vmatpush.msra.mxu0 0.0
        %1418 = vmatpush.msra.mxu0 0.0
        %1419 = vmatpush.msra.mxu0 0.0
        %1420 = vmatpush.msra.mxu0 %v633
        %1421 = vmatpush.msra.mxu0 %v507
        %1422 = vmatpush.msra.mxu0 %v381
        %1423 = vmatpush.msra.mxu0 %v255
        %1424 = vmatmul.f32.gmra.mxu0 %v1026
        %v1425 = vpop.f32.mrf.mxu0
        %v1426 = vadd.f32 %v791, %v1425
        %1427 = vdwg.mxu0
        %1428 = vmatpush.msra.mxu0 0.0
        %1429 = vmatpush.msra.mxu0 0.0
        %1430 = vmatpush.msra.mxu0 0.0
        %1431 = vmatpush.msra.mxu0 0.0
        %1432 = vmatpush.msra.mxu0 0.0
        %1433 = vmatpush.msra.mxu0 0.0
        %1434 = vmatpush.msra.mxu0 0.0
        %1435 = vmatpush.msra.mxu0 0.0
        %1436 = vmatpush.msra.mxu0 0.0
        %1437 = vmatpush.msra.mxu0 0.0
        %1438 = vmatpush.msra.mxu0 0.0
        %1439 = vmatpush.msra.mxu0 0.0
        %1440 = vmatpush.msra.mxu0 %v634
        %1441 = vmatpush.msra.mxu0 %v508
        %1442 = vmatpush.msra.mxu0 %v382
        %1443 = vmatpush.msra.mxu0 %v256
        %1444 = vmatmul.f32.gmra.mxu0 %v1026
        %v1445 = vpop.f32.mrf.mxu0
        %v1446 = vadd.f32 %v792, %v1445
        %1447 = vdwg.mxu0
        %1448 = vmatpush.msra.mxu0 0.0
        %1449 = vmatpush.msra.mxu0 0.0
        %1450 = vmatpush.msra.mxu0 0.0
        %1451 = vmatpush.msra.mxu0 0.0
        %1452 = vmatpush.msra.mxu0 0.0
        %1453 = vmatpush.msra.mxu0 0.0
        %1454 = vmatpush.msra.mxu0 0.0
        %1455 = vmatpush.msra.mxu0 0.0
        %1456 = vmatpush.msra.mxu0 0.0
        %1457 = vmatpush.msra.mxu0 0.0
        %1458 = vmatpush.msra.mxu0 0.0
        %1459 = vmatpush.msra.mxu0 0.0
        %1460 = vmatpush.msra.mxu0 %v635
        %1461 = vmatpush.msra.mxu0 %v509
        %1462 = vmatpush.msra.mxu0 %v383
        %1463 = vmatpush.msra.mxu0 %v257
        %1464 = vmatmul.f32.gmra.mxu0 %v1026
        %v1465 = vpop.f32.mrf.mxu0
        %v1466 = vadd.f32 %v793, %v1465
        %1467 = vdwg.mxu0
        %1468 = vmatpush.msra.mxu0 0.0
        %1469 = vmatpush.msra.mxu0 0.0
        %1470 = vmatpush.msra.mxu0 0.0
        %1471 = vmatpush.msra.mxu0 0.0
        %1472 = vmatpush.msra.mxu0 0.0
        %1473 = vmatpush.msra.mxu0 0.0
        %1474 = vmatpush.msra.mxu0 0.0
        %1475 = vmatpush.msra.mxu0 0.0
        %1476 = vmatpush.msra.mxu0 0.0
        %1477 = vmatpush.msra.mxu0 0.0
        %1478 = vmatpush.msra.mxu0 0.0
        %1479 = vmatpush.msra.mxu0 0.0
        %1480 = vmatpush.msra.mxu0 %v636
        %1481 = vmatpush.msra.mxu0 %v510
        %1482 = vmatpush.msra.mxu0 %v384
        %1483 = vmatpush.msra.mxu0 %v258
        %1484 = vmatmul.f32.gmra.mxu0 %v1026
        %v1485 = vpop.f32.mrf.mxu0
        %v1486 = vadd.f32 %v794, %v1485
        %1487 = vdwg.mxu0
        %1488 = vmatpush.msra.mxu0 0.0
        %1489 = vmatpush.msra.mxu0 0.0
        %1490 = vmatpush.msra.mxu0 0.0
        %1491 = vmatpush.msra.mxu0 0.0
        %1492 = vmatpush.msra.mxu0 0.0
        %1493 = vmatpush.msra.mxu0 0.0
        %1494 = vmatpush.msra.mxu0 0.0
        %1495 = vmatpush.msra.mxu0 0.0
        %1496 = vmatpush.msra.mxu0 0.0
        %1497 = vmatpush.msra.mxu0 0.0
        %1498 = vmatpush.msra.mxu0 0.0
        %1499 = vmatpush.msra.mxu0 0.0
        %1500 = vmatpush.msra.mxu0 %v637
        %1501 = vmatpush.msra.mxu0 %v511
        %1502 = vmatpush.msra.mxu0 %v385
        %1503 = vmatpush.msra.mxu0 %v259
        %1504 = vmatmul.f32.gmra.mxu0 %v1026
        %v1505 = vpop.f32.mrf.mxu0
        %v1506 = vadd.f32 %v795, %v1505
        %1507 = vdwg.mxu0
        %1508 = vmatpush.msra.mxu0 0.0
        %1509 = vmatpush.msra.mxu0 0.0
        %1510 = vmatpush.msra.mxu0 0.0
        %1511 = vmatpush.msra.mxu0 0.0
        %1512 = vmatpush.msra.mxu0 0.0
        %1513 = vmatpush.msra.mxu0 0.0
        %1514 = vmatpush.msra.mxu0 0.0
        %1515 = vmatpush.msra.mxu0 0.0
        %1516 = vmatpush.msra.mxu0 0.0
        %1517 = vmatpush.msra.mxu0 0.0
        %1518 = vmatpush.msra.mxu0 0.0
        %1519 = vmatpush.msra.mxu0 0.0
        %1520 = vmatpush.msra.mxu0 %v638
        %1521 = vmatpush.msra.mxu0 %v512
        %1522 = vmatpush.msra.mxu0 %v386
        %1523 = vmatpush.msra.mxu0 %v260
        %1524 = vmatmul.f32.gmra.mxu0 %v1026
        %v1525 = vpop.f32.mrf.mxu0
        %v1526 = vadd.f32 %v796, %v1525
        %1527 = vdwg.mxu0
        %1528 = vmatpush.msra.mxu0 0.0
        %1529 = vmatpush.msra.mxu0 0.0
        %1530 = vmatpush.msra.mxu0 0.0
        %1531 = vmatpush.msra.mxu0 0.0
        %1532 = vmatpush.msra.mxu0 0.0
        %1533 = vmatpush.msra.mxu0 0.0
        %1534 = vmatpush.msra.mxu0 0.0
        %1535 = vmatpush.msra.mxu0 0.0
        %1536 = vmatpush.msra.mxu0 0.0
        %1537 = vmatpush.msra.mxu0 0.0
        %1538 = vmatpush.msra.mxu0 0.0
        %1539 = vmatpush.msra.mxu0 0.0
        %1540 = vmatpush.msra.mxu0 %v639
        %1541 = vmatpush.msra.mxu0 %v513
        %1542 = vmatpush.msra.mxu0 %v387
        %1543 = vmatpush.msra.mxu0 %v261
        %1544 = vmatmul.f32.gmra.mxu0 %v1026
        %v1545 = vpop.f32.mrf.mxu0
        %v1546 = vadd.f32 %v797, %v1545
        %1547 = vdwg.mxu0
        %1548 = vmatpush.msra.mxu0 0.0
        %1549 = vmatpush.msra.mxu0 0.0
        %1550 = vmatpush.msra.mxu0 0.0
        %1551 = vmatpush.msra.mxu0 0.0
        %1552 = vmatpush.msra.mxu0 0.0
        %1553 = vmatpush.msra.mxu0 0.0
        %1554 = vmatpush.msra.mxu0 0.0
        %1555 = vmatpush.msra.mxu0 0.0
        %1556 = vmatpush.msra.mxu0 0.0
        %1557 = vmatpush.msra.mxu0 0.0
        %1558 = vmatpush.msra.mxu0 0.0
        %1559 = vmatpush.msra.mxu0 0.0
        %1560 = vmatpush.msra.mxu0 %v640
        %1561 = vmatpush.msra.mxu0 %v514
        %1562 = vmatpush.msra.mxu0 %v388
        %1563 = vmatpush.msra.mxu0 %v262
        %1564 = vmatmul.f32.gmra.mxu0 %v1026
        %v1565 = vpop.f32.mrf.mxu0
        %v1566 = vadd.f32 %v798, %v1565
        %1567 = vdwg.mxu0
        %1568 = vmatpush.msra.mxu0 0.0
        %1569 = vmatpush.msra.mxu0 0.0
        %1570 = vmatpush.msra.mxu0 0.0
        %1571 = vmatpush.msra.mxu0 0.0
        %1572 = vmatpush.msra.mxu0 0.0
        %1573 = vmatpush.msra.mxu0 0.0
        %1574 = vmatpush.msra.mxu0 0.0
        %1575 = vmatpush.msra.mxu0 0.0
        %1576 = vmatpush.msra.mxu0 0.0
        %1577 = vmatpush.msra.mxu0 0.0
        %1578 = vmatpush.msra.mxu0 0.0
        %1579 = vmatpush.msra.mxu0 0.0
        %1580 = vmatpush.msra.mxu0 %v641
        %1581 = vmatpush.msra.mxu0 %v515
        %1582 = vmatpush.msra.mxu0 %v389
        %1583 = vmatpush.msra.mxu0 %v263
        %1584 = vmatmul.f32.gmra.mxu0 %v1026
        %v1585 = vpop.f32.mrf.mxu0
        %v1586 = vadd.f32 %v799, %v1585
        %1587 = vdwg.mxu0
        %1588 = vmatpush.msra.mxu0 0.0
        %1589 = vmatpush.msra.mxu0 0.0
        %1590 = vmatpush.msra.mxu0 0.0
        %1591 = vmatpush.msra.mxu0 0.0
        %1592 = vmatpush.msra.mxu0 0.0
        %1593 = vmatpush.msra.mxu0 0.0
        %1594 = vmatpush.msra.mxu0 0.0
        %1595 = vmatpush.msra.mxu0 0.0
        %1596 = vmatpush.msra.mxu0 0.0
        %1597 = vmatpush.msra.mxu0 0.0
        %1598 = vmatpush.msra.mxu0 0.0
        %1599 = vmatpush.msra.mxu0 0.0
        %1600 = vmatpush.msra.mxu0 %v642
        %1601 = vmatpush.msra.mxu0 %v516
        %1602 = vmatpush.msra.mxu0 %v390
        %1603 = vmatpush.msra.mxu0 %v264
        %1604 = vmatmul.f32.gmra.mxu0 %v1026
        %v1605 = vpop.f32.mrf.mxu0
        %v1606 = vadd.f32 %v800, %v1605
        %1607 = vdwg.mxu0
        %1608 = vmatpush.msra.mxu0 0.0
        %1609 = vmatpush.msra.mxu0 0.0
        %1610 = vmatpush.msra.mxu0 0.0
        %1611 = vmatpush.msra.mxu0 0.0
        %1612 = vmatpush.msra.mxu0 0.0
        %1613 = vmatpush.msra.mxu0 0.0
        %1614 = vmatpush.msra.mxu0 0.0
        %1615 = vmatpush.msra.mxu0 0.0
        %1616 = vmatpush.msra.mxu0 0.0
        %1617 = vmatpush.msra.mxu0 0.0
        %1618 = vmatpush.msra.mxu0 0.0
        %1619 = vmatpush.msra.mxu0 0.0
        %1620 = vmatpush.msra.mxu0 %v643
        %1621 = vmatpush.msra.mxu0 %v517
        %1622 = vmatpush.msra.mxu0 %v391
        %1623 = vmatpush.msra.mxu0 %v265
        %1624 = vmatmul.f32.gmra.mxu0 %v1026
        %v1625 = vpop.f32.mrf.mxu0
        %v1626 = vadd.f32 %v801, %v1625
        %1627 = vdwg.mxu0
        %1628 = vmatpush.msra.mxu0 0.0
        %1629 = vmatpush.msra.mxu0 0.0
        %1630 = vmatpush.msra.mxu0 0.0
        %1631 = vmatpush.msra.mxu0 0.0
        %1632 = vmatpush.msra.mxu0 0.0
        %1633 = vmatpush.msra.mxu0 0.0
        %1634 = vmatpush.msra.mxu0 0.0
        %1635 = vmatpush.msra.mxu0 0.0
        %1636 = vmatpush.msra.mxu0 0.0
        %1637 = vmatpush.msra.mxu0 0.0
        %1638 = vmatpush.msra.mxu0 0.0
        %1639 = vmatpush.msra.mxu0 0.0
        %1640 = vmatpush.msra.mxu0 %v644
        %1641 = vmatpush.msra.mxu0 %v518
        %1642 = vmatpush.msra.mxu0 %v392
        %1643 = vmatpush.msra.mxu0 %v266
        %1644 = vmatmul.f32.gmra.mxu0 %v1026
        %v1645 = vpop.f32.mrf.mxu0
        %v1646 = vadd.f32 %v802, %v1645
        %1647 = vdwg.mxu0
        %1648 = vmatpush.msra.mxu0 0.0
        %1649 = vmatpush.msra.mxu0 0.0
        %1650 = vmatpush.msra.mxu0 0.0
        %1651 = vmatpush.msra.mxu0 0.0
        %1652 = vmatpush.msra.mxu0 0.0
        %1653 = vmatpush.msra.mxu0 0.0
        %1654 = vmatpush.msra.mxu0 0.0
        %1655 = vmatpush.msra.mxu0 0.0
        %1656 = vmatpush.msra.mxu0 0.0
        %1657 = vmatpush.msra.mxu0 0.0
        %1658 = vmatpush.msra.mxu0 0.0
        %1659 = vmatpush.msra.mxu0 0.0
        %1660 = vmatpush.msra.mxu0 %v645
        %1661 = vmatpush.msra.mxu0 %v519
        %1662 = vmatpush.msra.mxu0 %v393
        %1663 = vmatpush.msra.mxu0 %v267
        %1664 = vmatmul.f32.gmra.mxu0 %v1026
        %v1665 = vpop.f32.mrf.mxu0
        %v1666 = vadd.f32 %v803, %v1665
        %1667 = vdwg.mxu0
        %1668 = vmatpush.msra.mxu0 0.0
        %1669 = vmatpush.msra.mxu0 0.0
        %1670 = vmatpush.msra.mxu0 0.0
        %1671 = vmatpush.msra.mxu0 0.0
        %1672 = vmatpush.msra.mxu0 0.0
        %1673 = vmatpush.msra.mxu0 0.0
        %1674 = vmatpush.msra.mxu0 0.0
        %1675 = vmatpush.msra.mxu0 0.0
        %1676 = vmatpush.msra.mxu0 0.0
        %1677 = vmatpush.msra.mxu0 0.0
        %1678 = vmatpush.msra.mxu0 0.0
        %1679 = vmatpush.msra.mxu0 0.0
        %1680 = vmatpush.msra.mxu0 %v646
        %1681 = vmatpush.msra.mxu0 %v520
        %1682 = vmatpush.msra.mxu0 %v394
        %1683 = vmatpush.msra.mxu0 %v268
        %1684 = vmatmul.f32.gmra.mxu0 %v1026
        %v1685 = vpop.f32.mrf.mxu0
        %v1686 = vadd.f32 %v804, %v1685
        %1687 = vdwg.mxu0
        %1688 = vmatpush.msra.mxu0 0.0
        %1689 = vmatpush.msra.mxu0 0.0
        %1690 = vmatpush.msra.mxu0 0.0
        %1691 = vmatpush.msra.mxu0 0.0
        %1692 = vmatpush.msra.mxu0 0.0
        %1693 = vmatpush.msra.mxu0 0.0
        %1694 = vmatpush.msra.mxu0 0.0
        %1695 = vmatpush.msra.mxu0 0.0
        %1696 = vmatpush.msra.mxu0 0.0
        %1697 = vmatpush.msra.mxu0 0.0
        %1698 = vmatpush.msra.mxu0 0.0
        %1699 = vmatpush.msra.mxu0 0.0
        %1700 = vmatpush.msra.mxu0 %v647
        %1701 = vmatpush.msra.mxu0 %v521
        %1702 = vmatpush.msra.mxu0 %v395
        %1703 = vmatpush.msra.mxu0 %v269
        %1704 = vmatmul.f32.gmra.mxu0 %v1026
        %v1705 = vpop.f32.mrf.mxu0
        %v1706 = vadd.f32 %v805, %v1705
        %1707 = vdwg.mxu0
        %1708 = vmatpush.msra.mxu0 0.0
        %1709 = vmatpush.msra.mxu0 0.0
        %1710 = vmatpush.msra.mxu0 0.0
        %1711 = vmatpush.msra.mxu0 0.0
        %1712 = vmatpush.msra.mxu0 0.0
        %1713 = vmatpush.msra.mxu0 0.0
        %1714 = vmatpush.msra.mxu0 0.0
        %1715 = vmatpush.msra.mxu0 0.0
        %1716 = vmatpush.msra.mxu0 0.0
        %1717 = vmatpush.msra.mxu0 0.0
        %1718 = vmatpush.msra.mxu0 0.0
        %1719 = vmatpush.msra.mxu0 0.0
        %1720 = vmatpush.msra.mxu0 %v648
        %1721 = vmatpush.msra.mxu0 %v522
        %1722 = vmatpush.msra.mxu0 %v396
        %1723 = vmatpush.msra.mxu0 %v270
        %1724 = vmatmul.f32.gmra.mxu0 %v1026
        %v1725 = vpop.f32.mrf.mxu0
        %v1726 = vadd.f32 %v806, %v1725
        %1727 = vdwg.mxu0
        %1728 = vmatpush.msra.mxu0 0.0
        %1729 = vmatpush.msra.mxu0 0.0
        %1730 = vmatpush.msra.mxu0 0.0
        %1731 = vmatpush.msra.mxu0 0.0
        %1732 = vmatpush.msra.mxu0 0.0
        %1733 = vmatpush.msra.mxu0 0.0
        %1734 = vmatpush.msra.mxu0 0.0
        %1735 = vmatpush.msra.mxu0 0.0
        %1736 = vmatpush.msra.mxu0 0.0
        %1737 = vmatpush.msra.mxu0 0.0
        %1738 = vmatpush.msra.mxu0 0.0
        %1739 = vmatpush.msra.mxu0 0.0
        %1740 = vmatpush.msra.mxu0 %v649
        %1741 = vmatpush.msra.mxu0 %v523
        %1742 = vmatpush.msra.mxu0 %v397
        %1743 = vmatpush.msra.mxu0 %v271
        %1744 = vmatmul.f32.gmra.mxu0 %v1026
        %v1745 = vpop.f32.mrf.mxu0
        %v1746 = vadd.f32 %v807, %v1745
        %1747 = vdwg.mxu0
        %1748 = vmatpush.msra.mxu0 0.0
        %1749 = vmatpush.msra.mxu0 0.0
        %1750 = vmatpush.msra.mxu0 0.0
        %1751 = vmatpush.msra.mxu0 0.0
        %1752 = vmatpush.msra.mxu0 0.0
        %1753 = vmatpush.msra.mxu0 0.0
        %1754 = vmatpush.msra.mxu0 0.0
        %1755 = vmatpush.msra.mxu0 0.0
        %1756 = vmatpush.msra.mxu0 0.0
        %1757 = vmatpush.msra.mxu0 0.0
        %1758 = vmatpush.msra.mxu0 0.0
        %1759 = vmatpush.msra.mxu0 0.0
        %1760 = vmatpush.msra.mxu0 %v650
        %1761 = vmatpush.msra.mxu0 %v524
        %1762 = vmatpush.msra.mxu0 %v398
        %1763 = vmatpush.msra.mxu0 %v272
        %1764 = vmatmul.f32.gmra.mxu0 %v1026
        %v1765 = vpop.f32.mrf.mxu0
        %v1766 = vadd.f32 %v808, %v1765
        %1767 = vdwg.mxu0
        %1768 = vmatpush.msra.mxu0 0.0
        %1769 = vmatpush.msra.mxu0 0.0
        %1770 = vmatpush.msra.mxu0 0.0
        %1771 = vmatpush.msra.mxu0 0.0
        %1772 = vmatpush.msra.mxu0 0.0
        %1773 = vmatpush.msra.mxu0 0.0
        %1774 = vmatpush.msra.mxu0 0.0
        %1775 = vmatpush.msra.mxu0 0.0
        %1776 = vmatpush.msra.mxu0 0.0
        %1777 = vmatpush.msra.mxu0 0.0
        %1778 = vmatpush.msra.mxu0 0.0
        %1779 = vmatpush.msra.mxu0 0.0
        %1780 = vmatpush.msra.mxu0 %v651
        %1781 = vmatpush.msra.mxu0 %v525
        %1782 = vmatpush.msra.mxu0 %v399
        %1783 = vmatpush.msra.mxu0 %v273
        %1784 = vmatmul.f32.gmra.mxu0 %v1026
        %v1785 = vpop.f32.mrf.mxu0
        %v1786 = vadd.f32 %v809, %v1785
        %1787 = vdwg.mxu0
        %1788 = vmatpush.msra.mxu0 0.0
        %1789 = vmatpush.msra.mxu0 0.0
        %1790 = vmatpush.msra.mxu0 0.0
        %1791 = vmatpush.msra.mxu0 0.0
        %1792 = vmatpush.msra.mxu0 0.0
        %1793 = vmatpush.msra.mxu0 0.0
        %1794 = vmatpush.msra.mxu0 0.0
        %1795 = vmatpush.msra.mxu0 0.0
        %1796 = vmatpush.msra.mxu0 0.0
        %1797 = vmatpush.msra.mxu0 0.0
        %1798 = vmatpush.msra.mxu0 0.0
        %1799 = vmatpush.msra.mxu0 0.0
        %1800 = vmatpush.msra.mxu0 %v652
        %1801 = vmatpush.msra.mxu0 %v526
        %1802 = vmatpush.msra.mxu0 %v400
        %1803 = vmatpush.msra.mxu0 %v274
        %1804 = vmatmul.f32.gmra.mxu0 %v1026
        %v1805 = vpop.f32.mrf.mxu0
        %v1806 = vadd.f32 %v810, %v1805
        %1807 = vdwg.mxu0
        %1808 = vmatpush.msra.mxu0 0.0
        %1809 = vmatpush.msra.mxu0 0.0
        %1810 = vmatpush.msra.mxu0 0.0
        %1811 = vmatpush.msra.mxu0 0.0
        %1812 = vmatpush.msra.mxu0 0.0
        %1813 = vmatpush.msra.mxu0 0.0
        %1814 = vmatpush.msra.mxu0 0.0
        %1815 = vmatpush.msra.mxu0 0.0
        %1816 = vmatpush.msra.mxu0 0.0
        %1817 = vmatpush.msra.mxu0 0.0
        %1818 = vmatpush.msra.mxu0 0.0
        %1819 = vmatpush.msra.mxu0 0.0
        %1820 = vmatpush.msra.mxu0 %v653
        %1821 = vmatpush.msra.mxu0 %v527
        %1822 = vmatpush.msra.mxu0 %v401
        %1823 = vmatpush.msra.mxu0 %v275
        %1824 = vmatmul.f32.gmra.mxu0 %v1026
        %v1825 = vpop.f32.mrf.mxu0
        %v1826 = vadd.f32 %v811, %v1825
        %1827 = vdwg.mxu0
        %1828 = vmatpush.msra.mxu0 0.0
        %1829 = vmatpush.msra.mxu0 0.0
        %1830 = vmatpush.msra.mxu0 0.0
        %1831 = vmatpush.msra.mxu0 0.0
        %1832 = vmatpush.msra.mxu0 0.0
        %1833 = vmatpush.msra.mxu0 0.0
        %1834 = vmatpush.msra.mxu0 0.0
        %1835 = vmatpush.msra.mxu0 0.0
        %1836 = vmatpush.msra.mxu0 0.0
        %1837 = vmatpush.msra.mxu0 0.0
        %1838 = vmatpush.msra.mxu0 0.0
        %1839 = vmatpush.msra.mxu0 0.0
        %1840 = vmatpush.msra.mxu0 %v654
        %1841 = vmatpush.msra.mxu0 %v528
        %1842 = vmatpush.msra.mxu0 %v402
        %1843 = vmatpush.msra.mxu0 %v276
        %1844 = vmatmul.f32.gmra.mxu0 %v1026
        %v1845 = vpop.f32.mrf.mxu0
        %v1846 = vadd.f32 %v812, %v1845
        %1847 = vdwg.mxu0
        %1848 = vmatpush.msra.mxu0 0.0
        %1849 = vmatpush.msra.mxu0 0.0
        %1850 = vmatpush.msra.mxu0 0.0
        %1851 = vmatpush.msra.mxu0 0.0
        %1852 = vmatpush.msra.mxu0 0.0
        %1853 = vmatpush.msra.mxu0 0.0
        %1854 = vmatpush.msra.mxu0 0.0
        %1855 = vmatpush.msra.mxu0 0.0
        %1856 = vmatpush.msra.mxu0 0.0
        %1857 = vmatpush.msra.mxu0 0.0
        %1858 = vmatpush.msra.mxu0 0.0
        %1859 = vmatpush.msra.mxu0 0.0
        %1860 = vmatpush.msra.mxu0 %v655
        %1861 = vmatpush.msra.mxu0 %v529
        %1862 = vmatpush.msra.mxu0 %v403
        %1863 = vmatpush.msra.mxu0 %v277
        %1864 = vmatmul.f32.gmra.mxu0 %v1026
        %v1865 = vpop.f32.mrf.mxu0
        %v1866 = vadd.f32 %v813, %v1865
        %1867 = vdwg.mxu0
        %1868 = vmatpush.msra.mxu0 0.0
        %1869 = vmatpush.msra.mxu0 0.0
        %1870 = vmatpush.msra.mxu0 0.0
        %1871 = vmatpush.msra.mxu0 0.0
        %1872 = vmatpush.msra.mxu0 0.0
        %1873 = vmatpush.msra.mxu0 0.0
        %1874 = vmatpush.msra.mxu0 0.0
        %1875 = vmatpush.msra.mxu0 0.0
        %1876 = vmatpush.msra.mxu0 0.0
        %1877 = vmatpush.msra.mxu0 0.0
        %1878 = vmatpush.msra.mxu0 0.0
        %1879 = vmatpush.msra.mxu0 0.0
        %1880 = vmatpush.msra.mxu0 %v656
        %1881 = vmatpush.msra.mxu0 %v530
        %1882 = vmatpush.msra.mxu0 %v404
        %1883 = vmatpush.msra.mxu0 %v278
        %1884 = vmatmul.f32.gmra.mxu0 %v1026
        %v1885 = vpop.f32.mrf.mxu0
        %v1886 = vadd.f32 %v814, %v1885
        %1887 = vdwg.mxu0
        %1888 = vmatpush.msra.mxu0 0.0
        %1889 = vmatpush.msra.mxu0 0.0
        %1890 = vmatpush.msra.mxu0 0.0
        %1891 = vmatpush.msra.mxu0 0.0
        %1892 = vmatpush.msra.mxu0 0.0
        %1893 = vmatpush.msra.mxu0 0.0
        %1894 = vmatpush.msra.mxu0 0.0
        %1895 = vmatpush.msra.mxu0 0.0
        %1896 = vmatpush.msra.mxu0 0.0
        %1897 = vmatpush.msra.mxu0 0.0
        %1898 = vmatpush.msra.mxu0 0.0
        %1899 = vmatpush.msra.mxu0 0.0
        %1900 = vmatpush.msra.mxu0 %v657
        %1901 = vmatpush.msra.mxu0 %v531
        %1902 = vmatpush.msra.mxu0 %v405
        %1903 = vmatpush.msra.mxu0 %v279
        %1904 = vmatmul.f32.gmra.mxu0 %v1026
        %v1905 = vpop.f32.mrf.mxu0
        %v1906 = vadd.f32 %v815, %v1905
        %1907 = vdwg.mxu0
        %1908 = vmatpush.msra.mxu0 0.0
        %1909 = vmatpush.msra.mxu0 0.0
        %1910 = vmatpush.msra.mxu0 0.0
        %1911 = vmatpush.msra.mxu0 0.0
        %1912 = vmatpush.msra.mxu0 0.0
        %1913 = vmatpush.msra.mxu0 0.0
        %1914 = vmatpush.msra.mxu0 0.0
        %1915 = vmatpush.msra.mxu0 0.0
        %1916 = vmatpush.msra.mxu0 0.0
        %1917 = vmatpush.msra.mxu0 0.0
        %1918 = vmatpush.msra.mxu0 0.0
        %1919 = vmatpush.msra.mxu0 0.0
        %1920 = vmatpush.msra.mxu0 %v658
        %1921 = vmatpush.msra.mxu0 %v532
        %1922 = vmatpush.msra.mxu0 %v406
        %1923 = vmatpush.msra.mxu0 %v280
        %1924 = vmatmul.f32.gmra.mxu0 %v1026
        %v1925 = vpop.f32.mrf.mxu0
        %v1926 = vadd.f32 %v816, %v1925
        %1927 = vdwg.mxu0
        %1928 = vmatpush.msra.mxu0 0.0
        %1929 = vmatpush.msra.mxu0 0.0
        %1930 = vmatpush.msra.mxu0 0.0
        %1931 = vmatpush.msra.mxu0 0.0
        %1932 = vmatpush.msra.mxu0 0.0
        %1933 = vmatpush.msra.mxu0 0.0
        %1934 = vmatpush.msra.mxu0 0.0
        %1935 = vmatpush.msra.mxu0 0.0
        %1936 = vmatpush.msra.mxu0 0.0
        %1937 = vmatpush.msra.mxu0 0.0
        %1938 = vmatpush.msra.mxu0 0.0
        %1939 = vmatpush.msra.mxu0 0.0
        %1940 = vmatpush.msra.mxu0 %v659
        %1941 = vmatpush.msra.mxu0 %v533
        %1942 = vmatpush.msra.mxu0 %v407
        %1943 = vmatpush.msra.mxu0 %v281
        %1944 = vmatmul.f32.gmra.mxu0 %v1026
        %v1945 = vpop.f32.mrf.mxu0
        %v1946 = vadd.f32 %v817, %v1945
        %1947 = vdwg.mxu0
        %1948 = vmatpush.msra.mxu0 0.0
        %1949 = vmatpush.msra.mxu0 0.0
        %1950 = vmatpush.msra.mxu0 0.0
        %1951 = vmatpush.msra.mxu0 0.0
        %1952 = vmatpush.msra.mxu0 0.0
        %1953 = vmatpush.msra.mxu0 0.0
        %1954 = vmatpush.msra.mxu0 0.0
        %1955 = vmatpush.msra.mxu0 0.0
        %1956 = vmatpush.msra.mxu0 0.0
        %1957 = vmatpush.msra.mxu0 0.0
        %1958 = vmatpush.msra.mxu0 0.0
        %1959 = vmatpush.msra.mxu0 0.0
        %1960 = vmatpush.msra.mxu0 %v660
        %1961 = vmatpush.msra.mxu0 %v534
        %1962 = vmatpush.msra.mxu0 %v408
        %1963 = vmatpush.msra.mxu0 %v282
        %1964 = vmatmul.f32.gmra.mxu0 %v1026
        %v1965 = vpop.f32.mrf.mxu0
        %v1966 = vadd.f32 %v818, %v1965
        %1967 = vdwg.mxu0
        %1968 = vmatpush.msra.mxu0 0.0
        %1969 = vmatpush.msra.mxu0 0.0
        %1970 = vmatpush.msra.mxu0 0.0
        %1971 = vmatpush.msra.mxu0 0.0
        %1972 = vmatpush.msra.mxu0 0.0
        %1973 = vmatpush.msra.mxu0 0.0
        %1974 = vmatpush.msra.mxu0 0.0
        %1975 = vmatpush.msra.mxu0 0.0
        %1976 = vmatpush.msra.mxu0 0.0
        %1977 = vmatpush.msra.mxu0 0.0
        %1978 = vmatpush.msra.mxu0 0.0
        %1979 = vmatpush.msra.mxu0 0.0
        %1980 = vmatpush.msra.mxu0 %v661
        %1981 = vmatpush.msra.mxu0 %v535
        %1982 = vmatpush.msra.mxu0 %v409
        %1983 = vmatpush.msra.mxu0 %v283
        %1984 = vmatmul.f32.gmra.mxu0 %v1026
        %v1985 = vpop.f32.mrf.mxu0
        %v1986 = vadd.f32 %v819, %v1985
        %1987 = vdwg.mxu0
        %1988 = vmatpush.msra.mxu0 0.0
        %1989 = vmatpush.msra.mxu0 0.0
        %1990 = vmatpush.msra.mxu0 0.0
        %1991 = vmatpush.msra.mxu0 0.0
        %1992 = vmatpush.msra.mxu0 0.0
        %1993 = vmatpush.msra.mxu0 0.0
        %1994 = vmatpush.msra.mxu0 0.0
        %1995 = vmatpush.msra.mxu0 0.0
        %1996 = vmatpush.msra.mxu0 0.0
        %1997 = vmatpush.msra.mxu0 0.0
        %1998 = vmatpush.msra.mxu0 0.0
        %1999 = vmatpush.msra.mxu0 0.0
        %2000 = vmatpush.msra.mxu0 %v662
        %2001 = vmatpush.msra.mxu0 %v536
        %2002 = vmatpush.msra.mxu0 %v410
        %2003 = vmatpush.msra.mxu0 %v284
        %2004 = vmatmul.f32.gmra.mxu0 %v1026
        %v2005 = vpop.f32.mrf.mxu0
        %v2006 = vadd.f32 %v820, %v2005
        %2007 = vdwg.mxu0
        %2008 = vmatpush.msra.mxu0 0.0
        %2009 = vmatpush.msra.mxu0 0.0
        %2010 = vmatpush.msra.mxu0 0.0
        %2011 = vmatpush.msra.mxu0 0.0
        %2012 = vmatpush.msra.mxu0 0.0
        %2013 = vmatpush.msra.mxu0 0.0
        %2014 = vmatpush.msra.mxu0 0.0
        %2015 = vmatpush.msra.mxu0 0.0
        %2016 = vmatpush.msra.mxu0 0.0
        %2017 = vmatpush.msra.mxu0 0.0
        %2018 = vmatpush.msra.mxu0 0.0
        %2019 = vmatpush.msra.mxu0 0.0
        %2020 = vmatpush.msra.mxu0 %v663
        %2021 = vmatpush.msra.mxu0 %v537
        %2022 = vmatpush.msra.mxu0 %v411
        %2023 = vmatpush.msra.mxu0 %v285
        %2024 = vmatmul.f32.gmra.mxu0 %v1026
        %v2025 = vpop.f32.mrf.mxu0
        %v2026 = vadd.f32 %v821, %v2025
        %2027 = vdwg.mxu0
        %2028 = vmatpush.msra.mxu0 0.0
        %2029 = vmatpush.msra.mxu0 0.0
        %2030 = vmatpush.msra.mxu0 0.0
        %2031 = vmatpush.msra.mxu0 0.0
        %2032 = vmatpush.msra.mxu0 0.0
        %2033 = vmatpush.msra.mxu0 0.0
        %2034 = vmatpush.msra.mxu0 0.0
        %2035 = vmatpush.msra.mxu0 0.0
        %2036 = vmatpush.msra.mxu0 0.0
        %2037 = vmatpush.msra.mxu0 0.0
        %2038 = vmatpush.msra.mxu0 0.0
        %2039 = vmatpush.msra.mxu0 0.0
        %2040 = vmatpush.msra.mxu0 %v664
        %2041 = vmatpush.msra.mxu0 %v538
        %2042 = vmatpush.msra.mxu0 %v412
        %2043 = vmatpush.msra.mxu0 %v286
        %2044 = vmatmul.f32.gmra.mxu0 %v1026
        %v2045 = vpop.f32.mrf.mxu0
        %v2046 = vadd.f32 %v822, %v2045
        %2047 = vdwg.mxu0
        %2048 = vmatpush.msra.mxu0 0.0
        %2049 = vmatpush.msra.mxu0 0.0
        %2050 = vmatpush.msra.mxu0 0.0
        %2051 = vmatpush.msra.mxu0 0.0
        %2052 = vmatpush.msra.mxu0 0.0
        %2053 = vmatpush.msra.mxu0 0.0
        %2054 = vmatpush.msra.mxu0 0.0
        %2055 = vmatpush.msra.mxu0 0.0
        %2056 = vmatpush.msra.mxu0 0.0
        %2057 = vmatpush.msra.mxu0 0.0
        %2058 = vmatpush.msra.mxu0 0.0
        %2059 = vmatpush.msra.mxu0 0.0
        %2060 = vmatpush.msra.mxu0 %v665
        %2061 = vmatpush.msra.mxu0 %v539
        %2062 = vmatpush.msra.mxu0 %v413
        %2063 = vmatpush.msra.mxu0 %v287
        %2064 = vmatmul.f32.gmra.mxu0 %v1026
        %v2065 = vpop.f32.mrf.mxu0
        %v2066 = vadd.f32 %v823, %v2065
        %2067 = vdwg.mxu0
        %2068 = vmatpush.msra.mxu0 0.0
        %2069 = vmatpush.msra.mxu0 0.0
        %2070 = vmatpush.msra.mxu0 0.0
        %2071 = vmatpush.msra.mxu0 0.0
        %2072 = vmatpush.msra.mxu0 0.0
        %2073 = vmatpush.msra.mxu0 0.0
        %2074 = vmatpush.msra.mxu0 0.0
        %2075 = vmatpush.msra.mxu0 0.0
        %2076 = vmatpush.msra.mxu0 0.0
        %2077 = vmatpush.msra.mxu0 0.0
        %2078 = vmatpush.msra.mxu0 0.0
        %2079 = vmatpush.msra.mxu0 0.0
        %2080 = vmatpush.msra.mxu0 %v666
        %2081 = vmatpush.msra.mxu0 %v540
        %2082 = vmatpush.msra.mxu0 %v414
        %2083 = vmatpush.msra.mxu0 %v288
        %2084 = vmatmul.f32.gmra.mxu0 %v1026
        %v2085 = vpop.f32.mrf.mxu0
        %v2086 = vadd.f32 %v824, %v2085
        %2087 = vdwg.mxu0
        %2088 = vmatpush.msra.mxu0 0.0
        %2089 = vmatpush.msra.mxu0 0.0
        %2090 = vmatpush.msra.mxu0 0.0
        %2091 = vmatpush.msra.mxu0 0.0
        %2092 = vmatpush.msra.mxu0 0.0
        %2093 = vmatpush.msra.mxu0 0.0
        %2094 = vmatpush.msra.mxu0 0.0
        %2095 = vmatpush.msra.mxu0 0.0
        %2096 = vmatpush.msra.mxu0 0.0
        %2097 = vmatpush.msra.mxu0 0.0
        %2098 = vmatpush.msra.mxu0 0.0
        %2099 = vmatpush.msra.mxu0 0.0
        %2100 = vmatpush.msra.mxu0 %v667
        %2101 = vmatpush.msra.mxu0 %v541
        %2102 = vmatpush.msra.mxu0 %v415
        %2103 = vmatpush.msra.mxu0 %v289
        %2104 = vmatmul.f32.gmra.mxu0 %v1026
        %v2105 = vpop.f32.mrf.mxu0
        %v2106 = vadd.f32 %v825, %v2105
        %2107 = vdwg.mxu0
        %2108 = vmatpush.msra.mxu0 0.0
        %2109 = vmatpush.msra.mxu0 0.0
        %2110 = vmatpush.msra.mxu0 0.0
        %2111 = vmatpush.msra.mxu0 0.0
        %2112 = vmatpush.msra.mxu0 0.0
        %2113 = vmatpush.msra.mxu0 0.0
        %2114 = vmatpush.msra.mxu0 0.0
        %2115 = vmatpush.msra.mxu0 0.0
        %2116 = vmatpush.msra.mxu0 0.0
        %2117 = vmatpush.msra.mxu0 0.0
        %2118 = vmatpush.msra.mxu0 0.0
        %2119 = vmatpush.msra.mxu0 0.0
        %2120 = vmatpush.msra.mxu0 %v668
        %2121 = vmatpush.msra.mxu0 %v542
        %2122 = vmatpush.msra.mxu0 %v416
        %2123 = vmatpush.msra.mxu0 %v290
        %2124 = vmatmul.f32.gmra.mxu0 %v1026
        %v2125 = vpop.f32.mrf.mxu0
        %v2126 = vadd.f32 %v826, %v2125
        %2127 = vdwg.mxu0
        %2128 = vmatpush.msra.mxu0 0.0
        %2129 = vmatpush.msra.mxu0 0.0
        %2130 = vmatpush.msra.mxu0 0.0
        %2131 = vmatpush.msra.mxu0 0.0
        %2132 = vmatpush.msra.mxu0 0.0
        %2133 = vmatpush.msra.mxu0 0.0
        %2134 = vmatpush.msra.mxu0 0.0
        %2135 = vmatpush.msra.mxu0 0.0
        %2136 = vmatpush.msra.mxu0 0.0
        %2137 = vmatpush.msra.mxu0 0.0
        %2138 = vmatpush.msra.mxu0 0.0
        %2139 = vmatpush.msra.mxu0 0.0
        %2140 = vmatpush.msra.mxu0 %v669
        %2141 = vmatpush.msra.mxu0 %v543
        %2142 = vmatpush.msra.mxu0 %v417
        %2143 = vmatpush.msra.mxu0 %v291
        %2144 = vmatmul.f32.gmra.mxu0 %v1026
        %v2145 = vpop.f32.mrf.mxu0
        %v2146 = vadd.f32 %v827, %v2145
        %2147 = vdwg.mxu0
        %2148 = vmatpush.msra.mxu0 0.0
        %2149 = vmatpush.msra.mxu0 0.0
        %2150 = vmatpush.msra.mxu0 0.0
        %2151 = vmatpush.msra.mxu0 0.0
        %2152 = vmatpush.msra.mxu0 0.0
        %2153 = vmatpush.msra.mxu0 0.0
        %2154 = vmatpush.msra.mxu0 0.0
        %2155 = vmatpush.msra.mxu0 0.0
        %2156 = vmatpush.msra.mxu0 0.0
        %2157 = vmatpush.msra.mxu0 0.0
        %2158 = vmatpush.msra.mxu0 0.0
        %2159 = vmatpush.msra.mxu0 0.0
        %2160 = vmatpush.msra.mxu0 %v670
        %2161 = vmatpush.msra.mxu0 %v544
        %2162 = vmatpush.msra.mxu0 %v418
        %2163 = vmatpush.msra.mxu0 %v292
        %2164 = vmatmul.f32.gmra.mxu0 %v1026
        %v2165 = vpop.f32.mrf.mxu0
        %v2166 = vadd.f32 %v828, %v2165
        %2167 = vdwg.mxu0
        %2168 = vmatpush.msra.mxu0 0.0
        %2169 = vmatpush.msra.mxu0 0.0
        %2170 = vmatpush.msra.mxu0 0.0
        %2171 = vmatpush.msra.mxu0 0.0
        %2172 = vmatpush.msra.mxu0 0.0
        %2173 = vmatpush.msra.mxu0 0.0
        %2174 = vmatpush.msra.mxu0 0.0
        %2175 = vmatpush.msra.mxu0 0.0
        %2176 = vmatpush.msra.mxu0 0.0
        %2177 = vmatpush.msra.mxu0 0.0
        %2178 = vmatpush.msra.mxu0 0.0
        %2179 = vmatpush.msra.mxu0 0.0
        %2180 = vmatpush.msra.mxu0 %v671
        %2181 = vmatpush.msra.mxu0 %v545
        %2182 = vmatpush.msra.mxu0 %v419
        %2183 = vmatpush.msra.mxu0 %v293
        %2184 = vmatmul.f32.gmra.mxu0 %v1026
        %v2185 = vpop.f32.mrf.mxu0
        %v2186 = vadd.f32 %v829, %v2185
        %2187 = vdwg.mxu0
        %2188 = vmatpush.msra.mxu0 0.0
        %2189 = vmatpush.msra.mxu0 0.0
        %2190 = vmatpush.msra.mxu0 0.0
        %2191 = vmatpush.msra.mxu0 0.0
        %2192 = vmatpush.msra.mxu0 0.0
        %2193 = vmatpush.msra.mxu0 0.0
        %2194 = vmatpush.msra.mxu0 0.0
        %2195 = vmatpush.msra.mxu0 0.0
        %2196 = vmatpush.msra.mxu0 0.0
        %2197 = vmatpush.msra.mxu0 0.0
        %2198 = vmatpush.msra.mxu0 0.0
        %2199 = vmatpush.msra.mxu0 0.0
        %2200 = vmatpush.msra.mxu0 %v672
        %2201 = vmatpush.msra.mxu0 %v546
        %2202 = vmatpush.msra.mxu0 %v420
        %2203 = vmatpush.msra.mxu0 %v294
        %2204 = vmatmul.f32.gmra.mxu0 %v1026
        %v2205 = vpop.f32.mrf.mxu0
        %v2206 = vadd.f32 %v830, %v2205
        %2207 = vdwg.mxu0
        %2208 = vmatpush.msra.mxu0 0.0
        %2209 = vmatpush.msra.mxu0 0.0
        %2210 = vmatpush.msra.mxu0 0.0
        %2211 = vmatpush.msra.mxu0 0.0
        %2212 = vmatpush.msra.mxu0 0.0
        %2213 = vmatpush.msra.mxu0 0.0
        %2214 = vmatpush.msra.mxu0 0.0
        %2215 = vmatpush.msra.mxu0 0.0
        %2216 = vmatpush.msra.mxu0 0.0
        %2217 = vmatpush.msra.mxu0 0.0
        %2218 = vmatpush.msra.mxu0 0.0
        %2219 = vmatpush.msra.mxu0 0.0
        %2220 = vmatpush.msra.mxu0 %v673
        %2221 = vmatpush.msra.mxu0 %v547
        %2222 = vmatpush.msra.mxu0 %v421
        %2223 = vmatpush.msra.mxu0 %v295
        %2224 = vmatmul.f32.gmra.mxu0 %v1026
        %v2225 = vpop.f32.mrf.mxu0
        %v2226 = vadd.f32 %v831, %v2225
        %2227 = vdwg.mxu0
        %2228 = vmatpush.msra.mxu0 0.0
        %2229 = vmatpush.msra.mxu0 0.0
        %2230 = vmatpush.msra.mxu0 0.0
        %2231 = vmatpush.msra.mxu0 0.0
        %2232 = vmatpush.msra.mxu0 0.0
        %2233 = vmatpush.msra.mxu0 0.0
        %2234 = vmatpush.msra.mxu0 0.0
        %2235 = vmatpush.msra.mxu0 0.0
        %2236 = vmatpush.msra.mxu0 0.0
        %2237 = vmatpush.msra.mxu0 0.0
        %2238 = vmatpush.msra.mxu0 0.0
        %2239 = vmatpush.msra.mxu0 0.0
        %2240 = vmatpush.msra.mxu0 %v674
        %2241 = vmatpush.msra.mxu0 %v548
        %2242 = vmatpush.msra.mxu0 %v422
        %2243 = vmatpush.msra.mxu0 %v296
        %2244 = vmatmul.f32.gmra.mxu0 %v1026
        %v2245 = vpop.f32.mrf.mxu0
        %v2246 = vadd.f32 %v832, %v2245
        %2247 = vdwg.mxu0
        %2248 = vmatpush.msra.mxu0 0.0
        %2249 = vmatpush.msra.mxu0 0.0
        %2250 = vmatpush.msra.mxu0 0.0
        %2251 = vmatpush.msra.mxu0 0.0
        %2252 = vmatpush.msra.mxu0 0.0
        %2253 = vmatpush.msra.mxu0 0.0
        %2254 = vmatpush.msra.mxu0 0.0
        %2255 = vmatpush.msra.mxu0 0.0
        %2256 = vmatpush.msra.mxu0 0.0
        %2257 = vmatpush.msra.mxu0 0.0
        %2258 = vmatpush.msra.mxu0 0.0
        %2259 = vmatpush.msra.mxu0 0.0
        %2260 = vmatpush.msra.mxu0 %v675
        %2261 = vmatpush.msra.mxu0 %v549
        %2262 = vmatpush.msra.mxu0 %v423
        %2263 = vmatpush.msra.mxu0 %v297
        %2264 = vmatmul.f32.gmra.mxu0 %v1026
        %v2265 = vpop.f32.mrf.mxu0
        %v2266 = vadd.f32 %v833, %v2265
        %2267 = vdwg.mxu0
        %2268 = vmatpush.msra.mxu0 0.0
        %2269 = vmatpush.msra.mxu0 0.0
        %2270 = vmatpush.msra.mxu0 0.0
        %2271 = vmatpush.msra.mxu0 0.0
        %2272 = vmatpush.msra.mxu0 0.0
        %2273 = vmatpush.msra.mxu0 0.0
        %2274 = vmatpush.msra.mxu0 0.0
        %2275 = vmatpush.msra.mxu0 0.0
        %2276 = vmatpush.msra.mxu0 0.0
        %2277 = vmatpush.msra.mxu0 0.0
        %2278 = vmatpush.msra.mxu0 0.0
        %2279 = vmatpush.msra.mxu0 0.0
        %2280 = vmatpush.msra.mxu0 %v676
        %2281 = vmatpush.msra.mxu0 %v550
        %2282 = vmatpush.msra.mxu0 %v424
        %2283 = vmatpush.msra.mxu0 %v298
        %2284 = vmatmul.f32.gmra.mxu0 %v1026
        %v2285 = vpop.f32.mrf.mxu0
        %v2286 = vadd.f32 %v834, %v2285
        %2287 = vdwg.mxu0
        %2288 = vmatpush.msra.mxu0 0.0
        %2289 = vmatpush.msra.mxu0 0.0
        %2290 = vmatpush.msra.mxu0 0.0
        %2291 = vmatpush.msra.mxu0 0.0
        %2292 = vmatpush.msra.mxu0 0.0
        %2293 = vmatpush.msra.mxu0 0.0
        %2294 = vmatpush.msra.mxu0 0.0
        %2295 = vmatpush.msra.mxu0 0.0
        %2296 = vmatpush.msra.mxu0 0.0
        %2297 = vmatpush.msra.mxu0 0.0
        %2298 = vmatpush.msra.mxu0 0.0
        %2299 = vmatpush.msra.mxu0 0.0
        %2300 = vmatpush.msra.mxu0 %v677
        %2301 = vmatpush.msra.mxu0 %v551
        %2302 = vmatpush.msra.mxu0 %v425
        %2303 = vmatpush.msra.mxu0 %v299
        %2304 = vmatmul.f32.gmra.mxu0 %v1026
        %v2305 = vpop.f32.mrf.mxu0
        %v2306 = vadd.f32 %v835, %v2305
        %2307 = vdwg.mxu0
        %2308 = vmatpush.msra.mxu0 0.0
        %2309 = vmatpush.msra.mxu0 0.0
        %2310 = vmatpush.msra.mxu0 0.0
        %2311 = vmatpush.msra.mxu0 0.0
        %2312 = vmatpush.msra.mxu0 0.0
        %2313 = vmatpush.msra.mxu0 0.0
        %2314 = vmatpush.msra.mxu0 0.0
        %2315 = vmatpush.msra.mxu0 0.0
        %2316 = vmatpush.msra.mxu0 0.0
        %2317 = vmatpush.msra.mxu0 0.0
        %2318 = vmatpush.msra.mxu0 0.0
        %2319 = vmatpush.msra.mxu0 0.0
        %2320 = vmatpush.msra.mxu0 %v678
        %2321 = vmatpush.msra.mxu0 %v552
        %2322 = vmatpush.msra.mxu0 %v426
        %2323 = vmatpush.msra.mxu0 %v300
        %2324 = vmatmul.f32.gmra.mxu0 %v1026
        %v2325 = vpop.f32.mrf.mxu0
        %v2326 = vadd.f32 %v836, %v2325
        %2327 = vdwg.mxu0
        %2328 = vmatpush.msra.mxu0 0.0
        %2329 = vmatpush.msra.mxu0 0.0
        %2330 = vmatpush.msra.mxu0 0.0
        %2331 = vmatpush.msra.mxu0 0.0
        %2332 = vmatpush.msra.mxu0 0.0
        %2333 = vmatpush.msra.mxu0 0.0
        %2334 = vmatpush.msra.mxu0 0.0
        %2335 = vmatpush.msra.mxu0 0.0
        %2336 = vmatpush.msra.mxu0 0.0
        %2337 = vmatpush.msra.mxu0 0.0
        %2338 = vmatpush.msra.mxu0 0.0
        %2339 = vmatpush.msra.mxu0 0.0
        %2340 = vmatpush.msra.mxu0 %v679
        %2341 = vmatpush.msra.mxu0 %v553
        %2342 = vmatpush.msra.mxu0 %v427
        %2343 = vmatpush.msra.mxu0 %v301
        %2344 = vmatmul.f32.gmra.mxu0 %v1026
        %v2345 = vpop.f32.mrf.mxu0
        %v2346 = vadd.f32 %v837, %v2345
        %2347 = vdwg.mxu0
        %2348 = vmatpush.msra.mxu0 0.0
        %2349 = vmatpush.msra.mxu0 0.0
        %2350 = vmatpush.msra.mxu0 0.0
        %2351 = vmatpush.msra.mxu0 0.0
        %2352 = vmatpush.msra.mxu0 0.0
        %2353 = vmatpush.msra.mxu0 0.0
        %2354 = vmatpush.msra.mxu0 0.0
        %2355 = vmatpush.msra.mxu0 0.0
        %2356 = vmatpush.msra.mxu0 0.0
        %2357 = vmatpush.msra.mxu0 0.0
        %2358 = vmatpush.msra.mxu0 0.0
        %2359 = vmatpush.msra.mxu0 0.0
        %2360 = vmatpush.msra.mxu0 %v680
        %2361 = vmatpush.msra.mxu0 %v554
        %2362 = vmatpush.msra.mxu0 %v428
        %2363 = vmatpush.msra.mxu0 %v302
        %2364 = vmatmul.f32.gmra.mxu0 %v1026
        %v2365 = vpop.f32.mrf.mxu0
        %v2366 = vadd.f32 %v838, %v2365
        %2367 = vdwg.mxu0
        %2368 = vmatpush.msra.mxu0 0.0
        %2369 = vmatpush.msra.mxu0 0.0
        %2370 = vmatpush.msra.mxu0 0.0
        %2371 = vmatpush.msra.mxu0 0.0
        %2372 = vmatpush.msra.mxu0 0.0
        %2373 = vmatpush.msra.mxu0 0.0
        %2374 = vmatpush.msra.mxu0 0.0
        %2375 = vmatpush.msra.mxu0 0.0
        %2376 = vmatpush.msra.mxu0 0.0
        %2377 = vmatpush.msra.mxu0 0.0
        %2378 = vmatpush.msra.mxu0 0.0
        %2379 = vmatpush.msra.mxu0 0.0
        %2380 = vmatpush.msra.mxu0 %v681
        %2381 = vmatpush.msra.mxu0 %v555
        %2382 = vmatpush.msra.mxu0 %v429
        %2383 = vmatpush.msra.mxu0 %v303
        %2384 = vmatmul.f32.gmra.mxu0 %v1026
        %v2385 = vpop.f32.mrf.mxu0
        %v2386 = vadd.f32 %v839, %v2385
        %2387 = vdwg.mxu0
        %2388 = vmatpush.msra.mxu0 0.0
        %2389 = vmatpush.msra.mxu0 0.0
        %2390 = vmatpush.msra.mxu0 0.0
        %2391 = vmatpush.msra.mxu0 0.0
        %2392 = vmatpush.msra.mxu0 0.0
        %2393 = vmatpush.msra.mxu0 0.0
        %2394 = vmatpush.msra.mxu0 0.0
        %2395 = vmatpush.msra.mxu0 0.0
        %2396 = vmatpush.msra.mxu0 0.0
        %2397 = vmatpush.msra.mxu0 0.0
        %2398 = vmatpush.msra.mxu0 0.0
        %2399 = vmatpush.msra.mxu0 0.0
        %2400 = vmatpush.msra.mxu0 %v682
        %2401 = vmatpush.msra.mxu0 %v556
        %2402 = vmatpush.msra.mxu0 %v430
        %2403 = vmatpush.msra.mxu0 %v304
        %2404 = vmatmul.f32.gmra.mxu0 %v1026
        %v2405 = vpop.f32.mrf.mxu0
        %v2406 = vadd.f32 %v840, %v2405
        %2407 = vdwg.mxu0
        %2408 = vmatpush.msra.mxu0 0.0
        %2409 = vmatpush.msra.mxu0 0.0
        %2410 = vmatpush.msra.mxu0 0.0
        %2411 = vmatpush.msra.mxu0 0.0
        %2412 = vmatpush.msra.mxu0 0.0
        %2413 = vmatpush.msra.mxu0 0.0
        %2414 = vmatpush.msra.mxu0 0.0
        %2415 = vmatpush.msra.mxu0 0.0
        %2416 = vmatpush.msra.mxu0 0.0
        %2417 = vmatpush.msra.mxu0 0.0
        %2418 = vmatpush.msra.mxu0 0.0
        %2419 = vmatpush.msra.mxu0 0.0
        %2420 = vmatpush.msra.mxu0 %v683
        %2421 = vmatpush.msra.mxu0 %v557
        %2422 = vmatpush.msra.mxu0 %v431
        %2423 = vmatpush.msra.mxu0 %v305
        %2424 = vmatmul.f32.gmra.mxu0 %v1026
        %v2425 = vpop.f32.mrf.mxu0
        %v2426 = vadd.f32 %v841, %v2425
        %2427 = vdwg.mxu0
        %2428 = vmatpush.msra.mxu0 0.0
        %2429 = vmatpush.msra.mxu0 0.0
        %2430 = vmatpush.msra.mxu0 0.0
        %2431 = vmatpush.msra.mxu0 0.0
        %2432 = vmatpush.msra.mxu0 0.0
        %2433 = vmatpush.msra.mxu0 0.0
        %2434 = vmatpush.msra.mxu0 0.0
        %2435 = vmatpush.msra.mxu0 0.0
        %2436 = vmatpush.msra.mxu0 0.0
        %2437 = vmatpush.msra.mxu0 0.0
        %2438 = vmatpush.msra.mxu0 0.0
        %2439 = vmatpush.msra.mxu0 0.0
        %2440 = vmatpush.msra.mxu0 %v684
        %2441 = vmatpush.msra.mxu0 %v558
        %2442 = vmatpush.msra.mxu0 %v432
        %2443 = vmatpush.msra.mxu0 %v306
        %2444 = vmatmul.f32.gmra.mxu0 %v1026
        %v2445 = vpop.f32.mrf.mxu0
        %v2446 = vadd.f32 %v842, %v2445
        %2447 = vdwg.mxu0
        %2448 = vmatpush.msra.mxu0 0.0
        %2449 = vmatpush.msra.mxu0 0.0
        %2450 = vmatpush.msra.mxu0 0.0
        %2451 = vmatpush.msra.mxu0 0.0
        %2452 = vmatpush.msra.mxu0 0.0
        %2453 = vmatpush.msra.mxu0 0.0
        %2454 = vmatpush.msra.mxu0 0.0
        %2455 = vmatpush.msra.mxu0 0.0
        %2456 = vmatpush.msra.mxu0 0.0
        %2457 = vmatpush.msra.mxu0 0.0
        %2458 = vmatpush.msra.mxu0 0.0
        %2459 = vmatpush.msra.mxu0 0.0
        %2460 = vmatpush.msra.mxu0 %v685
        %2461 = vmatpush.msra.mxu0 %v559
        %2462 = vmatpush.msra.mxu0 %v433
        %2463 = vmatpush.msra.mxu0 %v307
        %2464 = vmatmul.f32.gmra.mxu0 %v1026
        %v2465 = vpop.f32.mrf.mxu0
        %v2466 = vadd.f32 %v843, %v2465
        %2467 = vdwg.mxu0
        %2468 = vmatpush.msra.mxu0 0.0
        %2469 = vmatpush.msra.mxu0 0.0
        %2470 = vmatpush.msra.mxu0 0.0
        %2471 = vmatpush.msra.mxu0 0.0
        %2472 = vmatpush.msra.mxu0 0.0
        %2473 = vmatpush.msra.mxu0 0.0
        %2474 = vmatpush.msra.mxu0 0.0
        %2475 = vmatpush.msra.mxu0 0.0
        %2476 = vmatpush.msra.mxu0 0.0
        %2477 = vmatpush.msra.mxu0 0.0
        %2478 = vmatpush.msra.mxu0 0.0
        %2479 = vmatpush.msra.mxu0 0.0
        %2480 = vmatpush.msra.mxu0 %v686
        %2481 = vmatpush.msra.mxu0 %v560
        %2482 = vmatpush.msra.mxu0 %v434
        %2483 = vmatpush.msra.mxu0 %v308
        %2484 = vmatmul.f32.gmra.mxu0 %v1026
        %v2485 = vpop.f32.mrf.mxu0
        %v2486 = vadd.f32 %v844, %v2485
        %2487 = vdwg.mxu0
        %2488 = vmatpush.msra.mxu0 0.0
        %2489 = vmatpush.msra.mxu0 0.0
        %2490 = vmatpush.msra.mxu0 0.0
        %2491 = vmatpush.msra.mxu0 0.0
        %2492 = vmatpush.msra.mxu0 0.0
        %2493 = vmatpush.msra.mxu0 0.0
        %2494 = vmatpush.msra.mxu0 0.0
        %2495 = vmatpush.msra.mxu0 0.0
        %2496 = vmatpush.msra.mxu0 0.0
        %2497 = vmatpush.msra.mxu0 0.0
        %2498 = vmatpush.msra.mxu0 0.0
        %2499 = vmatpush.msra.mxu0 0.0
        %2500 = vmatpush.msra.mxu0 %v687
        %2501 = vmatpush.msra.mxu0 %v561
        %2502 = vmatpush.msra.mxu0 %v435
        %2503 = vmatpush.msra.mxu0 %v309
        %2504 = vmatmul.f32.gmra.mxu0 %v1026
        %v2505 = vpop.f32.mrf.mxu0
        %v2506 = vadd.f32 %v845, %v2505
        %2507 = vdwg.mxu0
        %2508 = vmatpush.msra.mxu0 0.0
        %2509 = vmatpush.msra.mxu0 0.0
        %2510 = vmatpush.msra.mxu0 0.0
        %2511 = vmatpush.msra.mxu0 0.0
        %2512 = vmatpush.msra.mxu0 0.0
        %2513 = vmatpush.msra.mxu0 0.0
        %2514 = vmatpush.msra.mxu0 0.0
        %2515 = vmatpush.msra.mxu0 0.0
        %2516 = vmatpush.msra.mxu0 0.0
        %2517 = vmatpush.msra.mxu0 0.0
        %2518 = vmatpush.msra.mxu0 0.0
        %2519 = vmatpush.msra.mxu0 0.0
        %2520 = vmatpush.msra.mxu0 %v688
        %2521 = vmatpush.msra.mxu0 %v562
        %2522 = vmatpush.msra.mxu0 %v436
        %2523 = vmatpush.msra.mxu0 %v310
        %2524 = vmatmul.f32.gmra.mxu0 %v1026
        %v2525 = vpop.f32.mrf.mxu0
        %v2526 = vadd.f32 %v846, %v2525
        %2527 = vdwg.mxu0
        %2528 = vmatpush.msra.mxu0 0.0
        %2529 = vmatpush.msra.mxu0 0.0
        %2530 = vmatpush.msra.mxu0 0.0
        %2531 = vmatpush.msra.mxu0 0.0
        %2532 = vmatpush.msra.mxu0 0.0
        %2533 = vmatpush.msra.mxu0 0.0
        %2534 = vmatpush.msra.mxu0 0.0
        %2535 = vmatpush.msra.mxu0 0.0
        %2536 = vmatpush.msra.mxu0 0.0
        %2537 = vmatpush.msra.mxu0 0.0
        %2538 = vmatpush.msra.mxu0 0.0
        %2539 = vmatpush.msra.mxu0 0.0
        %2540 = vmatpush.msra.mxu0 %v689
        %2541 = vmatpush.msra.mxu0 %v563
        %2542 = vmatpush.msra.mxu0 %v437
        %2543 = vmatpush.msra.mxu0 %v311
        %2544 = vmatmul.f32.gmra.mxu0 %v1026
        %v2545 = vpop.f32.mrf.mxu0
        %v2546 = vadd.f32 %v847, %v2545
        %2547 = vdwg.mxu0
        %2548 = vmatpush.msra.mxu0 0.0
        %2549 = vmatpush.msra.mxu0 0.0
        %2550 = vmatpush.msra.mxu0 0.0
        %2551 = vmatpush.msra.mxu0 0.0
        %2552 = vmatpush.msra.mxu0 0.0
        %2553 = vmatpush.msra.mxu0 0.0
        %2554 = vmatpush.msra.mxu0 0.0
        %2555 = vmatpush.msra.mxu0 0.0
        %2556 = vmatpush.msra.mxu0 0.0
        %2557 = vmatpush.msra.mxu0 0.0
        %2558 = vmatpush.msra.mxu0 0.0
        %2559 = vmatpush.msra.mxu0 0.0
        %2560 = vmatpush.msra.mxu0 %v690
        %2561 = vmatpush.msra.mxu0 %v564
        %2562 = vmatpush.msra.mxu0 %v438
        %2563 = vmatpush.msra.mxu0 %v312
        %2564 = vmatmul.f32.gmra.mxu0 %v1026
        %v2565 = vpop.f32.mrf.mxu0
        %v2566 = vadd.f32 %v848, %v2565
        %2567 = vdwg.mxu0
        %2568 = vmatpush.msra.mxu0 0.0
        %2569 = vmatpush.msra.mxu0 0.0
        %2570 = vmatpush.msra.mxu0 0.0
        %2571 = vmatpush.msra.mxu0 0.0
        %2572 = vmatpush.msra.mxu0 0.0
        %2573 = vmatpush.msra.mxu0 0.0
        %2574 = vmatpush.msra.mxu0 0.0
        %2575 = vmatpush.msra.mxu0 0.0
        %2576 = vmatpush.msra.mxu0 0.0
        %2577 = vmatpush.msra.mxu0 0.0
        %2578 = vmatpush.msra.mxu0 0.0
        %2579 = vmatpush.msra.mxu0 0.0
        %2580 = vmatpush.msra.mxu0 %v691
        %2581 = vmatpush.msra.mxu0 %v565
        %2582 = vmatpush.msra.mxu0 %v439
        %2583 = vmatpush.msra.mxu0 %v313
        %2584 = vmatmul.f32.gmra.mxu0 %v1026
        %v2585 = vpop.f32.mrf.mxu0
        %v2586 = vadd.f32 %v849, %v2585
        %2587 = vdwg.mxu0
        %2588 = vmatpush.msra.mxu0 0.0
        %2589 = vmatpush.msra.mxu0 0.0
        %2590 = vmatpush.msra.mxu0 0.0
        %2591 = vmatpush.msra.mxu0 0.0
        %2592 = vmatpush.msra.mxu0 0.0
        %2593 = vmatpush.msra.mxu0 0.0
        %2594 = vmatpush.msra.mxu0 0.0
        %2595 = vmatpush.msra.mxu0 0.0
        %2596 = vmatpush.msra.mxu0 0.0
        %2597 = vmatpush.msra.mxu0 0.0
        %2598 = vmatpush.msra.mxu0 0.0
        %2599 = vmatpush.msra.mxu0 0.0
        %2600 = vmatpush.msra.mxu0 %v692
        %2601 = vmatpush.msra.mxu0 %v566
        %2602 = vmatpush.msra.mxu0 %v440
        %2603 = vmatpush.msra.mxu0 %v314
        %2604 = vmatmul.f32.gmra.mxu0 %v1026
        %v2605 = vpop.f32.mrf.mxu0
        %v2606 = vadd.f32 %v850, %v2605
        %2607 = vdwg.mxu0
        %2608 = vmatpush.msra.mxu0 0.0
        %2609 = vmatpush.msra.mxu0 0.0
        %2610 = vmatpush.msra.mxu0 0.0
        %2611 = vmatpush.msra.mxu0 0.0
        %2612 = vmatpush.msra.mxu0 0.0
        %2613 = vmatpush.msra.mxu0 0.0
        %2614 = vmatpush.msra.mxu0 0.0
        %2615 = vmatpush.msra.mxu0 0.0
        %2616 = vmatpush.msra.mxu0 0.0
        %2617 = vmatpush.msra.mxu0 0.0
        %2618 = vmatpush.msra.mxu0 0.0
        %2619 = vmatpush.msra.mxu0 0.0
        %2620 = vmatpush.msra.mxu0 %v693
        %2621 = vmatpush.msra.mxu0 %v567
        %2622 = vmatpush.msra.mxu0 %v441
        %2623 = vmatpush.msra.mxu0 %v315
        %2624 = vmatmul.f32.gmra.mxu0 %v1026
        %v2625 = vpop.f32.mrf.mxu0
        %v2626 = vadd.f32 %v851, %v2625
        %2627 = vdwg.mxu0
        %2628 = vmatpush.msra.mxu0 0.0
        %2629 = vmatpush.msra.mxu0 0.0
        %2630 = vmatpush.msra.mxu0 0.0
        %2631 = vmatpush.msra.mxu0 0.0
        %2632 = vmatpush.msra.mxu0 0.0
        %2633 = vmatpush.msra.mxu0 0.0
        %2634 = vmatpush.msra.mxu0 0.0
        %2635 = vmatpush.msra.mxu0 0.0
        %2636 = vmatpush.msra.mxu0 0.0
        %2637 = vmatpush.msra.mxu0 0.0
        %2638 = vmatpush.msra.mxu0 0.0
        %2639 = vmatpush.msra.mxu0 0.0
        %2640 = vmatpush.msra.mxu0 %v694
        %2641 = vmatpush.msra.mxu0 %v568
        %2642 = vmatpush.msra.mxu0 %v442
        %2643 = vmatpush.msra.mxu0 %v316
        %2644 = vmatmul.f32.gmra.mxu0 %v1026
        %v2645 = vpop.f32.mrf.mxu0
        %v2646 = vadd.f32 %v852, %v2645
        %2647 = vdwg.mxu0
        %2648 = vmatpush.msra.mxu0 0.0
        %2649 = vmatpush.msra.mxu0 0.0
        %2650 = vmatpush.msra.mxu0 0.0
        %2651 = vmatpush.msra.mxu0 0.0
        %2652 = vmatpush.msra.mxu0 0.0
        %2653 = vmatpush.msra.mxu0 0.0
        %2654 = vmatpush.msra.mxu0 0.0
        %2655 = vmatpush.msra.mxu0 0.0
        %2656 = vmatpush.msra.mxu0 0.0
        %2657 = vmatpush.msra.mxu0 0.0
        %2658 = vmatpush.msra.mxu0 0.0
        %2659 = vmatpush.msra.mxu0 0.0
        %2660 = vmatpush.msra.mxu0 %v695
        %2661 = vmatpush.msra.mxu0 %v569
        %2662 = vmatpush.msra.mxu0 %v443
        %2663 = vmatpush.msra.mxu0 %v317
        %2664 = vmatmul.f32.gmra.mxu0 %v1026
        %v2665 = vpop.f32.mrf.mxu0
        %v2666 = vadd.f32 %v853, %v2665
        %2667 = vdwg.mxu0
        %2668 = vmatpush.msra.mxu0 0.0
        %2669 = vmatpush.msra.mxu0 0.0
        %2670 = vmatpush.msra.mxu0 0.0
        %2671 = vmatpush.msra.mxu0 0.0
        %2672 = vmatpush.msra.mxu0 0.0
        %2673 = vmatpush.msra.mxu0 0.0
        %2674 = vmatpush.msra.mxu0 0.0
        %2675 = vmatpush.msra.mxu0 0.0
        %2676 = vmatpush.msra.mxu0 0.0
        %2677 = vmatpush.msra.mxu0 0.0
        %2678 = vmatpush.msra.mxu0 0.0
        %2679 = vmatpush.msra.mxu0 0.0
        %2680 = vmatpush.msra.mxu0 %v696
        %2681 = vmatpush.msra.mxu0 %v570
        %2682 = vmatpush.msra.mxu0 %v444
        %2683 = vmatpush.msra.mxu0 %v318
        %2684 = vmatmul.f32.gmra.mxu0 %v1026
        %v2685 = vpop.f32.mrf.mxu0
        %v2686 = vadd.f32 %v854, %v2685
        %2687 = vdwg.mxu0
        %2688 = vmatpush.msra.mxu0 0.0
        %2689 = vmatpush.msra.mxu0 0.0
        %2690 = vmatpush.msra.mxu0 0.0
        %2691 = vmatpush.msra.mxu0 0.0
        %2692 = vmatpush.msra.mxu0 0.0
        %2693 = vmatpush.msra.mxu0 0.0
        %2694 = vmatpush.msra.mxu0 0.0
        %2695 = vmatpush.msra.mxu0 0.0
        %2696 = vmatpush.msra.mxu0 0.0
        %2697 = vmatpush.msra.mxu0 0.0
        %2698 = vmatpush.msra.mxu0 0.0
        %2699 = vmatpush.msra.mxu0 0.0
        %2700 = vmatpush.msra.mxu0 %v697
        %2701 = vmatpush.msra.mxu0 %v571
        %2702 = vmatpush.msra.mxu0 %v445
        %2703 = vmatpush.msra.mxu0 %v319
        %2704 = vmatmul.f32.gmra.mxu0 %v1026
        %v2705 = vpop.f32.mrf.mxu0
        %v2706 = vadd.f32 %v855, %v2705
        %2707 = vdwg.mxu0
        %2708 = vmatpush.msra.mxu0 0.0
        %2709 = vmatpush.msra.mxu0 0.0
        %2710 = vmatpush.msra.mxu0 0.0
        %2711 = vmatpush.msra.mxu0 0.0
        %2712 = vmatpush.msra.mxu0 0.0
        %2713 = vmatpush.msra.mxu0 0.0
        %2714 = vmatpush.msra.mxu0 0.0
        %2715 = vmatpush.msra.mxu0 0.0
        %2716 = vmatpush.msra.mxu0 0.0
        %2717 = vmatpush.msra.mxu0 0.0
        %2718 = vmatpush.msra.mxu0 0.0
        %2719 = vmatpush.msra.mxu0 0.0
        %2720 = vmatpush.msra.mxu0 %v698
        %2721 = vmatpush.msra.mxu0 %v572
        %2722 = vmatpush.msra.mxu0 %v446
        %2723 = vmatpush.msra.mxu0 %v320
        %2724 = vmatmul.f32.gmra.mxu0 %v1026
        %v2725 = vpop.f32.mrf.mxu0
        %v2726 = vadd.f32 %v856, %v2725
        %2727 = vdwg.mxu0
        %2728 = vmatpush.msra.mxu0 0.0
        %2729 = vmatpush.msra.mxu0 0.0
        %2730 = vmatpush.msra.mxu0 0.0
        %2731 = vmatpush.msra.mxu0 0.0
        %2732 = vmatpush.msra.mxu0 0.0
        %2733 = vmatpush.msra.mxu0 0.0
        %2734 = vmatpush.msra.mxu0 0.0
        %2735 = vmatpush.msra.mxu0 0.0
        %2736 = vmatpush.msra.mxu0 0.0
        %2737 = vmatpush.msra.mxu0 0.0
        %2738 = vmatpush.msra.mxu0 0.0
        %2739 = vmatpush.msra.mxu0 0.0
        %2740 = vmatpush.msra.mxu0 %v699
        %2741 = vmatpush.msra.mxu0 %v573
        %2742 = vmatpush.msra.mxu0 %v447
        %2743 = vmatpush.msra.mxu0 %v321
        %2744 = vmatmul.f32.gmra.mxu0 %v1026
        %v2745 = vpop.f32.mrf.mxu0
        %v2746 = vadd.f32 %v857, %v2745
        %2747 = vdwg.mxu0
        %2748 = vmatpush.msra.mxu0 0.0
        %2749 = vmatpush.msra.mxu0 0.0
        %2750 = vmatpush.msra.mxu0 0.0
        %2751 = vmatpush.msra.mxu0 0.0
        %2752 = vmatpush.msra.mxu0 0.0
        %2753 = vmatpush.msra.mxu0 0.0
        %2754 = vmatpush.msra.mxu0 0.0
        %2755 = vmatpush.msra.mxu0 0.0
        %2756 = vmatpush.msra.mxu0 0.0
        %2757 = vmatpush.msra.mxu0 0.0
        %2758 = vmatpush.msra.mxu0 0.0
        %2759 = vmatpush.msra.mxu0 0.0
        %2760 = vmatpush.msra.mxu0 %v700
        %2761 = vmatpush.msra.mxu0 %v574
        %2762 = vmatpush.msra.mxu0 %v448
        %2763 = vmatpush.msra.mxu0 %v322
        %2764 = vmatmul.f32.gmra.mxu0 %v1026
        %v2765 = vpop.f32.mrf.mxu0
        %v2766 = vadd.f32 %v858, %v2765
        %2767 = vdwg.mxu0
        %2768 = vmatpush.msra.mxu0 0.0
        %2769 = vmatpush.msra.mxu0 0.0
        %2770 = vmatpush.msra.mxu0 0.0
        %2771 = vmatpush.msra.mxu0 0.0
        %2772 = vmatpush.msra.mxu0 0.0
        %2773 = vmatpush.msra.mxu0 0.0
        %2774 = vmatpush.msra.mxu0 0.0
        %2775 = vmatpush.msra.mxu0 0.0
        %2776 = vmatpush.msra.mxu0 0.0
        %2777 = vmatpush.msra.mxu0 0.0
        %2778 = vmatpush.msra.mxu0 0.0
        %2779 = vmatpush.msra.mxu0 0.0
        %2780 = vmatpush.msra.mxu0 %v701
        %2781 = vmatpush.msra.mxu0 %v575
        %2782 = vmatpush.msra.mxu0 %v449
        %2783 = vmatpush.msra.mxu0 %v323
        %2784 = vmatmul.f32.gmra.mxu0 %v1026
        %v2785 = vpop.f32.mrf.mxu0
        %v2786 = vadd.f32 %v859, %v2785
        %2787 = vdwg.mxu0
        %2788 = vmatpush.msra.mxu0 0.0
        %2789 = vmatpush.msra.mxu0 0.0
        %2790 = vmatpush.msra.mxu0 0.0
        %2791 = vmatpush.msra.mxu0 0.0
        %2792 = vmatpush.msra.mxu0 0.0
        %2793 = vmatpush.msra.mxu0 0.0
        %2794 = vmatpush.msra.mxu0 0.0
        %2795 = vmatpush.msra.mxu0 0.0
        %2796 = vmatpush.msra.mxu0 0.0
        %2797 = vmatpush.msra.mxu0 0.0
        %2798 = vmatpush.msra.mxu0 0.0
        %2799 = vmatpush.msra.mxu0 0.0
        %2800 = vmatpush.msra.mxu0 %v702
        %2801 = vmatpush.msra.mxu0 %v576
        %2802 = vmatpush.msra.mxu0 %v450
        %2803 = vmatpush.msra.mxu0 %v324
        %2804 = vmatmul.f32.gmra.mxu0 %v1026
        %v2805 = vpop.f32.mrf.mxu0
        %v2806 = vadd.f32 %v860, %v2805
        %2807 = vdwg.mxu0
        %2808 = vmatpush.msra.mxu0 0.0
        %2809 = vmatpush.msra.mxu0 0.0
        %2810 = vmatpush.msra.mxu0 0.0
        %2811 = vmatpush.msra.mxu0 0.0
        %2812 = vmatpush.msra.mxu0 0.0
        %2813 = vmatpush.msra.mxu0 0.0
        %2814 = vmatpush.msra.mxu0 0.0
        %2815 = vmatpush.msra.mxu0 0.0
        %2816 = vmatpush.msra.mxu0 0.0
        %2817 = vmatpush.msra.mxu0 0.0
        %2818 = vmatpush.msra.mxu0 0.0
        %2819 = vmatpush.msra.mxu0 0.0
        %2820 = vmatpush.msra.mxu0 %v703
        %2821 = vmatpush.msra.mxu0 %v577
        %2822 = vmatpush.msra.mxu0 %v451
        %2823 = vmatpush.msra.mxu0 %v325
        %2824 = vmatmul.f32.gmra.mxu0 %v1026
        %v2825 = vpop.f32.mrf.mxu0
        %v2826 = vadd.f32 %v861, %v2825
        %2827 = vdwg.mxu0
        %2828 = vmatpush.msra.mxu0 0.0
        %2829 = vmatpush.msra.mxu0 0.0
        %2830 = vmatpush.msra.mxu0 0.0
        %2831 = vmatpush.msra.mxu0 0.0
        %2832 = vmatpush.msra.mxu0 0.0
        %2833 = vmatpush.msra.mxu0 0.0
        %2834 = vmatpush.msra.mxu0 0.0
        %2835 = vmatpush.msra.mxu0 0.0
        %2836 = vmatpush.msra.mxu0 0.0
        %2837 = vmatpush.msra.mxu0 0.0
        %2838 = vmatpush.msra.mxu0 0.0
        %2839 = vmatpush.msra.mxu0 0.0
        %2840 = vmatpush.msra.mxu0 %v704
        %2841 = vmatpush.msra.mxu0 %v578
        %2842 = vmatpush.msra.mxu0 %v452
        %2843 = vmatpush.msra.mxu0 %v326
        %2844 = vmatmul.f32.gmra.mxu0 %v1026
        %v2845 = vpop.f32.mrf.mxu0
        %v2846 = vadd.f32 %v862, %v2845
        %2847 = vdwg.mxu0
        %2848 = vmatpush.msra.mxu0 0.0
        %2849 = vmatpush.msra.mxu0 0.0
        %2850 = vmatpush.msra.mxu0 0.0
        %2851 = vmatpush.msra.mxu0 0.0
        %2852 = vmatpush.msra.mxu0 0.0
        %2853 = vmatpush.msra.mxu0 0.0
        %2854 = vmatpush.msra.mxu0 0.0
        %2855 = vmatpush.msra.mxu0 0.0
        %2856 = vmatpush.msra.mxu0 0.0
        %2857 = vmatpush.msra.mxu0 0.0
        %2858 = vmatpush.msra.mxu0 0.0
        %2859 = vmatpush.msra.mxu0 0.0
        %2860 = vmatpush.msra.mxu0 %v705
        %2861 = vmatpush.msra.mxu0 %v579
        %2862 = vmatpush.msra.mxu0 %v453
        %2863 = vmatpush.msra.mxu0 %v327
        %2864 = vmatmul.f32.gmra.mxu0 %v1026
        %v2865 = vpop.f32.mrf.mxu0
        %v2866 = vadd.f32 %v863, %v2865
        %2867 = vdwg.mxu0
        %2868 = vmatpush.msra.mxu0 0.0
        %2869 = vmatpush.msra.mxu0 0.0
        %2870 = vmatpush.msra.mxu0 0.0
        %2871 = vmatpush.msra.mxu0 0.0
        %2872 = vmatpush.msra.mxu0 0.0
        %2873 = vmatpush.msra.mxu0 0.0
        %2874 = vmatpush.msra.mxu0 0.0
        %2875 = vmatpush.msra.mxu0 0.0
        %2876 = vmatpush.msra.mxu0 0.0
        %2877 = vmatpush.msra.mxu0 0.0
        %2878 = vmatpush.msra.mxu0 0.0
        %2879 = vmatpush.msra.mxu0 0.0
        %2880 = vmatpush.msra.mxu0 %v706
        %2881 = vmatpush.msra.mxu0 %v580
        %2882 = vmatpush.msra.mxu0 %v454
        %2883 = vmatpush.msra.mxu0 %v328
        %2884 = vmatmul.f32.gmra.mxu0 %v1026
        %v2885 = vpop.f32.mrf.mxu0
        %v2886 = vadd.f32 %v864, %v2885
        %2887 = vdwg.mxu0
        %2888 = vmatpush.msra.mxu0 0.0
        %2889 = vmatpush.msra.mxu0 0.0
        %2890 = vmatpush.msra.mxu0 0.0
        %2891 = vmatpush.msra.mxu0 0.0
        %2892 = vmatpush.msra.mxu0 0.0
        %2893 = vmatpush.msra.mxu0 0.0
        %2894 = vmatpush.msra.mxu0 0.0
        %2895 = vmatpush.msra.mxu0 0.0
        %2896 = vmatpush.msra.mxu0 0.0
        %2897 = vmatpush.msra.mxu0 0.0
        %2898 = vmatpush.msra.mxu0 0.0
        %2899 = vmatpush.msra.mxu0 0.0
        %2900 = vmatpush.msra.mxu0 %v707
        %2901 = vmatpush.msra.mxu0 %v581
        %2902 = vmatpush.msra.mxu0 %v455
        %2903 = vmatpush.msra.mxu0 %v329
        %2904 = vmatmul.f32.gmra.mxu0 %v1026
        %v2905 = vpop.f32.mrf.mxu0
        %v2906 = vadd.f32 %v865, %v2905
        %2907 = vdwg.mxu0
        %2908 = vmatpush.msra.mxu0 0.0
        %2909 = vmatpush.msra.mxu0 0.0
        %2910 = vmatpush.msra.mxu0 0.0
        %2911 = vmatpush.msra.mxu0 0.0
        %2912 = vmatpush.msra.mxu0 0.0
        %2913 = vmatpush.msra.mxu0 0.0
        %2914 = vmatpush.msra.mxu0 0.0
        %2915 = vmatpush.msra.mxu0 0.0
        %2916 = vmatpush.msra.mxu0 0.0
        %2917 = vmatpush.msra.mxu0 0.0
        %2918 = vmatpush.msra.mxu0 0.0
        %2919 = vmatpush.msra.mxu0 0.0
        %2920 = vmatpush.msra.mxu0 %v708
        %2921 = vmatpush.msra.mxu0 %v582
        %2922 = vmatpush.msra.mxu0 %v456
        %2923 = vmatpush.msra.mxu0 %v330
        %2924 = vmatmul.f32.gmra.mxu0 %v1026
        %v2925 = vpop.f32.mrf.mxu0
        %v2926 = vadd.f32 %v866, %v2925
        %2927 = vdwg.mxu0
        %2928 = vmatpush.msra.mxu0 0.0
        %2929 = vmatpush.msra.mxu0 0.0
        %2930 = vmatpush.msra.mxu0 0.0
        %2931 = vmatpush.msra.mxu0 0.0
        %2932 = vmatpush.msra.mxu0 0.0
        %2933 = vmatpush.msra.mxu0 0.0
        %2934 = vmatpush.msra.mxu0 0.0
        %2935 = vmatpush.msra.mxu0 0.0
        %2936 = vmatpush.msra.mxu0 0.0
        %2937 = vmatpush.msra.mxu0 0.0
        %2938 = vmatpush.msra.mxu0 0.0
        %2939 = vmatpush.msra.mxu0 0.0
        %2940 = vmatpush.msra.mxu0 %v709
        %2941 = vmatpush.msra.mxu0 %v583
        %2942 = vmatpush.msra.mxu0 %v457
        %2943 = vmatpush.msra.mxu0 %v331
        %2944 = vmatmul.f32.gmra.mxu0 %v1026
        %v2945 = vpop.f32.mrf.mxu0
        %v2946 = vadd.f32 %v867, %v2945
        %2947 = vdwg.mxu0
        %2948 = vmatpush.msra.mxu0 0.0
        %2949 = vmatpush.msra.mxu0 0.0
        %2950 = vmatpush.msra.mxu0 0.0
        %2951 = vmatpush.msra.mxu0 0.0
        %2952 = vmatpush.msra.mxu0 0.0
        %2953 = vmatpush.msra.mxu0 0.0
        %2954 = vmatpush.msra.mxu0 0.0
        %2955 = vmatpush.msra.mxu0 0.0
        %2956 = vmatpush.msra.mxu0 0.0
        %2957 = vmatpush.msra.mxu0 0.0
        %2958 = vmatpush.msra.mxu0 0.0
        %2959 = vmatpush.msra.mxu0 0.0
        %2960 = vmatpush.msra.mxu0 %v710
        %2961 = vmatpush.msra.mxu0 %v584
        %2962 = vmatpush.msra.mxu0 %v458
        %2963 = vmatpush.msra.mxu0 %v332
        %2964 = vmatmul.f32.gmra.mxu0 %v1026
        %v2965 = vpop.f32.mrf.mxu0
        %v2966 = vadd.f32 %v868, %v2965
        %2967 = vdwg.mxu0
        %2968 = vmatpush.msra.mxu0 0.0
        %2969 = vmatpush.msra.mxu0 0.0
        %2970 = vmatpush.msra.mxu0 0.0
        %2971 = vmatpush.msra.mxu0 0.0
        %2972 = vmatpush.msra.mxu0 0.0
        %2973 = vmatpush.msra.mxu0 0.0
        %2974 = vmatpush.msra.mxu0 0.0
        %2975 = vmatpush.msra.mxu0 0.0
        %2976 = vmatpush.msra.mxu0 0.0
        %2977 = vmatpush.msra.mxu0 0.0
        %2978 = vmatpush.msra.mxu0 0.0
        %2979 = vmatpush.msra.mxu0 0.0
        %2980 = vmatpush.msra.mxu0 %v711
        %2981 = vmatpush.msra.mxu0 %v585
        %2982 = vmatpush.msra.mxu0 %v459
        %2983 = vmatpush.msra.mxu0 %v333
        %2984 = vmatmul.f32.gmra.mxu0 %v1026
        %v2985 = vpop.f32.mrf.mxu0
        %v2986 = vadd.f32 %v869, %v2985
        %2987 = vdwg.mxu0
        %2988 = vmatpush.msra.mxu0 0.0
        %2989 = vmatpush.msra.mxu0 0.0
        %2990 = vmatpush.msra.mxu0 0.0
        %2991 = vmatpush.msra.mxu0 0.0
        %2992 = vmatpush.msra.mxu0 0.0
        %2993 = vmatpush.msra.mxu0 0.0
        %2994 = vmatpush.msra.mxu0 0.0
        %2995 = vmatpush.msra.mxu0 0.0
        %2996 = vmatpush.msra.mxu0 0.0
        %2997 = vmatpush.msra.mxu0 0.0
        %2998 = vmatpush.msra.mxu0 0.0
        %2999 = vmatpush.msra.mxu0 0.0
        %3000 = vmatpush.msra.mxu0 %v712
        %3001 = vmatpush.msra.mxu0 %v586
        %3002 = vmatpush.msra.mxu0 %v460
        %3003 = vmatpush.msra.mxu0 %v334
        %3004 = vmatmul.f32.gmra.mxu0 %v1026
        %v3005 = vpop.f32.mrf.mxu0
        %v3006 = vadd.f32 %v870, %v3005
        %3007 = vdwg.mxu0
        %3008 = vmatpush.msra.mxu0 0.0
        %3009 = vmatpush.msra.mxu0 0.0
        %3010 = vmatpush.msra.mxu0 0.0
        %3011 = vmatpush.msra.mxu0 0.0
        %3012 = vmatpush.msra.mxu0 0.0
        %3013 = vmatpush.msra.mxu0 0.0
        %3014 = vmatpush.msra.mxu0 0.0
        %3015 = vmatpush.msra.mxu0 0.0
        %3016 = vmatpush.msra.mxu0 0.0
        %3017 = vmatpush.msra.mxu0 0.0
        %3018 = vmatpush.msra.mxu0 0.0
        %3019 = vmatpush.msra.mxu0 0.0
        %3020 = vmatpush.msra.mxu0 %v713
        %3021 = vmatpush.msra.mxu0 %v587
        %3022 = vmatpush.msra.mxu0 %v461
        %3023 = vmatpush.msra.mxu0 %v335
        %3024 = vmatmul.f32.gmra.mxu0 %v1026
        %v3025 = vpop.f32.mrf.mxu0
        %v3026 = vadd.f32 %v871, %v3025
        %3027 = vdwg.mxu0
        %3028 = vmatpush.msra.mxu0 0.0
        %3029 = vmatpush.msra.mxu0 0.0
        %3030 = vmatpush.msra.mxu0 0.0
        %3031 = vmatpush.msra.mxu0 0.0
        %3032 = vmatpush.msra.mxu0 0.0
        %3033 = vmatpush.msra.mxu0 0.0
        %3034 = vmatpush.msra.mxu0 0.0
        %3035 = vmatpush.msra.mxu0 0.0
        %3036 = vmatpush.msra.mxu0 0.0
        %3037 = vmatpush.msra.mxu0 0.0
        %3038 = vmatpush.msra.mxu0 0.0
        %3039 = vmatpush.msra.mxu0 0.0
        %3040 = vmatpush.msra.mxu0 %v714
        %3041 = vmatpush.msra.mxu0 %v588
        %3042 = vmatpush.msra.mxu0 %v462
        %3043 = vmatpush.msra.mxu0 %v336
        %3044 = vmatmul.f32.gmra.mxu0 %v1026
        %v3045 = vpop.f32.mrf.mxu0
        %v3046 = vadd.f32 %v872, %v3045
        %3047 = vdwg.mxu0
        %3048 = vmatpush.msra.mxu0 0.0
        %3049 = vmatpush.msra.mxu0 0.0
        %3050 = vmatpush.msra.mxu0 0.0
        %3051 = vmatpush.msra.mxu0 0.0
        %3052 = vmatpush.msra.mxu0 0.0
        %3053 = vmatpush.msra.mxu0 0.0
        %3054 = vmatpush.msra.mxu0 0.0
        %3055 = vmatpush.msra.mxu0 0.0
        %3056 = vmatpush.msra.mxu0 0.0
        %3057 = vmatpush.msra.mxu0 0.0
        %3058 = vmatpush.msra.mxu0 0.0
        %3059 = vmatpush.msra.mxu0 0.0
        %3060 = vmatpush.msra.mxu0 %v715
        %3061 = vmatpush.msra.mxu0 %v589
        %3062 = vmatpush.msra.mxu0 %v463
        %3063 = vmatpush.msra.mxu0 %v337
        %3064 = vmatmul.f32.gmra.mxu0 %v1026
        %v3065 = vpop.f32.mrf.mxu0
        %v3066 = vadd.f32 %v873, %v3065
        %3067 = vdwg.mxu0
        %3068 = vmatpush.msra.mxu0 0.0
        %3069 = vmatpush.msra.mxu0 0.0
        %3070 = vmatpush.msra.mxu0 0.0
        %3071 = vmatpush.msra.mxu0 0.0
        %3072 = vmatpush.msra.mxu0 0.0
        %3073 = vmatpush.msra.mxu0 0.0
        %3074 = vmatpush.msra.mxu0 0.0
        %3075 = vmatpush.msra.mxu0 0.0
        %3076 = vmatpush.msra.mxu0 0.0
        %3077 = vmatpush.msra.mxu0 0.0
        %3078 = vmatpush.msra.mxu0 0.0
        %3079 = vmatpush.msra.mxu0 0.0
        %3080 = vmatpush.msra.mxu0 %v716
        %3081 = vmatpush.msra.mxu0 %v590
        %3082 = vmatpush.msra.mxu0 %v464
        %3083 = vmatpush.msra.mxu0 %v338
        %3084 = vmatmul.f32.gmra.mxu0 %v1026
        %v3085 = vpop.f32.mrf.mxu0
        %v3086 = vadd.f32 %v874, %v3085
        %3087 = vdwg.mxu0
        %3088 = vmatpush.msra.mxu0 0.0
        %3089 = vmatpush.msra.mxu0 0.0
        %3090 = vmatpush.msra.mxu0 0.0
        %3091 = vmatpush.msra.mxu0 0.0
        %3092 = vmatpush.msra.mxu0 0.0
        %3093 = vmatpush.msra.mxu0 0.0
        %3094 = vmatpush.msra.mxu0 0.0
        %3095 = vmatpush.msra.mxu0 0.0
        %3096 = vmatpush.msra.mxu0 0.0
        %3097 = vmatpush.msra.mxu0 0.0
        %3098 = vmatpush.msra.mxu0 0.0
        %3099 = vmatpush.msra.mxu0 0.0
        %3100 = vmatpush.msra.mxu0 %v717
        %3101 = vmatpush.msra.mxu0 %v591
        %3102 = vmatpush.msra.mxu0 %v465
        %3103 = vmatpush.msra.mxu0 %v339
        %3104 = vmatmul.f32.gmra.mxu0 %v1026
        %v3105 = vpop.f32.mrf.mxu0
        %v3106 = vadd.f32 %v875, %v3105
        %3107 = vdwg.mxu0
        %3108 = vmatpush.msra.mxu0 0.0
        %3109 = vmatpush.msra.mxu0 0.0
        %3110 = vmatpush.msra.mxu0 0.0
        %3111 = vmatpush.msra.mxu0 0.0
        %3112 = vmatpush.msra.mxu0 0.0
        %3113 = vmatpush.msra.mxu0 0.0
        %3114 = vmatpush.msra.mxu0 0.0
        %3115 = vmatpush.msra.mxu0 0.0
        %3116 = vmatpush.msra.mxu0 0.0
        %3117 = vmatpush.msra.mxu0 0.0
        %3118 = vmatpush.msra.mxu0 0.0
        %3119 = vmatpush.msra.mxu0 0.0
        %3120 = vmatpush.msra.mxu0 %v718
        %3121 = vmatpush.msra.mxu0 %v592
        %3122 = vmatpush.msra.mxu0 %v466
        %3123 = vmatpush.msra.mxu0 %v340
        %3124 = vmatmul.f32.gmra.mxu0 %v1026
        %v3125 = vpop.f32.mrf.mxu0
        %v3126 = vadd.f32 %v876, %v3125
        %3127 = vdwg.mxu0
        %3128 = vmatpush.msra.mxu0 0.0
        %3129 = vmatpush.msra.mxu0 0.0
        %3130 = vmatpush.msra.mxu0 0.0
        %3131 = vmatpush.msra.mxu0 0.0
        %3132 = vmatpush.msra.mxu0 0.0
        %3133 = vmatpush.msra.mxu0 0.0
        %3134 = vmatpush.msra.mxu0 0.0
        %3135 = vmatpush.msra.mxu0 0.0
        %3136 = vmatpush.msra.mxu0 0.0
        %3137 = vmatpush.msra.mxu0 0.0
        %3138 = vmatpush.msra.mxu0 0.0
        %3139 = vmatpush.msra.mxu0 0.0
        %3140 = vmatpush.msra.mxu0 %v719
        %3141 = vmatpush.msra.mxu0 %v593
        %3142 = vmatpush.msra.mxu0 %v467
        %3143 = vmatpush.msra.mxu0 %v341
        %3144 = vmatmul.f32.gmra.mxu0 %v1026
        %v3145 = vpop.f32.mrf.mxu0
        %v3146 = vadd.f32 %v877, %v3145
        %3147 = vdwg.mxu0
        %3148 = vmatpush.msra.mxu0 0.0
        %3149 = vmatpush.msra.mxu0 0.0
        %3150 = vmatpush.msra.mxu0 0.0
        %3151 = vmatpush.msra.mxu0 0.0
        %3152 = vmatpush.msra.mxu0 0.0
        %3153 = vmatpush.msra.mxu0 0.0
        %3154 = vmatpush.msra.mxu0 0.0
        %3155 = vmatpush.msra.mxu0 0.0
        %3156 = vmatpush.msra.mxu0 0.0
        %3157 = vmatpush.msra.mxu0 0.0
        %3158 = vmatpush.msra.mxu0 0.0
        %3159 = vmatpush.msra.mxu0 0.0
        %3160 = vmatpush.msra.mxu0 %v720
        %3161 = vmatpush.msra.mxu0 %v594
        %3162 = vmatpush.msra.mxu0 %v468
        %3163 = vmatpush.msra.mxu0 %v342
        %3164 = vmatmul.f32.gmra.mxu0 %v1026
        %v3165 = vpop.f32.mrf.mxu0
        %v3166 = vadd.f32 %v878, %v3165
        %3167 = vdwg.mxu0
        %3168 = vmatpush.msra.mxu0 0.0
        %3169 = vmatpush.msra.mxu0 0.0
        %3170 = vmatpush.msra.mxu0 0.0
        %3171 = vmatpush.msra.mxu0 0.0
        %3172 = vmatpush.msra.mxu0 0.0
        %3173 = vmatpush.msra.mxu0 0.0
        %3174 = vmatpush.msra.mxu0 0.0
        %3175 = vmatpush.msra.mxu0 0.0
        %3176 = vmatpush.msra.mxu0 0.0
        %3177 = vmatpush.msra.mxu0 0.0
        %3178 = vmatpush.msra.mxu0 0.0
        %3179 = vmatpush.msra.mxu0 0.0
        %3180 = vmatpush.msra.mxu0 %v721
        %3181 = vmatpush.msra.mxu0 %v595
        %3182 = vmatpush.msra.mxu0 %v469
        %3183 = vmatpush.msra.mxu0 %v343
        %3184 = vmatmul.f32.gmra.mxu0 %v1026
        %v3185 = vpop.f32.mrf.mxu0
        %v3186 = vadd.f32 %v879, %v3185
        %3187 = vdwg.mxu0
        %3188 = vmatpush.msra.mxu0 0.0
        %3189 = vmatpush.msra.mxu0 0.0
        %3190 = vmatpush.msra.mxu0 0.0
        %3191 = vmatpush.msra.mxu0 0.0
        %3192 = vmatpush.msra.mxu0 0.0
        %3193 = vmatpush.msra.mxu0 0.0
        %3194 = vmatpush.msra.mxu0 0.0
        %3195 = vmatpush.msra.mxu0 0.0
        %3196 = vmatpush.msra.mxu0 0.0
        %3197 = vmatpush.msra.mxu0 0.0
        %3198 = vmatpush.msra.mxu0 0.0
        %3199 = vmatpush.msra.mxu0 0.0
        %3200 = vmatpush.msra.mxu0 %v722
        %3201 = vmatpush.msra.mxu0 %v596
        %3202 = vmatpush.msra.mxu0 %v470
        %3203 = vmatpush.msra.mxu0 %v344
        %3204 = vmatmul.f32.gmra.mxu0 %v1026
        %v3205 = vpop.f32.mrf.mxu0
        %v3206 = vadd.f32 %v880, %v3205
        %3207 = vdwg.mxu0
        %3208 = vmatpush.msra.mxu0 0.0
        %3209 = vmatpush.msra.mxu0 0.0
        %3210 = vmatpush.msra.mxu0 0.0
        %3211 = vmatpush.msra.mxu0 0.0
        %3212 = vmatpush.msra.mxu0 0.0
        %3213 = vmatpush.msra.mxu0 0.0
        %3214 = vmatpush.msra.mxu0 0.0
        %3215 = vmatpush.msra.mxu0 0.0
        %3216 = vmatpush.msra.mxu0 0.0
        %3217 = vmatpush.msra.mxu0 0.0
        %3218 = vmatpush.msra.mxu0 0.0
        %3219 = vmatpush.msra.mxu0 0.0
        %3220 = vmatpush.msra.mxu0 %v723
        %3221 = vmatpush.msra.mxu0 %v597
        %3222 = vmatpush.msra.mxu0 %v471
        %3223 = vmatpush.msra.mxu0 %v345
        %3224 = vmatmul.f32.gmra.mxu0 %v1026
        %v3225 = vpop.f32.mrf.mxu0
        %v3226 = vadd.f32 %v881, %v3225
        %3227 = vdwg.mxu0
        %3228 = vmatpush.msra.mxu0 0.0
        %3229 = vmatpush.msra.mxu0 0.0
        %3230 = vmatpush.msra.mxu0 0.0
        %3231 = vmatpush.msra.mxu0 0.0
        %3232 = vmatpush.msra.mxu0 0.0
        %3233 = vmatpush.msra.mxu0 0.0
        %3234 = vmatpush.msra.mxu0 0.0
        %3235 = vmatpush.msra.mxu0 0.0
        %3236 = vmatpush.msra.mxu0 0.0
        %3237 = vmatpush.msra.mxu0 0.0
        %3238 = vmatpush.msra.mxu0 0.0
        %3239 = vmatpush.msra.mxu0 0.0
        %3240 = vmatpush.msra.mxu0 %v724
        %3241 = vmatpush.msra.mxu0 %v598
        %3242 = vmatpush.msra.mxu0 %v472
        %3243 = vmatpush.msra.mxu0 %v346
        %3244 = vmatmul.f32.gmra.mxu0 %v1026
        %v3245 = vpop.f32.mrf.mxu0
        %v3246 = vadd.f32 %v882, %v3245
        %3247 = vdwg.mxu0
        %3248 = vmatpush.msra.mxu0 0.0
        %3249 = vmatpush.msra.mxu0 0.0
        %3250 = vmatpush.msra.mxu0 0.0
        %3251 = vmatpush.msra.mxu0 0.0
        %3252 = vmatpush.msra.mxu0 0.0
        %3253 = vmatpush.msra.mxu0 0.0
        %3254 = vmatpush.msra.mxu0 0.0
        %3255 = vmatpush.msra.mxu0 0.0
        %3256 = vmatpush.msra.mxu0 0.0
        %3257 = vmatpush.msra.mxu0 0.0
        %3258 = vmatpush.msra.mxu0 0.0
        %3259 = vmatpush.msra.mxu0 0.0
        %3260 = vmatpush.msra.mxu0 %v725
        %3261 = vmatpush.msra.mxu0 %v599
        %3262 = vmatpush.msra.mxu0 %v473
        %3263 = vmatpush.msra.mxu0 %v347
        %3264 = vmatmul.f32.gmra.mxu0 %v1026
        %v3265 = vpop.f32.mrf.mxu0
        %v3266 = vadd.f32 %v883, %v3265
        %3267 = vdwg.mxu0
        %3268 = vmatpush.msra.mxu0 0.0
        %3269 = vmatpush.msra.mxu0 0.0
        %3270 = vmatpush.msra.mxu0 0.0
        %3271 = vmatpush.msra.mxu0 0.0
        %3272 = vmatpush.msra.mxu0 0.0
        %3273 = vmatpush.msra.mxu0 0.0
        %3274 = vmatpush.msra.mxu0 0.0
        %3275 = vmatpush.msra.mxu0 0.0
        %3276 = vmatpush.msra.mxu0 0.0
        %3277 = vmatpush.msra.mxu0 0.0
        %3278 = vmatpush.msra.mxu0 0.0
        %3279 = vmatpush.msra.mxu0 0.0
        %3280 = vmatpush.msra.mxu0 %v726
        %3281 = vmatpush.msra.mxu0 %v600
        %3282 = vmatpush.msra.mxu0 %v474
        %3283 = vmatpush.msra.mxu0 %v348
        %3284 = vmatmul.f32.gmra.mxu0 %v1026
        %v3285 = vpop.f32.mrf.mxu0
        %v3286 = vadd.f32 %v884, %v3285
        %3287 = vdwg.mxu0
        %3288 = vmatpush.msra.mxu0 0.0
        %3289 = vmatpush.msra.mxu0 0.0
        %3290 = vmatpush.msra.mxu0 0.0
        %3291 = vmatpush.msra.mxu0 0.0
        %3292 = vmatpush.msra.mxu0 0.0
        %3293 = vmatpush.msra.mxu0 0.0
        %3294 = vmatpush.msra.mxu0 0.0
        %3295 = vmatpush.msra.mxu0 0.0
        %3296 = vmatpush.msra.mxu0 0.0
        %3297 = vmatpush.msra.mxu0 0.0
        %3298 = vmatpush.msra.mxu0 0.0
        %3299 = vmatpush.msra.mxu0 0.0
        %3300 = vmatpush.msra.mxu0 %v727
        %3301 = vmatpush.msra.mxu0 %v601
        %3302 = vmatpush.msra.mxu0 %v475
        %3303 = vmatpush.msra.mxu0 %v349
        %3304 = vmatmul.f32.gmra.mxu0 %v1026
        %v3305 = vpop.f32.mrf.mxu0
        %v3306 = vadd.f32 %v885, %v3305
        %3307 = vdwg.mxu0
        %3308 = vmatpush.msra.mxu0 0.0
        %3309 = vmatpush.msra.mxu0 0.0
        %3310 = vmatpush.msra.mxu0 0.0
        %3311 = vmatpush.msra.mxu0 0.0
        %3312 = vmatpush.msra.mxu0 0.0
        %3313 = vmatpush.msra.mxu0 0.0
        %3314 = vmatpush.msra.mxu0 0.0
        %3315 = vmatpush.msra.mxu0 0.0
        %3316 = vmatpush.msra.mxu0 0.0
        %3317 = vmatpush.msra.mxu0 0.0
        %3318 = vmatpush.msra.mxu0 0.0
        %3319 = vmatpush.msra.mxu0 0.0
        %3320 = vmatpush.msra.mxu0 %v728
        %3321 = vmatpush.msra.mxu0 %v602
        %3322 = vmatpush.msra.mxu0 %v476
        %3323 = vmatpush.msra.mxu0 %v350
        %3324 = vmatmul.f32.gmra.mxu0 %v1026
        %v3325 = vpop.f32.mrf.mxu0
        %v3326 = vadd.f32 %v886, %v3325
        %3327 = vdwg.mxu0
        %3328 = vmatpush.msra.mxu0 0.0
        %3329 = vmatpush.msra.mxu0 0.0
        %3330 = vmatpush.msra.mxu0 0.0
        %3331 = vmatpush.msra.mxu0 0.0
        %3332 = vmatpush.msra.mxu0 0.0
        %3333 = vmatpush.msra.mxu0 0.0
        %3334 = vmatpush.msra.mxu0 0.0
        %3335 = vmatpush.msra.mxu0 0.0
        %3336 = vmatpush.msra.mxu0 0.0
        %3337 = vmatpush.msra.mxu0 0.0
        %3338 = vmatpush.msra.mxu0 0.0
        %3339 = vmatpush.msra.mxu0 0.0
        %3340 = vmatpush.msra.mxu0 %v729
        %3341 = vmatpush.msra.mxu0 %v603
        %3342 = vmatpush.msra.mxu0 %v477
        %3343 = vmatpush.msra.mxu0 %v351
        %3344 = vmatmul.f32.gmra.mxu0 %v1026
        %v3345 = vpop.f32.mrf.mxu0
        %v3346 = vadd.f32 %v887, %v3345
        %3347 = vdwg.mxu0
        %3348 = vmatpush.msra.mxu0 0.0
        %3349 = vmatpush.msra.mxu0 0.0
        %3350 = vmatpush.msra.mxu0 0.0
        %3351 = vmatpush.msra.mxu0 0.0
        %3352 = vmatpush.msra.mxu0 0.0
        %3353 = vmatpush.msra.mxu0 0.0
        %3354 = vmatpush.msra.mxu0 0.0
        %3355 = vmatpush.msra.mxu0 0.0
        %3356 = vmatpush.msra.mxu0 0.0
        %3357 = vmatpush.msra.mxu0 0.0
        %3358 = vmatpush.msra.mxu0 0.0
        %3359 = vmatpush.msra.mxu0 0.0
        %3360 = vmatpush.msra.mxu0 %v730
        %3361 = vmatpush.msra.mxu0 %v604
        %3362 = vmatpush.msra.mxu0 %v478
        %3363 = vmatpush.msra.mxu0 %v352
        %3364 = vmatmul.f32.gmra.mxu0 %v1026
        %v3365 = vpop.f32.mrf.mxu0
        %v3366 = vadd.f32 %v888, %v3365
        %3367 = vdwg.mxu0
        %3368 = vmatpush.msra.mxu0 0.0
        %3369 = vmatpush.msra.mxu0 0.0
        %3370 = vmatpush.msra.mxu0 0.0
        %3371 = vmatpush.msra.mxu0 0.0
        %3372 = vmatpush.msra.mxu0 0.0
        %3373 = vmatpush.msra.mxu0 0.0
        %3374 = vmatpush.msra.mxu0 0.0
        %3375 = vmatpush.msra.mxu0 0.0
        %3376 = vmatpush.msra.mxu0 0.0
        %3377 = vmatpush.msra.mxu0 0.0
        %3378 = vmatpush.msra.mxu0 0.0
        %3379 = vmatpush.msra.mxu0 0.0
        %3380 = vmatpush.msra.mxu0 %v731
        %3381 = vmatpush.msra.mxu0 %v605
        %3382 = vmatpush.msra.mxu0 %v479
        %3383 = vmatpush.msra.mxu0 %v353
        %3384 = vmatmul.f32.gmra.mxu0 %v1026
        %v3385 = vpop.f32.mrf.mxu0
        %v3386 = vadd.f32 %v889, %v3385
        %3387 = vdwg.mxu0
        %3388 = vmatpush.msra.mxu0 0.0
        %3389 = vmatpush.msra.mxu0 0.0
        %3390 = vmatpush.msra.mxu0 0.0
        %3391 = vmatpush.msra.mxu0 0.0
        %3392 = vmatpush.msra.mxu0 0.0
        %3393 = vmatpush.msra.mxu0 0.0
        %3394 = vmatpush.msra.mxu0 0.0
        %3395 = vmatpush.msra.mxu0 0.0
        %3396 = vmatpush.msra.mxu0 0.0
        %3397 = vmatpush.msra.mxu0 0.0
        %3398 = vmatpush.msra.mxu0 0.0
        %3399 = vmatpush.msra.mxu0 0.0
        %3400 = vmatpush.msra.mxu0 %v732
        %3401 = vmatpush.msra.mxu0 %v606
        %3402 = vmatpush.msra.mxu0 %v480
        %3403 = vmatpush.msra.mxu0 %v354
        %3404 = vmatmul.f32.gmra.mxu0 %v1026
        %v3405 = vpop.f32.mrf.mxu0
        %v3406 = vadd.f32 %v890, %v3405
        %3407 = vdwg.mxu0
        %3408 = vmatpush.msra.mxu0 0.0
        %3409 = vmatpush.msra.mxu0 0.0
        %3410 = vmatpush.msra.mxu0 0.0
        %3411 = vmatpush.msra.mxu0 0.0
        %3412 = vmatpush.msra.mxu0 0.0
        %3413 = vmatpush.msra.mxu0 0.0
        %3414 = vmatpush.msra.mxu0 0.0
        %3415 = vmatpush.msra.mxu0 0.0
        %3416 = vmatpush.msra.mxu0 0.0
        %3417 = vmatpush.msra.mxu0 0.0
        %3418 = vmatpush.msra.mxu0 0.0
        %3419 = vmatpush.msra.mxu0 0.0
        %3420 = vmatpush.msra.mxu0 %v733
        %3421 = vmatpush.msra.mxu0 %v607
        %3422 = vmatpush.msra.mxu0 %v481
        %3423 = vmatpush.msra.mxu0 %v355
        %3424 = vmatmul.f32.gmra.mxu0 %v1026
        %v3425 = vpop.f32.mrf.mxu0
        %v3426 = vadd.f32 %v891, %v3425
        %3427 = vdwg.mxu0
        %3428 = vmatpush.msra.mxu0 0.0
        %3429 = vmatpush.msra.mxu0 0.0
        %3430 = vmatpush.msra.mxu0 0.0
        %3431 = vmatpush.msra.mxu0 0.0
        %3432 = vmatpush.msra.mxu0 0.0
        %3433 = vmatpush.msra.mxu0 0.0
        %3434 = vmatpush.msra.mxu0 0.0
        %3435 = vmatpush.msra.mxu0 0.0
        %3436 = vmatpush.msra.mxu0 0.0
        %3437 = vmatpush.msra.mxu0 0.0
        %3438 = vmatpush.msra.mxu0 0.0
        %3439 = vmatpush.msra.mxu0 0.0
        %3440 = vmatpush.msra.mxu0 %v734
        %3441 = vmatpush.msra.mxu0 %v608
        %3442 = vmatpush.msra.mxu0 %v482
        %3443 = vmatpush.msra.mxu0 %v356
        %3444 = vmatmul.f32.gmra.mxu0 %v1026
        %v3445 = vpop.f32.mrf.mxu0
        %v3446 = vadd.f32 %v892, %v3445
        %3447 = vdwg.mxu0
        %3448 = vmatpush.msra.mxu0 0.0
        %3449 = vmatpush.msra.mxu0 0.0
        %3450 = vmatpush.msra.mxu0 0.0
        %3451 = vmatpush.msra.mxu0 0.0
        %3452 = vmatpush.msra.mxu0 0.0
        %3453 = vmatpush.msra.mxu0 0.0
        %3454 = vmatpush.msra.mxu0 0.0
        %3455 = vmatpush.msra.mxu0 0.0
        %3456 = vmatpush.msra.mxu0 0.0
        %3457 = vmatpush.msra.mxu0 0.0
        %3458 = vmatpush.msra.mxu0 0.0
        %3459 = vmatpush.msra.mxu0 0.0
        %3460 = vmatpush.msra.mxu0 %v735
        %3461 = vmatpush.msra.mxu0 %v609
        %3462 = vmatpush.msra.mxu0 %v483
        %3463 = vmatpush.msra.mxu0 %v357
        %3464 = vmatmul.f32.gmra.mxu0 %v1026
        %v3465 = vpop.f32.mrf.mxu0
        %v3466 = vadd.f32 %v893, %v3465
        %3467 = vdwg.mxu0
        %3468 = vmatpush.msra.mxu0 0.0
        %3469 = vmatpush.msra.mxu0 0.0
        %3470 = vmatpush.msra.mxu0 0.0
        %3471 = vmatpush.msra.mxu0 0.0
        %3472 = vmatpush.msra.mxu0 0.0
        %3473 = vmatpush.msra.mxu0 0.0
        %3474 = vmatpush.msra.mxu0 0.0
        %3475 = vmatpush.msra.mxu0 0.0
        %3476 = vmatpush.msra.mxu0 0.0
        %3477 = vmatpush.msra.mxu0 0.0
        %3478 = vmatpush.msra.mxu0 0.0
        %3479 = vmatpush.msra.mxu0 0.0
        %3480 = vmatpush.msra.mxu0 %v736
        %3481 = vmatpush.msra.mxu0 %v610
        %3482 = vmatpush.msra.mxu0 %v484
        %3483 = vmatpush.msra.mxu0 %v358
        %3484 = vmatmul.f32.gmra.mxu0 %v1026
        %v3485 = vpop.f32.mrf.mxu0
        %v3486 = vadd.f32 %v894, %v3485
        %3487 = vdwg.mxu0
        %3488 = vmatpush.msra.mxu0 0.0
        %3489 = vmatpush.msra.mxu0 0.0
        %3490 = vmatpush.msra.mxu0 0.0
        %3491 = vmatpush.msra.mxu0 0.0
        %3492 = vmatpush.msra.mxu0 0.0
        %3493 = vmatpush.msra.mxu0 0.0
        %3494 = vmatpush.msra.mxu0 0.0
        %3495 = vmatpush.msra.mxu0 0.0
        %3496 = vmatpush.msra.mxu0 0.0
        %3497 = vmatpush.msra.mxu0 0.0
        %3498 = vmatpush.msra.mxu0 0.0
        %3499 = vmatpush.msra.mxu0 0.0
        %3500 = vmatpush.msra.mxu0 %v737
        %3501 = vmatpush.msra.mxu0 %v611
        %3502 = vmatpush.msra.mxu0 %v485
        %3503 = vmatpush.msra.mxu0 %v359
        %3504 = vmatmul.f32.gmra.mxu0 %v1026
        %v3505 = vpop.f32.mrf.mxu0
        %v3506 = vadd.f32 %v895, %v3505
        %3507 = vdwg.mxu0
        %3508 = vmatpush.msra.mxu0 0.0
        %3509 = vmatpush.msra.mxu0 0.0
        %3510 = vmatpush.msra.mxu0 0.0
        %3511 = vmatpush.msra.mxu0 0.0
        %3512 = vmatpush.msra.mxu0 0.0
        %3513 = vmatpush.msra.mxu0 0.0
        %3514 = vmatpush.msra.mxu0 0.0
        %3515 = vmatpush.msra.mxu0 0.0
        %3516 = vmatpush.msra.mxu0 0.0
        %3517 = vmatpush.msra.mxu0 0.0
        %3518 = vmatpush.msra.mxu0 0.0
        %3519 = vmatpush.msra.mxu0 0.0
        %3520 = vmatpush.msra.mxu0 %v738
        %3521 = vmatpush.msra.mxu0 %v612
        %3522 = vmatpush.msra.mxu0 %v486
        %3523 = vmatpush.msra.mxu0 %v360
        %3524 = vmatmul.f32.gmra.mxu0 %v1026
        %v3525 = vpop.f32.mrf.mxu0
        %v3526 = vadd.f32 %v896, %v3525
        %3527 = vdwg.mxu0
        %3528 = vmatpush.msra.mxu0 0.0
        %3529 = vmatpush.msra.mxu0 0.0
        %3530 = vmatpush.msra.mxu0 0.0
        %3531 = vmatpush.msra.mxu0 0.0
        %3532 = vmatpush.msra.mxu0 0.0
        %3533 = vmatpush.msra.mxu0 0.0
        %3534 = vmatpush.msra.mxu0 0.0
        %3535 = vmatpush.msra.mxu0 0.0
        %3536 = vmatpush.msra.mxu0 0.0
        %3537 = vmatpush.msra.mxu0 0.0
        %3538 = vmatpush.msra.mxu0 0.0
        %3539 = vmatpush.msra.mxu0 0.0
        %3540 = vmatpush.msra.mxu0 %v739
        %3541 = vmatpush.msra.mxu0 %v613
        %3542 = vmatpush.msra.mxu0 %v487
        %3543 = vmatpush.msra.mxu0 %v361
        %3544 = vmatmul.f32.gmra.mxu0 %v1026
        %v3545 = vpop.f32.mrf.mxu0
        %v3546 = vadd.f32 %v897, %v3545
        %3547 = vdwg.mxu0
        %v3674 = vrot.slane %v1066, 6
        %v3675 = vrot.slane %v1086, 4
        %v3676 = vrot.slane %v1106, 2
        %v3677 = vrot.slane %v1146, 6
        %v3678 = vrot.slane %v1166, 4
        %v3679 = vrot.slane %v1186, 2
        %v3680 = vrot.slane %v1226, 6
        %v3681 = vrot.slane %v1246, 4
        %v3682 = vrot.slane %v1266, 2
        %v3683 = vrot.slane %v1306, 6
        %v3684 = vrot.slane %v1326, 4
        %v3685 = vrot.slane %v1346, 2
        %v3686 = vrot.slane %v1386, 6
        %v3687 = vrot.slane %v1406, 4
        %v3688 = vrot.slane %v1426, 2
        %v3689 = vrot.slane %v1466, 6
        %v3690 = vrot.slane %v1486, 4
        %v3691 = vrot.slane %v1506, 2
        %v3692 = vrot.slane %v1546, 6
        %v3693 = vrot.slane %v1566, 4
        %v3694 = vrot.slane %v1586, 2
        %v3695 = vrot.slane %v1626, 6
        %v3696 = vrot.slane %v1646, 4
        %v3697 = vrot.slane %v1666, 2
        %v3698 = vrot.slane %v1706, 6
        %v3699 = vrot.slane %v1726, 4
        %v3700 = vrot.slane %v1746, 2
        %v3701 = vrot.slane %v1786, 6
        %v3702 = vrot.slane %v1806, 4
        %v3703 = vrot.slane %v1826, 2
        %v3704 = vrot.slane %v1866, 6
        %v3705 = vrot.slane %v1886, 4
        %v3706 = vrot.slane %v1906, 2
        %v3707 = vrot.slane %v1946, 6
        %v3708 = vrot.slane %v1966, 4
        %v3709 = vrot.slane %v1986, 2
        %v3710 = vrot.slane %v2026, 6
        %v3711 = vrot.slane %v2046, 4
        %v3712 = vrot.slane %v2066, 2
        %v3713 = vrot.slane %v2106, 6
        %v3714 = vrot.slane %v2126, 4
        %v3715 = vrot.slane %v2146, 2
        %v3716 = vrot.slane %v2186, 6
        %v3717 = vrot.slane %v2206, 4
        %v3718 = vrot.slane %v2226, 2
        %v3719 = vrot.slane %v2266, 6
        %v3720 = vrot.slane %v2286, 4
        %v3721 = vrot.slane %v2306, 2
        %v3722 = vrot.slane %v2346, 6
        %v3723 = vrot.slane %v2366, 4
        %v3724 = vrot.slane %v2386, 2
        %v3725 = vrot.slane %v2426, 6
        %v3726 = vrot.slane %v2446, 4
        %v3727 = vrot.slane %v2466, 2
        %v3728 = vrot.slane %v2506, 6
        %v3729 = vrot.slane %v2526, 4
        %v3730 = vrot.slane %v2546, 2
        %v3731 = vrot.slane %v2586, 6
        %v3732 = vrot.slane %v2606, 4
        %v3733 = vrot.slane %v2626, 2
        %v3734 = vrot.slane %v2666, 6
        %v3735 = vrot.slane %v2686, 4
        %v3736 = vrot.slane %v2706, 2
        %v3737 = vrot.slane %v2746, 6
        %v3738 = vrot.slane %v2766, 4
        %v3739 = vrot.slane %v2786, 2
        %v3740 = vrot.slane %v2826, 6
        %v3741 = vrot.slane %v2846, 4
        %v3742 = vrot.slane %v2866, 2
        %v3743 = vrot.slane %v2906, 6
        %v3744 = vrot.slane %v2926, 4
        %v3745 = vrot.slane %v2946, 2
        %v3746 = vrot.slane %v2986, 6
        %v3747 = vrot.slane %v3006, 4
        %v3748 = vrot.slane %v3026, 2
        %v3749 = vrot.slane %v3066, 6
        %v3750 = vrot.slane %v3086, 4
        %v3751 = vrot.slane %v3106, 2
        %v3752 = vrot.slane %v3146, 6
        %v3753 = vrot.slane %v3166, 4
        %v3754 = vrot.slane %v3186, 2
        %v3755 = vrot.slane %v3226, 6
        %v3756 = vrot.slane %v3246, 4
        %v3757 = vrot.slane %v3266, 2
        %v3758 = vrot.slane %v3306, 6
        %v3759 = vrot.slane %v3326, 4
        %v3760 = vrot.slane %v3346, 2
        %v3761 = vrot.slane %v3386, 6
        %v3762 = vrot.slane %v3406, 4
        %v3763 = vrot.slane %v3426, 2
        %v3764 = vrot.slane %v3466, 6
        %v3765 = vrot.slane %v3486, 4
        %v3766 = vrot.slane %v3506, 2
        %v3767 = vrot.slane %v3546, 6
        %vm3768 = vcmask 1041408
        %v3769 = vsel %vm3768, %v1046, %v3674
        %vm3770 = vcmask 1045508
        %v3771 = vsel %vm3770, %v3675, %v3676
        %vm3772 = vcmask 1043456
        %v3773 = vsel %vm3772, %v3769, %v3771
        %v3774 = vsel %vm3768, %v1126, %v3677
        %v3775 = vsel %vm3770, %v3678, %v3679
        %v3776 = vsel %vm3772, %v3774, %v3775
        %v3777 = vsel %vm3768, %v1206, %v3680
        %v3778 = vsel %vm3770, %v3681, %v3682
        %v3779 = vsel %vm3772, %v3777, %v3778
        %v3780 = vsel %vm3768, %v1286, %v3683
        %v3781 = vsel %vm3770, %v3684, %v3685
        %v3782 = vsel %vm3772, %v3780, %v3781
        %v3783 = vsel %vm3768, %v1366, %v3686
        %v3784 = vsel %vm3770, %v3687, %v3688
        %v3785 = vsel %vm3772, %v3783, %v3784
        %v3786 = vsel %vm3768, %v1446, %v3689
        %v3787 = vsel %vm3770, %v3690, %v3691
        %v3788 = vsel %vm3772, %v3786, %v3787
        %v3789 = vsel %vm3768, %v1526, %v3692
        %v3790 = vsel %vm3770, %v3693, %v3694
        %v3791 = vsel %vm3772, %v3789, %v3790
        %v3792 = vsel %vm3768, %v1606, %v3695
        %v3793 = vsel %vm3770, %v3696, %v3697
        %v3794 = vsel %vm3772, %v3792, %v3793
        %v3795 = vsel %vm3768, %v1686, %v3698
        %v3796 = vsel %vm3770, %v3699, %v3700
        %v3797 = vsel %vm3772, %v3795, %v3796
        %v3798 = vsel %vm3768, %v1766, %v3701
        %v3799 = vsel %vm3770, %v3702, %v3703
        %v3800 = vsel %vm3772, %v3798, %v3799
        %v3801 = vsel %vm3768, %v1846, %v3704
        %v3802 = vsel %vm3770, %v3705, %v3706
        %v3803 = vsel %vm3772, %v3801, %v3802
        %v3804 = vsel %vm3768, %v1926, %v3707
        %v3805 = vsel %vm3770, %v3708, %v3709
        %v3806 = vsel %vm3772, %v3804, %v3805
        %v3807 = vsel %vm3768, %v2006, %v3710
        %v3808 = vsel %vm3770, %v3711, %v3712
        %v3809 = vsel %vm3772, %v3807, %v3808
        %v3810 = vsel %vm3768, %v2086, %v3713
        %v3811 = vsel %vm3770, %v3714, %v3715
        %v3812 = vsel %vm3772, %v3810, %v3811
        %v3813 = vsel %vm3768, %v2166, %v3716
        %v3814 = vsel %vm3770, %v3717, %v3718
        %v3815 = vsel %vm3772, %v3813, %v3814
        %v3816 = vsel %vm3768, %v2246, %v3719
        %v3817 = vsel %vm3770, %v3720, %v3721
        %v3818 = vsel %vm3772, %v3816, %v3817
        %v3819 = vsel %vm3768, %v2326, %v3722
        %v3820 = vsel %vm3770, %v3723, %v3724
        %v3821 = vsel %vm3772, %v3819, %v3820
        %v3822 = vsel %vm3768, %v2406, %v3725
        %v3823 = vsel %vm3770, %v3726, %v3727
        %v3824 = vsel %vm3772, %v3822, %v3823
        %v3825 = vsel %vm3768, %v2486, %v3728
        %v3826 = vsel %vm3770, %v3729, %v3730
        %v3827 = vsel %vm3772, %v3825, %v3826
        %v3828 = vsel %vm3768, %v2566, %v3731
        %v3829 = vsel %vm3770, %v3732, %v3733
        %v3830 = vsel %vm3772, %v3828, %v3829
        %v3831 = vsel %vm3768, %v2646, %v3734
        %v3832 = vsel %vm3770, %v3735, %v3736
        %v3833 = vsel %vm3772, %v3831, %v3832
        %v3834 = vsel %vm3768, %v2726, %v3737
        %v3835 = vsel %vm3770, %v3738, %v3739
        %v3836 = vsel %vm3772, %v3834, %v3835
        %v3837 = vsel %vm3768, %v2806, %v3740
        %v3838 = vsel %vm3770, %v3741, %v3742
        %v3839 = vsel %vm3772, %v3837, %v3838
        %v3840 = vsel %vm3768, %v2886, %v3743
        %v3841 = vsel %vm3770, %v3744, %v3745
        %v3842 = vsel %vm3772, %v3840, %v3841
        %v3843 = vsel %vm3768, %v2966, %v3746
        %v3844 = vsel %vm3770, %v3747, %v3748
        %v3845 = vsel %vm3772, %v3843, %v3844
        %v3846 = vsel %vm3768, %v3046, %v3749
        %v3847 = vsel %vm3770, %v3750, %v3751
        %v3848 = vsel %vm3772, %v3846, %v3847
        %v3849 = vsel %vm3768, %v3126, %v3752
        %v3850 = vsel %vm3770, %v3753, %v3754
        %v3851 = vsel %vm3772, %v3849, %v3850
        %v3852 = vsel %vm3768, %v3206, %v3755
        %v3853 = vsel %vm3770, %v3756, %v3757
        %v3854 = vsel %vm3772, %v3852, %v3853
        %v3855 = vsel %vm3768, %v3286, %v3758
        %v3856 = vsel %vm3770, %v3759, %v3760
        %v3857 = vsel %vm3772, %v3855, %v3856
        %v3858 = vsel %vm3768, %v3366, %v3761
        %v3859 = vsel %vm3770, %v3762, %v3763
        %v3860 = vsel %vm3772, %v3858, %v3859
        %v3861 = vsel %vm3768, %v3446, %v3764
        %v3862 = vsel %vm3770, %v3765, %v3766
        %v3863 = vsel %vm3772, %v3861, %v3862
        %v3864 = vsel %vm3768, %v3526, %v3767
        %3897 = vst [vmem:[%s233] sm:$0xff] %v3773
        %3898 = vst [vmem:[%s233 + $0x8] sm:$0xff] %v3776
        %3899 = vst [vmem:[%s233 + $0x10] sm:$0xff] %v3779
        %3900 = vst [vmem:[%s233 + $0x18] sm:$0xff] %v3782
        %3901 = vst [vmem:[%s233 + $0x20] sm:$0xff] %v3785
        %3902 = vst [vmem:[%s233 + $0x28] sm:$0xff] %v3788
        %3903 = vst [vmem:[%s233 + $0x30] sm:$0xff] %v3791
        %3904 = vst [vmem:[%s233 + $0x38] sm:$0xff] %v3794
        %3905 = vst [vmem:[%s233 + $0x40] sm:$0xff] %v3797
        %3906 = vst [vmem:[%s233 + $0x48] sm:$0xff] %v3800
        %3907 = vst [vmem:[%s233 + $0x50] sm:$0xff] %v3803
        %3908 = vst [vmem:[%s233 + $0x58] sm:$0xff] %v3806
        %3909 = vst [vmem:[%s233 + $0x60] sm:$0xff] %v3809
        %3910 = vst [vmem:[%s233 + $0x68] sm:$0xff] %v3812
        %3911 = vst [vmem:[%s233 + $0x70] sm:$0xff] %v3815
        %3912 = vst [vmem:[%s233 + $0x78] sm:$0xff] %v3818
        %3913 = vst [vmem:[%s233 + $0x80] sm:$0xff] %v3821
        %3914 = vst [vmem:[%s233 + $0x88] sm:$0xff] %v3824
        %3915 = vst [vmem:[%s233 + $0x90] sm:$0xff] %v3827
        %3916 = vst [vmem:[%s233 + $0x98] sm:$0xff] %v3830
        %3917 = vst [vmem:[%s233 + $0xa0] sm:$0xff] %v3833
        %3918 = vst [vmem:[%s233 + $0xa8] sm:$0xff] %v3836
        %3919 = vst [vmem:[%s233 + $0xb0] sm:$0xff] %v3839
        %3920 = vst [vmem:[%s233 + $0xb8] sm:$0xff] %v3842
        %3921 = vst [vmem:[%s233 + $0xc0] sm:$0xff] %v3845
        %3922 = vst [vmem:[%s233 + $0xc8] sm:$0xff] %v3848
        %3923 = vst [vmem:[%s233 + $0xd0] sm:$0xff] %v3851
        %3924 = vst [vmem:[%s233 + $0xd8] sm:$0xff] %v3854
        %3925 = vst [vmem:[%s233 + $0xe0] sm:$0xff] %v3857
        %3926 = vst [vmem:[%s233 + $0xe8] sm:$0xff] %v3860
        %3927 = vst [vmem:[%s233 + $0xf0] sm:$0xff] %v3863
        %3928 = vst [vmem:[%s233 + $0xf8] sm:$0xf] %v3864
        %s3929 = smul.u32 126, %s20
        %p3930 = scmp.lt.s32.totalorder %s3929, 377
        %s3931 = scalar_select %p3930, %s3929, 377
        %s3932 = smul.addr %s3931, 2
        %s3933 = scalar_lea.vmem %s3, %s3932
        // Predicated region
        $region41: #{psf_forward.3} parent=31 // pred_check
          %p3934 = pneg %p111
        $region42: #{psf_forward.3} parent=31 // pred_check_branch
          %3936 = sbr.rel (%p3934) target = $region44
        $region43: #{psf_forward.3} parent=31 // pred_region
          %s3937 = smul.u32 126, %s20
        $region44: #{psf_forward.3} parent=31 // pred_fallthru
          _
      $region32: #{psf_forward.3} parent=5 // pred_fallthru
        _
      %p3938 = scmp.le.s32.totalorder 2, %s15
      // Predicated region
      $region45: #{psf_forward.3} parent=5 // pred_check
        %p3939 = pneg %p3938
      $region46: #{psf_forward.3} parent=5 // pred_check_branch
        %3941 = sbr.rel (%p3939) target = $region48
      $region47: #{psf_forward.3} parent=5 // pred_region
        %s3942 = ssub.s32 %s15, 2
        // Predicated region
        $region49: #{psf_forward.3} parent=47 // pred_check
          %p3943 = pneg %p117
        $region50: #{psf_forward.3} parent=47 // pred_check_branch
          %3945 = sbr.rel (%p3943) target = $region52
        $region51: #{psf_forward.3} parent=47 // pred_region
          %s3946 = smul.u32 126, %s21
          %p3947 = scmp.lt.s32.totalorder %s3946, 377
          %s3948 = scalar_select %p3947, %s3946, 377
          %s3949 = smul.addr %s3948, 2
          %s3950 = scalar_lea.vmem %s3, %s3949
        $region52: #{psf_forward.3} parent=47 // pred_fallthru
          _
      $region48: #{psf_forward.3} parent=5 // pred_fallthru
        _
    $region6: #{psf_forward.3} parent=1 // loop_footer
      %s19 = sadd.s32 1, %s15
    $region7: #{psf_forward.3} parent=1 // loop_footer_branch
      %14 = sbr.rel target = $region3
    $region8: #{psf_forward.3} parent=1 // loop_exit
      _
    %3951 = vsyncpa [#allocation3], 1
    %s3952 = scalar_lea.sflag [#allocation3], 1
    %3953 = vsyncpa %s3952, 1
    %3954 = vsyncpa [#allocation5], 1
    %s3955 = scalar_lea.sflag [#allocation5], 1
    %3956 = vsyncpa %s3955, 1

</llo_original>
